<compile_context>
chip_gen: v7x
topology: tpu7x:2x2x1
jax: 0.10.0
libtpu: 0.0.40
codegen_flags: <defaults>
</compile_context>

<pallas_src>
import jax
import jax.numpy as jnp
from jax.experimental import pallas as pl
from jax.experimental.pallas import tpu as pltpu

C1P = 128    # conv1 out-channels padded to a full lane tile (real: 32)
C2 = 64      # conv2 out-channels (= per-pixel fc input width)
K1 = 36      # conv1 im2col width: 4 in-channels * 3 * 3
IMG_B_MAX = 8


# ---------------------------------------------------------------------------
# Kernel 1: fused conv1 + conv2 for IMG_B images (grid = batch/IMG_B, parallel)
# ---------------------------------------------------------------------------
def _make_conv_kernel(img_b):
    m = img_b * 256   # matmul M: (image, 16, 16) output pixels

    # conv1 row needed for conv2 output row P at tap kh is 2P + kh - 1:
    #   kh=0 -> odd parity,  index P-1 -> window row start 0 (row 0 = zero halo)
    #   kh=1 -> even parity, index P   -> window row start 1
    #   kh=2 -> odd parity,  index P   -> window row start 1
    row_sel = [(1, 0), (0, 1), (1, 1)]   # (row parity, scratch row start)
    # conv1 col needed for conv2 output col Q at tap kw is 2Q + kw - 1:
    #   kw=0 -> odd parity,  index Q-1 -> window col start 15 (col 0 of the
    #           window is garbage -> masked to zero in-register below)
    #   kw=1 -> even parity, index Q   -> window col start 16 (tile aligned)
    #   kw=2 -> odd parity,  index Q   -> window col start 16 (tile aligned)
    col_sel = [(1, 15), (0, 16), (1, 16)]

    def kernel(patches_ref, w1_ref, b1_ref, w2_ref, b2_ref, out_ref, plane_ref):
        # plane_ref: (4, img_b, 17, 32, C1P) bf16 scratch; group g = 2*rp + cp.
        # Data rows 0..15 live at rows 1..16, data cols 0..15 at cols 16..31.
        # Only the row-0 halo (read by kh==0 taps) is ever zero-filled; the
        # col-15 halo is masked at load time, everything else is overwritten.
        plane_ref[:, :, 0, 16:32, :] = jnp.zeros((4, img_b, 16, C1P),
                                                 jnp.bfloat16)

        w1 = w1_ref[...]
        b1 = b1_ref[...]

        # ---- conv1: one MXU matmul per parity group, epilogue fused into
        # the aligned (img_b*16) vreg stores to that group's scratch slot.
        for g in range(4):
            acc1 = jnp.dot(patches_ref[g], w1,
                           preferred_element_type=jnp.float32)   # (m, C1P) f32
            act = jnp.maximum(acc1 + b1, 0.0).astype(jnp.bfloat16)
            plane_ref[g, :, 1:17, 16:32, :] = act.reshape(img_b, 16, 16, C1P)

        # ---- conv2: 9 shifted-window matmuls, f32 accumulation -------------
        # Constant sublane-0 mask that zeroes the column halo of kw==0 windows.
        col_halo = jax.lax.broadcasted_iota(jnp.int32, (16, C1P), 0) == 0
        zero = jnp.zeros([], jnp.bfloat16)

        acc2 = None
        for kh in range(3):
            pr, r0 = row_sel[kh]
            for kw in range(3):
                pc, c0 = col_sel[kw]
                g = pr * 2 + pc
                win = plane_ref[g, :, r0:r0 + 16, c0:c0 + 16, :]  # (b,16,16,C1P)
                if kw == 0:
                    win = jnp.where(col_halo, zero, win)          # halo -> 0
                part = jnp.dot(win.reshape(m, C1P), w2_ref[kh * 3 + kw],
                               preferred_element_type=jnp.float32)
                acc2 = part if acc2 is None else acc2 + part

        out = jnp.maximum(acc2 + b2_ref[...], 0.0).astype(out_ref.dtype)
        out_ref[...] = out.reshape(img_b, 256, C2)

    return kernel


def _conv_stack(patches, w1, b1, w2, b2, img_b):
    """(nb, 4, img_b*256, 36) bf16 patches -> (nb*img_b, 256, 64) bf16."""
    nb = patches.shape[0]
    m = img_b * 256
    return pl.pallas_call(
        _make_conv_kernel(img_b),
        out_shape=jax.ShapeDtypeStruct((nb * img_b, 256, C2), jnp.bfloat16),
        grid_spec=pltpu.PrefetchScalarGridSpec(
            num_scalar_prefetch=0,
            grid=(nb,),
            in_specs=[
                pl.BlockSpec((None, 4, m, K1), lambda i: (i, 0, 0, 0)),
                pl.BlockSpec((K1, C1P), lambda i: (0, 0)),
                pl.BlockSpec((1, C1P), lambda i: (0, 0)),
                pl.BlockSpec((9, C1P, C2), lambda i: (0, 0, 0)),
                pl.BlockSpec((1, C2), lambda i: (0, 0)),
            ],
            out_specs=pl.BlockSpec((img_b, 256, C2), lambda i: (i, 0, 0)),
            scratch_shapes=[pltpu.VMEM((4, img_b, 17, 32, C1P), jnp.bfloat16)],
        ),
        compiler_params=pltpu.CompilerParams(
            dimension_semantics=("parallel",)),
    )(patches, w1, b1, w2, b2)


# ---------------------------------------------------------------------------
# Kernel 2: fc layer, K-tiled matmul with f32 accumulator, fused bias + ReLU
# ---------------------------------------------------------------------------
def _fc_kernel(x_ref, w_ref, b_ref, o_ref, acc_ref):
    @pl.when(pl.program_id(1) == 0)
    def _():
        acc_ref[...] = jnp.zeros_like(acc_ref)

    acc_ref[...] += jnp.dot(x_ref[...], w_ref[...],
                            preferred_element_type=jnp.float32)

    @pl.when(pl.program_id(1) == pl.num_programs(1) - 1)
    def _():
        o_ref[...] = jnp.maximum(acc_ref[...] + b_ref[...],
                                 0.0).astype(o_ref.dtype)


def _fc_relu(x, w, b, *, tk=8192):
    """relu(x @ w + b): x (M, K) bf16, w (K, 64) bf16, b (1, 64) f32 -> f32."""
    m, k = x.shape
    nout = w.shape[1]
    assert k % tk == 0
    # Pad rows so the M tile is layout-friendly (bf16 sublane tiling of 16).
    mp = max(16, -(-m // 16) * 16)
    if mp > 256:
        mp = -(-mp // 256) * 256
    tm = min(mp, 256)
    if mp != m:
        x = jnp.pad(x, ((0, mp - m), (0, 0)))

    out = pl.pallas_call(
        _fc_kernel,
        out_shape=jax.ShapeDtypeStruct((mp, nout), jnp.float32),
        grid_spec=pltpu.PrefetchScalarGridSpec(
            num_scalar_prefetch=0,
            grid=(mp // tm, k // tk),
            in_specs=[
                pl.BlockSpec((tm, tk), lambda i, j: (i, j)),
                pl.BlockSpec((tk, nout), lambda i, j: (j, 0)),
                pl.BlockSpec((1, nout), lambda i, j: (0, 0)),
            ],
            out_specs=pl.BlockSpec((tm, nout), lambda i, j: (i, 0)),
            scratch_shapes=[pltpu.VMEM((tm, nout), jnp.float32)],
        ),
        compiler_params=pltpu.CompilerParams(
            dimension_semantics=("parallel", "arbitrary")),
    )(x, w, b)
    return out[:m]


# ---------------------------------------------------------------------------
# XLA-side prep (raw input only): parity/group-major im2col for conv1
# ---------------------------------------------------------------------------
def _conv1_patches(x_nchw, img_b):
    """(N,4,64,64) f32 -> (N/img_b, 4, img_b*256, 36) bf16 conv1 patches.

    Group index = 2*row_parity + col_parity of the conv1 output pixel;
    rows within a group are ordered (image_in_block, i, j) where the conv1
    output pixel is (2i+rp, 2j+cp); columns are (kh, kw, c_in) — matching the
    prepared conv1 weight.  (bf16 input quantization is intentional: bf16 MXU
    operands with f32 accumulation, ~1e-3 abs error vs the f32 reference.)
    """
    n = x_nchw.shape[0]
    assert n % img_b == 0
    nb = n // img_b
    xh = jnp.transpose(x_nchw, (0, 2, 3, 1))                  # NHWC (N,64,64,4)
    xp = jnp.pad(xh, ((0, 0), (1, 1), (1, 1), (0, 0)))        # (N,66,66,4)
    slabs = [xp[:, kh:kh + 64:2, kw:kw + 64:2, :]             # each (N,32,32,4)
             for kh in range(3) for kw in range(3)]
    pat = jnp.stack(slabs, axis=3)                            # (N,32,32,9,4)
    pat = pat.reshape(nb, img_b, 16, 2, 16, 2, K1)            # (nb,B,i,pi,j,pj,k)
    pat = pat.transpose(0, 3, 5, 1, 2, 4, 6)                  # (nb,pi,pj,B,i,j,k)
    return pat.reshape(nb, 4, img_b * 256, K1).astype(jnp.bfloat16)


def _choose_img_block(n):
    """Largest image block (amortizes per-step overhead) that still leaves
    >= 2 grid steps, so the parallel batch axis can shard across v7x's 2 TCs."""
    for cand in (8, 4, 2):
        if n >= 2 * cand:
            return cand
    return 1


# ---------------------------------------------------------------------------
# Parameters: raw torch layouts + one-time kernel-ready preparation
# ---------------------------------------------------------------------------
def init_params(key):
    """Raw parameters in the PyTorch layouts (OIHW conv weights, (out,in) fc)."""
    k1, k2, k3, k4, k5, k6 = jax.random.split(key, 6)
    return {
        "conv1_w": 0.05 * jax.random.normal(k1, (32, 4, 3, 3), jnp.float32),
        "conv1_b": 0.05 * jax.random.normal(k2, (32,), jnp.float32),
        "conv2_w": 0.05 * jax.random.normal(k3, (64, 32, 3, 3), jnp.float32),
        "conv2_b": 0.05 * jax.random.normal(k4, (64,), jnp.float32),
        "fc_w": 0.02 * jax.random.normal(k5, (64, 64 * 16 * 16), jnp.float32),
        "fc_b": 0.02 * jax.random.normal(k6, (64,), jnp.float32),
    }


def prepare_params(raw):
    """One-time weight permutation / lane padding / bf16 cast."""
    w1 = raw["conv1_w"].transpose(2, 3, 1, 0).reshape(K1, 32)        # (kh,kw,c) x o
    w1 = jnp.pad(w1, ((0, 0), (0, C1P - 32))).astype(jnp.bfloat16)   # (36, 128)
    b1 = jnp.pad(raw["conv1_b"], (0, C1P - 32)).reshape(1, C1P)      # f32, padded

    w2 = raw["conv2_w"].transpose(2, 3, 1, 0).reshape(9, 32, C2)     # tap x c x o
    w2 = jnp.pad(w2, ((0, 0), (0, C1P - 32), (0, 0))).astype(jnp.bfloat16)
    b2 = raw["conv2_b"].reshape(1, C2)                               # f32

    # torch flattens NCHW (c,h,w); the kernel produces (h,w,c) rows, so fold
    # that permutation into the fc weight once.
    wf = raw["fc_w"].reshape(C2, C2, 16, 16)                         # (o,c,h,w)
    wf = wf.transpose(2, 3, 1, 0).reshape(16 * 16 * C2, C2)          # (h,w,c) x o
    return {
        "w1": w1, "b1": b1, "w2": w2, "b2": b2,
        "fc_w": wf.astype(jnp.bfloat16),
        "fc_b": raw["fc_b"].reshape(1, C2),
    }


@jax.jit
def lidar_cnn_forward(params, x):
    """x: (N, 4, 64, 64) f32 -> (N, 64) f32 (matches the PyTorch module)."""
    n = x.shape[0]
    img_b = _choose_img_block(n)
    n_pad = -(-n // img_b) * img_b
    if n_pad != n:
        x = jnp.pad(x, ((0, n_pad - n), (0, 0), (0, 0), (0, 0)))
    patches = _conv1_patches(x, img_b)                               # (nb,4,B*256,36)
    act = _conv_stack(patches, params["w1"], params["b1"],
                      params["w2"], params["b2"], img_b)             # (n_pad,256,64)
    feat = act.reshape(n_pad, 256 * C2)                              # (h,w,c) flat
    return _fc_relu(feat, params["fc_w"], params["fc_b"])[:n]        # (N, 64)


# ---------------------------------------------------------------------------
# Pure-JAX f32 reference (sanity check against the raw torch-layout weights)
# ---------------------------------------------------------------------------
def _reference_forward(raw, x):
    dn = ("NCHW", "OIHW", "NCHW")
    y = jax.lax.conv_general_dilated(
        x, raw["conv1_w"], (2, 2), [(1, 1), (1, 1)],
        dimension_numbers=jax.lax.conv_dimension_numbers(
            x.shape, raw["conv1_w"].shape, dn))
    y = jax.nn.relu(y + raw["conv1_b"][None, :, None, None])
    y = jax.lax.conv_general_dilated(
        y, raw["conv2_w"], (2, 2), [(1, 1), (1, 1)],
        dimension_numbers=jax.lax.conv_dimension_numbers(
            y.shape, raw["conv2_w"].shape, dn))
    y = jax.nn.relu(y + raw["conv2_b"][None, :, None, None])
    y = y.reshape(y.shape[0], -1)
    return jax.nn.relu(y @ raw["fc_w"].T + raw["fc_b"])


if __name__ == "__main__":
    key = jax.random.PRNGKey(0)
    pkey, xkey, xbkey = jax.random.split(key, 3)
    raw = init_params(pkey)
    params = prepare_params(raw)

    # The module's fc hard-codes 64*16*16 features => input must be 64x64.
    x = jax.random.normal(xkey, (2, 4, 64, 64), jnp.float32)
    out = jax.block_until_ready(lidar_cnn_forward(params, x))
    assert out.shape == (2, 64) and out.dtype == jnp.float32
    ref = jax.block_until_ready(_reference_forward(raw, x))
    err = float(jnp.max(jnp.abs(out - ref)))
    assert jnp.allclose(out, ref, atol=3e-2, rtol=3e-2), f"mismatch vs ref: {err}"

    # Also exercise the image-blocked (IMG_B=8, 2 grid steps) megacore path.
    xb = jax.random.normal(xbkey, (16, 4, 64, 64), jnp.float32)
    outb = jax.block_until_ready(lidar_cnn_forward(params, xb))
    refb = jax.block_until_ready(_reference_forward(raw, xb))
    errb = float(jnp.max(jnp.abs(outb - refb)))
    assert outb.shape == (16, 64)
    assert jnp.allclose(outb, refb, atol=3e-2, rtol=3e-2), f"blocked mismatch: {errb}"

    print("KERNEL_OK")
</pallas_src>

<mosaic_0001>
module attributes {stable_mosaic.version = 11 : i64} {
  func.func @kernel(%arg0: i32, %arg1: memref<1x4x256x36xbf16, #tpu.memory_space<vmem>>, %arg2: memref<36x128xbf16, #tpu.memory_space<vmem>>, %arg3: memref<1x128xf32, #tpu.memory_space<vmem>>, %arg4: memref<9x128x64xbf16, #tpu.memory_space<vmem>>, %arg5: memref<1x64xf32, #tpu.memory_space<vmem>>, %arg6: memref<1x256x64xbf16, #tpu.memory_space<vmem>>, %arg7: memref<4x1x17x32x128xbf16, #tpu.memory_space<vmem>>) attributes {dimension_semantics = [#tpu.dimension_semantics<parallel>], iteration_bounds = array<i64: 2>, scalar_prefetch = 0 : i64, scratch_operands = 1 : i64, tpu.core_type = #tpu.core_type<tc>, window_params = [{transform_indices = @transform_0, window_bounds = array<i64: 1, 4, 256, 36>}, {pipeline_mode = #tpu.pipeline_mode<synchronous>, transform_indices = @transform_1, window_bounds = array<i64: 36, 128>}, {pipeline_mode = #tpu.pipeline_mode<synchronous>, transform_indices = @transform_2, window_bounds = array<i64: 1, 128>}, {pipeline_mode = #tpu.pipeline_mode<synchronous>, transform_indices = @transform_3, window_bounds = array<i64: 9, 128, 64>}, {pipeline_mode = #tpu.pipeline_mode<synchronous>, transform_indices = @transform_4, window_bounds = array<i64: 1, 64>}, {transform_indices = @transform_5, window_bounds = array<i64: 1, 256, 64>}]} {
    %cst = arith.constant 0.000000e+00 : bf16
    %0 = vector.broadcast %cst : bf16 to vector<4x1x16x128xbf16>
    %c0 = arith.constant 0 : index
    %c0_0 = arith.constant 0 : index
    %c0_1 = arith.constant 0 : index
    %c16 = arith.constant 16 : index
    %c0_2 = arith.constant 0 : index
    %1 = vector.load %arg7[%c0, %c0_0, %c0_1, %c16, %c0_2] : memref<4x1x17x32x128xbf16, #tpu.memory_space<vmem>>, vector<4x1x1x16x128xbf16>
    %2 = vector.shape_cast %1 : vector<4x1x1x16x128xbf16> to vector<4x1x16x128xbf16>
    %3 = vector.shape_cast %0 : vector<4x1x16x128xbf16> to vector<4x1x1x16x128xbf16>
    tpu.vector_store %arg7[%c0, %c0_0, %c0_1, %c16, %c0_2], %3 {strides = array<i32>} : memref<4x1x17x32x128xbf16, #tpu.memory_space<vmem>>, vector<4x1x1x16x128xbf16>,
    %c0_3 = arith.constant 0 : index
    %c0_4 = arith.constant 0 : index
    %4 = vector.load %arg2[%c0_3, %c0_4] : memref<36x128xbf16, #tpu.memory_space<vmem>>, vector<36x128xbf16>
    %c0_5 = arith.constant 0 : index
    %c0_6 = arith.constant 0 : index
    %5 = vector.load %arg3[%c0_5, %c0_6] : memref<1x128xf32, #tpu.memory_space<vmem>>, vector<1x128xf32>
    %c0_7 = arith.constant 0 : index
    %c0_8 = arith.constant 0 : index
    %c0_9 = arith.constant 0 : index
    %c0_10 = arith.constant 0 : index
    %6 = vector.load %arg1[%c0_7, %c0_8, %c0_9, %c0_10] : memref<1x4x256x36xbf16, #tpu.memory_space<vmem>>, vector<1x1x256x36xbf16>
    %7 = vector.shape_cast %6 : vector<1x1x256x36xbf16> to vector<256x36xbf16>
    %cst_11 = arith.constant dense<0.000000e+00> : vector<256x128xf32>
    %8 = tpu.matmul %7, %4, %cst_11 {dimension_numbers = #tpu.dot_dimension_numbers<[1], [0], [0], [1], [0, 0, 1, 1], [], []>} : vector<256x36xbf16>, vector<36x128xbf16>, vector<256x128xf32> -> vector<256x128xf32>
    %9 = vector.broadcast %5 : vector<1x128xf32> to vector<256x128xf32>
    %10 = arith.addf %8, %9 : vector<256x128xf32>
    %cst_12 = arith.constant 0.000000e+00 : f32
    %11 = vector.broadcast %cst_12 : f32 to vector<256x128xf32>
    %12 = arith.maximumf %10, %11 : vector<256x128xf32>
    %13 = arith.truncf %12 : vector<256x128xf32> to vector<256x128xbf16>
    %14 = vector.shape_cast %13 : vector<256x128xbf16> to vector<1x16x16x128xbf16>
    %c0_13 = arith.constant 0 : index
    %c0_14 = arith.constant 0 : index
    %c1 = arith.constant 1 : index
    %c16_15 = arith.constant 16 : index
    %c0_16 = arith.constant 0 : index
    %15 = vector.load %arg7[%c0_13, %c0_14, %c1, %c16_15, %c0_16] : memref<4x1x17x32x128xbf16, #tpu.memory_space<vmem>>, vector<1x1x16x16x128xbf16>
    %16 = vector.shape_cast %15 : vector<1x1x16x16x128xbf16> to vector<1x16x16x128xbf16>
    %17 = vector.shape_cast %14 : vector<1x16x16x128xbf16> to vector<1x1x16x16x128xbf16>
    tpu.vector_store %arg7[%c0_13, %c0_14, %c1, %c16_15, %c0_16], %17 {strides = array<i32>} : memref<4x1x17x32x128xbf16, #tpu.memory_space<vmem>>, vector<1x1x16x16x128xbf16>,
    %c0_17 = arith.constant 0 : index
    %c1_18 = arith.constant 1 : index
    %c0_19 = arith.constant 0 : index
    %c0_20 = arith.constant 0 : index
    %18 = vector.load %arg1[%c0_17, %c1_18, %c0_19, %c0_20] : memref<1x4x256x36xbf16, #tpu.memory_space<vmem>>, vector<1x1x256x36xbf16>
    %19 = vector.shape_cast %18 : vector<1x1x256x36xbf16> to vector<256x36xbf16>
    %cst_21 = arith.constant dense<0.000000e+00> : vector<256x128xf32>
    %20 = tpu.matmul %19, %4, %cst_21 {dimension_numbers = #tpu.dot_dimension_numbers<[1], [0], [0], [1], [0, 0, 1, 1], [], []>} : vector<256x36xbf16>, vector<36x128xbf16>, vector<256x128xf32> -> vector<256x128xf32>
    %21 = vector.broadcast %5 : vector<1x128xf32> to vector<256x128xf32>
    %22 = arith.addf %20, %21 : vector<256x128xf32>
    %cst_22 = arith.constant 0.000000e+00 : f32
    %23 = vector.broadcast %cst_22 : f32 to vector<256x128xf32>
    %24 = arith.maximumf %22, %23 : vector<256x128xf32>
    %25 = arith.truncf %24 : vector<256x128xf32> to vector<256x128xbf16>
    %26 = vector.shape_cast %25 : vector<256x128xbf16> to vector<1x16x16x128xbf16>
    %c1_23 = arith.constant 1 : index
    %c0_24 = arith.constant 0 : index
    %c1_25 = arith.constant 1 : index
    %c16_26 = arith.constant 16 : index
    %c0_27 = arith.constant 0 : index
    %27 = vector.load %arg7[%c1_23, %c0_24, %c1_25, %c16_26, %c0_27] : memref<4x1x17x32x128xbf16, #tpu.memory_space<vmem>>, vector<1x1x16x16x128xbf16>
    %28 = vector.shape_cast %27 : vector<1x1x16x16x128xbf16> to vector<1x16x16x128xbf16>
    %29 = vector.shape_cast %26 : vector<1x16x16x128xbf16> to vector<1x1x16x16x128xbf16>
    tpu.vector_store %arg7[%c1_23, %c0_24, %c1_25, %c16_26, %c0_27], %29 {strides = array<i32>} : memref<4x1x17x32x128xbf16, #tpu.memory_space<vmem>>, vector<1x1x16x16x128xbf16>,
    %c0_28 = arith.constant 0 : index
    %c2 = arith.constant 2 : index
    %c0_29 = arith.constant 0 : index
    %c0_30 = arith.constant 0 : index
    %30 = vector.load %arg1[%c0_28, %c2, %c0_29, %c0_30] : memref<1x4x256x36xbf16, #tpu.memory_space<vmem>>, vector<1x1x256x36xbf16>
    %31 = vector.shape_cast %30 : vector<1x1x256x36xbf16> to vector<256x36xbf16>
    %cst_31 = arith.constant dense<0.000000e+00> : vector<256x128xf32>
    %32 = tpu.matmul %31, %4, %cst_31 {dimension_numbers = #tpu.dot_dimension_numbers<[1], [0], [0], [1], [0, 0, 1, 1], [], []>} : vector<256x36xbf16>, vector<36x128xbf16>, vector<256x128xf32> -> vector<256x128xf32>
    %33 = vector.broadcast %5 : vector<1x128xf32> to vector<256x128xf32>
    %34 = arith.addf %32, %33 : vector<256x128xf32>
    %cst_32 = arith.constant 0.000000e+00 : f32
    %35 = vector.broadcast %cst_32 : f32 to vector<256x128xf32>
    %36 = arith.maximumf %34, %35 : vector<256x128xf32>
    %37 = arith.truncf %36 : vector<256x128xf32> to vector<256x128xbf16>
    %38 = vector.shape_cast %37 : vector<256x128xbf16> to vector<1x16x16x128xbf16>
    %c2_33 = arith.constant 2 : index
    %c0_34 = arith.constant 0 : index
    %c1_35 = arith.constant 1 : index
    %c16_36 = arith.constant 16 : index
    %c0_37 = arith.constant 0 : index
    %39 = vector.load %arg7[%c2_33, %c0_34, %c1_35, %c16_36, %c0_37] : memref<4x1x17x32x128xbf16, #tpu.memory_space<vmem>>, vector<1x1x16x16x128xbf16>
    %40 = vector.shape_cast %39 : vector<1x1x16x16x128xbf16> to vector<1x16x16x128xbf16>
    %41 = vector.shape_cast %38 : vector<1x16x16x128xbf16> to vector<1x1x16x16x128xbf16>
    tpu.vector_store %arg7[%c2_33, %c0_34, %c1_35, %c16_36, %c0_37], %41 {strides = array<i32>} : memref<4x1x17x32x128xbf16, #tpu.memory_space<vmem>>, vector<1x1x16x16x128xbf16>,
    %c0_38 = arith.constant 0 : index
    %c3 = arith.constant 3 : index
    %c0_39 = arith.constant 0 : index
    %c0_40 = arith.constant 0 : index
    %42 = vector.load %arg1[%c0_38, %c3, %c0_39, %c0_40] : memref<1x4x256x36xbf16, #tpu.memory_space<vmem>>, vector<1x1x256x36xbf16>
    %43 = vector.shape_cast %42 : vector<1x1x256x36xbf16> to vector<256x36xbf16>
    %cst_41 = arith.constant dense<0.000000e+00> : vector<256x128xf32>
    %44 = tpu.matmul %43, %4, %cst_41 {dimension_numbers = #tpu.dot_dimension_numbers<[1], [0], [0], [1], [0, 0, 1, 1], [], []>} : vector<256x36xbf16>, vector<36x128xbf16>, vector<256x128xf32> -> vector<256x128xf32>
    %45 = vector.broadcast %5 : vector<1x128xf32> to vector<256x128xf32>
    %46 = arith.addf %44, %45 : vector<256x128xf32>
    %cst_42 = arith.constant 0.000000e+00 : f32
    %47 = vector.broadcast %cst_42 : f32 to vector<256x128xf32>
    %48 = arith.maximumf %46, %47 : vector<256x128xf32>
    %49 = arith.truncf %48 : vector<256x128xf32> to vector<256x128xbf16>
    %50 = vector.shape_cast %49 : vector<256x128xbf16> to vector<1x16x16x128xbf16>
    %c3_43 = arith.constant 3 : index
    %c0_44 = arith.constant 0 : index
    %c1_45 = arith.constant 1 : index
    %c16_46 = arith.constant 16 : index
    %c0_47 = arith.constant 0 : index
    %51 = vector.load %arg7[%c3_43, %c0_44, %c1_45, %c16_46, %c0_47] : memref<4x1x17x32x128xbf16, #tpu.memory_space<vmem>>, vector<1x1x16x16x128xbf16>
    %52 = vector.shape_cast %51 : vector<1x1x16x16x128xbf16> to vector<1x16x16x128xbf16>
    %53 = vector.shape_cast %50 : vector<1x16x16x128xbf16> to vector<1x1x16x16x128xbf16>
    tpu.vector_store %arg7[%c3_43, %c0_44, %c1_45, %c16_46, %c0_47], %53 {strides = array<i32>} : memref<4x1x17x32x128xbf16, #tpu.memory_space<vmem>>, vector<1x1x16x16x128xbf16>,
    %54 = tpu.iota {dimensions = array<i32: 0>} : vector<16x128xi32>
    %c0_i32 = arith.constant 0 : i32
    %55 = vector.broadcast %c0_i32 : i32 to vector<16x128xi32>
    %56 = arith.cmpi eq, %54, %55 : vector<16x128xi32>
    %c3_48 = arith.constant 3 : index
    %c0_49 = arith.constant 0 : index
    %c0_50 = arith.constant 0 : index
    %c15 = arith.constant 15 : index
    %c0_51 = arith.constant 0 : index
    %57 = vector.load %arg7[%c3_48, %c0_49, %c0_50, %c15, %c0_51] : memref<4x1x17x32x128xbf16, #tpu.memory_space<vmem>>, vector<1x1x16x16x128xbf16>
    %58 = vector.shape_cast %57 : vector<1x1x16x16x128xbf16> to vector<1x16x16x128xbf16>
    %cst_52 = arith.constant 0.000000e+00 : bf16
    %59 = vector.shape_cast %56 : vector<16x128xi1> to vector<1x1x16x128xi1>
    %60 = vector.broadcast %59 : vector<1x1x16x128xi1> to vector<1x16x16x128xi1>
    %61 = vector.broadcast %cst_52 : bf16 to vector<1x16x16x128xbf16>
    %62 = arith.select %60, %61, %58 : vector<1x16x16x128xi1>, vector<1x16x16x128xbf16>
    %63 = vector.shape_cast %62 : vector<1x16x16x128xbf16> to vector<256x128xbf16>
    %c0_53 = arith.constant 0 : index
    %c0_54 = arith.constant 0 : index
    %c0_55 = arith.constant 0 : index
    %64 = vector.load %arg4[%c0_53, %c0_54, %c0_55] : memref<9x128x64xbf16, #tpu.memory_space<vmem>>, vector<1x128x64xbf16>
    %65 = vector.shape_cast %64 : vector<1x128x64xbf16> to vector<128x64xbf16>
    %cst_56 = arith.constant dense<0.000000e+00> : vector<256x64xf32>
    %66 = tpu.matmul %63, %65, %cst_56 {dimension_numbers = #tpu.dot_dimension_numbers<[1], [0], [0], [1], [0, 0, 1, 1], [], []>} : vector<256x128xbf16>, vector<128x64xbf16>, vector<256x64xf32> -> vector<256x64xf32>
    %c2_57 = arith.constant 2 : index
    %c0_58 = arith.constant 0 : index
    %c0_59 = arith.constant 0 : index
    %c16_60 = arith.constant 16 : index
    %c0_61 = arith.constant 0 : index
    %67 = vector.load %arg7[%c2_57, %c0_58, %c0_59, %c16_60, %c0_61] : memref<4x1x17x32x128xbf16, #tpu.memory_space<vmem>>, vector<1x1x16x16x128xbf16>
    %68 = vector.shape_cast %67 : vector<1x1x16x16x128xbf16> to vector<1x16x16x128xbf16>
    %69 = vector.shape_cast %68 : vector<1x16x16x128xbf16> to vector<256x128xbf16>
    %c1_62 = arith.constant 1 : index
    %c0_63 = arith.constant 0 : index
    %c0_64 = arith.constant 0 : index
    %70 = vector.load %arg4[%c1_62, %c0_63, %c0_64] : memref<9x128x64xbf16, #tpu.memory_space<vmem>>, vector<1x128x64xbf16>
    %71 = vector.shape_cast %70 : vector<1x128x64xbf16> to vector<128x64xbf16>
    %cst_65 = arith.constant dense<0.000000e+00> : vector<256x64xf32>
    %72 = tpu.matmul %69, %71, %cst_65 {dimension_numbers = #tpu.dot_dimension_numbers<[1], [0], [0], [1], [0, 0, 1, 1], [], []>} : vector<256x128xbf16>, vector<128x64xbf16>, vector<256x64xf32> -> vector<256x64xf32>
    %73 = arith.addf %66, %72 : vector<256x64xf32>
    %c3_66 = arith.constant 3 : index
    %c0_67 = arith.constant 0 : index
    %c0_68 = arith.constant 0 : index
    %c16_69 = arith.constant 16 : index
    %c0_70 = arith.constant 0 : index
    %74 = vector.load %arg7[%c3_66, %c0_67, %c0_68, %c16_69, %c0_70] : memref<4x1x17x32x128xbf16, #tpu.memory_space<vmem>>, vector<1x1x16x16x128xbf16>
    %75 = vector.shape_cast %74 : vector<1x1x16x16x128xbf16> to vector<1x16x16x128xbf16>
    %76 = vector.shape_cast %75 : vector<1x16x16x128xbf16> to vector<256x128xbf16>
    %c2_71 = arith.constant 2 : index
    %c0_72 = arith.constant 0 : index
    %c0_73 = arith.constant 0 : index
    %77 = vector.load %arg4[%c2_71, %c0_72, %c0_73] : memref<9x128x64xbf16, #tpu.memory_space<vmem>>, vector<1x128x64xbf16>
    %78 = vector.shape_cast %77 : vector<1x128x64xbf16> to vector<128x64xbf16>
    %cst_74 = arith.constant dense<0.000000e+00> : vector<256x64xf32>
    %79 = tpu.matmul %76, %78, %cst_74 {dimension_numbers = #tpu.dot_dimension_numbers<[1], [0], [0], [1], [0, 0, 1, 1], [], []>} : vector<256x128xbf16>, vector<128x64xbf16>, vector<256x64xf32> -> vector<256x64xf32>
    %80 = arith.addf %73, %79 : vector<256x64xf32>
    %c1_75 = arith.constant 1 : index
    %c0_76 = arith.constant 0 : index
    %c1_77 = arith.constant 1 : index
    %c15_78 = arith.constant 15 : index
    %c0_79 = arith.constant 0 : index
    %81 = vector.load %arg7[%c1_75, %c0_76, %c1_77, %c15_78, %c0_79] : memref<4x1x17x32x128xbf16, #tpu.memory_space<vmem>>, vector<1x1x16x16x128xbf16>
    %82 = vector.shape_cast %81 : vector<1x1x16x16x128xbf16> to vector<1x16x16x128xbf16>
    %cst_80 = arith.constant 0.000000e+00 : bf16
    %83 = vector.shape_cast %56 : vector<16x128xi1> to vector<1x1x16x128xi1>
    %84 = vector.broadcast %83 : vector<1x1x16x128xi1> to vector<1x16x16x128xi1>
    %85 = vector.broadcast %cst_80 : bf16 to vector<1x16x16x128xbf16>
    %86 = arith.select %84, %85, %82 : vector<1x16x16x128xi1>, vector<1x16x16x128xbf16>
    %87 = vector.shape_cast %86 : vector<1x16x16x128xbf16> to vector<256x128xbf16>
    %c3_81 = arith.constant 3 : index
    %c0_82 = arith.constant 0 : index
    %c0_83 = arith.constant 0 : index
    %88 = vector.load %arg4[%c3_81, %c0_82, %c0_83] : memref<9x128x64xbf16, #tpu.memory_space<vmem>>, vector<1x128x64xbf16>
    %89 = vector.shape_cast %88 : vector<1x128x64xbf16> to vector<128x64xbf16>
    %cst_84 = arith.constant dense<0.000000e+00> : vector<256x64xf32>
    %90 = tpu.matmul %87, %89, %cst_84 {dimension_numbers = #tpu.dot_dimension_numbers<[1], [0], [0], [1], [0, 0, 1, 1], [], []>} : vector<256x128xbf16>, vector<128x64xbf16>, vector<256x64xf32> -> vector<256x64xf32>
    %91 = arith.addf %80, %90 : vector<256x64xf32>
    %c0_85 = arith.constant 0 : index
    %c0_86 = arith.constant 0 : index
    %c1_87 = arith.constant 1 : index
    %c16_88 = arith.constant 16 : index
    %c0_89 = arith.constant 0 : index
    %92 = vector.load %arg7[%c0_85, %c0_86, %c1_87, %c16_88, %c0_89] : memref<4x1x17x32x128xbf16, #tpu.memory_space<vmem>>, vector<1x1x16x16x128xbf16>
    %93 = vector.shape_cast %92 : vector<1x1x16x16x128xbf16> to vector<1x16x16x128xbf16>
    %94 = vector.shape_cast %93 : vector<1x16x16x128xbf16> to vector<256x128xbf16>
    %c4 = arith.constant 4 : index
    %c0_90 = arith.constant 0 : index
    %c0_91 = arith.constant 0 : index
    %95 = vector.load %arg4[%c4, %c0_90, %c0_91] : memref<9x128x64xbf16, #tpu.memory_space<vmem>>, vector<1x128x64xbf16>
    %96 = vector.shape_cast %95 : vector<1x128x64xbf16> to vector<128x64xbf16>
    %cst_92 = arith.constant dense<0.000000e+00> : vector<256x64xf32>
    %97 = tpu.matmul %94, %96, %cst_92 {dimension_numbers = #tpu.dot_dimension_numbers<[1], [0], [0], [1], [0, 0, 1, 1], [], []>} : vector<256x128xbf16>, vector<128x64xbf16>, vector<256x64xf32> -> vector<256x64xf32>
    %98 = arith.addf %91, %97 : vector<256x64xf32>
    %c1_93 = arith.constant 1 : index
    %c0_94 = arith.constant 0 : index
    %c1_95 = arith.constant 1 : index
    %c16_96 = arith.constant 16 : index
    %c0_97 = arith.constant 0 : index
    %99 = vector.load %arg7[%c1_93, %c0_94, %c1_95, %c16_96, %c0_97] : memref<4x1x17x32x128xbf16, #tpu.memory_space<vmem>>, vector<1x1x16x16x128xbf16>
    %100 = vector.shape_cast %99 : vector<1x1x16x16x128xbf16> to vector<1x16x16x128xbf16>
    %101 = vector.shape_cast %100 : vector<1x16x16x128xbf16> to vector<256x128xbf16>
    %c5 = arith.constant 5 : index
    %c0_98 = arith.constant 0 : index
    %c0_99 = arith.constant 0 : index
    %102 = vector.load %arg4[%c5, %c0_98, %c0_99] : memref<9x128x64xbf16, #tpu.memory_space<vmem>>, vector<1x128x64xbf16>
    %103 = vector.shape_cast %102 : vector<1x128x64xbf16> to vector<128x64xbf16>
    %cst_100 = arith.constant dense<0.000000e+00> : vector<256x64xf32>
    %104 = tpu.matmul %101, %103, %cst_100 {dimension_numbers = #tpu.dot_dimension_numbers<[1], [0], [0], [1], [0, 0, 1, 1], [], []>} : vector<256x128xbf16>, vector<128x64xbf16>, vector<256x64xf32> -> vector<256x64xf32>
    %105 = arith.addf %98, %104 : vector<256x64xf32>
    %c3_101 = arith.constant 3 : index
    %c0_102 = arith.constant 0 : index
    %c1_103 = arith.constant 1 : index
    %c15_104 = arith.constant 15 : index
    %c0_105 = arith.constant 0 : index
    %106 = vector.load %arg7[%c3_101, %c0_102, %c1_103, %c15_104, %c0_105] : memref<4x1x17x32x128xbf16, #tpu.memory_space<vmem>>, vector<1x1x16x16x128xbf16>
    %107 = vector.shape_cast %106 : vector<1x1x16x16x128xbf16> to vector<1x16x16x128xbf16>
    %cst_106 = arith.constant 0.000000e+00 : bf16
    %108 = vector.shape_cast %56 : vector<16x128xi1> to vector<1x1x16x128xi1>
    %109 = vector.broadcast %108 : vector<1x1x16x128xi1> to vector<1x16x16x128xi1>
    %110 = vector.broadcast %cst_106 : bf16 to vector<1x16x16x128xbf16>
    %111 = arith.select %109, %110, %107 : vector<1x16x16x128xi1>, vector<1x16x16x128xbf16>
    %112 = vector.shape_cast %111 : vector<1x16x16x128xbf16> to vector<256x128xbf16>
    %c6 = arith.constant 6 : index
    %c0_107 = arith.constant 0 : index
    %c0_108 = arith.constant 0 : index
    %113 = vector.load %arg4[%c6, %c0_107, %c0_108] : memref<9x128x64xbf16, #tpu.memory_space<vmem>>, vector<1x128x64xbf16>
    %114 = vector.shape_cast %113 : vector<1x128x64xbf16> to vector<128x64xbf16>
    %cst_109 = arith.constant dense<0.000000e+00> : vector<256x64xf32>
    %115 = tpu.matmul %112, %114, %cst_109 {dimension_numbers = #tpu.dot_dimension_numbers<[1], [0], [0], [1], [0, 0, 1, 1], [], []>} : vector<256x128xbf16>, vector<128x64xbf16>, vector<256x64xf32> -> vector<256x64xf32>
    %116 = arith.addf %105, %115 : vector<256x64xf32>
    %c2_110 = arith.constant 2 : index
    %c0_111 = arith.constant 0 : index
    %c1_112 = arith.constant 1 : index
    %c16_113 = arith.constant 16 : index
    %c0_114 = arith.constant 0 : index
    %117 = vector.load %arg7[%c2_110, %c0_111, %c1_112, %c16_113, %c0_114] : memref<4x1x17x32x128xbf16, #tpu.memory_space<vmem>>, vector<1x1x16x16x128xbf16>
    %118 = vector.shape_cast %117 : vector<1x1x16x16x128xbf16> to vector<1x16x16x128xbf16>
    %119 = vector.shape_cast %118 : vector<1x16x16x128xbf16> to vector<256x128xbf16>
    %c7 = arith.constant 7 : index
    %c0_115 = arith.constant 0 : index
    %c0_116 = arith.constant 0 : index
    %120 = vector.load %arg4[%c7, %c0_115, %c0_116] : memref<9x128x64xbf16, #tpu.memory_space<vmem>>, vector<1x128x64xbf16>
    %121 = vector.shape_cast %120 : vector<1x128x64xbf16> to vector<128x64xbf16>
    %cst_117 = arith.constant dense<0.000000e+00> : vector<256x64xf32>
    %122 = tpu.matmul %119, %121, %cst_117 {dimension_numbers = #tpu.dot_dimension_numbers<[1], [0], [0], [1], [0, 0, 1, 1], [], []>} : vector<256x128xbf16>, vector<128x64xbf16>, vector<256x64xf32> -> vector<256x64xf32>
    %123 = arith.addf %116, %122 : vector<256x64xf32>
    %c3_118 = arith.constant 3 : index
    %c0_119 = arith.constant 0 : index
    %c1_120 = arith.constant 1 : index
    %c16_121 = arith.constant 16 : index
    %c0_122 = arith.constant 0 : index
    %124 = vector.load %arg7[%c3_118, %c0_119, %c1_120, %c16_121, %c0_122] : memref<4x1x17x32x128xbf16, #tpu.memory_space<vmem>>, vector<1x1x16x16x128xbf16>
    %125 = vector.shape_cast %124 : vector<1x1x16x16x128xbf16> to vector<1x16x16x128xbf16>
    %126 = vector.shape_cast %125 : vector<1x16x16x128xbf16> to vector<256x128xbf16>
    %c8 = arith.constant 8 : index
    %c0_123 = arith.constant 0 : index
    %c0_124 = arith.constant 0 : index
    %127 = vector.load %arg4[%c8, %c0_123, %c0_124] : memref<9x128x64xbf16, #tpu.memory_space<vmem>>, vector<1x128x64xbf16>
    %128 = vector.shape_cast %127 : vector<1x128x64xbf16> to vector<128x64xbf16>
    %cst_125 = arith.constant dense<0.000000e+00> : vector<256x64xf32>
    %129 = tpu.matmul %126, %128, %cst_125 {dimension_numbers = #tpu.dot_dimension_numbers<[1], [0], [0], [1], [0, 0, 1, 1], [], []>} : vector<256x128xbf16>, vector<128x64xbf16>, vector<256x64xf32> -> vector<256x64xf32>
    %130 = arith.addf %123, %129 : vector<256x64xf32>
    %c0_126 = arith.constant 0 : index
    %c0_127 = arith.constant 0 : index
    %131 = vector.load %arg5[%c0_126, %c0_127] : memref<1x64xf32, #tpu.memory_space<vmem>>, vector<1x64xf32>
    %132 = vector.broadcast %131 : vector<1x64xf32> to vector<256x64xf32>
    %133 = arith.addf %130, %132 : vector<256x64xf32>
    %cst_128 = arith.constant 0.000000e+00 : f32
    %134 = vector.broadcast %cst_128 : f32 to vector<256x64xf32>
    %135 = arith.maximumf %133, %134 : vector<256x64xf32>
    %136 = arith.truncf %135 : vector<256x64xf32> to vector<256x64xbf16>
    %137 = vector.shape_cast %136 : vector<256x64xbf16> to vector<1x256x64xbf16>
    %c0_129 = arith.constant 0 : index
    %c0_130 = arith.constant 0 : index
    %c0_131 = arith.constant 0 : index
    %138 = vector.load %arg6[%c0_129, %c0_130, %c0_131] : memref<1x256x64xbf16, #tpu.memory_space<vmem>>, vector<1x256x64xbf16>
    tpu.vector_store %arg6[%c0_129, %c0_130, %c0_131], %137 {strides = array<i32>} : memref<1x256x64xbf16, #tpu.memory_space<vmem>>, vector<1x256x64xbf16>,
    return
  }
  func.func @transform_0(%arg0: i32) -> (i32, i32, i32, i32) {
    %c0_i32 = arith.constant 0 : i32
    %c0_i32_0 = arith.constant 0 : i32
    %c0_i32_1 = arith.constant 0 : i32
    %c0_i32_2 = arith.constant 0 : i32
    return %arg0, %c0_i32, %c0_i32_0, %c0_i32_1 : i32, i32, i32, i32
  }
  func.func @transform_1(%arg0: i32) -> (i32, i32) {
    %c0_i32 = arith.constant 0 : i32
    %c0_i32_0 = arith.constant 0 : i32
    %c0_i32_1 = arith.constant 0 : i32
    return %c0_i32, %c0_i32_0 : i32, i32
  }
  func.func @transform_2(%arg0: i32) -> (i32, i32) {
    %c0_i32 = arith.constant 0 : i32
    %c0_i32_0 = arith.constant 0 : i32
    %c0_i32_1 = arith.constant 0 : i32
    return %c0_i32, %c0_i32_0 : i32, i32
  }
  func.func @transform_3(%arg0: i32) -> (i32, i32, i32) {
    %c0_i32 = arith.constant 0 : i32
    %c0_i32_0 = arith.constant 0 : i32
    %c0_i32_1 = arith.constant 0 : i32
    %c0_i32_2 = arith.constant 0 : i32
    return %c0_i32, %c0_i32_0, %c0_i32_1 : i32, i32, i32
  }
  func.func @transform_4(%arg0: i32) -> (i32, i32) {
    %c0_i32 = arith.constant 0 : i32
    %c0_i32_0 = arith.constant 0 : i32
    %c0_i32_1 = arith.constant 0 : i32
    return %c0_i32, %c0_i32_0 : i32, i32
  }
  func.func @transform_5(%arg0: i32) -> (i32, i32, i32) {
    %c0_i32 = arith.constant 0 : i32
    %c0_i32_0 = arith.constant 0 : i32
    %c0_i32_1 = arith.constant 0 : i32
    return %arg0, %c0_i32, %c0_i32_0 : i32, i32, i32
  }
}

module attributes {stable_mosaic.version = 11 : i64} {
  func.func @_fc_kernel(%arg0: i32, %arg1: i32, %arg2: memref<16x8192xbf16, #tpu.memory_space<vmem>>, %arg3: memref<8192x64xbf16, #tpu.memory_space<vmem>>, %arg4: memref<1x64xf32, #tpu.memory_space<vmem>>, %arg5: memref<16x64xf32, #tpu.memory_space<vmem>>, %arg6: memref<16x64xf32, #tpu.memory_space<vmem>>) attributes {dimension_semantics = [#tpu.dimension_semantics<parallel>, #tpu.dimension_semantics<arbitrary>], iteration_bounds = array<i64: 1, 2>, scalar_prefetch = 0 : i64, scratch_operands = 1 : i64, tpu.core_type = #tpu.core_type<tc>, window_params = [{transform_indices = @transform_0, window_bounds = array<i64: 16, 8192>}, {transform_indices = @transform_1, window_bounds = array<i64: 8192, 64>}, {pipeline_mode = #tpu.pipeline_mode<synchronous>, transform_indices = @transform_2, window_bounds = array<i64: 1, 64>}, {transform_indices = @transform_3, window_bounds = array<i64: 16, 64>}]} {
    %c0_i32 = arith.constant 0 : i32
    %0 = arith.cmpi eq, %arg1, %c0_i32 : i32
    %1 = arith.extui %0 : i1 to i32
    %c0_i32_0 = arith.constant 0 : i32
    %2 = arith.cmpi ne, %1, %c0_i32_0 : i32
    scf.if %2 {
      %cst_9 = arith.constant 0.000000e+00 : f32
      %12 = vector.broadcast %cst_9 : f32 to vector<16x64xf32>
      %c0_10 = arith.constant 0 : index
      %c0_11 = arith.constant 0 : index
      %13 = vector.load %arg6[%c0_10, %c0_11] : memref<16x64xf32, #tpu.memory_space<vmem>>, vector<16x64xf32>
      tpu.vector_store %arg6[%c0_10, %c0_11], %12 {strides = array<i32>} : memref<16x64xf32, #tpu.memory_space<vmem>>, vector<16x64xf32>,
    } else {
    }
    %c0 = arith.constant 0 : index
    %c0_1 = arith.constant 0 : index
    %3 = vector.load %arg6[%c0, %c0_1] : memref<16x64xf32, #tpu.memory_space<vmem>>, vector<16x64xf32>
    %c0_2 = arith.constant 0 : index
    %c0_3 = arith.constant 0 : index
    %4 = vector.load %arg2[%c0_2, %c0_3] : memref<16x8192xbf16, #tpu.memory_space<vmem>>, vector<16x8192xbf16>
    %c0_4 = arith.constant 0 : index
    %c0_5 = arith.constant 0 : index
    %5 = vector.load %arg3[%c0_4, %c0_5] : memref<8192x64xbf16, #tpu.memory_space<vmem>>, vector<8192x64xbf16>
    %cst = arith.constant dense<0.000000e+00> : vector<16x64xf32>
    %6 = tpu.matmul %4, %5, %cst {dimension_numbers = #tpu.dot_dimension_numbers<[1], [0], [0], [1], [0, 0, 1, 1], [], []>} : vector<16x8192xbf16>, vector<8192x64xbf16>, vector<16x64xf32> -> vector<16x64xf32>
    %7 = arith.addf %3, %6 : vector<16x64xf32>
    %c0_6 = arith.constant 0 : index
    %c0_7 = arith.constant 0 : index
    %8 = vector.load %arg6[%c0_6, %c0_7] : memref<16x64xf32, #tpu.memory_space<vmem>>, vector<16x64xf32>
    tpu.vector_store %arg6[%c0_6, %c0_7], %7 {strides = array<i32>} : memref<16x64xf32, #tpu.memory_space<vmem>>, vector<16x64xf32>,
    %c1_i32 = arith.constant 1 : i32
    %9 = arith.cmpi eq, %arg1, %c1_i32 : i32
    %10 = arith.extui %9 : i1 to i32
    %c0_i32_8 = arith.constant 0 : i32
    %11 = arith.cmpi ne, %10, %c0_i32_8 : i32
    scf.if %11 {
      %c0_9 = arith.constant 0 : index
      %c0_10 = arith.constant 0 : index
      %12 = vector.load %arg6[%c0_9, %c0_10] : memref<16x64xf32, #tpu.memory_space<vmem>>, vector<16x64xf32>
      %c0_11 = arith.constant 0 : index
      %c0_12 = arith.constant 0 : index
      %13 = vector.load %arg4[%c0_11, %c0_12] : memref<1x64xf32, #tpu.memory_space<vmem>>, vector<1x64xf32>
      %14 = vector.broadcast %13 : vector<1x64xf32> to vector<16x64xf32>
      %15 = arith.addf %12, %14 : vector<16x64xf32>
      %cst_13 = arith.constant 0.000000e+00 : f32
      %16 = vector.broadcast %cst_13 : f32 to vector<16x64xf32>
      %17 = arith.maximumf %15, %16 : vector<16x64xf32>
      %c0_14 = arith.constant 0 : index
      %c0_15 = arith.constant 0 : index
      %18 = vector.load %arg5[%c0_14, %c0_15] : memref<16x64xf32, #tpu.memory_space<vmem>>, vector<16x64xf32>
      tpu.vector_store %arg5[%c0_14, %c0_15], %17 {strides = array<i32>} : memref<16x64xf32, #tpu.memory_space<vmem>>, vector<16x64xf32>,
    } else {
    }
    return
  }
  func.func @transform_0(%arg0: i32, %arg1: i32) -> (i32, i32) {
    %c0_i32 = arith.constant 0 : i32
    return %arg0, %arg1 : i32, i32
  }
  func.func @transform_1(%arg0: i32, %arg1: i32) -> (i32, i32) {
    %c0_i32 = arith.constant 0 : i32
    %c0_i32_0 = arith.constant 0 : i32
    return %arg1, %c0_i32 : i32, i32
  }
  func.func @transform_2(%arg0: i32, %arg1: i32) -> (i32, i32) {
    %c0_i32 = arith.constant 0 : i32
    %c0_i32_0 = arith.constant 0 : i32
    %c0_i32_1 = arith.constant 0 : i32
    return %c0_i32, %c0_i32_0 : i32, i32
  }
  func.func @transform_3(%arg0: i32, %arg1: i32) -> (i32, i32) {
    %c0_i32 = arith.constant 0 : i32
    %c0_i32_0 = arith.constant 0 : i32
    return %arg0, %c0_i32 : i32, i32
  }
}

</mosaic_0001>

<llo_original>
// kernel: lidar_cnn_forward.2
$region0: #{lidar_cnn_forward.2}
  #allocation0 [shape = 'u32[]', space=smem, size = 0x4, offset = 0x4, fixed_abs, tag = 'smem constant byte address 0x4 - core index']
  #allocation1 [shape = 'u32[144,128]{1,0:T(1,128)}', space=vmem, size = 0x12000, scoped, tag = 'internal scratch']
  #allocation2 [shape = 'bf16[4,1,17,32,128]{4,3,2,1,0:T(16,128)(2,1)}', space=vmem, size = 0x88000, scoped, tag = 'scratch operand']
  %s0 = inlined_call_operand.vmem [shape: bf16[2,4,256,36], index: 0, kind: input, shape index: {}]
  %s1 = inlined_call_operand.vmem [shape: bf16[36,128], index: 1, kind: input, shape index: {}]
  %s2 = inlined_call_operand.vmem [shape: f32[1,128], index: 2, kind: input, shape index: {}]
  %s3 = inlined_call_operand.vmem [shape: bf16[9,128,64], index: 3, kind: input, shape index: {}]
  %s4 = inlined_call_operand.vmem [shape: f32[1,64], index: 4, kind: input, shape index: {}]
  %s5 = inlined_call_operand.vmem [shape: bf16[2,256,64], index: 5, kind: output, shape index: {}]
  %s6 = sld [smem:[#allocation0]]
  $region53: #{lidar_cnn_forward.2} parent=0
    _
  %s8 = ssub.s32 1, %s6
  %s9 = scalar_select 0, %s8, %s6
  loop: start=0, step=1, limit=4
  $region2: #{lidar_cnn_forward.2} parent=0 // loop_pre_header
    _
  $region3: #{lidar_cnn_forward.2} parent=0 // loop_header
    %s11 = sphi 0, %s15
    %p12 = scmp.ge.s32.totalorder %s11, 4
    %s21 = sphi 0, %s23
    %s24 = sphi 0, %s21
    %s25 = sphi 0, %s24
    %s41 = sphi 0, %s25
    %s45 = sphi 0, %s45
    %s47 = sphi 0, %s45
    %s48 = sphi 0, %s47
    %s62 = sphi 0, %s48
    %s66 = sphi 0, %s66
    %s68 = sphi 0, %s66
    %s69 = sphi 0, %s68
    %s83 = sphi 0, %s69
    %s87 = sphi 0, %s87
    %s89 = sphi 0, %s87
    %s90 = sphi 0, %s89
    %s104 = sphi 0, %s90
    %s108 = sphi 0, %s108
    %s110 = sphi 0, %s108
    %s111 = sphi 0, %s110
    %s125 = sphi 0, %s111
    %s131 = sphi 0, %s133
    %s134 = sphi 0, %s131
    %s135 = sphi 0, %s134
    %s151 = sphi 0, %s135
  $region4: #{lidar_cnn_forward.2} parent=0 // loop_header_branch
    %14 = sbr.rel (%p12) target = $region8
  $region5: #{lidar_cnn_forward.2} parent=0 // loop_body
    %s16 = ssub.s32 %s11, 1
    %s17 = ssub.s32 %s11, 2
    %s18 = sadd.s32 %s11, 1
    %s19 = ssub.s32 %s11, %s18
    %p20 = scmp.eq.s32.totalorder %s19, 0
    %s22 = sadd.s32 %s21, 1
    %s23 = scalar_select %p20, %s21, %s22
    %p26 = pneg %p20
    %p27 = scmp.eq.s32.totalorder %s11, 1
    %p28 = por %p26, %p27
    %p29 = scmp.ne.s32.totalorder %s21, %s24
    %p30 = scmp.eq.s32.totalorder %s11, 0
    %p31 = por %p29, %p30
    %p32 = scmp.ne.s32.totalorder %s21, %s24
    %p33 = scmp.eq.s32.totalorder %s16, 1
    %p34 = por %p32, %p33
    %p35 = scmp.ne.s32.totalorder %s24, %s25
    %p36 = scmp.eq.s32.totalorder %s16, 0
    %p37 = por %p35, %p36
    %p38 = scmp.ne.s32.totalorder %s24, %s25
    %p39 = scmp.eq.s32.totalorder %s17, 1
    %p40 = por %p38, %p39
    %p42 = scmp.ne.s32.totalorder %s25, %s41
    %p43 = scmp.eq.s32.totalorder %s17, 0
    %p44 = por %p42, %p43
    %s46 = sadd.s32 %s45, 1
    %p49 = scmp.eq.s32.totalorder %s11, 1
    %p50 = scmp.ne.s32.totalorder %s45, %s47
    %p51 = scmp.eq.s32.totalorder %s11, 0
    %p52 = por %p50, %p51
    %p53 = scmp.ne.s32.totalorder %s45, %s47
    %p54 = scmp.eq.s32.totalorder %s16, 1
    %p55 = por %p53, %p54
    %p56 = scmp.ne.s32.totalorder %s47, %s48
    %p57 = scmp.eq.s32.totalorder %s16, 0
    %p58 = por %p56, %p57
    %p59 = scmp.ne.s32.totalorder %s47, %s48
    %p60 = scmp.eq.s32.totalorder %s17, 1
    %p61 = por %p59, %p60
    %p63 = scmp.ne.s32.totalorder %s48, %s62
    %p64 = scmp.eq.s32.totalorder %s17, 0
    %p65 = por %p63, %p64
    %s67 = sadd.s32 %s66, 1
    %p70 = scmp.eq.s32.totalorder %s11, 1
    %p71 = scmp.ne.s32.totalorder %s66, %s68
    %p72 = scmp.eq.s32.totalorder %s11, 0
    %p73 = por %p71, %p72
    %p74 = scmp.ne.s32.totalorder %s66, %s68
    %p75 = scmp.eq.s32.totalorder %s16, 1
    %p76 = por %p74, %p75
    %p77 = scmp.ne.s32.totalorder %s68, %s69
    %p78 = scmp.eq.s32.totalorder %s16, 0
    %p79 = por %p77, %p78
    %p80 = scmp.ne.s32.totalorder %s68, %s69
    %p81 = scmp.eq.s32.totalorder %s17, 1
    %p82 = por %p80, %p81
    %p84 = scmp.ne.s32.totalorder %s69, %s83
    %p85 = scmp.eq.s32.totalorder %s17, 0
    %p86 = por %p84, %p85
    %s88 = sadd.s32 %s87, 1
    %p91 = scmp.eq.s32.totalorder %s11, 1
    %p92 = scmp.ne.s32.totalorder %s87, %s89
    %p93 = scmp.eq.s32.totalorder %s11, 0
    %p94 = por %p92, %p93
    %p95 = scmp.ne.s32.totalorder %s87, %s89
    %p96 = scmp.eq.s32.totalorder %s16, 1
    %p97 = por %p95, %p96
    %p98 = scmp.ne.s32.totalorder %s89, %s90
    %p99 = scmp.eq.s32.totalorder %s16, 0
    %p100 = por %p98, %p99
    %p101 = scmp.ne.s32.totalorder %s89, %s90
    %p102 = scmp.eq.s32.totalorder %s17, 1
    %p103 = por %p101, %p102
    %p105 = scmp.ne.s32.totalorder %s90, %s104
    %p106 = scmp.eq.s32.totalorder %s17, 0
    %p107 = por %p105, %p106
    %s109 = sadd.s32 %s108, 1
    %p112 = scmp.eq.s32.totalorder %s11, 1
    %p113 = scmp.ne.s32.totalorder %s108, %s110
    %p114 = scmp.eq.s32.totalorder %s11, 0
    %p115 = por %p113, %p114
    %p116 = scmp.ne.s32.totalorder %s108, %s110
    %p117 = scmp.eq.s32.totalorder %s16, 1
    %p118 = por %p116, %p117
    %p119 = scmp.ne.s32.totalorder %s110, %s111
    %p120 = scmp.eq.s32.totalorder %s16, 0
    %p121 = por %p119, %p120
    %p122 = scmp.ne.s32.totalorder %s110, %s111
    %p123 = scmp.eq.s32.totalorder %s17, 1
    %p124 = por %p122, %p123
    %p126 = scmp.ne.s32.totalorder %s111, %s125
    %p127 = scmp.eq.s32.totalorder %s17, 0
    %p128 = por %p126, %p127
    %s129 = ssub.s32 %s11, %s18
    %p130 = scmp.eq.s32.totalorder %s129, 0
    %s132 = sadd.s32 %s131, 1
    %s133 = scalar_select %p130, %s131, %s132
    %p136 = pneg %p130
    %p137 = scmp.eq.s32.totalorder %s11, 1
    %p138 = por %p136, %p137
    %p139 = scmp.ne.s32.totalorder %s131, %s134
    %p140 = scmp.eq.s32.totalorder %s11, 0
    %p141 = por %p139, %p140
    %p142 = scmp.ne.s32.totalorder %s131, %s134
    %p143 = scmp.eq.s32.totalorder %s16, 1
    %p144 = por %p142, %p143
    %p145 = scmp.ne.s32.totalorder %s134, %s135
    %p146 = scmp.eq.s32.totalorder %s16, 0
    %p147 = por %p145, %p146
    %p148 = scmp.ne.s32.totalorder %s134, %s135
    %p149 = scmp.eq.s32.totalorder %s17, 1
    %p150 = por %p148, %p149
    %p152 = scmp.ne.s32.totalorder %s135, %s151
    %p153 = scmp.eq.s32.totalorder %s17, 0
    %p154 = por %p152, %p153
    %p155 = scmp.le.s32.totalorder 1, %s11
    %p156 = scmp.lt.s32.totalorder %s11, 3
    %p157 = pnand %p155, %p156
    %p158 = pneg %p157
    // Predicated region
    $region9: #{lidar_cnn_forward.2} parent=5 // pred_check
      _
    $region10: #{lidar_cnn_forward.2} parent=5 // pred_check_branch
      %160 = sbr.rel (%p157) target = $region12
    $region11: #{lidar_cnn_forward.2} parent=5 // pred_region
      %s161 = ssub.s32 %s11, 1
      // Predicated region
      $region13: #{lidar_cnn_forward.2} parent=11 // pred_check
        %p162 = pneg %p58
      $region14: #{lidar_cnn_forward.2} parent=11 // pred_check_branch
        %164 = sbr.rel (%p162) target = $region16
      $region15: #{lidar_cnn_forward.2} parent=11 // pred_region
        _
      $region16: #{lidar_cnn_forward.2} parent=11 // pred_fallthru
        _
      // Predicated region
      $region17: #{lidar_cnn_forward.2} parent=11 // pred_check
        %p165 = pneg %p79
      $region18: #{lidar_cnn_forward.2} parent=11 // pred_check_branch
        %167 = sbr.rel (%p165) target = $region20
      $region19: #{lidar_cnn_forward.2} parent=11 // pred_region
        _
      $region20: #{lidar_cnn_forward.2} parent=11 // pred_fallthru
        _
      // Predicated region
      $region21: #{lidar_cnn_forward.2} parent=11 // pred_check
        %p168 = pneg %p100
      $region22: #{lidar_cnn_forward.2} parent=11 // pred_check_branch
        %170 = sbr.rel (%p168) target = $region24
      $region23: #{lidar_cnn_forward.2} parent=11 // pred_region
        _
      $region24: #{lidar_cnn_forward.2} parent=11 // pred_fallthru
        _
      // Predicated region
      $region25: #{lidar_cnn_forward.2} parent=11 // pred_check
        %p171 = pneg %p121
      $region26: #{lidar_cnn_forward.2} parent=11 // pred_check_branch
        %173 = sbr.rel (%p171) target = $region28
      $region27: #{lidar_cnn_forward.2} parent=11 // pred_region
        _
      $region28: #{lidar_cnn_forward.2} parent=11 // pred_fallthru
        _
    $region12: #{lidar_cnn_forward.2} parent=5 // pred_fallthru
      _
    %p174 = scmp.lt.s32.totalorder %s11, 2
    // Predicated region
    $region29: #{lidar_cnn_forward.2} parent=5 // pred_check
      %p175 = pneg %p174
    $region30: #{lidar_cnn_forward.2} parent=5 // pred_check_branch
      %177 = sbr.rel (%p175) target = $region32
    $region31: #{lidar_cnn_forward.2} parent=5 // pred_region
      // Predicated region
      $region33: #{lidar_cnn_forward.2} parent=31 // pred_check
        %p178 = pneg %p31
      $region34: #{lidar_cnn_forward.2} parent=31 // pred_check_branch
        %180 = sbr.rel (%p178) target = $region36
      $region35: #{lidar_cnn_forward.2} parent=31 // pred_region
        %p181 = scmp.lt.s32.totalorder %s11, 1
        %s182 = scalar_select %p181, %s11, 1
        %s183 = smul.addr %s182, 128
        %s184 = smul.addr %s183, 4
        %s185 = scalar_lea.vmem %s0, %s184
      $region36: #{lidar_cnn_forward.2} parent=31 // pred_fallthru
        _
    $region32: #{lidar_cnn_forward.2} parent=5 // pred_fallthru
      _
    %p186 = scmp.le.s32.totalorder 1, %s11
    %p187 = scmp.lt.s32.totalorder %s11, 3
    %p188 = pnand %p186, %p187
    %p189 = pneg %p188
    // Predicated region
    $region37: #{lidar_cnn_forward.2} parent=5 // pred_check
      _
    $region38: #{lidar_cnn_forward.2} parent=5 // pred_check_branch
      %191 = sbr.rel (%p188) target = $region40
    $region39: #{lidar_cnn_forward.2} parent=5 // pred_region
      %s192 = ssub.s32 %s11, 1
      %p193 = scmp.lt.s32.totalorder %s16, 1
      %s194 = scalar_select %p193, %s16, 1
      %s195 = smul.addr %s194, 128
      %s196 = smul.addr %s195, 4
      %s197 = scalar_lea.vmem %s0, %s196
      %p198 = pneg %p37
      %p199 = pneg %p34
      %p200 = pneg %p58
      %p201 = pneg %p55
      %p202 = pneg %p79
      %p203 = pneg %p76
      %p204 = pneg %p100
      %p205 = pneg %p97
      %p206 = pneg %p121
      %p207 = pneg %p118
      %p208 = pneg %p147
      %p209 = pneg %p144
      %p210 = scmp.lt.s32.totalorder %s16, 1
      %s211 = scalar_select %p210, %s16, 1
      %s212 = smul.addr %s211, 32
      %s213 = smul.addr %s212, 4
      %s214 = scalar_lea.vmem %s5, %s213
      %p215 = scmp.lt.s32.totalorder %s16, 1
      %s216 = scalar_select %p215, %s16, 1
      %s217 = smul.addr %s216, 128
      %s218 = smul.addr %s217, 4
      %s219 = scalar_lea.vmem %s0, %s218
      %p220 = scmp.lt.s32.totalorder %s16, 1
      %s221 = scalar_select %p220, %s16, 1
      %s222 = smul.addr %s221, 32
      %s223 = smul.addr %s222, 4
      %s224 = scalar_lea.vmem %s5, %s223
      %228 = vst [vmem:[#allocation2 + $0x8] sm:$0xff] 0
      %229 = vst [vmem:[#allocation2 + $0x118] sm:$0xff] 0
      %230 = vst [vmem:[#allocation2 + $0x228] sm:$0xff] 0
      %231 = vst [vmem:[#allocation2 + $0x338] sm:$0xff] 0
      %v232 = vld [vmem:[%s1] sm:$0xf]
      %v233 = vld [vmem:[%s1 + $0x4] sm:$0xf]
      %v234 = vld [vmem:[%s1 + $0x8] sm:$0xf]
      %v235 = vld [vmem:[%s1 + $0xc] sm:$0xf]
      %v236 = vld [vmem:[%s1 + $0x10] sm:$0x3]
      %v237 = vld [vmem:[%s2] sm:$0x1]
      %v238 = vld [vmem:[%s219] sm:$0xf]
      %v239 = vld [vmem:[%s219 + $0x4] sm:$0xf]
      %v240 = vld [vmem:[%s219 + $0x8] sm:$0xf]
      %v241 = vld [vmem:[%s219 + $0xc] sm:$0xf]
      %v242 = vld [vmem:[%s219 + $0x10] sm:$0xf]
      %v243 = vld [vmem:[%s219 + $0x14] sm:$0xf]
      %v244 = vld [vmem:[%s219 + $0x18] sm:$0xf]
      %v245 = vld [vmem:[%s219 + $0x1c] sm:$0xf]
      %v246 = vld [vmem:[%s219 + $0x20] sm:$0xf]
      %v247 = vld [vmem:[%s219 + $0x24] sm:$0xf]
      %v248 = vld [vmem:[%s219 + $0x28] sm:$0xf]
      %v249 = vld [vmem:[%s219 + $0x2c] sm:$0xf]
      %v250 = vld [vmem:[%s219 + $0x30] sm:$0xf]
      %v251 = vld [vmem:[%s219 + $0x34] sm:$0xf]
      %v252 = vld [vmem:[%s219 + $0x38] sm:$0xf]
      %v253 = vld [vmem:[%s219 + $0x3c] sm:$0xf]
      %v254 = vld [vmem:[%s219 + $0x40] sm:$0xf]
      %v255 = vld [vmem:[%s219 + $0x44] sm:$0xf]
      %v256 = vld [vmem:[%s219 + $0x48] sm:$0xf]
      %v257 = vld [vmem:[%s219 + $0x4c] sm:$0xf]
      %v258 = vld [vmem:[%s219 + $0x50] sm:$0xf]
      %v259 = vld [vmem:[%s219 + $0x54] sm:$0xf]
      %v260 = vld [vmem:[%s219 + $0x58] sm:$0xf]
      %v261 = vld [vmem:[%s219 + $0x5c] sm:$0xf]
      %v262 = vld [vmem:[%s219 + $0x60] sm:$0xf]
      %v263 = vld [vmem:[%s219 + $0x64] sm:$0xf]
      %v264 = vld [vmem:[%s219 + $0x68] sm:$0xf]
      %v265 = vld [vmem:[%s219 + $0x6c] sm:$0xf]
      %v266 = vld [vmem:[%s219 + $0x70] sm:$0xf]
      %v267 = vld [vmem:[%s219 + $0x74] sm:$0xf]
      %v268 = vld [vmem:[%s219 + $0x78] sm:$0xf]
      %v269 = vld [vmem:[%s219 + $0x7c] sm:$0xf]
      %v271 = vlaneseq
      %v272 = vshrl.u32 %v271, 7
      %v273 = vsub.s32 0, %v272
      %v274 = vrot.slane %v237, %v273
      %v308 = vunpack.c.l.b16 %v238
      %v309 = vunpack.c.l.b16 %v239
      %v310 = vunpack.c.l.b16 %v240
      %v311 = vunpack.c.l.b16 %v241
      %v312 = vunpack.c.l.b16 %v242
      %v313 = vunpack.c.l.b16 %v243
      %v314 = vunpack.c.l.b16 %v244
      %v315 = vunpack.c.l.b16 %v245
      %v316 = vunpack.c.l.b16 %v246
      %v317 = vunpack.c.l.b16 %v247
      %v318 = vunpack.c.l.b16 %v248
      %v319 = vunpack.c.l.b16 %v249
      %v320 = vunpack.c.l.b16 %v250
      %v321 = vunpack.c.l.b16 %v251
      %v322 = vunpack.c.l.b16 %v252
      %v323 = vunpack.c.l.b16 %v253
      %v324 = vunpack.c.l.b16 %v254
      %v325 = vunpack.c.l.b16 %v255
      %v326 = vunpack.c.l.b16 %v256
      %v327 = vunpack.c.l.b16 %v257
      %v328 = vunpack.c.l.b16 %v258
      %v329 = vunpack.c.l.b16 %v259
      %v330 = vunpack.c.l.b16 %v260
      %v331 = vunpack.c.l.b16 %v261
      %v332 = vunpack.c.l.b16 %v262
      %v333 = vunpack.c.l.b16 %v263
      %v334 = vunpack.c.l.b16 %v264
      %v335 = vunpack.c.l.b16 %v265
      %v336 = vunpack.c.l.b16 %v266
      %v337 = vunpack.c.l.b16 %v267
      %v338 = vunpack.c.l.b16 %v268
      %v339 = vunpack.c.l.b16 %v269
      %v340 = vpack.c.b16 %v309, %v308
      %v341 = vpack.c.b16 %v311, %v310
      %v342 = vpack.c.b16 %v313, %v312
      %v343 = vpack.c.b16 %v315, %v314
      %v344 = vpack.c.b16 %v317, %v316
      %v345 = vpack.c.b16 %v319, %v318
      %v346 = vpack.c.b16 %v321, %v320
      %v347 = vpack.c.b16 %v323, %v322
      %v348 = vpack.c.b16 %v325, %v324
      %v349 = vpack.c.b16 %v327, %v326
      %v350 = vpack.c.b16 %v329, %v328
      %v351 = vpack.c.b16 %v331, %v330
      %v352 = vpack.c.b16 %v333, %v332
      %v353 = vpack.c.b16 %v335, %v334
      %v354 = vpack.c.b16 %v337, %v336
      %v355 = vpack.c.b16 %v339, %v338
      %v361 = vunpack.c.l.b16 %v232
      %v362 = vunpack.c.l.b16 %v233
      %v363 = vunpack.c.l.b16 %v234
      %v364 = vunpack.c.l.b16 %v235
      %v365 = vunpack.c.l.b16 %v236
      %v366 = vpack.c.b16 %v362, %v361
      %v367 = vpack.c.b16 %v364, %v363
      %v368 = vpack.c.b16 %v365, %v365
      %vm371 = vcmask 293888
      %v373 = vsel %vm371, %v340, 0
      %v376 = vsel %vm371, %v341, 0
      %v379 = vsel %vm371, %v342, 0
      %v382 = vsel %vm371, %v343, 0
      %v385 = vsel %vm371, %v344, 0
      %v388 = vsel %vm371, %v345, 0
      %v391 = vsel %vm371, %v346, 0
      %v394 = vsel %vm371, %v347, 0
      %v397 = vsel %vm371, %v348, 0
      %v400 = vsel %vm371, %v349, 0
      %v403 = vsel %vm371, %v350, 0
      %v406 = vsel %vm371, %v351, 0
      %v409 = vsel %vm371, %v352, 0
      %v412 = vsel %vm371, %v353, 0
      %v415 = vsel %vm371, %v354, 0
      %v418 = vsel %vm371, %v355, 0
      %vm420 = vcmask 1041408
      %v422 = vsel %vm420, %v368, 0
      %424 = vmatprep.subr.bf16.mxu0 0
      %425 = vmatpush1.bf16.msra.mxu0 %v366
      %426 = vmatprep.subr.bf16.mxu0 0
      %427 = vmatpush1.bf16.msra.mxu0 %v367
      %428 = vmatprep.subr.bf16.mxu0 0
      %429 = vmatpush1.bf16.msra.mxu0 %v422
      %430 = vmatprep.subr.bf16.mxu0 0
      %431 = vmatpush1.bf16.msra.mxu0 0
      %432 = vmatprep.subr.bf16.mxu0 0
      %433 = vmatpush1.bf16.msra.mxu0 0
      %434 = vmatprep.subr.bf16.mxu0 0
      %435 = vmatpush1.bf16.msra.mxu0 0
      %436 = vmatprep.subr.bf16.mxu0 0
      %437 = vmatpush1.bf16.msra.mxu0 0
      %438 = vmatprep.subr.bf16.mxu0 0
      %439 = vmatpush1.bf16.msra.mxu0 0
      %440 = vmatprep.subr.bf16.mxu0 0
      %441 = vmatpush1.bf16.msra.mxu0 0
      %442 = vmatprep.subr.bf16.mxu0 0
      %443 = vmatpush1.bf16.msra.mxu0 0
      %444 = vmatprep.subr.bf16.mxu0 0
      %445 = vmatpush1.bf16.msra.mxu0 0
      %446 = vmatprep.subr.bf16.mxu0 0
      %447 = vmatpush1.bf16.msra.mxu0 0
      %448 = vmatprep.subr.bf16.mxu0 0
      %449 = vmatpush1.bf16.msra.mxu0 0
      %450 = vmatprep.subr.bf16.mxu0 0
      %451 = vmatpush1.bf16.msra.mxu0 0
      %452 = vmatprep.subr.bf16.mxu0 0
      %453 = vmatpush1.bf16.msra.mxu0 0
      %454 = vmatprep.subr.bf16.mxu0 0
      %455 = vmatpush1.bf16.msra.mxu0 0
      %456 = vmatprep.mubr.bf16.mxu0 0
      %457 = vmatmul.mubr.bf16.gmra.mrb[0].mxu0 %v373
      %v458 = vpop.f32.mrb[0].mxu0
      %v459 = vadd.f32 %v274, %v458
      %v460 = vpop.f32.mrb[0].mxu0
      %v461 = vpop.f32.mrb[0].mxu0
      %v462 = vadd.f32 %v274, %v461
      %v463 = vpop.f32.mrb[0].mxu0
      %464 = vmatprep.mubr.bf16.mxu0 0
      %465 = vmatmul.mubr.bf16.gmra.mrb[0].mxu0 %v376
      %v466 = vpop.f32.mrb[0].mxu0
      %v467 = vadd.f32 %v274, %v466
      %v468 = vpop.f32.mrb[0].mxu0
      %v469 = vpop.f32.mrb[0].mxu0
      %v470 = vadd.f32 %v274, %v469
      %v471 = vpop.f32.mrb[0].mxu0
      %472 = vmatprep.mubr.bf16.mxu0 0
      %473 = vmatmul.mubr.bf16.gmra.mrb[0].mxu0 %v379
      %v474 = vpop.f32.mrb[0].mxu0
      %v475 = vadd.f32 %v274, %v474
      %v476 = vpop.f32.mrb[0].mxu0
      %v477 = vpop.f32.mrb[0].mxu0
      %v478 = vadd.f32 %v274, %v477
      %v479 = vpop.f32.mrb[0].mxu0
      %480 = vmatprep.mubr.bf16.mxu0 0
      %481 = vmatmul.mubr.bf16.gmra.mrb[0].mxu0 %v382
      %v482 = vpop.f32.mrb[0].mxu0
      %v483 = vadd.f32 %v274, %v482
      %v484 = vpop.f32.mrb[0].mxu0
      %v485 = vpop.f32.mrb[0].mxu0
      %v486 = vadd.f32 %v274, %v485
      %v487 = vpop.f32.mrb[0].mxu0
      %488 = vmatprep.mubr.bf16.mxu0 0
      %489 = vmatmul.mubr.bf16.gmra.mrb[0].mxu0 %v385
      %v490 = vpop.f32.mrb[0].mxu0
      %v491 = vadd.f32 %v274, %v490
      %v492 = vpop.f32.mrb[0].mxu0
      %v493 = vpop.f32.mrb[0].mxu0
      %v494 = vadd.f32 %v274, %v493
      %v495 = vpop.f32.mrb[0].mxu0
      %496 = vmatprep.mubr.bf16.mxu0 0
      %497 = vmatmul.mubr.bf16.gmra.mrb[0].mxu0 %v388
      %v498 = vpop.f32.mrb[0].mxu0
      %v499 = vadd.f32 %v274, %v498
      %v500 = vpop.f32.mrb[0].mxu0
      %v501 = vpop.f32.mrb[0].mxu0
      %v502 = vadd.f32 %v274, %v501
      %v503 = vpop.f32.mrb[0].mxu0
      %504 = vmatprep.mubr.bf16.mxu0 0
      %505 = vmatmul.mubr.bf16.gmra.mrb[0].mxu0 %v391
      %v506 = vpop.f32.mrb[0].mxu0
      %v507 = vadd.f32 %v274, %v506
      %v508 = vpop.f32.mrb[0].mxu0
      %v509 = vpop.f32.mrb[0].mxu0
      %v510 = vadd.f32 %v274, %v509
      %v511 = vpop.f32.mrb[0].mxu0
      %512 = vmatprep.mubr.bf16.mxu0 0
      %513 = vmatmul.mubr.bf16.gmra.mrb[0].mxu0 %v394
      %v514 = vpop.f32.mrb[0].mxu0
      %v515 = vadd.f32 %v274, %v514
      %v516 = vpop.f32.mrb[0].mxu0
      %v517 = vpop.f32.mrb[0].mxu0
      %v518 = vadd.f32 %v274, %v517
      %v519 = vpop.f32.mrb[0].mxu0
      %520 = vmatprep.mubr.bf16.mxu0 0
      %521 = vmatmul.mubr.bf16.gmra.mrb[0].mxu0 %v397
      %v522 = vpop.f32.mrb[0].mxu0
      %v523 = vadd.f32 %v274, %v522
      %v524 = vpop.f32.mrb[0].mxu0
      %v525 = vpop.f32.mrb[0].mxu0
      %v526 = vadd.f32 %v274, %v525
      %v527 = vpop.f32.mrb[0].mxu0
      %528 = vmatprep.mubr.bf16.mxu0 0
      %529 = vmatmul.mubr.bf16.gmra.mrb[0].mxu0 %v400
      %v530 = vpop.f32.mrb[0].mxu0
      %v531 = vadd.f32 %v274, %v530
      %v532 = vpop.f32.mrb[0].mxu0
      %v533 = vpop.f32.mrb[0].mxu0
      %v534 = vadd.f32 %v274, %v533
      %v535 = vpop.f32.mrb[0].mxu0
      %536 = vmatprep.mubr.bf16.mxu0 0
      %537 = vmatmul.mubr.bf16.gmra.mrb[0].mxu0 %v403
      %v538 = vpop.f32.mrb[0].mxu0
      %v539 = vadd.f32 %v274, %v538
      %v540 = vpop.f32.mrb[0].mxu0
      %v541 = vpop.f32.mrb[0].mxu0
      %v542 = vadd.f32 %v274, %v541
      %v543 = vpop.f32.mrb[0].mxu0
      %544 = vmatprep.mubr.bf16.mxu0 0
      %545 = vmatmul.mubr.bf16.gmra.mrb[0].mxu0 %v406
      %v546 = vpop.f32.mrb[0].mxu0
      %v547 = vadd.f32 %v274, %v546
      %v548 = vpop.f32.mrb[0].mxu0
      %v549 = vpop.f32.mrb[0].mxu0
      %v550 = vadd.f32 %v274, %v549
      %v551 = vpop.f32.mrb[0].mxu0
      %552 = vmatprep.mubr.bf16.mxu0 0
      %553 = vmatmul.mubr.bf16.gmra.mrb[0].mxu0 %v409
      %v554 = vpop.f32.mrb[0].mxu0
      %v555 = vadd.f32 %v274, %v554
      %v556 = vpop.f32.mrb[0].mxu0
      %v557 = vpop.f32.mrb[0].mxu0
      %v558 = vadd.f32 %v274, %v557
      %v559 = vpop.f32.mrb[0].mxu0
      %560 = vmatprep.mubr.bf16.mxu0 0
      %561 = vmatmul.mubr.bf16.gmra.mrb[0].mxu0 %v412
      %v562 = vpop.f32.mrb[0].mxu0
      %v563 = vadd.f32 %v274, %v562
      %v564 = vpop.f32.mrb[0].mxu0
      %v565 = vpop.f32.mrb[0].mxu0
      %v566 = vadd.f32 %v274, %v565
      %v567 = vpop.f32.mrb[0].mxu0
      %568 = vmatprep.mubr.bf16.mxu0 0
      %569 = vmatmul.mubr.bf16.gmra.mrb[0].mxu0 %v415
      %v570 = vpop.f32.mrb[0].mxu0
      %v571 = vadd.f32 %v274, %v570
      %v572 = vpop.f32.mrb[0].mxu0
      %v573 = vpop.f32.mrb[0].mxu0
      %v574 = vadd.f32 %v274, %v573
      %v575 = vpop.f32.mrb[0].mxu0
      %576 = vmatprep.mubr.bf16.mxu0 0
      %577 = vmatmul.mubr.bf16.gmra.mrb[0].mxu0 %v418
      %v578 = vpop.f32.mrb[0].mxu0
      %v579 = vadd.f32 %v274, %v578
      %v580 = vpop.f32.mrb[0].mxu0
      %v581 = vpop.f32.mrb[0].mxu0
      %v582 = vadd.f32 %v274, %v581
      %v583 = vpop.f32.mrb[0].mxu0
      %584 = vdwg.mxu0
      %v585 = vmax.f32 %v459, 0.0
      %v586 = vmax.f32 %v462, 0.0
      %v587 = vmax.f32 %v467, 0.0
      %v588 = vmax.f32 %v470, 0.0
      %v589 = vmax.f32 %v475, 0.0
      %v590 = vmax.f32 %v478, 0.0
      %v591 = vmax.f32 %v483, 0.0
      %v592 = vmax.f32 %v486, 0.0
      %v593 = vmax.f32 %v491, 0.0
      %v594 = vmax.f32 %v494, 0.0
      %v595 = vmax.f32 %v499, 0.0
      %v596 = vmax.f32 %v502, 0.0
      %v597 = vmax.f32 %v507, 0.0
      %v598 = vmax.f32 %v510, 0.0
      %v599 = vmax.f32 %v515, 0.0
      %v600 = vmax.f32 %v518, 0.0
      %v601 = vmax.f32 %v523, 0.0
      %v602 = vmax.f32 %v526, 0.0
      %v603 = vmax.f32 %v531, 0.0
      %v604 = vmax.f32 %v534, 0.0
      %v605 = vmax.f32 %v539, 0.0
      %v606 = vmax.f32 %v542, 0.0
      %v607 = vmax.f32 %v547, 0.0
      %v608 = vmax.f32 %v550, 0.0
      %v609 = vmax.f32 %v555, 0.0
      %v610 = vmax.f32 %v558, 0.0
      %v611 = vmax.f32 %v563, 0.0
      %v612 = vmax.f32 %v566, 0.0
      %v613 = vmax.f32 %v571, 0.0
      %v614 = vmax.f32 %v574, 0.0
      %v615 = vmax.f32 %v579, 0.0
      %v616 = vmax.f32 %v582, 0.0
      %v617 = vpack.c.bf16 %v586, %v585
      %v618 = vpack.c.bf16 %v588, %v587
      %v619 = vpack.c.bf16 %v590, %v589
      %v620 = vpack.c.bf16 %v592, %v591
      %v621 = vpack.c.bf16 %v594, %v593
      %v622 = vpack.c.bf16 %v596, %v595
      %v623 = vpack.c.bf16 %v598, %v597
      %v624 = vpack.c.bf16 %v600, %v599
      %v625 = vpack.c.bf16 %v602, %v601
      %v626 = vpack.c.bf16 %v604, %v603
      %v627 = vpack.c.bf16 %v606, %v605
      %v628 = vpack.c.bf16 %v608, %v607
      %v629 = vpack.c.bf16 %v610, %v609
      %v630 = vpack.c.bf16 %v612, %v611
      %v631 = vpack.c.bf16 %v614, %v613
      %v632 = vpack.c.bf16 %v616, %v615
      %s633 = scalar_lea.vmem [#allocation2], 16
      %634 = vst [vmem:[%s633 + $0x8] sm:$0xff] %v617
      %635 = vst [vmem:[%s633 + $0x18] sm:$0xff] %v618
      %636 = vst [vmem:[%s633 + $0x28] sm:$0xff] %v619
      %637 = vst [vmem:[%s633 + $0x38] sm:$0xff] %v620
      %638 = vst [vmem:[%s633 + $0x48] sm:$0xff] %v621
      %639 = vst [vmem:[%s633 + $0x58] sm:$0xff] %v622
      %640 = vst [vmem:[%s633 + $0x68] sm:$0xff] %v623
      %641 = vst [vmem:[%s633 + $0x78] sm:$0xff] %v624
      %642 = vst [vmem:[%s633 + $0x88] sm:$0xff] %v625
      %643 = vst [vmem:[%s633 + $0x98] sm:$0xff] %v626
      %644 = vst [vmem:[%s633 + $0xa8] sm:$0xff] %v627
      %645 = vst [vmem:[%s633 + $0xb8] sm:$0xff] %v628
      %646 = vst [vmem:[%s633 + $0xc8] sm:$0xff] %v629
      %647 = vst [vmem:[%s633 + $0xd8] sm:$0xff] %v630
      %648 = vst [vmem:[%s633 + $0xe8] sm:$0xff] %v631
      %649 = vst [vmem:[%s633 + $0xf8] sm:$0xff] %v632
      %s650 = scalar_lea.vmem %s219, 128
      %v651 = vld [vmem:[%s650] sm:$0xf]
      %v652 = vld [vmem:[%s650 + $0x4] sm:$0xf]
      %v653 = vld [vmem:[%s650 + $0x8] sm:$0xf]
      %v654 = vld [vmem:[%s650 + $0xc] sm:$0xf]
      %v655 = vld [vmem:[%s650 + $0x10] sm:$0xf]
      %v656 = vld [vmem:[%s650 + $0x14] sm:$0xf]
      %v657 = vld [vmem:[%s650 + $0x18] sm:$0xf]
      %v658 = vld [vmem:[%s650 + $0x1c] sm:$0xf]
      %v659 = vld [vmem:[%s650 + $0x20] sm:$0xf]
      %v660 = vld [vmem:[%s650 + $0x24] sm:$0xf]
      %v661 = vld [vmem:[%s650 + $0x28] sm:$0xf]
      %v662 = vld [vmem:[%s650 + $0x2c] sm:$0xf]
      %v663 = vld [vmem:[%s650 + $0x30] sm:$0xf]
      %v664 = vld [vmem:[%s650 + $0x34] sm:$0xf]
      %v665 = vld [vmem:[%s650 + $0x38] sm:$0xf]
      %v666 = vld [vmem:[%s650 + $0x3c] sm:$0xf]
      %v667 = vld [vmem:[%s650 + $0x40] sm:$0xf]
      %v668 = vld [vmem:[%s650 + $0x44] sm:$0xf]
      %v669 = vld [vmem:[%s650 + $0x48] sm:$0xf]
      %v670 = vld [vmem:[%s650 + $0x4c] sm:$0xf]
      %v671 = vld [vmem:[%s650 + $0x50] sm:$0xf]
      %v672 = vld [vmem:[%s650 + $0x54] sm:$0xf]
      %v673 = vld [vmem:[%s650 + $0x58] sm:$0xf]
      %v674 = vld [vmem:[%s650 + $0x5c] sm:$0xf]
      %v675 = vld [vmem:[%s650 + $0x60] sm:$0xf]
      %v676 = vld [vmem:[%s650 + $0x64] sm:$0xf]
      %v677 = vld [vmem:[%s650 + $0x68] sm:$0xf]
      %v678 = vld [vmem:[%s650 + $0x6c] sm:$0xf]
      %v679 = vld [vmem:[%s650 + $0x70] sm:$0xf]
      %v680 = vld [vmem:[%s650 + $0x74] sm:$0xf]
      %v681 = vld [vmem:[%s650 + $0x78] sm:$0xf]
      %v682 = vld [vmem:[%s650 + $0x7c] sm:$0xf]
      %v715 = vunpack.c.l.b16 %v651
      %v716 = vunpack.c.l.b16 %v652
      %v717 = vunpack.c.l.b16 %v653
      %v718 = vunpack.c.l.b16 %v654
      %v719 = vunpack.c.l.b16 %v655
      %v720 = vunpack.c.l.b16 %v656
      %v721 = vunpack.c.l.b16 %v657
      %v722 = vunpack.c.l.b16 %v658
      %v723 = vunpack.c.l.b16 %v659
      %v724 = vunpack.c.l.b16 %v660
      %v725 = vunpack.c.l.b16 %v661
      %v726 = vunpack.c.l.b16 %v662
      %v727 = vunpack.c.l.b16 %v663
      %v728 = vunpack.c.l.b16 %v664
      %v729 = vunpack.c.l.b16 %v665
      %v730 = vunpack.c.l.b16 %v666
      %v731 = vunpack.c.l.b16 %v667
      %v732 = vunpack.c.l.b16 %v668
      %v733 = vunpack.c.l.b16 %v669
      %v734 = vunpack.c.l.b16 %v670
      %v735 = vunpack.c.l.b16 %v671
      %v736 = vunpack.c.l.b16 %v672
      %v737 = vunpack.c.l.b16 %v673
      %v738 = vunpack.c.l.b16 %v674
      %v739 = vunpack.c.l.b16 %v675
      %v740 = vunpack.c.l.b16 %v676
      %v741 = vunpack.c.l.b16 %v677
      %v742 = vunpack.c.l.b16 %v678
      %v743 = vunpack.c.l.b16 %v679
      %v744 = vunpack.c.l.b16 %v680
      %v745 = vunpack.c.l.b16 %v681
      %v746 = vunpack.c.l.b16 %v682
      %v747 = vpack.c.b16 %v716, %v715
      %v748 = vpack.c.b16 %v718, %v717
      %v749 = vpack.c.b16 %v720, %v719
      %v750 = vpack.c.b16 %v722, %v721
      %v751 = vpack.c.b16 %v724, %v723
      %v752 = vpack.c.b16 %v726, %v725
      %v753 = vpack.c.b16 %v728, %v727
      %v754 = vpack.c.b16 %v730, %v729
      %v755 = vpack.c.b16 %v732, %v731
      %v756 = vpack.c.b16 %v734, %v733
      %v757 = vpack.c.b16 %v736, %v735
      %v758 = vpack.c.b16 %v738, %v737
      %v759 = vpack.c.b16 %v740, %v739
      %v760 = vpack.c.b16 %v742, %v741
      %v761 = vpack.c.b16 %v744, %v743
      %v762 = vpack.c.b16 %v746, %v745
      %v764 = vsel %vm371, %v747, 0
      %v767 = vsel %vm371, %v748, 0
      %v770 = vsel %vm371, %v749, 0
      %v773 = vsel %vm371, %v750, 0
      %v776 = vsel %vm371, %v751, 0
      %v779 = vsel %vm371, %v752, 0
      %v782 = vsel %vm371, %v753, 0
      %v785 = vsel %vm371, %v754, 0
      %v788 = vsel %vm371, %v755, 0
      %v791 = vsel %vm371, %v756, 0
      %v794 = vsel %vm371, %v757, 0
      %v797 = vsel %vm371, %v758, 0
      %v800 = vsel %vm371, %v759, 0
      %v803 = vsel %vm371, %v760, 0
      %v806 = vsel %vm371, %v761, 0
      %v809 = vsel %vm371, %v762, 0
      %811 = vmatprep.subr.bf16.mxu0 0
      %812 = vmatpush1.bf16.msra.mxu0 %v366
      %813 = vmatprep.subr.bf16.mxu0 0
      %814 = vmatpush1.bf16.msra.mxu0 %v367
      %815 = vmatprep.subr.bf16.mxu0 0
      %816 = vmatpush1.bf16.msra.mxu0 %v422
      %817 = vmatprep.subr.bf16.mxu0 0
      %818 = vmatpush1.bf16.msra.mxu0 0
      %819 = vmatprep.subr.bf16.mxu0 0
      %820 = vmatpush1.bf16.msra.mxu0 0
      %821 = vmatprep.subr.bf16.mxu0 0
      %822 = vmatpush1.bf16.msra.mxu0 0
      %823 = vmatprep.subr.bf16.mxu0 0
      %824 = vmatpush1.bf16.msra.mxu0 0
      %825 = vmatprep.subr.bf16.mxu0 0
      %826 = vmatpush1.bf16.msra.mxu0 0
      %827 = vmatprep.subr.bf16.mxu0 0
      %828 = vmatpush1.bf16.msra.mxu0 0
      %829 = vmatprep.subr.bf16.mxu0 0
      %830 = vmatpush1.bf16.msra.mxu0 0
      %831 = vmatprep.subr.bf16.mxu0 0
      %832 = vmatpush1.bf16.msra.mxu0 0
      %833 = vmatprep.subr.bf16.mxu0 0
      %834 = vmatpush1.bf16.msra.mxu0 0
      %835 = vmatprep.subr.bf16.mxu0 0
      %836 = vmatpush1.bf16.msra.mxu0 0
      %837 = vmatprep.subr.bf16.mxu0 0
      %838 = vmatpush1.bf16.msra.mxu0 0
      %839 = vmatprep.subr.bf16.mxu0 0
      %840 = vmatpush1.bf16.msra.mxu0 0
      %841 = vmatprep.subr.bf16.mxu0 0
      %842 = vmatpush1.bf16.msra.mxu0 0
      %843 = vmatprep.mubr.bf16.mxu0 0
      %844 = vmatmul.mubr.bf16.gmra.mrb[0].mxu0 %v764
      %v845 = vpop.f32.mrb[0].mxu0
      %v846 = vadd.f32 %v274, %v845
      %v847 = vpop.f32.mrb[0].mxu0
      %v848 = vpop.f32.mrb[0].mxu0
      %v849 = vadd.f32 %v274, %v848
      %v850 = vpop.f32.mrb[0].mxu0
      %851 = vmatprep.mubr.bf16.mxu0 0
      %852 = vmatmul.mubr.bf16.gmra.mrb[0].mxu0 %v767
      %v853 = vpop.f32.mrb[0].mxu0
      %v854 = vadd.f32 %v274, %v853
      %v855 = vpop.f32.mrb[0].mxu0
      %v856 = vpop.f32.mrb[0].mxu0
      %v857 = vadd.f32 %v274, %v856
      %v858 = vpop.f32.mrb[0].mxu0
      %859 = vmatprep.mubr.bf16.mxu0 0
      %860 = vmatmul.mubr.bf16.gmra.mrb[0].mxu0 %v770
      %v861 = vpop.f32.mrb[0].mxu0
      %v862 = vadd.f32 %v274, %v861
      %v863 = vpop.f32.mrb[0].mxu0
      %v864 = vpop.f32.mrb[0].mxu0
      %v865 = vadd.f32 %v274, %v864
      %v866 = vpop.f32.mrb[0].mxu0
      %867 = vmatprep.mubr.bf16.mxu0 0
      %868 = vmatmul.mubr.bf16.gmra.mrb[0].mxu0 %v773
      %v869 = vpop.f32.mrb[0].mxu0
      %v870 = vadd.f32 %v274, %v869
      %v871 = vpop.f32.mrb[0].mxu0
      %v872 = vpop.f32.mrb[0].mxu0
      %v873 = vadd.f32 %v274, %v872
      %v874 = vpop.f32.mrb[0].mxu0
      %875 = vmatprep.mubr.bf16.mxu0 0
      %876 = vmatmul.mubr.bf16.gmra.mrb[0].mxu0 %v776
      %v877 = vpop.f32.mrb[0].mxu0
      %v878 = vadd.f32 %v274, %v877
      %v879 = vpop.f32.mrb[0].mxu0
      %v880 = vpop.f32.mrb[0].mxu0
      %v881 = vadd.f32 %v274, %v880
      %v882 = vpop.f32.mrb[0].mxu0
      %883 = vmatprep.mubr.bf16.mxu0 0
      %884 = vmatmul.mubr.bf16.gmra.mrb[0].mxu0 %v779
      %v885 = vpop.f32.mrb[0].mxu0
      %v886 = vadd.f32 %v274, %v885
      %v887 = vpop.f32.mrb[0].mxu0
      %v888 = vpop.f32.mrb[0].mxu0
      %v889 = vadd.f32 %v274, %v888
      %v890 = vpop.f32.mrb[0].mxu0
      %891 = vmatprep.mubr.bf16.mxu0 0
      %892 = vmatmul.mubr.bf16.gmra.mrb[0].mxu0 %v782
      %v893 = vpop.f32.mrb[0].mxu0
      %v894 = vadd.f32 %v274, %v893
      %v895 = vpop.f32.mrb[0].mxu0
      %v896 = vpop.f32.mrb[0].mxu0
      %v897 = vadd.f32 %v274, %v896
      %v898 = vpop.f32.mrb[0].mxu0
      %899 = vmatprep.mubr.bf16.mxu0 0
      %900 = vmatmul.mubr.bf16.gmra.mrb[0].mxu0 %v785
      %v901 = vpop.f32.mrb[0].mxu0
      %v902 = vadd.f32 %v274, %v901
      %v903 = vpop.f32.mrb[0].mxu0
      %v904 = vpop.f32.mrb[0].mxu0
      %v905 = vadd.f32 %v274, %v904
      %v906 = vpop.f32.mrb[0].mxu0
      %907 = vmatprep.mubr.bf16.mxu0 0
      %908 = vmatmul.mubr.bf16.gmra.mrb[0].mxu0 %v788
      %v909 = vpop.f32.mrb[0].mxu0
      %v910 = vadd.f32 %v274, %v909
      %v911 = vpop.f32.mrb[0].mxu0
      %v912 = vpop.f32.mrb[0].mxu0
      %v913 = vadd.f32 %v274, %v912
      %v914 = vpop.f32.mrb[0].mxu0
      %915 = vmatprep.mubr.bf16.mxu0 0
      %916 = vmatmul.mubr.bf16.gmra.mrb[0].mxu0 %v791
      %v917 = vpop.f32.mrb[0].mxu0
      %v918 = vadd.f32 %v274, %v917
      %v919 = vpop.f32.mrb[0].mxu0
      %v920 = vpop.f32.mrb[0].mxu0
      %v921 = vadd.f32 %v274, %v920
      %v922 = vpop.f32.mrb[0].mxu0
      %923 = vmatprep.mubr.bf16.mxu0 0
      %924 = vmatmul.mubr.bf16.gmra.mrb[0].mxu0 %v794
      %v925 = vpop.f32.mrb[0].mxu0
      %v926 = vadd.f32 %v274, %v925
      %v927 = vpop.f32.mrb[0].mxu0
      %v928 = vpop.f32.mrb[0].mxu0
      %v929 = vadd.f32 %v274, %v928
      %v930 = vpop.f32.mrb[0].mxu0
      %931 = vmatprep.mubr.bf16.mxu0 0
      %932 = vmatmul.mubr.bf16.gmra.mrb[0].mxu0 %v797
      %v933 = vpop.f32.mrb[0].mxu0
      %v934 = vadd.f32 %v274, %v933
      %v935 = vpop.f32.mrb[0].mxu0
      %v936 = vpop.f32.mrb[0].mxu0
      %v937 = vadd.f32 %v274, %v936
      %v938 = vpop.f32.mrb[0].mxu0
      %939 = vmatprep.mubr.bf16.mxu0 0
      %940 = vmatmul.mubr.bf16.gmra.mrb[0].mxu0 %v800
      %v941 = vpop.f32.mrb[0].mxu0
      %v942 = vadd.f32 %v274, %v941
      %v943 = vpop.f32.mrb[0].mxu0
      %v944 = vpop.f32.mrb[0].mxu0
      %v945 = vadd.f32 %v274, %v944
      %v946 = vpop.f32.mrb[0].mxu0
      %947 = vmatprep.mubr.bf16.mxu0 0
      %948 = vmatmul.mubr.bf16.gmra.mrb[0].mxu0 %v803
      %v949 = vpop.f32.mrb[0].mxu0
      %v950 = vadd.f32 %v274, %v949
      %v951 = vpop.f32.mrb[0].mxu0
      %v952 = vpop.f32.mrb[0].mxu0
      %v953 = vadd.f32 %v274, %v952
      %v954 = vpop.f32.mrb[0].mxu0
      %955 = vmatprep.mubr.bf16.mxu0 0
      %956 = vmatmul.mubr.bf16.gmra.mrb[0].mxu0 %v806
      %v957 = vpop.f32.mrb[0].mxu0
      %v958 = vadd.f32 %v274, %v957
      %v959 = vpop.f32.mrb[0].mxu0
      %v960 = vpop.f32.mrb[0].mxu0
      %v961 = vadd.f32 %v274, %v960
      %v962 = vpop.f32.mrb[0].mxu0
      %963 = vmatprep.mubr.bf16.mxu0 0
      %964 = vmatmul.mubr.bf16.gmra.mrb[0].mxu0 %v809
      %v965 = vpop.f32.mrb[0].mxu0
      %v966 = vadd.f32 %v274, %v965
      %v967 = vpop.f32.mrb[0].mxu0
      %v968 = vpop.f32.mrb[0].mxu0
      %v969 = vadd.f32 %v274, %v968
      %v970 = vpop.f32.mrb[0].mxu0
      %971 = vdwg.mxu0
      %v972 = vmax.f32 %v846, 0.0
      %v973 = vmax.f32 %v849, 0.0
      %v974 = vmax.f32 %v854, 0.0
      %v975 = vmax.f32 %v857, 0.0
      %v976 = vmax.f32 %v862, 0.0
      %v977 = vmax.f32 %v865, 0.0
      %v978 = vmax.f32 %v870, 0.0
      %v979 = vmax.f32 %v873, 0.0
      %v980 = vmax.f32 %v878, 0.0
      %v981 = vmax.f32 %v881, 0.0
      %v982 = vmax.f32 %v886, 0.0
      %v983 = vmax.f32 %v889, 0.0
      %v984 = vmax.f32 %v894, 0.0
      %v985 = vmax.f32 %v897, 0.0
      %v986 = vmax.f32 %v902, 0.0
      %v987 = vmax.f32 %v905, 0.0
      %v988 = vmax.f32 %v910, 0.0
      %v989 = vmax.f32 %v913, 0.0
      %v990 = vmax.f32 %v918, 0.0
      %v991 = vmax.f32 %v921, 0.0
      %v992 = vmax.f32 %v926, 0.0
      %v993 = vmax.f32 %v929, 0.0
      %v994 = vmax.f32 %v934, 0.0
      %v995 = vmax.f32 %v937, 0.0
      %v996 = vmax.f32 %v942, 0.0
      %v997 = vmax.f32 %v945, 0.0
      %v998 = vmax.f32 %v950, 0.0
      %v999 = vmax.f32 %v953, 0.0
      %v1000 = vmax.f32 %v958, 0.0
      %v1001 = vmax.f32 %v961, 0.0
      %v1002 = vmax.f32 %v966, 0.0
      %v1003 = vmax.f32 %v969, 0.0
      %v1004 = vpack.c.bf16 %v973, %v972
      %v1005 = vpack.c.bf16 %v975, %v974
      %v1006 = vpack.c.bf16 %v977, %v976
      %v1007 = vpack.c.bf16 %v979, %v978
      %v1008 = vpack.c.bf16 %v981, %v980
      %v1009 = vpack.c.bf16 %v983, %v982
      %v1010 = vpack.c.bf16 %v985, %v984
      %v1011 = vpack.c.bf16 %v987, %v986
      %v1012 = vpack.c.bf16 %v989, %v988
      %v1013 = vpack.c.bf16 %v991, %v990
      %v1014 = vpack.c.bf16 %v993, %v992
      %v1015 = vpack.c.bf16 %v995, %v994
      %v1016 = vpack.c.bf16 %v997, %v996
      %v1017 = vpack.c.bf16 %v999, %v998
      %v1018 = vpack.c.bf16 %v1001, %v1000
      %v1019 = vpack.c.bf16 %v1003, %v1002
      %s1020 = scalar_lea.vmem [#allocation2], 288
      %1021 = vst [vmem:[%s1020 + $0x8] sm:$0xff] %v1004
      %1022 = vst [vmem:[%s1020 + $0x18] sm:$0xff] %v1005
      %1023 = vst [vmem:[%s1020 + $0x28] sm:$0xff] %v1006
      %1024 = vst [vmem:[%s1020 + $0x38] sm:$0xff] %v1007
      %1025 = vst [vmem:[%s1020 + $0x48] sm:$0xff] %v1008
      %1026 = vst [vmem:[%s1020 + $0x58] sm:$0xff] %v1009
      %1027 = vst [vmem:[%s1020 + $0x68] sm:$0xff] %v1010
      %1028 = vst [vmem:[%s1020 + $0x78] sm:$0xff] %v1011
      %1029 = vst [vmem:[%s1020 + $0x88] sm:$0xff] %v1012
      %1030 = vst [vmem:[%s1020 + $0x98] sm:$0xff] %v1013
      %1031 = vst [vmem:[%s1020 + $0xa8] sm:$0xff] %v1014
      %1032 = vst [vmem:[%s1020 + $0xb8] sm:$0xff] %v1015
      %1033 = vst [vmem:[%s1020 + $0xc8] sm:$0xff] %v1016
      %1034 = vst [vmem:[%s1020 + $0xd8] sm:$0xff] %v1017
      %1035 = vst [vmem:[%s1020 + $0xe8] sm:$0xff] %v1018
      %1036 = vst [vmem:[%s1020 + $0xf8] sm:$0xff] %v1019
      %s1037 = scalar_lea.vmem %s219, 256
      %v1038 = vld [vmem:[%s1037] sm:$0xf]
      %v1039 = vld [vmem:[%s1037 + $0x4] sm:$0xf]
      %v1040 = vld [vmem:[%s1037 + $0x8] sm:$0xf]
      %v1041 = vld [vmem:[%s1037 + $0xc] sm:$0xf]
      %v1042 = vld [vmem:[%s1037 + $0x10] sm:$0xf]
      %v1043 = vld [vmem:[%s1037 + $0x14] sm:$0xf]
      %v1044 = vld [vmem:[%s1037 + $0x18] sm:$0xf]
      %v1045 = vld [vmem:[%s1037 + $0x1c] sm:$0xf]
      %v1046 = vld [vmem:[%s1037 + $0x20] sm:$0xf]
      %v1047 = vld [vmem:[%s1037 + $0x24] sm:$0xf]
      %v1048 = vld [vmem:[%s1037 + $0x28] sm:$0xf]
      %v1049 = vld [vmem:[%s1037 + $0x2c] sm:$0xf]
      %v1050 = vld [vmem:[%s1037 + $0x30] sm:$0xf]
      %v1051 = vld [vmem:[%s1037 + $0x34] sm:$0xf]
      %v1052 = vld [vmem:[%s1037 + $0x38] sm:$0xf]
      %v1053 = vld [vmem:[%s1037 + $0x3c] sm:$0xf]
      %v1054 = vld [vmem:[%s1037 + $0x40] sm:$0xf]
      %v1055 = vld [vmem:[%s1037 + $0x44] sm:$0xf]
      %v1056 = vld [vmem:[%s1037 + $0x48] sm:$0xf]
      %v1057 = vld [vmem:[%s1037 + $0x4c] sm:$0xf]
      %v1058 = vld [vmem:[%s1037 + $0x50] sm:$0xf]
      %v1059 = vld [vmem:[%s1037 + $0x54] sm:$0xf]
      %v1060 = vld [vmem:[%s1037 + $0x58] sm:$0xf]
      %v1061 = vld [vmem:[%s1037 + $0x5c] sm:$0xf]
      %v1062 = vld [vmem:[%s1037 + $0x60] sm:$0xf]
      %v1063 = vld [vmem:[%s1037 + $0x64] sm:$0xf]
      %v1064 = vld [vmem:[%s1037 + $0x68] sm:$0xf]
      %v1065 = vld [vmem:[%s1037 + $0x6c] sm:$0xf]
      %v1066 = vld [vmem:[%s1037 + $0x70] sm:$0xf]
      %v1067 = vld [vmem:[%s1037 + $0x74] sm:$0xf]
      %v1068 = vld [vmem:[%s1037 + $0x78] sm:$0xf]
      %v1069 = vld [vmem:[%s1037 + $0x7c] sm:$0xf]
      %v1102 = vunpack.c.l.b16 %v1038
      %v1103 = vunpack.c.l.b16 %v1039
      %v1104 = vunpack.c.l.b16 %v1040
      %v1105 = vunpack.c.l.b16 %v1041
      %v1106 = vunpack.c.l.b16 %v1042
      %v1107 = vunpack.c.l.b16 %v1043
      %v1108 = vunpack.c.l.b16 %v1044
      %v1109 = vunpack.c.l.b16 %v1045
      %v1110 = vunpack.c.l.b16 %v1046
      %v1111 = vunpack.c.l.b16 %v1047
      %v1112 = vunpack.c.l.b16 %v1048
      %v1113 = vunpack.c.l.b16 %v1049
      %v1114 = vunpack.c.l.b16 %v1050
      %v1115 = vunpack.c.l.b16 %v1051
      %v1116 = vunpack.c.l.b16 %v1052
      %v1117 = vunpack.c.l.b16 %v1053
      %v1118 = vunpack.c.l.b16 %v1054
      %v1119 = vunpack.c.l.b16 %v1055
      %v1120 = vunpack.c.l.b16 %v1056
      %v1121 = vunpack.c.l.b16 %v1057
      %v1122 = vunpack.c.l.b16 %v1058
      %v1123 = vunpack.c.l.b16 %v1059
      %v1124 = vunpack.c.l.b16 %v1060
      %v1125 = vunpack.c.l.b16 %v1061
      %v1126 = vunpack.c.l.b16 %v1062
      %v1127 = vunpack.c.l.b16 %v1063
      %v1128 = vunpack.c.l.b16 %v1064
      %v1129 = vunpack.c.l.b16 %v1065
      %v1130 = vunpack.c.l.b16 %v1066
      %v1131 = vunpack.c.l.b16 %v1067
      %v1132 = vunpack.c.l.b16 %v1068
      %v1133 = vunpack.c.l.b16 %v1069
      %v1134 = vpack.c.b16 %v1103, %v1102
      %v1135 = vpack.c.b16 %v1105, %v1104
      %v1136 = vpack.c.b16 %v1107, %v1106
      %v1137 = vpack.c.b16 %v1109, %v1108
      %v1138 = vpack.c.b16 %v1111, %v1110
      %v1139 = vpack.c.b16 %v1113, %v1112
      %v1140 = vpack.c.b16 %v1115, %v1114
      %v1141 = vpack.c.b16 %v1117, %v1116
      %v1142 = vpack.c.b16 %v1119, %v1118
      %v1143 = vpack.c.b16 %v1121, %v1120
      %v1144 = vpack.c.b16 %v1123, %v1122
      %v1145 = vpack.c.b16 %v1125, %v1124
      %v1146 = vpack.c.b16 %v1127, %v1126
      %v1147 = vpack.c.b16 %v1129, %v1128
      %v1148 = vpack.c.b16 %v1131, %v1130
      %v1149 = vpack.c.b16 %v1133, %v1132
      %v1151 = vsel %vm371, %v1134, 0
      %v1154 = vsel %vm371, %v1135, 0
      %v1157 = vsel %vm371, %v1136, 0
      %v1160 = vsel %vm371, %v1137, 0
      %v1163 = vsel %vm371, %v1138, 0
      %v1166 = vsel %vm371, %v1139, 0
      %v1169 = vsel %vm371, %v1140, 0
      %v1172 = vsel %vm371, %v1141, 0
      %v1175 = vsel %vm371, %v1142, 0
      %v1178 = vsel %vm371, %v1143, 0
      %v1181 = vsel %vm371, %v1144, 0
      %v1184 = vsel %vm371, %v1145, 0
      %v1187 = vsel %vm371, %v1146, 0
      %v1190 = vsel %vm371, %v1147, 0
      %v1193 = vsel %vm371, %v1148, 0
      %v1196 = vsel %vm371, %v1149, 0
      %1198 = vmatprep.subr.bf16.mxu0 0
      %1199 = vmatpush1.bf16.msra.mxu0 %v366
      %1200 = vmatprep.subr.bf16.mxu0 0
      %1201 = vmatpush1.bf16.msra.mxu0 %v367
      %1202 = vmatprep.subr.bf16.mxu0 0
      %1203 = vmatpush1.bf16.msra.mxu0 %v422
      %1204 = vmatprep.subr.bf16.mxu0 0
      %1205 = vmatpush1.bf16.msra.mxu0 0
      %1206 = vmatprep.subr.bf16.mxu0 0
      %1207 = vmatpush1.bf16.msra.mxu0 0
      %1208 = vmatprep.subr.bf16.mxu0 0
      %1209 = vmatpush1.bf16.msra.mxu0 0
      %1210 = vmatprep.subr.bf16.mxu0 0
      %1211 = vmatpush1.bf16.msra.mxu0 0
      %1212 = vmatprep.subr.bf16.mxu0 0
      %1213 = vmatpush1.bf16.msra.mxu0 0
      %1214 = vmatprep.subr.bf16.mxu0 0
      %1215 = vmatpush1.bf16.msra.mxu0 0
      %1216 = vmatprep.subr.bf16.mxu0 0
      %1217 = vmatpush1.bf16.msra.mxu0 0
      %1218 = vmatprep.subr.bf16.mxu0 0
      %1219 = vmatpush1.bf16.msra.mxu0 0
      %1220 = vmatprep.subr.bf16.mxu0 0
      %1221 = vmatpush1.bf16.msra.mxu0 0
      %1222 = vmatprep.subr.bf16.mxu0 0
      %1223 = vmatpush1.bf16.msra.mxu0 0
      %1224 = vmatprep.subr.bf16.mxu0 0
      %1225 = vmatpush1.bf16.msra.mxu0 0
      %1226 = vmatprep.subr.bf16.mxu0 0
      %1227 = vmatpush1.bf16.msra.mxu0 0
      %1228 = vmatprep.subr.bf16.mxu0 0
      %1229 = vmatpush1.bf16.msra.mxu0 0
      %1230 = vmatprep.mubr.bf16.mxu0 0
      %1231 = vmatmul.mubr.bf16.gmra.mrb[0].mxu0 %v1151
      %v1232 = vpop.f32.mrb[0].mxu0
      %v1233 = vadd.f32 %v274, %v1232
      %v1234 = vpop.f32.mrb[0].mxu0
      %v1235 = vpop.f32.mrb[0].mxu0
      %v1236 = vadd.f32 %v274, %v1235
      %v1237 = vpop.f32.mrb[0].mxu0
      %1238 = vmatprep.mubr.bf16.mxu0 0
      %1239 = vmatmul.mubr.bf16.gmra.mrb[0].mxu0 %v1154
      %v1240 = vpop.f32.mrb[0].mxu0
      %v1241 = vadd.f32 %v274, %v1240
      %v1242 = vpop.f32.mrb[0].mxu0
      %v1243 = vpop.f32.mrb[0].mxu0
      %v1244 = vadd.f32 %v274, %v1243
      %v1245 = vpop.f32.mrb[0].mxu0
      %1246 = vmatprep.mubr.bf16.mxu0 0
      %1247 = vmatmul.mubr.bf16.gmra.mrb[0].mxu0 %v1157
      %v1248 = vpop.f32.mrb[0].mxu0
      %v1249 = vadd.f32 %v274, %v1248
      %v1250 = vpop.f32.mrb[0].mxu0
      %v1251 = vpop.f32.mrb[0].mxu0
      %v1252 = vadd.f32 %v274, %v1251
      %v1253 = vpop.f32.mrb[0].mxu0
      %1254 = vmatprep.mubr.bf16.mxu0 0
      %1255 = vmatmul.mubr.bf16.gmra.mrb[0].mxu0 %v1160
      %v1256 = vpop.f32.mrb[0].mxu0
      %v1257 = vadd.f32 %v274, %v1256
      %v1258 = vpop.f32.mrb[0].mxu0
      %v1259 = vpop.f32.mrb[0].mxu0
      %v1260 = vadd.f32 %v274, %v1259
      %v1261 = vpop.f32.mrb[0].mxu0
      %1262 = vmatprep.mubr.bf16.mxu0 0
      %1263 = vmatmul.mubr.bf16.gmra.mrb[0].mxu0 %v1163
      %v1264 = vpop.f32.mrb[0].mxu0
      %v1265 = vadd.f32 %v274, %v1264
      %v1266 = vpop.f32.mrb[0].mxu0
      %v1267 = vpop.f32.mrb[0].mxu0
      %v1268 = vadd.f32 %v274, %v1267
      %v1269 = vpop.f32.mrb[0].mxu0
      %1270 = vmatprep.mubr.bf16.mxu0 0
      %1271 = vmatmul.mubr.bf16.gmra.mrb[0].mxu0 %v1166
      %v1272 = vpop.f32.mrb[0].mxu0
      %v1273 = vadd.f32 %v274, %v1272
      %v1274 = vpop.f32.mrb[0].mxu0
      %v1275 = vpop.f32.mrb[0].mxu0
      %v1276 = vadd.f32 %v274, %v1275
      %v1277 = vpop.f32.mrb[0].mxu0
      %1278 = vmatprep.mubr.bf16.mxu0 0
      %1279 = vmatmul.mubr.bf16.gmra.mrb[0].mxu0 %v1169
      %v1280 = vpop.f32.mrb[0].mxu0
      %v1281 = vadd.f32 %v274, %v1280
      %v1282 = vpop.f32.mrb[0].mxu0
      %v1283 = vpop.f32.mrb[0].mxu0
      %v1284 = vadd.f32 %v274, %v1283
      %v1285 = vpop.f32.mrb[0].mxu0
      %1286 = vmatprep.mubr.bf16.mxu0 0
      %1287 = vmatmul.mubr.bf16.gmra.mrb[0].mxu0 %v1172
      %v1288 = vpop.f32.mrb[0].mxu0
      %v1289 = vadd.f32 %v274, %v1288
      %v1290 = vpop.f32.mrb[0].mxu0
      %v1291 = vpop.f32.mrb[0].mxu0
      %v1292 = vadd.f32 %v274, %v1291
      %v1293 = vpop.f32.mrb[0].mxu0
      %1294 = vmatprep.mubr.bf16.mxu0 0
      %1295 = vmatmul.mubr.bf16.gmra.mrb[0].mxu0 %v1175
      %v1296 = vpop.f32.mrb[0].mxu0
      %v1297 = vadd.f32 %v274, %v1296
      %v1298 = vpop.f32.mrb[0].mxu0
      %v1299 = vpop.f32.mrb[0].mxu0
      %v1300 = vadd.f32 %v274, %v1299
      %v1301 = vpop.f32.mrb[0].mxu0
      %1302 = vmatprep.mubr.bf16.mxu0 0
      %1303 = vmatmul.mubr.bf16.gmra.mrb[0].mxu0 %v1178
      %v1304 = vpop.f32.mrb[0].mxu0
      %v1305 = vadd.f32 %v274, %v1304
      %v1306 = vpop.f32.mrb[0].mxu0
      %v1307 = vpop.f32.mrb[0].mxu0
      %v1308 = vadd.f32 %v274, %v1307
      %v1309 = vpop.f32.mrb[0].mxu0
      %1310 = vmatprep.mubr.bf16.mxu0 0
      %1311 = vmatmul.mubr.bf16.gmra.mrb[0].mxu0 %v1181
      %v1312 = vpop.f32.mrb[0].mxu0
      %v1313 = vadd.f32 %v274, %v1312
      %v1314 = vpop.f32.mrb[0].mxu0
      %v1315 = vpop.f32.mrb[0].mxu0
      %v1316 = vadd.f32 %v274, %v1315
      %v1317 = vpop.f32.mrb[0].mxu0
      %1318 = vmatprep.mubr.bf16.mxu0 0
      %1319 = vmatmul.mubr.bf16.gmra.mrb[0].mxu0 %v1184
      %v1320 = vpop.f32.mrb[0].mxu0
      %v1321 = vadd.f32 %v274, %v1320
      %v1322 = vpop.f32.mrb[0].mxu0
      %v1323 = vpop.f32.mrb[0].mxu0
      %v1324 = vadd.f32 %v274, %v1323
      %v1325 = vpop.f32.mrb[0].mxu0
      %1326 = vmatprep.mubr.bf16.mxu0 0
      %1327 = vmatmul.mubr.bf16.gmra.mrb[0].mxu0 %v1187
      %v1328 = vpop.f32.mrb[0].mxu0
      %v1329 = vadd.f32 %v274, %v1328
      %v1330 = vpop.f32.mrb[0].mxu0
      %v1331 = vpop.f32.mrb[0].mxu0
      %v1332 = vadd.f32 %v274, %v1331
      %v1333 = vpop.f32.mrb[0].mxu0
      %1334 = vmatprep.mubr.bf16.mxu0 0
      %1335 = vmatmul.mubr.bf16.gmra.mrb[0].mxu0 %v1190
      %v1336 = vpop.f32.mrb[0].mxu0
      %v1337 = vadd.f32 %v274, %v1336
      %v1338 = vpop.f32.mrb[0].mxu0
      %v1339 = vpop.f32.mrb[0].mxu0
      %v1340 = vadd.f32 %v274, %v1339
      %v1341 = vpop.f32.mrb[0].mxu0
      %1342 = vmatprep.mubr.bf16.mxu0 0
      %1343 = vmatmul.mubr.bf16.gmra.mrb[0].mxu0 %v1193
      %v1344 = vpop.f32.mrb[0].mxu0
      %v1345 = vadd.f32 %v274, %v1344
      %v1346 = vpop.f32.mrb[0].mxu0
      %v1347 = vpop.f32.mrb[0].mxu0
      %v1348 = vadd.f32 %v274, %v1347
      %v1349 = vpop.f32.mrb[0].mxu0
      %1350 = vmatprep.mubr.bf16.mxu0 0
      %1351 = vmatmul.mubr.bf16.gmra.mrb[0].mxu0 %v1196
      %v1352 = vpop.f32.mrb[0].mxu0
      %v1353 = vadd.f32 %v274, %v1352
      %v1354 = vpop.f32.mrb[0].mxu0
      %v1355 = vpop.f32.mrb[0].mxu0
      %v1356 = vadd.f32 %v274, %v1355
      %v1357 = vpop.f32.mrb[0].mxu0
      %1358 = vdwg.mxu0
      %v1359 = vmax.f32 %v1233, 0.0
      %v1360 = vmax.f32 %v1236, 0.0
      %v1361 = vmax.f32 %v1241, 0.0
      %v1362 = vmax.f32 %v1244, 0.0
      %v1363 = vmax.f32 %v1249, 0.0
      %v1364 = vmax.f32 %v1252, 0.0
      %v1365 = vmax.f32 %v1257, 0.0
      %v1366 = vmax.f32 %v1260, 0.0
      %v1367 = vmax.f32 %v1265, 0.0
      %v1368 = vmax.f32 %v1268, 0.0
      %v1369 = vmax.f32 %v1273, 0.0
      %v1370 = vmax.f32 %v1276, 0.0
      %v1371 = vmax.f32 %v1281, 0.0
      %v1372 = vmax.f32 %v1284, 0.0
      %v1373 = vmax.f32 %v1289, 0.0
      %v1374 = vmax.f32 %v1292, 0.0
      %v1375 = vmax.f32 %v1297, 0.0
      %v1376 = vmax.f32 %v1300, 0.0
      %v1377 = vmax.f32 %v1305, 0.0
      %v1378 = vmax.f32 %v1308, 0.0
      %v1379 = vmax.f32 %v1313, 0.0
      %v1380 = vmax.f32 %v1316, 0.0
      %v1381 = vmax.f32 %v1321, 0.0
      %v1382 = vmax.f32 %v1324, 0.0
      %v1383 = vmax.f32 %v1329, 0.0
      %v1384 = vmax.f32 %v1332, 0.0
      %v1385 = vmax.f32 %v1337, 0.0
      %v1386 = vmax.f32 %v1340, 0.0
      %v1387 = vmax.f32 %v1345, 0.0
      %v1388 = vmax.f32 %v1348, 0.0
      %v1389 = vmax.f32 %v1353, 0.0
      %v1390 = vmax.f32 %v1356, 0.0
      %v1391 = vpack.c.bf16 %v1360, %v1359
      %v1392 = vpack.c.bf16 %v1362, %v1361
      %v1393 = vpack.c.bf16 %v1364, %v1363
      %v1394 = vpack.c.bf16 %v1366, %v1365
      %v1395 = vpack.c.bf16 %v1368, %v1367
      %v1396 = vpack.c.bf16 %v1370, %v1369
      %v1397 = vpack.c.bf16 %v1372, %v1371
      %v1398 = vpack.c.bf16 %v1374, %v1373
      %v1399 = vpack.c.bf16 %v1376, %v1375
      %v1400 = vpack.c.bf16 %v1378, %v1377
      %v1401 = vpack.c.bf16 %v1380, %v1379
      %v1402 = vpack.c.bf16 %v1382, %v1381
      %v1403 = vpack.c.bf16 %v1384, %v1383
      %v1404 = vpack.c.bf16 %v1386, %v1385
      %v1405 = vpack.c.bf16 %v1388, %v1387
      %v1406 = vpack.c.bf16 %v1390, %v1389
      %s1407 = scalar_lea.vmem [#allocation2], 560
      %1408 = vst [vmem:[%s1407 + $0x8] sm:$0xff] %v1391
      %1409 = vst [vmem:[%s1407 + $0x18] sm:$0xff] %v1392
      %1410 = vst [vmem:[%s1407 + $0x28] sm:$0xff] %v1393
      %1411 = vst [vmem:[%s1407 + $0x38] sm:$0xff] %v1394
      %1412 = vst [vmem:[%s1407 + $0x48] sm:$0xff] %v1395
      %1413 = vst [vmem:[%s1407 + $0x58] sm:$0xff] %v1396
      %1414 = vst [vmem:[%s1407 + $0x68] sm:$0xff] %v1397
      %1415 = vst [vmem:[%s1407 + $0x78] sm:$0xff] %v1398
      %1416 = vst [vmem:[%s1407 + $0x88] sm:$0xff] %v1399
      %1417 = vst [vmem:[%s1407 + $0x98] sm:$0xff] %v1400
      %1418 = vst [vmem:[%s1407 + $0xa8] sm:$0xff] %v1401
      %1419 = vst [vmem:[%s1407 + $0xb8] sm:$0xff] %v1402
      %1420 = vst [vmem:[%s1407 + $0xc8] sm:$0xff] %v1403
      %1421 = vst [vmem:[%s1407 + $0xd8] sm:$0xff] %v1404
      %1422 = vst [vmem:[%s1407 + $0xe8] sm:$0xff] %v1405
      %1423 = vst [vmem:[%s1407 + $0xf8] sm:$0xff] %v1406
      %s1424 = scalar_lea.vmem %s219, 384
      %v1425 = vld [vmem:[%s1424] sm:$0xf]
      %v1426 = vld [vmem:[%s1424 + $0x4] sm:$0xf]
      %v1427 = vld [vmem:[%s1424 + $0x8] sm:$0xf]
      %v1428 = vld [vmem:[%s1424 + $0xc] sm:$0xf]
      %v1429 = vld [vmem:[%s1424 + $0x10] sm:$0xf]
      %v1430 = vld [vmem:[%s1424 + $0x14] sm:$0xf]
      %v1431 = vld [vmem:[%s1424 + $0x18] sm:$0xf]
      %v1432 = vld [vmem:[%s1424 + $0x1c] sm:$0xf]
      %v1433 = vld [vmem:[%s1424 + $0x20] sm:$0xf]
      %v1434 = vld [vmem:[%s1424 + $0x24] sm:$0xf]
      %v1435 = vld [vmem:[%s1424 + $0x28] sm:$0xf]
      %v1436 = vld [vmem:[%s1424 + $0x2c] sm:$0xf]
      %v1437 = vld [vmem:[%s1424 + $0x30] sm:$0xf]
      %v1438 = vld [vmem:[%s1424 + $0x34] sm:$0xf]
      %v1439 = vld [vmem:[%s1424 + $0x38] sm:$0xf]
      %v1440 = vld [vmem:[%s1424 + $0x3c] sm:$0xf]
      %v1441 = vld [vmem:[%s1424 + $0x40] sm:$0xf]
      %v1442 = vld [vmem:[%s1424 + $0x44] sm:$0xf]
      %v1443 = vld [vmem:[%s1424 + $0x48] sm:$0xf]
      %v1444 = vld [vmem:[%s1424 + $0x4c] sm:$0xf]
      %v1445 = vld [vmem:[%s1424 + $0x50] sm:$0xf]
      %v1446 = vld [vmem:[%s1424 + $0x54] sm:$0xf]
      %v1447 = vld [vmem:[%s1424 + $0x58] sm:$0xf]
      %v1448 = vld [vmem:[%s1424 + $0x5c] sm:$0xf]
      %v1449 = vld [vmem:[%s1424 + $0x60] sm:$0xf]
      %v1450 = vld [vmem:[%s1424 + $0x64] sm:$0xf]
      %v1451 = vld [vmem:[%s1424 + $0x68] sm:$0xf]
      %v1452 = vld [vmem:[%s1424 + $0x6c] sm:$0xf]
      %v1453 = vld [vmem:[%s1424 + $0x70] sm:$0xf]
      %v1454 = vld [vmem:[%s1424 + $0x74] sm:$0xf]
      %v1455 = vld [vmem:[%s1424 + $0x78] sm:$0xf]
      %v1456 = vld [vmem:[%s1424 + $0x7c] sm:$0xf]
      %v1489 = vunpack.c.l.b16 %v1425
      %v1490 = vunpack.c.l.b16 %v1426
      %v1491 = vunpack.c.l.b16 %v1427
      %v1492 = vunpack.c.l.b16 %v1428
      %v1493 = vunpack.c.l.b16 %v1429
      %v1494 = vunpack.c.l.b16 %v1430
      %v1495 = vunpack.c.l.b16 %v1431
      %v1496 = vunpack.c.l.b16 %v1432
      %v1497 = vunpack.c.l.b16 %v1433
      %v1498 = vunpack.c.l.b16 %v1434
      %v1499 = vunpack.c.l.b16 %v1435
      %v1500 = vunpack.c.l.b16 %v1436
      %v1501 = vunpack.c.l.b16 %v1437
      %v1502 = vunpack.c.l.b16 %v1438
      %v1503 = vunpack.c.l.b16 %v1439
      %v1504 = vunpack.c.l.b16 %v1440
      %v1505 = vunpack.c.l.b16 %v1441
      %v1506 = vunpack.c.l.b16 %v1442
      %v1507 = vunpack.c.l.b16 %v1443
      %v1508 = vunpack.c.l.b16 %v1444
      %v1509 = vunpack.c.l.b16 %v1445
      %v1510 = vunpack.c.l.b16 %v1446
      %v1511 = vunpack.c.l.b16 %v1447
      %v1512 = vunpack.c.l.b16 %v1448
      %v1513 = vunpack.c.l.b16 %v1449
      %v1514 = vunpack.c.l.b16 %v1450
      %v1515 = vunpack.c.l.b16 %v1451
      %v1516 = vunpack.c.l.b16 %v1452
      %v1517 = vunpack.c.l.b16 %v1453
      %v1518 = vunpack.c.l.b16 %v1454
      %v1519 = vunpack.c.l.b16 %v1455
      %v1520 = vunpack.c.l.b16 %v1456
      %v1521 = vpack.c.b16 %v1490, %v1489
      %v1522 = vpack.c.b16 %v1492, %v1491
      %v1523 = vpack.c.b16 %v1494, %v1493
      %v1524 = vpack.c.b16 %v1496, %v1495
      %v1525 = vpack.c.b16 %v1498, %v1497
      %v1526 = vpack.c.b16 %v1500, %v1499
      %v1527 = vpack.c.b16 %v1502, %v1501
      %v1528 = vpack.c.b16 %v1504, %v1503
      %v1529 = vpack.c.b16 %v1506, %v1505
      %v1530 = vpack.c.b16 %v1508, %v1507
      %v1531 = vpack.c.b16 %v1510, %v1509
      %v1532 = vpack.c.b16 %v1512, %v1511
      %v1533 = vpack.c.b16 %v1514, %v1513
      %v1534 = vpack.c.b16 %v1516, %v1515
      %v1535 = vpack.c.b16 %v1518, %v1517
      %v1536 = vpack.c.b16 %v1520, %v1519
      %v1538 = vsel %vm371, %v1521, 0
      %v1541 = vsel %vm371, %v1522, 0
      %v1544 = vsel %vm371, %v1523, 0
      %v1547 = vsel %vm371, %v1524, 0
      %v1550 = vsel %vm371, %v1525, 0
      %v1553 = vsel %vm371, %v1526, 0
      %v1556 = vsel %vm371, %v1527, 0
      %v1559 = vsel %vm371, %v1528, 0
      %v1562 = vsel %vm371, %v1529, 0
      %v1565 = vsel %vm371, %v1530, 0
      %v1568 = vsel %vm371, %v1531, 0
      %v1571 = vsel %vm371, %v1532, 0
      %v1574 = vsel %vm371, %v1533, 0
      %v1577 = vsel %vm371, %v1534, 0
      %v1580 = vsel %vm371, %v1535, 0
      %v1583 = vsel %vm371, %v1536, 0
      %1585 = vmatprep.subr.bf16.mxu0 0
      %1586 = vmatpush1.bf16.msra.mxu0 %v366
      %1587 = vmatprep.subr.bf16.mxu0 0
      %1588 = vmatpush1.bf16.msra.mxu0 %v367
      %1589 = vmatprep.subr.bf16.mxu0 0
      %1590 = vmatpush1.bf16.msra.mxu0 %v422
      %1591 = vmatprep.subr.bf16.mxu0 0
      %1592 = vmatpush1.bf16.msra.mxu0 0
      %1593 = vmatprep.subr.bf16.mxu0 0
      %1594 = vmatpush1.bf16.msra.mxu0 0
      %1595 = vmatprep.subr.bf16.mxu0 0
      %1596 = vmatpush1.bf16.msra.mxu0 0
      %1597 = vmatprep.subr.bf16.mxu0 0
      %1598 = vmatpush1.bf16.msra.mxu0 0
      %1599 = vmatprep.subr.bf16.mxu0 0
      %1600 = vmatpush1.bf16.msra.mxu0 0
      %1601 = vmatprep.subr.bf16.mxu0 0
      %1602 = vmatpush1.bf16.msra.mxu0 0
      %1603 = vmatprep.subr.bf16.mxu0 0
      %1604 = vmatpush1.bf16.msra.mxu0 0
      %1605 = vmatprep.subr.bf16.mxu0 0
      %1606 = vmatpush1.bf16.msra.mxu0 0
      %1607 = vmatprep.subr.bf16.mxu0 0
      %1608 = vmatpush1.bf16.msra.mxu0 0
      %1609 = vmatprep.subr.bf16.mxu0 0
      %1610 = vmatpush1.bf16.msra.mxu0 0
      %1611 = vmatprep.subr.bf16.mxu0 0
      %1612 = vmatpush1.bf16.msra.mxu0 0
      %1613 = vmatprep.subr.bf16.mxu0 0
      %1614 = vmatpush1.bf16.msra.mxu0 0
      %1615 = vmatprep.subr.bf16.mxu0 0
      %1616 = vmatpush1.bf16.msra.mxu0 0
      %1617 = vmatprep.mubr.bf16.mxu0 0
      %1618 = vmatmul.mubr.bf16.gmra.mrb[0].mxu0 %v1538
      %v1619 = vpop.f32.mrb[0].mxu0
      %v1620 = vadd.f32 %v274, %v1619
      %v1621 = vpop.f32.mrb[0].mxu0
      %v1622 = vpop.f32.mrb[0].mxu0
      %v1623 = vadd.f32 %v274, %v1622
      %v1624 = vpop.f32.mrb[0].mxu0
      %1625 = vmatprep.mubr.bf16.mxu0 0
      %1626 = vmatmul.mubr.bf16.gmra.mrb[0].mxu0 %v1541
      %v1627 = vpop.f32.mrb[0].mxu0
      %v1628 = vadd.f32 %v274, %v1627
      %v1629 = vpop.f32.mrb[0].mxu0
      %v1630 = vpop.f32.mrb[0].mxu0
      %v1631 = vadd.f32 %v274, %v1630
      %v1632 = vpop.f32.mrb[0].mxu0
      %1633 = vmatprep.mubr.bf16.mxu0 0
      %1634 = vmatmul.mubr.bf16.gmra.mrb[0].mxu0 %v1544
      %v1635 = vpop.f32.mrb[0].mxu0
      %v1636 = vadd.f32 %v274, %v1635
      %v1637 = vpop.f32.mrb[0].mxu0
      %v1638 = vpop.f32.mrb[0].mxu0
      %v1639 = vadd.f32 %v274, %v1638
      %v1640 = vpop.f32.mrb[0].mxu0
      %1641 = vmatprep.mubr.bf16.mxu0 0
      %1642 = vmatmul.mubr.bf16.gmra.mrb[0].mxu0 %v1547
      %v1643 = vpop.f32.mrb[0].mxu0
      %v1644 = vadd.f32 %v274, %v1643
      %v1645 = vpop.f32.mrb[0].mxu0
      %v1646 = vpop.f32.mrb[0].mxu0
      %v1647 = vadd.f32 %v274, %v1646
      %v1648 = vpop.f32.mrb[0].mxu0
      %1649 = vmatprep.mubr.bf16.mxu0 0
      %1650 = vmatmul.mubr.bf16.gmra.mrb[0].mxu0 %v1550
      %v1651 = vpop.f32.mrb[0].mxu0
      %v1652 = vadd.f32 %v274, %v1651
      %v1653 = vpop.f32.mrb[0].mxu0
      %v1654 = vpop.f32.mrb[0].mxu0
      %v1655 = vadd.f32 %v274, %v1654
      %v1656 = vpop.f32.mrb[0].mxu0
      %1657 = vmatprep.mubr.bf16.mxu0 0
      %1658 = vmatmul.mubr.bf16.gmra.mrb[0].mxu0 %v1553
      %v1659 = vpop.f32.mrb[0].mxu0
      %v1660 = vadd.f32 %v274, %v1659
      %v1661 = vpop.f32.mrb[0].mxu0
      %v1662 = vpop.f32.mrb[0].mxu0
      %v1663 = vadd.f32 %v274, %v1662
      %v1664 = vpop.f32.mrb[0].mxu0
      %1665 = vmatprep.mubr.bf16.mxu0 0
      %1666 = vmatmul.mubr.bf16.gmra.mrb[0].mxu0 %v1556
      %v1667 = vpop.f32.mrb[0].mxu0
      %v1668 = vadd.f32 %v274, %v1667
      %v1669 = vpop.f32.mrb[0].mxu0
      %v1670 = vpop.f32.mrb[0].mxu0
      %v1671 = vadd.f32 %v274, %v1670
      %v1672 = vpop.f32.mrb[0].mxu0
      %1673 = vmatprep.mubr.bf16.mxu0 0
      %1674 = vmatmul.mubr.bf16.gmra.mrb[0].mxu0 %v1559
      %v1675 = vpop.f32.mrb[0].mxu0
      %v1676 = vadd.f32 %v274, %v1675
      %v1677 = vpop.f32.mrb[0].mxu0
      %v1678 = vpop.f32.mrb[0].mxu0
      %v1679 = vadd.f32 %v274, %v1678
      %v1680 = vpop.f32.mrb[0].mxu0
      %1681 = vmatprep.mubr.bf16.mxu0 0
      %1682 = vmatmul.mubr.bf16.gmra.mrb[0].mxu0 %v1562
      %v1683 = vpop.f32.mrb[0].mxu0
      %v1684 = vadd.f32 %v274, %v1683
      %v1685 = vpop.f32.mrb[0].mxu0
      %v1686 = vpop.f32.mrb[0].mxu0
      %v1687 = vadd.f32 %v274, %v1686
      %v1688 = vpop.f32.mrb[0].mxu0
      %1689 = vmatprep.mubr.bf16.mxu0 0
      %1690 = vmatmul.mubr.bf16.gmra.mrb[0].mxu0 %v1565
      %v1691 = vpop.f32.mrb[0].mxu0
      %v1692 = vadd.f32 %v274, %v1691
      %v1693 = vpop.f32.mrb[0].mxu0
      %v1694 = vpop.f32.mrb[0].mxu0
      %v1695 = vadd.f32 %v274, %v1694
      %v1696 = vpop.f32.mrb[0].mxu0
      %1697 = vmatprep.mubr.bf16.mxu0 0
      %1698 = vmatmul.mubr.bf16.gmra.mrb[0].mxu0 %v1568
      %v1699 = vpop.f32.mrb[0].mxu0
      %v1700 = vadd.f32 %v274, %v1699
      %v1701 = vpop.f32.mrb[0].mxu0
      %v1702 = vpop.f32.mrb[0].mxu0
      %v1703 = vadd.f32 %v274, %v1702
      %v1704 = vpop.f32.mrb[0].mxu0
      %1705 = vmatprep.mubr.bf16.mxu0 0
      %1706 = vmatmul.mubr.bf16.gmra.mrb[0].mxu0 %v1571
      %v1707 = vpop.f32.mrb[0].mxu0
      %v1708 = vadd.f32 %v274, %v1707
      %v1709 = vpop.f32.mrb[0].mxu0
      %v1710 = vpop.f32.mrb[0].mxu0
      %v1711 = vadd.f32 %v274, %v1710
      %v1712 = vpop.f32.mrb[0].mxu0
      %1713 = vmatprep.mubr.bf16.mxu0 0
      %1714 = vmatmul.mubr.bf16.gmra.mrb[0].mxu0 %v1574
      %v1715 = vpop.f32.mrb[0].mxu0
      %v1716 = vadd.f32 %v274, %v1715
      %v1717 = vpop.f32.mrb[0].mxu0
      %v1718 = vpop.f32.mrb[0].mxu0
      %v1719 = vadd.f32 %v274, %v1718
      %v1720 = vpop.f32.mrb[0].mxu0
      %1721 = vmatprep.mubr.bf16.mxu0 0
      %1722 = vmatmul.mubr.bf16.gmra.mrb[0].mxu0 %v1577
      %v1723 = vpop.f32.mrb[0].mxu0
      %v1724 = vadd.f32 %v274, %v1723
      %v1725 = vpop.f32.mrb[0].mxu0
      %v1726 = vpop.f32.mrb[0].mxu0
      %v1727 = vadd.f32 %v274, %v1726
      %v1728 = vpop.f32.mrb[0].mxu0
      %1729 = vmatprep.mubr.bf16.mxu0 0
      %1730 = vmatmul.mubr.bf16.gmra.mrb[0].mxu0 %v1580
      %v1731 = vpop.f32.mrb[0].mxu0
      %v1732 = vadd.f32 %v274, %v1731
      %v1733 = vpop.f32.mrb[0].mxu0
      %v1734 = vpop.f32.mrb[0].mxu0
      %v1735 = vadd.f32 %v274, %v1734
      %v1736 = vpop.f32.mrb[0].mxu0
      %1737 = vmatprep.mubr.bf16.mxu0 0
      %1738 = vmatmul.mubr.bf16.gmra.mrb[0].mxu0 %v1583
      %v1739 = vpop.f32.mrb[0].mxu0
      %v1740 = vadd.f32 %v274, %v1739
      %v1741 = vpop.f32.mrb[0].mxu0
      %v1742 = vpop.f32.mrb[0].mxu0
      %v1743 = vadd.f32 %v274, %v1742
      %v1744 = vpop.f32.mrb[0].mxu0
      %1745 = vdwg.mxu0
      %v1746 = vmax.f32 %v1620, 0.0
      %v1747 = vmax.f32 %v1623, 0.0
      %v1748 = vmax.f32 %v1628, 0.0
      %v1749 = vmax.f32 %v1631, 0.0
      %v1750 = vmax.f32 %v1636, 0.0
      %v1751 = vmax.f32 %v1639, 0.0
      %v1752 = vmax.f32 %v1644, 0.0
      %v1753 = vmax.f32 %v1647, 0.0
      %v1754 = vmax.f32 %v1652, 0.0
      %v1755 = vmax.f32 %v1655, 0.0
      %v1756 = vmax.f32 %v1660, 0.0
      %v1757 = vmax.f32 %v1663, 0.0
      %v1758 = vmax.f32 %v1668, 0.0
      %v1759 = vmax.f32 %v1671, 0.0
      %v1760 = vmax.f32 %v1676, 0.0
      %v1761 = vmax.f32 %v1679, 0.0
      %v1762 = vmax.f32 %v1684, 0.0
      %v1763 = vmax.f32 %v1687, 0.0
      %v1764 = vmax.f32 %v1692, 0.0
      %v1765 = vmax.f32 %v1695, 0.0
      %v1766 = vmax.f32 %v1700, 0.0
      %v1767 = vmax.f32 %v1703, 0.0
      %v1768 = vmax.f32 %v1708, 0.0
      %v1769 = vmax.f32 %v1711, 0.0
      %v1770 = vmax.f32 %v1716, 0.0
      %v1771 = vmax.f32 %v1719, 0.0
      %v1772 = vmax.f32 %v1724, 0.0
      %v1773 = vmax.f32 %v1727, 0.0
      %v1774 = vmax.f32 %v1732, 0.0
      %v1775 = vmax.f32 %v1735, 0.0
      %v1776 = vmax.f32 %v1740, 0.0
      %v1777 = vmax.f32 %v1743, 0.0
      %v1778 = vpack.c.bf16 %v1747, %v1746
      %v1779 = vpack.c.bf16 %v1749, %v1748
      %v1780 = vpack.c.bf16 %v1751, %v1750
      %v1781 = vpack.c.bf16 %v1753, %v1752
      %v1782 = vpack.c.bf16 %v1755, %v1754
      %v1783 = vpack.c.bf16 %v1757, %v1756
      %v1784 = vpack.c.bf16 %v1759, %v1758
      %v1785 = vpack.c.bf16 %v1761, %v1760
      %v1786 = vpack.c.bf16 %v1763, %v1762
      %v1787 = vpack.c.bf16 %v1765, %v1764
      %v1788 = vpack.c.bf16 %v1767, %v1766
      %v1789 = vpack.c.bf16 %v1769, %v1768
      %v1790 = vpack.c.bf16 %v1771, %v1770
      %v1791 = vpack.c.bf16 %v1773, %v1772
      %v1792 = vpack.c.bf16 %v1775, %v1774
      %v1793 = vpack.c.bf16 %v1777, %v1776
      %s1794 = scalar_lea.vmem [#allocation2], 832
      %1795 = vst [vmem:[%s1794 + $0x8] sm:$0xff] %v1778
      %1796 = vst [vmem:[%s1794 + $0x18] sm:$0xff] %v1779
      %1797 = vst [vmem:[%s1794 + $0x28] sm:$0xff] %v1780
      %1798 = vst [vmem:[%s1794 + $0x38] sm:$0xff] %v1781
      %1799 = vst [vmem:[%s1794 + $0x48] sm:$0xff] %v1782
      %1800 = vst [vmem:[%s1794 + $0x58] sm:$0xff] %v1783
      %1801 = vst [vmem:[%s1794 + $0x68] sm:$0xff] %v1784
      %1802 = vst [vmem:[%s1794 + $0x78] sm:$0xff] %v1785
      %1803 = vst [vmem:[%s1794 + $0x88] sm:$0xff] %v1786
      %1804 = vst [vmem:[%s1794 + $0x98] sm:$0xff] %v1787
      %1805 = vst [vmem:[%s1794 + $0xa8] sm:$0xff] %v1788
      %1806 = vst [vmem:[%s1794 + $0xb8] sm:$0xff] %v1789
      %1807 = vst [vmem:[%s1794 + $0xc8] sm:$0xff] %v1790
      %1808 = vst [vmem:[%s1794 + $0xd8] sm:$0xff] %v1791
      %1809 = vst [vmem:[%s1794 + $0xe8] sm:$0xff] %v1792
      %1810 = vst [vmem:[%s1794 + $0xf8] sm:$0xff] %v1793
      %v1811 = vlaneseq
      %v1812 = vshrl.u32 %v1811, 7
      %v1813 = vadd.s32 %v1812, 8
      %vm1814 = vcmp.eq.s32.totalorder %v1812, 0
      %vm1815 = vcmp.eq.s32.totalorder %v1813, 0
      %s1816 = scalar_lea.vmem [#allocation2], 816
      %v1817 = vld [vmem:[%s1816] sm:$0x80]
      %v1818 = vld [vmem:[%s1816 + $0x8] sm:$0xff]
      %v1819 = vld [vmem:[%s1816 + $0x10] sm:$0x80]
      %v1820 = vld [vmem:[%s1816 + $0x18] sm:$0xff]
      %v1821 = vld [vmem:[%s1816 + $0x20] sm:$0x80]
      %v1822 = vld [vmem:[%s1816 + $0x28] sm:$0xff]
      %v1823 = vld [vmem:[%s1816 + $0x30] sm:$0x80]
      %v1824 = vld [vmem:[%s1816 + $0x38] sm:$0xff]
      %v1825 = vld [vmem:[%s1816 + $0x40] sm:$0x80]
      %v1826 = vld [vmem:[%s1816 + $0x48] sm:$0xff]
      %v1827 = vld [vmem:[%s1816 + $0x50] sm:$0x80]
      %v1828 = vld [vmem:[%s1816 + $0x58] sm:$0xff]
      %v1829 = vld [vmem:[%s1816 + $0x60] sm:$0x80]
      %v1830 = vld [vmem:[%s1816 + $0x68] sm:$0xff]
      %v1831 = vld [vmem:[%s1816 + $0x70] sm:$0x80]
      %v1832 = vld [vmem:[%s1816 + $0x78] sm:$0xff]
      %v1833 = vld [vmem:[%s1816 + $0x80] sm:$0x80]
      %v1834 = vld [vmem:[%s1816 + $0x88] sm:$0xff]
      %v1835 = vld [vmem:[%s1816 + $0x90] sm:$0x80]
      %v1836 = vld [vmem:[%s1816 + $0x98] sm:$0xff]
      %v1837 = vld [vmem:[%s1816 + $0xa0] sm:$0x80]
      %v1838 = vld [vmem:[%s1816 + $0xa8] sm:$0xff]
      %v1839 = vld [vmem:[%s1816 + $0xb0] sm:$0x80]
      %v1840 = vld [vmem:[%s1816 + $0xb8] sm:$0xff]
      %v1841 = vld [vmem:[%s1816 + $0xc0] sm:$0x80]
      %v1842 = vld [vmem:[%s1816 + $0xc8] sm:$0xff]
      %v1843 = vld [vmem:[%s1816 + $0xd0] sm:$0x80]
      %v1844 = vld [vmem:[%s1816 + $0xd8] sm:$0xff]
      %v1845 = vld [vmem:[%s1816 + $0xe0] sm:$0x80]
      %v1846 = vld [vmem:[%s1816 + $0xe8] sm:$0xff]
      %v1847 = vld [vmem:[%s1816 + $0xf0] sm:$0x80]
      %v1848 = vld [vmem:[%s1816 + $0xf8] sm:$0xff]
      %v1849 = vsel %vm1814, 1, 0
      %v1850 = vsel %vm1815, 1, 0
      %vm1851 = vcmp.eq.s32.totalorder %v1849, 1
      %vm1852 = vcmp.eq.s32.totalorder %v1850, 1
      %vm1853 = vmpackc.low %vm1851, %vm1851
      %vm1854 = vmpackc.low %vm1852, %vm1852
      %v1855 = vsel %vm1853, 65537, 0
      %v1856 = vsel %vm1854, 65537, 0
      %v1857 = vunpack.c.l.b16 %v1855
      %v1858 = vunpack.c.l.b16 %v1856
      %v1859 = vpack.c.b16 %v1858, %v1857
      %v1861 = vshll.u32 %v1859, 16
      %v1863 = vrot.slane %v1861, 1
      %v1864 = vshrl.u32 %v1859, 16
      %v1866 = vor.u32 %v1864, %v1863
      %vm1867 = vcmp.ne.s16.totalorder %v1863, 0
      %vm1868 = vcmp.ne.s16.totalorder %v1866, 0
      %v1869 = vsel %vm1867, 0, %v1817
      %v1870 = vsel %vm1868, 0, %v1818
      %v1871 = vsel %vm1867, 0, %v1819
      %v1872 = vsel %vm1868, 0, %v1820
      %v1873 = vsel %vm1867, 0, %v1821
      %v1874 = vsel %vm1868, 0, %v1822
      %v1875 = vsel %vm1867, 0, %v1823
      %v1876 = vsel %vm1868, 0, %v1824
      %v1877 = vsel %vm1867, 0, %v1825
      %v1878 = vsel %vm1868, 0, %v1826
      %v1879 = vsel %vm1867, 0, %v1827
      %v1880 = vsel %vm1868, 0, %v1828
      %v1881 = vsel %vm1867, 0, %v1829
      %v1882 = vsel %vm1868, 0, %v1830
      %v1883 = vsel %vm1867, 0, %v1831
      %v1884 = vsel %vm1868, 0, %v1832
      %v1885 = vsel %vm1867, 0, %v1833
      %v1886 = vsel %vm1868, 0, %v1834
      %v1887 = vsel %vm1867, 0, %v1835
      %v1888 = vsel %vm1868, 0, %v1836
      %v1889 = vsel %vm1867, 0, %v1837
      %v1890 = vsel %vm1868, 0, %v1838
      %v1891 = vsel %vm1867, 0, %v1839
      %v1892 = vsel %vm1868, 0, %v1840
      %v1893 = vsel %vm1867, 0, %v1841
      %v1894 = vsel %vm1868, 0, %v1842
      %v1895 = vsel %vm1867, 0, %v1843
      %v1896 = vsel %vm1868, 0, %v1844
      %v1897 = vsel %vm1867, 0, %v1845
      %v1898 = vsel %vm1868, 0, %v1846
      %v1899 = vsel %vm1867, 0, %v1847
      %v1900 = vsel %vm1868, 0, %v1848
      %vm1901 = vsmask.f32 256
      %v1903 = vshrl.u32 %v1869, 16
      %v1905 = vrot.slane %v1903, 7
      %v1907 = vshrl.u32 %v1870, 16
      %v1909 = vrot.slane %v1907, 7
      %v1910 = vshll.u32 %v1870, 16
      %v1912 = vor.u32 %v1909, %v1910
      %v1913 = vsel %vm1901, %v1905, %v1912
      %v1915 = vshrl.u32 %v1871, 16
      %v1917 = vrot.slane %v1915, 7
      %v1919 = vshrl.u32 %v1872, 16
      %v1921 = vrot.slane %v1919, 7
      %v1922 = vshll.u32 %v1872, 16
      %v1924 = vor.u32 %v1921, %v1922
      %v1925 = vsel %vm1901, %v1917, %v1924
      %v1927 = vshrl.u32 %v1873, 16
      %v1929 = vrot.slane %v1927, 7
      %v1931 = vshrl.u32 %v1874, 16
      %v1933 = vrot.slane %v1931, 7
      %v1934 = vshll.u32 %v1874, 16
      %v1936 = vor.u32 %v1933, %v1934
      %v1937 = vsel %vm1901, %v1929, %v1936
      %v1939 = vshrl.u32 %v1875, 16
      %v1941 = vrot.slane %v1939, 7
      %v1943 = vshrl.u32 %v1876, 16
      %v1945 = vrot.slane %v1943, 7
      %v1946 = vshll.u32 %v1876, 16
      %v1948 = vor.u32 %v1945, %v1946
      %v1949 = vsel %vm1901, %v1941, %v1948
      %v1951 = vshrl.u32 %v1877, 16
      %v1953 = vrot.slane %v1951, 7
      %v1955 = vshrl.u32 %v1878, 16
      %v1957 = vrot.slane %v1955, 7
      %v1958 = vshll.u32 %v1878, 16
      %v1960 = vor.u32 %v1957, %v1958
      %v1961 = vsel %vm1901, %v1953, %v1960
      %v1963 = vshrl.u32 %v1879, 16
      %v1965 = vrot.slane %v1963, 7
      %v1967 = vshrl.u32 %v1880, 16
      %v1969 = vrot.slane %v1967, 7
      %v1970 = vshll.u32 %v1880, 16
      %v1972 = vor.u32 %v1969, %v1970
      %v1973 = vsel %vm1901, %v1965, %v1972
      %v1975 = vshrl.u32 %v1881, 16
      %v1977 = vrot.slane %v1975, 7
      %v1979 = vshrl.u32 %v1882, 16
      %v1981 = vrot.slane %v1979, 7
      %v1982 = vshll.u32 %v1882, 16
      %v1984 = vor.u32 %v1981, %v1982
      %v1985 = vsel %vm1901, %v1977, %v1984
      %v1987 = vshrl.u32 %v1883, 16
      %v1989 = vrot.slane %v1987, 7
      %v1991 = vshrl.u32 %v1884, 16
      %v1993 = vrot.slane %v1991, 7
      %v1994 = vshll.u32 %v1884, 16
      %v1996 = vor.u32 %v1993, %v1994
      %v1997 = vsel %vm1901, %v1989, %v1996
      %v1999 = vshrl.u32 %v1885, 16
      %v2001 = vrot.slane %v1999, 7
      %v2003 = vshrl.u32 %v1886, 16
      %v2005 = vrot.slane %v2003, 7
      %v2006 = vshll.u32 %v1886, 16
      %v2008 = vor.u32 %v2005, %v2006
      %v2009 = vsel %vm1901, %v2001, %v2008
      %v2011 = vshrl.u32 %v1887, 16
      %v2013 = vrot.slane %v2011, 7
      %v2015 = vshrl.u32 %v1888, 16
      %v2017 = vrot.slane %v2015, 7
      %v2018 = vshll.u32 %v1888, 16
      %v2020 = vor.u32 %v2017, %v2018
      %v2021 = vsel %vm1901, %v2013, %v2020
      %v2023 = vshrl.u32 %v1889, 16
      %v2025 = vrot.slane %v2023, 7
      %v2027 = vshrl.u32 %v1890, 16
      %v2029 = vrot.slane %v2027, 7
      %v2030 = vshll.u32 %v1890, 16
      %v2032 = vor.u32 %v2029, %v2030
      %v2033 = vsel %vm1901, %v2025, %v2032
      %v2035 = vshrl.u32 %v1891, 16
      %v2037 = vrot.slane %v2035, 7
      %v2039 = vshrl.u32 %v1892, 16
      %v2041 = vrot.slane %v2039, 7
      %v2042 = vshll.u32 %v1892, 16
      %v2044 = vor.u32 %v2041, %v2042
      %v2045 = vsel %vm1901, %v2037, %v2044
      %v2047 = vshrl.u32 %v1893, 16
      %v2049 = vrot.slane %v2047, 7
      %v2051 = vshrl.u32 %v1894, 16
      %v2053 = vrot.slane %v2051, 7
      %v2054 = vshll.u32 %v1894, 16
      %v2056 = vor.u32 %v2053, %v2054
      %v2057 = vsel %vm1901, %v2049, %v2056
      %v2059 = vshrl.u32 %v1895, 16
      %v2061 = vrot.slane %v2059, 7
      %v2063 = vshrl.u32 %v1896, 16
      %v2065 = vrot.slane %v2063, 7
      %v2066 = vshll.u32 %v1896, 16
      %v2068 = vor.u32 %v2065, %v2066
      %v2069 = vsel %vm1901, %v2061, %v2068
      %v2071 = vshrl.u32 %v1897, 16
      %v2073 = vrot.slane %v2071, 7
      %v2075 = vshrl.u32 %v1898, 16
      %v2077 = vrot.slane %v2075, 7
      %v2078 = vshll.u32 %v1898, 16
      %v2080 = vor.u32 %v2077, %v2078
      %v2081 = vsel %vm1901, %v2073, %v2080
      %v2083 = vshrl.u32 %v1899, 16
      %v2085 = vrot.slane %v2083, 7
      %v2087 = vshrl.u32 %v1900, 16
      %v2089 = vrot.slane %v2087, 7
      %v2090 = vshll.u32 %v1900, 16
      %v2092 = vor.u32 %v2089, %v2090
      %v2093 = vsel %vm1901, %v2085, %v2092
      %v2110 = vld [vmem:[%s3] sm:$0xf]
      %v2111 = vld [vmem:[%s3 + $0x4] sm:$0xf]
      %v2112 = vld [vmem:[%s3 + $0x8] sm:$0xf]
      %v2113 = vld [vmem:[%s3 + $0xc] sm:$0xf]
      %v2114 = vld [vmem:[%s3 + $0x10] sm:$0xf]
      %v2115 = vld [vmem:[%s3 + $0x14] sm:$0xf]
      %v2116 = vld [vmem:[%s3 + $0x18] sm:$0xf]
      %v2117 = vld [vmem:[%s3 + $0x1c] sm:$0xf]
      %v2118 = vld [vmem:[%s3 + $0x20] sm:$0xf]
      %v2119 = vld [vmem:[%s3 + $0x24] sm:$0xf]
      %v2120 = vld [vmem:[%s3 + $0x28] sm:$0xf]
      %v2121 = vld [vmem:[%s3 + $0x2c] sm:$0xf]
      %v2122 = vld [vmem:[%s3 + $0x30] sm:$0xf]
      %v2123 = vld [vmem:[%s3 + $0x34] sm:$0xf]
      %v2124 = vld [vmem:[%s3 + $0x38] sm:$0xf]
      %v2125 = vld [vmem:[%s3 + $0x3c] sm:$0xf]
      %s2126 = scalar_lea.vmem [#allocation2], 544
      %v2127 = vld [vmem:[%s2126 + $0x8] sm:$0xff]
      %v2128 = vld [vmem:[%s2126 + $0x18] sm:$0xff]
      %v2129 = vld [vmem:[%s2126 + $0x28] sm:$0xff]
      %v2130 = vld [vmem:[%s2126 + $0x38] sm:$0xff]
      %v2131 = vld [vmem:[%s2126 + $0x48] sm:$0xff]
      %v2132 = vld [vmem:[%s2126 + $0x58] sm:$0xff]
      %v2133 = vld [vmem:[%s2126 + $0x68] sm:$0xff]
      %v2134 = vld [vmem:[%s2126 + $0x78] sm:$0xff]
      %v2135 = vld [vmem:[%s2126 + $0x88] sm:$0xff]
      %v2136 = vld [vmem:[%s2126 + $0x98] sm:$0xff]
      %v2137 = vld [vmem:[%s2126 + $0xa8] sm:$0xff]
      %v2138 = vld [vmem:[%s2126 + $0xb8] sm:$0xff]
      %v2139 = vld [vmem:[%s2126 + $0xc8] sm:$0xff]
      %v2140 = vld [vmem:[%s2126 + $0xd8] sm:$0xff]
      %v2141 = vld [vmem:[%s2126 + $0xe8] sm:$0xff]
      %v2142 = vld [vmem:[%s2126 + $0xf8] sm:$0xff]
      %s2143 = scalar_lea.vmem %s3, 64
      %v2144 = vld [vmem:[%s2143] sm:$0xf]
      %v2145 = vld [vmem:[%s2143 + $0x4] sm:$0xf]
      %v2146 = vld [vmem:[%s2143 + $0x8] sm:$0xf]
      %v2147 = vld [vmem:[%s2143 + $0xc] sm:$0xf]
      %v2148 = vld [vmem:[%s2143 + $0x10] sm:$0xf]
      %v2149 = vld [vmem:[%s2143 + $0x14] sm:$0xf]
      %v2150 = vld [vmem:[%s2143 + $0x18] sm:$0xf]
      %v2151 = vld [vmem:[%s2143 + $0x1c] sm:$0xf]
      %v2152 = vld [vmem:[%s2143 + $0x20] sm:$0xf]
      %v2153 = vld [vmem:[%s2143 + $0x24] sm:$0xf]
      %v2154 = vld [vmem:[%s2143 + $0x28] sm:$0xf]
      %v2155 = vld [vmem:[%s2143 + $0x2c] sm:$0xf]
      %v2156 = vld [vmem:[%s2143 + $0x30] sm:$0xf]
      %v2157 = vld [vmem:[%s2143 + $0x34] sm:$0xf]
      %v2158 = vld [vmem:[%s2143 + $0x38] sm:$0xf]
      %v2159 = vld [vmem:[%s2143 + $0x3c] sm:$0xf]
      %v2176 = vunpack.c.l.b16 %v2144
      %v2177 = vunpack.c.l.b16 %v2145
      %v2178 = vunpack.c.l.b16 %v2146
      %v2179 = vunpack.c.l.b16 %v2147
      %v2180 = vunpack.c.l.b16 %v2148
      %v2181 = vunpack.c.l.b16 %v2149
      %v2182 = vunpack.c.l.b16 %v2150
      %v2183 = vunpack.c.l.b16 %v2151
      %v2184 = vunpack.c.l.b16 %v2152
      %v2185 = vunpack.c.l.b16 %v2153
      %v2186 = vunpack.c.l.b16 %v2154
      %v2187 = vunpack.c.l.b16 %v2155
      %v2188 = vunpack.c.l.b16 %v2156
      %v2189 = vunpack.c.l.b16 %v2157
      %v2190 = vunpack.c.l.b16 %v2158
      %v2191 = vunpack.c.l.b16 %v2159
      %v2192 = vpack.c.b16 %v2177, %v2176
      %v2193 = vpack.c.b16 %v2179, %v2178
      %v2194 = vpack.c.b16 %v2181, %v2180
      %v2195 = vpack.c.b16 %v2183, %v2182
      %v2196 = vpack.c.b16 %v2185, %v2184
      %v2197 = vpack.c.b16 %v2187, %v2186
      %v2198 = vpack.c.b16 %v2189, %v2188
      %v2199 = vpack.c.b16 %v2191, %v2190
      %2208 = vmatprep.subr.bf16.mxu0 0
      %2209 = vmatpush1.bf16.msra.mxu0 %v2192
      %2210 = vmatprep.subr.bf16.mxu0 0
      %2211 = vmatpush1.bf16.msra.mxu0 %v2193
      %2212 = vmatprep.subr.bf16.mxu0 0
      %2213 = vmatpush1.bf16.msra.mxu0 %v2194
      %2214 = vmatprep.subr.bf16.mxu0 0
      %2215 = vmatpush1.bf16.msra.mxu0 %v2195
      %2216 = vmatprep.subr.bf16.mxu0 0
      %2217 = vmatpush1.bf16.msra.mxu0 %v2196
      %2218 = vmatprep.subr.bf16.mxu0 0
      %2219 = vmatpush1.bf16.msra.mxu0 %v2197
      %2220 = vmatprep.subr.bf16.mxu0 0
      %2221 = vmatpush1.bf16.msra.mxu0 %v2198
      %2222 = vmatprep.subr.bf16.mxu0 0
      %2223 = vmatpush1.bf16.msra.mxu0 %v2199
      %2224 = vmatprep.subr.bf16.mxu0 0
      %2225 = vmatpush1.bf16.msra.mxu0 0
      %2226 = vmatprep.subr.bf16.mxu0 0
      %2227 = vmatpush1.bf16.msra.mxu0 0
      %2228 = vmatprep.subr.bf16.mxu0 0
      %2229 = vmatpush1.bf16.msra.mxu0 0
      %2230 = vmatprep.subr.bf16.mxu0 0
      %2231 = vmatpush1.bf16.msra.mxu0 0
      %2232 = vmatprep.subr.bf16.mxu0 0
      %2233 = vmatpush1.bf16.msra.mxu0 0
      %2234 = vmatprep.subr.bf16.mxu0 0
      %2235 = vmatpush1.bf16.msra.mxu0 0
      %2236 = vmatprep.subr.bf16.mxu0 0
      %2237 = vmatpush1.bf16.msra.mxu0 0
      %2238 = vmatprep.subr.bf16.mxu0 0
      %2239 = vmatpush1.bf16.msra.mxu0 0
      %2240 = vmatprep.mubr.bf16.mxu0 0
      %2241 = vmatmul.mubr.bf16.gmra.mrb[0].mxu0 %v2127
      %v2242 = vpop.f32.mrb[0].mxu0
      %v2243 = vadd.f32 0.0, %v2242
      %v2244 = vpop.f32.mrb[0].mxu0
      %v2245 = vpop.f32.mrb[0].mxu0
      %v2246 = vadd.f32 0.0, %v2245
      %v2247 = vpop.f32.mrb[0].mxu0
      %2248 = vmatprep.mubr.bf16.mxu0 0
      %2249 = vmatmul.mubr.bf16.gmra.mrb[0].mxu0 %v2128
      %v2250 = vpop.f32.mrb[0].mxu0
      %v2251 = vadd.f32 0.0, %v2250
      %v2252 = vpop.f32.mrb[0].mxu0
      %v2253 = vpop.f32.mrb[0].mxu0
      %v2254 = vadd.f32 0.0, %v2253
      %v2255 = vpop.f32.mrb[0].mxu0
      %2256 = vmatprep.mubr.bf16.mxu0 0
      %2257 = vmatmul.mubr.bf16.gmra.mrb[0].mxu0 %v2129
      %v2258 = vpop.f32.mrb[0].mxu0
      %v2259 = vadd.f32 0.0, %v2258
      %v2260 = vpop.f32.mrb[0].mxu0
      %v2261 = vpop.f32.mrb[0].mxu0
      %v2262 = vadd.f32 0.0, %v2261
      %v2263 = vpop.f32.mrb[0].mxu0
      %2264 = vmatprep.mubr.bf16.mxu0 0
      %2265 = vmatmul.mubr.bf16.gmra.mrb[0].mxu0 %v2130
      %v2266 = vpop.f32.mrb[0].mxu0
      %v2267 = vadd.f32 0.0, %v2266
      %v2268 = vpop.f32.mrb[0].mxu0
      %v2269 = vpop.f32.mrb[0].mxu0
      %v2270 = vadd.f32 0.0, %v2269
      %v2271 = vpop.f32.mrb[0].mxu0
      %2272 = vmatprep.mubr.bf16.mxu0 0
      %2273 = vmatmul.mubr.bf16.gmra.mrb[0].mxu0 %v2131
      %v2274 = vpop.f32.mrb[0].mxu0
      %v2275 = vadd.f32 0.0, %v2274
      %v2276 = vpop.f32.mrb[0].mxu0
      %v2277 = vpop.f32.mrb[0].mxu0
      %v2278 = vadd.f32 0.0, %v2277
      %v2279 = vpop.f32.mrb[0].mxu0
      %2280 = vmatprep.mubr.bf16.mxu0 0
      %2281 = vmatmul.mubr.bf16.gmra.mrb[0].mxu0 %v2132
      %v2282 = vpop.f32.mrb[0].mxu0
      %v2283 = vadd.f32 0.0, %v2282
      %v2284 = vpop.f32.mrb[0].mxu0
      %v2285 = vpop.f32.mrb[0].mxu0
      %v2286 = vadd.f32 0.0, %v2285
      %v2287 = vpop.f32.mrb[0].mxu0
      %2288 = vmatprep.mubr.bf16.mxu0 0
      %2289 = vmatmul.mubr.bf16.gmra.mrb[0].mxu0 %v2133
      %v2290 = vpop.f32.mrb[0].mxu0
      %v2291 = vadd.f32 0.0, %v2290
      %v2292 = vpop.f32.mrb[0].mxu0
      %v2293 = vpop.f32.mrb[0].mxu0
      %v2294 = vadd.f32 0.0, %v2293
      %v2295 = vpop.f32.mrb[0].mxu0
      %2296 = vmatprep.mubr.bf16.mxu0 0
      %2297 = vmatmul.mubr.bf16.gmra.mrb[0].mxu0 %v2134
      %v2298 = vpop.f32.mrb[0].mxu0
      %v2299 = vadd.f32 0.0, %v2298
      %v2300 = vpop.f32.mrb[0].mxu0
      %v2301 = vpop.f32.mrb[0].mxu0
      %v2302 = vadd.f32 0.0, %v2301
      %v2303 = vpop.f32.mrb[0].mxu0
      %2304 = vmatprep.mubr.bf16.mxu0 0
      %2305 = vmatmul.mubr.bf16.gmra.mrb[0].mxu0 %v2135
      %v2306 = vpop.f32.mrb[0].mxu0
      %v2307 = vadd.f32 0.0, %v2306
      %v2308 = vpop.f32.mrb[0].mxu0
      %v2309 = vpop.f32.mrb[0].mxu0
      %v2310 = vadd.f32 0.0, %v2309
      %v2311 = vpop.f32.mrb[0].mxu0
      %2312 = vmatprep.mubr.bf16.mxu0 0
      %2313 = vmatmul.mubr.bf16.gmra.mrb[0].mxu0 %v2136
      %v2314 = vpop.f32.mrb[0].mxu0
      %v2315 = vadd.f32 0.0, %v2314
      %v2316 = vpop.f32.mrb[0].mxu0
      %v2317 = vpop.f32.mrb[0].mxu0
      %v2318 = vadd.f32 0.0, %v2317
      %v2319 = vpop.f32.mrb[0].mxu0
      %2320 = vmatprep.mubr.bf16.mxu0 0
      %2321 = vmatmul.mubr.bf16.gmra.mrb[0].mxu0 %v2137
      %v2322 = vpop.f32.mrb[0].mxu0
      %v2323 = vadd.f32 0.0, %v2322
      %v2324 = vpop.f32.mrb[0].mxu0
      %v2325 = vpop.f32.mrb[0].mxu0
      %v2326 = vadd.f32 0.0, %v2325
      %v2327 = vpop.f32.mrb[0].mxu0
      %2328 = vmatprep.mubr.bf16.mxu0 0
      %2329 = vmatmul.mubr.bf16.gmra.mrb[0].mxu0 %v2138
      %v2330 = vpop.f32.mrb[0].mxu0
      %v2331 = vadd.f32 0.0, %v2330
      %v2332 = vpop.f32.mrb[0].mxu0
      %v2333 = vpop.f32.mrb[0].mxu0
      %v2334 = vadd.f32 0.0, %v2333
      %v2335 = vpop.f32.mrb[0].mxu0
      %2336 = vmatprep.mubr.bf16.mxu0 0
      %2337 = vmatmul.mubr.bf16.gmra.mrb[0].mxu0 %v2139
      %v2338 = vpop.f32.mrb[0].mxu0
      %v2339 = vadd.f32 0.0, %v2338
      %v2340 = vpop.f32.mrb[0].mxu0
      %v2341 = vpop.f32.mrb[0].mxu0
      %v2342 = vadd.f32 0.0, %v2341
      %v2343 = vpop.f32.mrb[0].mxu0
      %2344 = vmatprep.mubr.bf16.mxu0 0
      %2345 = vmatmul.mubr.bf16.gmra.mrb[0].mxu0 %v2140
      %v2346 = vpop.f32.mrb[0].mxu0
      %v2347 = vadd.f32 0.0, %v2346
      %v2348 = vpop.f32.mrb[0].mxu0
      %v2349 = vpop.f32.mrb[0].mxu0
      %v2350 = vadd.f32 0.0, %v2349
      %v2351 = vpop.f32.mrb[0].mxu0
      %2352 = vmatprep.mubr.bf16.mxu0 0
      %2353 = vmatmul.mubr.bf16.gmra.mrb[0].mxu0 %v2141
      %v2354 = vpop.f32.mrb[0].mxu0
      %v2355 = vadd.f32 0.0, %v2354
      %v2356 = vpop.f32.mrb[0].mxu0
      %v2357 = vpop.f32.mrb[0].mxu0
      %v2358 = vadd.f32 0.0, %v2357
      %v2359 = vpop.f32.mrb[0].mxu0
      %2360 = vmatprep.mubr.bf16.mxu0 0
      %2361 = vmatmul.mubr.bf16.gmra.mrb[0].mxu0 %v2142
      %v2362 = vpop.f32.mrb[0].mxu0
      %v2363 = vadd.f32 0.0, %v2362
      %v2364 = vpop.f32.mrb[0].mxu0
      %v2365 = vpop.f32.mrb[0].mxu0
      %v2366 = vadd.f32 0.0, %v2365
      %v2367 = vpop.f32.mrb[0].mxu0
      %2368 = vdwg.mxu0
      %v2385 = vunpack.c.l.b16 %v2110
      %v2386 = vunpack.c.l.b16 %v2111
      %v2387 = vunpack.c.l.b16 %v2112
      %v2388 = vunpack.c.l.b16 %v2113
      %v2389 = vunpack.c.l.b16 %v2114
      %v2390 = vunpack.c.l.b16 %v2115
      %v2391 = vunpack.c.l.b16 %v2116
      %v2392 = vunpack.c.l.b16 %v2117
      %v2393 = vunpack.c.l.b16 %v2118
      %v2394 = vunpack.c.l.b16 %v2119
      %v2395 = vunpack.c.l.b16 %v2120
      %v2396 = vunpack.c.l.b16 %v2121
      %v2397 = vunpack.c.l.b16 %v2122
      %v2398 = vunpack.c.l.b16 %v2123
      %v2399 = vunpack.c.l.b16 %v2124
      %v2400 = vunpack.c.l.b16 %v2125
      %v2401 = vpack.c.b16 %v2386, %v2385
      %v2402 = vpack.c.b16 %v2388, %v2387
      %v2403 = vpack.c.b16 %v2390, %v2389
      %v2404 = vpack.c.b16 %v2392, %v2391
      %v2405 = vpack.c.b16 %v2394, %v2393
      %v2406 = vpack.c.b16 %v2396, %v2395
      %v2407 = vpack.c.b16 %v2398, %v2397
      %v2408 = vpack.c.b16 %v2400, %v2399
      %2417 = vmatprep.subr.bf16.mxu0 0
      %2418 = vmatpush1.bf16.msra.mxu0 %v2401
      %2419 = vmatprep.subr.bf16.mxu0 0
      %2420 = vmatpush1.bf16.msra.mxu0 %v2402
      %2421 = vmatprep.subr.bf16.mxu0 0
      %2422 = vmatpush1.bf16.msra.mxu0 %v2403
      %2423 = vmatprep.subr.bf16.mxu0 0
      %2424 = vmatpush1.bf16.msra.mxu0 %v2404
      %2425 = vmatprep.subr.bf16.mxu0 0
      %2426 = vmatpush1.bf16.msra.mxu0 %v2405
      %2427 = vmatprep.subr.bf16.mxu0 0
      %2428 = vmatpush1.bf16.msra.mxu0 %v2406
      %2429 = vmatprep.subr.bf16.mxu0 0
      %2430 = vmatpush1.bf16.msra.mxu0 %v2407
      %2431 = vmatprep.subr.bf16.mxu0 0
      %2432 = vmatpush1.bf16.msra.mxu0 %v2408
      %2433 = vmatprep.subr.bf16.mxu0 0
      %2434 = vmatpush1.bf16.msra.mxu0 0
      %2435 = vmatprep.subr.bf16.mxu0 0
      %2436 = vmatpush1.bf16.msra.mxu0 0
      %2437 = vmatprep.subr.bf16.mxu0 0
      %2438 = vmatpush1.bf16.msra.mxu0 0
      %2439 = vmatprep.subr.bf16.mxu0 0
      %2440 = vmatpush1.bf16.msra.mxu0 0
      %2441 = vmatprep.subr.bf16.mxu0 0
      %2442 = vmatpush1.bf16.msra.mxu0 0
      %2443 = vmatprep.subr.bf16.mxu0 0
      %2444 = vmatpush1.bf16.msra.mxu0 0
      %2445 = vmatprep.subr.bf16.mxu0 0
      %2446 = vmatpush1.bf16.msra.mxu0 0
      %2447 = vmatprep.subr.bf16.mxu0 0
      %2448 = vmatpush1.bf16.msra.mxu0 0
      %2449 = vmatprep.mubr.bf16.mxu0 0
      %2450 = vmatmul.mubr.bf16.gmra.mrb[0].mxu0 %v1913
      %v2451 = vpop.f32.mrb[0].mxu0
      %v2452 = vadd.f32 %v2243, %v2451
      %v2453 = vpop.f32.mrb[0].mxu0
      %v2454 = vpop.f32.mrb[0].mxu0
      %v2455 = vadd.f32 %v2246, %v2454
      %v2456 = vpop.f32.mrb[0].mxu0
      %2457 = vmatprep.mubr.bf16.mxu0 0
      %2458 = vmatmul.mubr.bf16.gmra.mrb[0].mxu0 %v1925
      %v2459 = vpop.f32.mrb[0].mxu0
      %v2460 = vadd.f32 %v2251, %v2459
      %v2461 = vpop.f32.mrb[0].mxu0
      %v2462 = vpop.f32.mrb[0].mxu0
      %v2463 = vadd.f32 %v2254, %v2462
      %v2464 = vpop.f32.mrb[0].mxu0
      %2465 = vmatprep.mubr.bf16.mxu0 0
      %2466 = vmatmul.mubr.bf16.gmra.mrb[0].mxu0 %v1937
      %v2467 = vpop.f32.mrb[0].mxu0
      %v2468 = vadd.f32 %v2259, %v2467
      %v2469 = vpop.f32.mrb[0].mxu0
      %v2470 = vpop.f32.mrb[0].mxu0
      %v2471 = vadd.f32 %v2262, %v2470
      %v2472 = vpop.f32.mrb[0].mxu0
      %2473 = vmatprep.mubr.bf16.mxu0 0
      %2474 = vmatmul.mubr.bf16.gmra.mrb[0].mxu0 %v1949
      %v2475 = vpop.f32.mrb[0].mxu0
      %v2476 = vadd.f32 %v2267, %v2475
      %v2477 = vpop.f32.mrb[0].mxu0
      %v2478 = vpop.f32.mrb[0].mxu0
      %v2479 = vadd.f32 %v2270, %v2478
      %v2480 = vpop.f32.mrb[0].mxu0
      %2481 = vmatprep.mubr.bf16.mxu0 0
      %2482 = vmatmul.mubr.bf16.gmra.mrb[0].mxu0 %v1961
      %v2483 = vpop.f32.mrb[0].mxu0
      %v2484 = vadd.f32 %v2275, %v2483
      %v2485 = vpop.f32.mrb[0].mxu0
      %v2486 = vpop.f32.mrb[0].mxu0
      %v2487 = vadd.f32 %v2278, %v2486
      %v2488 = vpop.f32.mrb[0].mxu0
      %2489 = vmatprep.mubr.bf16.mxu0 0
      %2490 = vmatmul.mubr.bf16.gmra.mrb[0].mxu0 %v1973
      %v2491 = vpop.f32.mrb[0].mxu0
      %v2492 = vadd.f32 %v2283, %v2491
      %v2493 = vpop.f32.mrb[0].mxu0
      %v2494 = vpop.f32.mrb[0].mxu0
      %v2495 = vadd.f32 %v2286, %v2494
      %v2496 = vpop.f32.mrb[0].mxu0
      %2497 = vmatprep.mubr.bf16.mxu0 0
      %2498 = vmatmul.mubr.bf16.gmra.mrb[0].mxu0 %v1985
      %v2499 = vpop.f32.mrb[0].mxu0
      %v2500 = vadd.f32 %v2291, %v2499
      %v2501 = vpop.f32.mrb[0].mxu0
      %v2502 = vpop.f32.mrb[0].mxu0
      %v2503 = vadd.f32 %v2294, %v2502
      %v2504 = vpop.f32.mrb[0].mxu0
      %2505 = vmatprep.mubr.bf16.mxu0 0
      %2506 = vmatmul.mubr.bf16.gmra.mrb[0].mxu0 %v1997
      %v2507 = vpop.f32.mrb[0].mxu0
      %v2508 = vadd.f32 %v2299, %v2507
      %v2509 = vpop.f32.mrb[0].mxu0
      %v2510 = vpop.f32.mrb[0].mxu0
      %v2511 = vadd.f32 %v2302, %v2510
      %v2512 = vpop.f32.mrb[0].mxu0
      %2513 = vmatprep.mubr.bf16.mxu0 0
      %2514 = vmatmul.mubr.bf16.gmra.mrb[0].mxu0 %v2009
      %v2515 = vpop.f32.mrb[0].mxu0
      %v2516 = vadd.f32 %v2307, %v2515
      %v2517 = vpop.f32.mrb[0].mxu0
      %v2518 = vpop.f32.mrb[0].mxu0
      %v2519 = vadd.f32 %v2310, %v2518
      %v2520 = vpop.f32.mrb[0].mxu0
      %2521 = vmatprep.mubr.bf16.mxu0 0
      %2522 = vmatmul.mubr.bf16.gmra.mrb[0].mxu0 %v2021
      %v2523 = vpop.f32.mrb[0].mxu0
      %v2524 = vadd.f32 %v2315, %v2523
      %v2525 = vpop.f32.mrb[0].mxu0
      %v2526 = vpop.f32.mrb[0].mxu0
      %v2527 = vadd.f32 %v2318, %v2526
      %v2528 = vpop.f32.mrb[0].mxu0
      %2529 = vmatprep.mubr.bf16.mxu0 0
      %2530 = vmatmul.mubr.bf16.gmra.mrb[0].mxu0 %v2033
      %v2531 = vpop.f32.mrb[0].mxu0
      %v2532 = vadd.f32 %v2323, %v2531
      %v2533 = vpop.f32.mrb[0].mxu0
      %v2534 = vpop.f32.mrb[0].mxu0
      %v2535 = vadd.f32 %v2326, %v2534
      %v2536 = vpop.f32.mrb[0].mxu0
      %2537 = vmatprep.mubr.bf16.mxu0 0
      %2538 = vmatmul.mubr.bf16.gmra.mrb[0].mxu0 %v2045
      %v2539 = vpop.f32.mrb[0].mxu0
      %v2540 = vadd.f32 %v2331, %v2539
      %v2541 = vpop.f32.mrb[0].mxu0
      %v2542 = vpop.f32.mrb[0].mxu0
      %v2543 = vadd.f32 %v2334, %v2542
      %v2544 = vpop.f32.mrb[0].mxu0
      %2545 = vmatprep.mubr.bf16.mxu0 0
      %2546 = vmatmul.mubr.bf16.gmra.mrb[0].mxu0 %v2057
      %v2547 = vpop.f32.mrb[0].mxu0
      %v2548 = vadd.f32 %v2339, %v2547
      %v2549 = vpop.f32.mrb[0].mxu0
      %v2550 = vpop.f32.mrb[0].mxu0
      %v2551 = vadd.f32 %v2342, %v2550
      %v2552 = vpop.f32.mrb[0].mxu0
      %2553 = vmatprep.mubr.bf16.mxu0 0
      %2554 = vmatmul.mubr.bf16.gmra.mrb[0].mxu0 %v2069
      %v2555 = vpop.f32.mrb[0].mxu0
      %v2556 = vadd.f32 %v2347, %v2555
      %v2557 = vpop.f32.mrb[0].mxu0
      %v2558 = vpop.f32.mrb[0].mxu0
      %v2559 = vadd.f32 %v2350, %v2558
      %v2560 = vpop.f32.mrb[0].mxu0
      %2561 = vmatprep.mubr.bf16.mxu0 0
      %2562 = vmatmul.mubr.bf16.gmra.mrb[0].mxu0 %v2081
      %v2563 = vpop.f32.mrb[0].mxu0
      %v2564 = vadd.f32 %v2355, %v2563
      %v2565 = vpop.f32.mrb[0].mxu0
      %v2566 = vpop.f32.mrb[0].mxu0
      %v2567 = vadd.f32 %v2358, %v2566
      %v2568 = vpop.f32.mrb[0].mxu0
      %2569 = vmatprep.mubr.bf16.mxu0 0
      %2570 = vmatmul.mubr.bf16.gmra.mrb[0].mxu0 %v2093
      %v2571 = vpop.f32.mrb[0].mxu0
      %v2572 = vadd.f32 %v2363, %v2571
      %v2573 = vpop.f32.mrb[0].mxu0
      %v2574 = vpop.f32.mrb[0].mxu0
      %v2575 = vadd.f32 %v2366, %v2574
      %v2576 = vpop.f32.mrb[0].mxu0
      %2577 = vdwg.mxu0
      %s2578 = scalar_lea.vmem %s3, 128
      %v2579 = vld [vmem:[%s2578] sm:$0xf]
      %v2580 = vld [vmem:[%s2578 + $0x4] sm:$0xf]
      %v2581 = vld [vmem:[%s2578 + $0x8] sm:$0xf]
      %v2582 = vld [vmem:[%s2578 + $0xc] sm:$0xf]
      %v2583 = vld [vmem:[%s2578 + $0x10] sm:$0xf]
      %v2584 = vld [vmem:[%s2578 + $0x14] sm:$0xf]
      %v2585 = vld [vmem:[%s2578 + $0x18] sm:$0xf]
      %v2586 = vld [vmem:[%s2578 + $0x1c] sm:$0xf]
      %v2587 = vld [vmem:[%s2578 + $0x20] sm:$0xf]
      %v2588 = vld [vmem:[%s2578 + $0x24] sm:$0xf]
      %v2589 = vld [vmem:[%s2578 + $0x28] sm:$0xf]
      %v2590 = vld [vmem:[%s2578 + $0x2c] sm:$0xf]
      %v2591 = vld [vmem:[%s2578 + $0x30] sm:$0xf]
      %v2592 = vld [vmem:[%s2578 + $0x34] sm:$0xf]
      %v2593 = vld [vmem:[%s2578 + $0x38] sm:$0xf]
      %v2594 = vld [vmem:[%s2578 + $0x3c] sm:$0xf]
      %v2611 = vunpack.c.l.b16 %v2579
      %v2612 = vunpack.c.l.b16 %v2580
      %v2613 = vunpack.c.l.b16 %v2581
      %v2614 = vunpack.c.l.b16 %v2582
      %v2615 = vunpack.c.l.b16 %v2583
      %v2616 = vunpack.c.l.b16 %v2584
      %v2617 = vunpack.c.l.b16 %v2585
      %v2618 = vunpack.c.l.b16 %v2586
      %v2619 = vunpack.c.l.b16 %v2587
      %v2620 = vunpack.c.l.b16 %v2588
      %v2621 = vunpack.c.l.b16 %v2589
      %v2622 = vunpack.c.l.b16 %v2590
      %v2623 = vunpack.c.l.b16 %v2591
      %v2624 = vunpack.c.l.b16 %v2592
      %v2625 = vunpack.c.l.b16 %v2593
      %v2626 = vunpack.c.l.b16 %v2594
      %v2627 = vpack.c.b16 %v2612, %v2611
      %v2628 = vpack.c.b16 %v2614, %v2613
      %v2629 = vpack.c.b16 %v2616, %v2615
      %v2630 = vpack.c.b16 %v2618, %v2617
      %v2631 = vpack.c.b16 %v2620, %v2619
      %v2632 = vpack.c.b16 %v2622, %v2621
      %v2633 = vpack.c.b16 %v2624, %v2623
      %v2634 = vpack.c.b16 %v2626, %v2625
      %2643 = vmatprep.subr.bf16.mxu0 0
      %2644 = vmatpush1.bf16.msra.mxu0 %v2627
      %2645 = vmatprep.subr.bf16.mxu0 0
      %2646 = vmatpush1.bf16.msra.mxu0 %v2628
      %2647 = vmatprep.subr.bf16.mxu0 0
      %2648 = vmatpush1.bf16.msra.mxu0 %v2629
      %2649 = vmatprep.subr.bf16.mxu0 0
      %2650 = vmatpush1.bf16.msra.mxu0 %v2630
      %2651 = vmatprep.subr.bf16.mxu0 0
      %2652 = vmatpush1.bf16.msra.mxu0 %v2631
      %2653 = vmatprep.subr.bf16.mxu0 0
      %2654 = vmatpush1.bf16.msra.mxu0 %v2632
      %2655 = vmatprep.subr.bf16.mxu0 0
      %2656 = vmatpush1.bf16.msra.mxu0 %v2633
      %2657 = vmatprep.subr.bf16.mxu0 0
      %2658 = vmatpush1.bf16.msra.mxu0 %v2634
      %2659 = vmatprep.subr.bf16.mxu0 0
      %2660 = vmatpush1.bf16.msra.mxu0 0
      %2661 = vmatprep.subr.bf16.mxu0 0
      %2662 = vmatpush1.bf16.msra.mxu0 0
      %2663 = vmatprep.subr.bf16.mxu0 0
      %2664 = vmatpush1.bf16.msra.mxu0 0
      %2665 = vmatprep.subr.bf16.mxu0 0
      %2666 = vmatpush1.bf16.msra.mxu0 0
      %2667 = vmatprep.subr.bf16.mxu0 0
      %2668 = vmatpush1.bf16.msra.mxu0 0
      %2669 = vmatprep.subr.bf16.mxu0 0
      %2670 = vmatpush1.bf16.msra.mxu0 0
      %2671 = vmatprep.subr.bf16.mxu0 0
      %2672 = vmatpush1.bf16.msra.mxu0 0
      %2673 = vmatprep.subr.bf16.mxu0 0
      %2674 = vmatpush1.bf16.msra.mxu0 0
      %2675 = vmatprep.mubr.bf16.mxu0 0
      %2676 = vmatmul.mubr.bf16.gmra.mrb[0].mxu0 %v1818
      %v2677 = vpop.f32.mrb[0].mxu0
      %v2678 = vadd.f32 0.0, %v2677
      %v2679 = vpop.f32.mrb[0].mxu0
      %v2680 = vpop.f32.mrb[0].mxu0
      %v2681 = vadd.f32 0.0, %v2680
      %v2682 = vpop.f32.mrb[0].mxu0
      %2683 = vmatprep.mubr.bf16.mxu0 0
      %2684 = vmatmul.mubr.bf16.gmra.mrb[0].mxu0 %v1820
      %v2685 = vpop.f32.mrb[0].mxu0
      %v2686 = vadd.f32 0.0, %v2685
      %v2687 = vpop.f32.mrb[0].mxu0
      %v2688 = vpop.f32.mrb[0].mxu0
      %v2689 = vadd.f32 0.0, %v2688
      %v2690 = vpop.f32.mrb[0].mxu0
      %2691 = vmatprep.mubr.bf16.mxu0 0
      %2692 = vmatmul.mubr.bf16.gmra.mrb[0].mxu0 %v1822
      %v2693 = vpop.f32.mrb[0].mxu0
      %v2694 = vadd.f32 0.0, %v2693
      %v2695 = vpop.f32.mrb[0].mxu0
      %v2696 = vpop.f32.mrb[0].mxu0
      %v2697 = vadd.f32 0.0, %v2696
      %v2698 = vpop.f32.mrb[0].mxu0
      %2699 = vmatprep.mubr.bf16.mxu0 0
      %2700 = vmatmul.mubr.bf16.gmra.mrb[0].mxu0 %v1824
      %v2701 = vpop.f32.mrb[0].mxu0
      %v2702 = vadd.f32 0.0, %v2701
      %v2703 = vpop.f32.mrb[0].mxu0
      %v2704 = vpop.f32.mrb[0].mxu0
      %v2705 = vadd.f32 0.0, %v2704
      %v2706 = vpop.f32.mrb[0].mxu0
      %2707 = vmatprep.mubr.bf16.mxu0 0
      %2708 = vmatmul.mubr.bf16.gmra.mrb[0].mxu0 %v1826
      %v2709 = vpop.f32.mrb[0].mxu0
      %v2710 = vadd.f32 0.0, %v2709
      %v2711 = vpop.f32.mrb[0].mxu0
      %v2712 = vpop.f32.mrb[0].mxu0
      %v2713 = vadd.f32 0.0, %v2712
      %v2714 = vpop.f32.mrb[0].mxu0
      %2715 = vmatprep.mubr.bf16.mxu0 0
      %2716 = vmatmul.mubr.bf16.gmra.mrb[0].mxu0 %v1828
      %v2717 = vpop.f32.mrb[0].mxu0
      %v2718 = vadd.f32 0.0, %v2717
      %v2719 = vpop.f32.mrb[0].mxu0
      %v2720 = vpop.f32.mrb[0].mxu0
      %v2721 = vadd.f32 0.0, %v2720
      %v2722 = vpop.f32.mrb[0].mxu0
      %2723 = vmatprep.mubr.bf16.mxu0 0
      %2724 = vmatmul.mubr.bf16.gmra.mrb[0].mxu0 %v1830
      %v2725 = vpop.f32.mrb[0].mxu0
      %v2726 = vadd.f32 0.0, %v2725
      %v2727 = vpop.f32.mrb[0].mxu0
      %v2728 = vpop.f32.mrb[0].mxu0
      %v2729 = vadd.f32 0.0, %v2728
      %v2730 = vpop.f32.mrb[0].mxu0
      %2731 = vmatprep.mubr.bf16.mxu0 0
      %2732 = vmatmul.mubr.bf16.gmra.mrb[0].mxu0 %v1832
      %v2733 = vpop.f32.mrb[0].mxu0
      %v2734 = vadd.f32 0.0, %v2733
      %v2735 = vpop.f32.mrb[0].mxu0
      %v2736 = vpop.f32.mrb[0].mxu0
      %v2737 = vadd.f32 0.0, %v2736
      %v2738 = vpop.f32.mrb[0].mxu0
      %2739 = vmatprep.mubr.bf16.mxu0 0
      %2740 = vmatmul.mubr.bf16.gmra.mrb[0].mxu0 %v1834
      %v2741 = vpop.f32.mrb[0].mxu0
      %v2742 = vadd.f32 0.0, %v2741
      %v2743 = vpop.f32.mrb[0].mxu0
      %v2744 = vpop.f32.mrb[0].mxu0
      %v2745 = vadd.f32 0.0, %v2744
      %v2746 = vpop.f32.mrb[0].mxu0
      %2747 = vmatprep.mubr.bf16.mxu0 0
      %2748 = vmatmul.mubr.bf16.gmra.mrb[0].mxu0 %v1836
      %v2749 = vpop.f32.mrb[0].mxu0
      %v2750 = vadd.f32 0.0, %v2749
      %v2751 = vpop.f32.mrb[0].mxu0
      %v2752 = vpop.f32.mrb[0].mxu0
      %v2753 = vadd.f32 0.0, %v2752
      %v2754 = vpop.f32.mrb[0].mxu0
      %2755 = vmatprep.mubr.bf16.mxu0 0
      %2756 = vmatmul.mubr.bf16.gmra.mrb[0].mxu0 %v1838
      %v2757 = vpop.f32.mrb[0].mxu0
      %v2758 = vadd.f32 0.0, %v2757
      %v2759 = vpop.f32.mrb[0].mxu0
      %v2760 = vpop.f32.mrb[0].mxu0
      %v2761 = vadd.f32 0.0, %v2760
      %v2762 = vpop.f32.mrb[0].mxu0
      %2763 = vmatprep.mubr.bf16.mxu0 0
      %2764 = vmatmul.mubr.bf16.gmra.mrb[0].mxu0 %v1840
      %v2765 = vpop.f32.mrb[0].mxu0
      %v2766 = vadd.f32 0.0, %v2765
      %v2767 = vpop.f32.mrb[0].mxu0
      %v2768 = vpop.f32.mrb[0].mxu0
      %v2769 = vadd.f32 0.0, %v2768
      %v2770 = vpop.f32.mrb[0].mxu0
      %2771 = vmatprep.mubr.bf16.mxu0 0
      %2772 = vmatmul.mubr.bf16.gmra.mrb[0].mxu0 %v1842
      %v2773 = vpop.f32.mrb[0].mxu0
      %v2774 = vadd.f32 0.0, %v2773
      %v2775 = vpop.f32.mrb[0].mxu0
      %v2776 = vpop.f32.mrb[0].mxu0
      %v2777 = vadd.f32 0.0, %v2776
      %v2778 = vpop.f32.mrb[0].mxu0
      %2779 = vmatprep.mubr.bf16.mxu0 0
      %2780 = vmatmul.mubr.bf16.gmra.mrb[0].mxu0 %v1844
      %v2781 = vpop.f32.mrb[0].mxu0
      %v2782 = vadd.f32 0.0, %v2781
      %v2783 = vpop.f32.mrb[0].mxu0
      %v2784 = vpop.f32.mrb[0].mxu0
      %v2785 = vadd.f32 0.0, %v2784
      %v2786 = vpop.f32.mrb[0].mxu0
      %2787 = vmatprep.mubr.bf16.mxu0 0
      %2788 = vmatmul.mubr.bf16.gmra.mrb[0].mxu0 %v1846
      %v2789 = vpop.f32.mrb[0].mxu0
      %v2790 = vadd.f32 0.0, %v2789
      %v2791 = vpop.f32.mrb[0].mxu0
      %v2792 = vpop.f32.mrb[0].mxu0
      %v2793 = vadd.f32 0.0, %v2792
      %v2794 = vpop.f32.mrb[0].mxu0
      %2795 = vmatprep.mubr.bf16.mxu0 0
      %2796 = vmatmul.mubr.bf16.gmra.mrb[0].mxu0 %v1848
      %v2797 = vpop.f32.mrb[0].mxu0
      %v2798 = vadd.f32 0.0, %v2797
      %v2799 = vpop.f32.mrb[0].mxu0
      %v2800 = vpop.f32.mrb[0].mxu0
      %v2801 = vadd.f32 0.0, %v2800
      %v2802 = vpop.f32.mrb[0].mxu0
      %2803 = vdwg.mxu0
      %v2804 = vadd.f32 %v2452, %v2678
      %v2805 = vadd.f32 %v2455, %v2681
      %v2806 = vadd.f32 %v2460, %v2686
      %v2807 = vadd.f32 %v2463, %v2689
      %v2808 = vadd.f32 %v2468, %v2694
      %v2809 = vadd.f32 %v2471, %v2697
      %v2810 = vadd.f32 %v2476, %v2702
      %v2811 = vadd.f32 %v2479, %v2705
      %v2812 = vadd.f32 %v2484, %v2710
      %v2813 = vadd.f32 %v2487, %v2713
      %v2814 = vadd.f32 %v2492, %v2718
      %v2815 = vadd.f32 %v2495, %v2721
      %v2816 = vadd.f32 %v2500, %v2726
      %v2817 = vadd.f32 %v2503, %v2729
      %v2818 = vadd.f32 %v2508, %v2734
      %v2819 = vadd.f32 %v2511, %v2737
      %v2820 = vadd.f32 %v2516, %v2742
      %v2821 = vadd.f32 %v2519, %v2745
      %v2822 = vadd.f32 %v2524, %v2750
      %v2823 = vadd.f32 %v2527, %v2753
      %v2824 = vadd.f32 %v2532, %v2758
      %v2825 = vadd.f32 %v2535, %v2761
      %v2826 = vadd.f32 %v2540, %v2766
      %v2827 = vadd.f32 %v2543, %v2769
      %v2828 = vadd.f32 %v2548, %v2774
      %v2829 = vadd.f32 %v2551, %v2777
      %v2830 = vadd.f32 %v2556, %v2782
      %v2831 = vadd.f32 %v2559, %v2785
      %v2832 = vadd.f32 %v2564, %v2790
      %v2833 = vadd.f32 %v2567, %v2793
      %v2834 = vadd.f32 %v2572, %v2798
      %v2835 = vadd.f32 %v2575, %v2801
      %v2836 = vld [vmem:[%s1020] sm:$0x80]
      %v2837 = vld [vmem:[%s1020 + $0x8] sm:$0xff]
      %v2838 = vld [vmem:[%s1020 + $0x10] sm:$0x80]
      %v2839 = vld [vmem:[%s1020 + $0x18] sm:$0xff]
      %v2840 = vld [vmem:[%s1020 + $0x20] sm:$0x80]
      %v2841 = vld [vmem:[%s1020 + $0x28] sm:$0xff]
      %v2842 = vld [vmem:[%s1020 + $0x30] sm:$0x80]
      %v2843 = vld [vmem:[%s1020 + $0x38] sm:$0xff]
      %v2844 = vld [vmem:[%s1020 + $0x40] sm:$0x80]
      %v2845 = vld [vmem:[%s1020 + $0x48] sm:$0xff]
      %v2846 = vld [vmem:[%s1020 + $0x50] sm:$0x80]
      %v2847 = vld [vmem:[%s1020 + $0x58] sm:$0xff]
      %v2848 = vld [vmem:[%s1020 + $0x60] sm:$0x80]
      %v2849 = vld [vmem:[%s1020 + $0x68] sm:$0xff]
      %v2850 = vld [vmem:[%s1020 + $0x70] sm:$0x80]
      %v2851 = vld [vmem:[%s1020 + $0x78] sm:$0xff]
      %v2852 = vld [vmem:[%s1020 + $0x80] sm:$0x80]
      %v2853 = vld [vmem:[%s1020 + $0x88] sm:$0xff]
      %v2854 = vld [vmem:[%s1020 + $0x90] sm:$0x80]
      %v2855 = vld [vmem:[%s1020 + $0x98] sm:$0xff]
      %v2856 = vld [vmem:[%s1020 + $0xa0] sm:$0x80]
      %v2857 = vld [vmem:[%s1020 + $0xa8] sm:$0xff]
      %v2858 = vld [vmem:[%s1020 + $0xb0] sm:$0x80]
      %v2859 = vld [vmem:[%s1020 + $0xb8] sm:$0xff]
      %v2860 = vld [vmem:[%s1020 + $0xc0] sm:$0x80]
      %v2861 = vld [vmem:[%s1020 + $0xc8] sm:$0xff]
      %v2862 = vld [vmem:[%s1020 + $0xd0] sm:$0x80]
      %v2863 = vld [vmem:[%s1020 + $0xd8] sm:$0xff]
      %v2864 = vld [vmem:[%s1020 + $0xe0] sm:$0x80]
      %v2865 = vld [vmem:[%s1020 + $0xe8] sm:$0xff]
      %v2866 = vld [vmem:[%s1020 + $0xf0] sm:$0x80]
      %v2867 = vld [vmem:[%s1020 + $0xf8] sm:$0xff]
      %v2868 = vsel %vm1867, 0, %v2836
      %v2869 = vsel %vm1868, 0, %v2837
      %v2870 = vsel %vm1867, 0, %v2838
      %v2871 = vsel %vm1868, 0, %v2839
      %v2872 = vsel %vm1867, 0, %v2840
      %v2873 = vsel %vm1868, 0, %v2841
      %v2874 = vsel %vm1867, 0, %v2842
      %v2875 = vsel %vm1868, 0, %v2843
      %v2876 = vsel %vm1867, 0, %v2844
      %v2877 = vsel %vm1868, 0, %v2845
      %v2878 = vsel %vm1867, 0, %v2846
      %v2879 = vsel %vm1868, 0, %v2847
      %v2880 = vsel %vm1867, 0, %v2848
      %v2881 = vsel %vm1868, 0, %v2849
      %v2882 = vsel %vm1867, 0, %v2850
      %v2883 = vsel %vm1868, 0, %v2851
      %v2884 = vsel %vm1867, 0, %v2852
      %v2885 = vsel %vm1868, 0, %v2853
      %v2886 = vsel %vm1867, 0, %v2854
      %v2887 = vsel %vm1868, 0, %v2855
      %v2888 = vsel %vm1867, 0, %v2856
      %v2889 = vsel %vm1868, 0, %v2857
      %v2890 = vsel %vm1867, 0, %v2858
      %v2891 = vsel %vm1868, 0, %v2859
      %v2892 = vsel %vm1867, 0, %v2860
      %v2893 = vsel %vm1868, 0, %v2861
      %v2894 = vsel %vm1867, 0, %v2862
      %v2895 = vsel %vm1868, 0, %v2863
      %v2896 = vsel %vm1867, 0, %v2864
      %v2897 = vsel %vm1868, 0, %v2865
      %v2898 = vsel %vm1867, 0, %v2866
      %v2899 = vsel %vm1868, 0, %v2867
      %v2901 = vshrl.u32 %v2868, 16
      %v2903 = vrot.slane %v2901, 7
      %v2905 = vshrl.u32 %v2869, 16
      %v2907 = vrot.slane %v2905, 7
      %v2908 = vshll.u32 %v2869, 16
      %v2910 = vor.u32 %v2907, %v2908
      %v2911 = vsel %vm1901, %v2903, %v2910
      %v2913 = vshrl.u32 %v2870, 16
      %v2915 = vrot.slane %v2913, 7
      %v2917 = vshrl.u32 %v2871, 16
      %v2919 = vrot.slane %v2917, 7
      %v2920 = vshll.u32 %v2871, 16
      %v2922 = vor.u32 %v2919, %v2920
      %v2923 = vsel %vm1901, %v2915, %v2922
      %v2925 = vshrl.u32 %v2872, 16
      %v2927 = vrot.slane %v2925, 7
      %v2929 = vshrl.u32 %v2873, 16
      %v2931 = vrot.slane %v2929, 7
      %v2932 = vshll.u32 %v2873, 16
      %v2934 = vor.u32 %v2931, %v2932
      %v2935 = vsel %vm1901, %v2927, %v2934
      %v2937 = vshrl.u32 %v2874, 16
      %v2939 = vrot.slane %v2937, 7
      %v2941 = vshrl.u32 %v2875, 16
      %v2943 = vrot.slane %v2941, 7
      %v2944 = vshll.u32 %v2875, 16
      %v2946 = vor.u32 %v2943, %v2944
      %v2947 = vsel %vm1901, %v2939, %v2946
      %v2949 = vshrl.u32 %v2876, 16
      %v2951 = vrot.slane %v2949, 7
      %v2953 = vshrl.u32 %v2877, 16
      %v2955 = vrot.slane %v2953, 7
      %v2956 = vshll.u32 %v2877, 16
      %v2958 = vor.u32 %v2955, %v2956
      %v2959 = vsel %vm1901, %v2951, %v2958
      %v2961 = vshrl.u32 %v2878, 16
      %v2963 = vrot.slane %v2961, 7
      %v2965 = vshrl.u32 %v2879, 16
      %v2967 = vrot.slane %v2965, 7
      %v2968 = vshll.u32 %v2879, 16
      %v2970 = vor.u32 %v2967, %v2968
      %v2971 = vsel %vm1901, %v2963, %v2970
      %v2973 = vshrl.u32 %v2880, 16
      %v2975 = vrot.slane %v2973, 7
      %v2977 = vshrl.u32 %v2881, 16
      %v2979 = vrot.slane %v2977, 7
      %v2980 = vshll.u32 %v2881, 16
      %v2982 = vor.u32 %v2979, %v2980
      %v2983 = vsel %vm1901, %v2975, %v2982
      %v2985 = vshrl.u32 %v2882, 16
      %v2987 = vrot.slane %v2985, 7
      %v2989 = vshrl.u32 %v2883, 16
      %v2991 = vrot.slane %v2989, 7
      %v2992 = vshll.u32 %v2883, 16
      %v2994 = vor.u32 %v2991, %v2992
      %v2995 = vsel %vm1901, %v2987, %v2994
      %v2997 = vshrl.u32 %v2884, 16
      %v2999 = vrot.slane %v2997, 7
      %v3001 = vshrl.u32 %v2885, 16
      %v3003 = vrot.slane %v3001, 7
      %v3004 = vshll.u32 %v2885, 16
      %v3006 = vor.u32 %v3003, %v3004
      %v3007 = vsel %vm1901, %v2999, %v3006
      %v3009 = vshrl.u32 %v2886, 16
      %v3011 = vrot.slane %v3009, 7
      %v3013 = vshrl.u32 %v2887, 16
      %v3015 = vrot.slane %v3013, 7
      %v3016 = vshll.u32 %v2887, 16
      %v3018 = vor.u32 %v3015, %v3016
      %v3019 = vsel %vm1901, %v3011, %v3018
      %v3021 = vshrl.u32 %v2888, 16
      %v3023 = vrot.slane %v3021, 7
      %v3025 = vshrl.u32 %v2889, 16
      %v3027 = vrot.slane %v3025, 7
      %v3028 = vshll.u32 %v2889, 16
      %v3030 = vor.u32 %v3027, %v3028
      %v3031 = vsel %vm1901, %v3023, %v3030
      %v3033 = vshrl.u32 %v2890, 16
      %v3035 = vrot.slane %v3033, 7
      %v3037 = vshrl.u32 %v2891, 16
      %v3039 = vrot.slane %v3037, 7
      %v3040 = vshll.u32 %v2891, 16
      %v3042 = vor.u32 %v3039, %v3040
      %v3043 = vsel %vm1901, %v3035, %v3042
      %v3045 = vshrl.u32 %v2892, 16
      %v3047 = vrot.slane %v3045, 7
      %v3049 = vshrl.u32 %v2893, 16
      %v3051 = vrot.slane %v3049, 7
      %v3052 = vshll.u32 %v2893, 16
      %v3054 = vor.u32 %v3051, %v3052
      %v3055 = vsel %vm1901, %v3047, %v3054
      %v3057 = vshrl.u32 %v2894, 16
      %v3059 = vrot.slane %v3057, 7
      %v3061 = vshrl.u32 %v2895, 16
      %v3063 = vrot.slane %v3061, 7
      %v3064 = vshll.u32 %v2895, 16
      %v3066 = vor.u32 %v3063, %v3064
      %v3067 = vsel %vm1901, %v3059, %v3066
      %v3069 = vshrl.u32 %v2896, 16
      %v3071 = vrot.slane %v3069, 7
      %v3073 = vshrl.u32 %v2897, 16
      %v3075 = vrot.slane %v3073, 7
      %v3076 = vshll.u32 %v2897, 16
      %v3078 = vor.u32 %v3075, %v3076
      %v3079 = vsel %vm1901, %v3071, %v3078
      %v3081 = vshrl.u32 %v2898, 16
      %v3083 = vrot.slane %v3081, 7
      %v3085 = vshrl.u32 %v2899, 16
      %v3087 = vrot.slane %v3085, 7
      %v3088 = vshll.u32 %v2899, 16
      %v3090 = vor.u32 %v3087, %v3088
      %v3091 = vsel %vm1901, %v3083, %v3090
      %s3108 = scalar_lea.vmem %s3, 192
      %v3109 = vld [vmem:[%s3108] sm:$0xf]
      %v3110 = vld [vmem:[%s3108 + $0x4] sm:$0xf]
      %v3111 = vld [vmem:[%s3108 + $0x8] sm:$0xf]
      %v3112 = vld [vmem:[%s3108 + $0xc] sm:$0xf]
      %v3113 = vld [vmem:[%s3108 + $0x10] sm:$0xf]
      %v3114 = vld [vmem:[%s3108 + $0x14] sm:$0xf]
      %v3115 = vld [vmem:[%s3108 + $0x18] sm:$0xf]
      %v3116 = vld [vmem:[%s3108 + $0x1c] sm:$0xf]
      %v3117 = vld [vmem:[%s3108 + $0x20] sm:$0xf]
      %v3118 = vld [vmem:[%s3108 + $0x24] sm:$0xf]
      %v3119 = vld [vmem:[%s3108 + $0x28] sm:$0xf]
      %v3120 = vld [vmem:[%s3108 + $0x2c] sm:$0xf]
      %v3121 = vld [vmem:[%s3108 + $0x30] sm:$0xf]
      %v3122 = vld [vmem:[%s3108 + $0x34] sm:$0xf]
      %v3123 = vld [vmem:[%s3108 + $0x38] sm:$0xf]
      %v3124 = vld [vmem:[%s3108 + $0x3c] sm:$0xf]
      %v3141 = vunpack.c.l.b16 %v3109
      %v3142 = vunpack.c.l.b16 %v3110
      %v3143 = vunpack.c.l.b16 %v3111
      %v3144 = vunpack.c.l.b16 %v3112
      %v3145 = vunpack.c.l.b16 %v3113
      %v3146 = vunpack.c.l.b16 %v3114
      %v3147 = vunpack.c.l.b16 %v3115
      %v3148 = vunpack.c.l.b16 %v3116
      %v3149 = vunpack.c.l.b16 %v3117
      %v3150 = vunpack.c.l.b16 %v3118
      %v3151 = vunpack.c.l.b16 %v3119
      %v3152 = vunpack.c.l.b16 %v3120
      %v3153 = vunpack.c.l.b16 %v3121
      %v3154 = vunpack.c.l.b16 %v3122
      %v3155 = vunpack.c.l.b16 %v3123
      %v3156 = vunpack.c.l.b16 %v3124
      %v3157 = vpack.c.b16 %v3142, %v3141
      %v3158 = vpack.c.b16 %v3144, %v3143
      %v3159 = vpack.c.b16 %v3146, %v3145
      %v3160 = vpack.c.b16 %v3148, %v3147
      %v3161 = vpack.c.b16 %v3150, %v3149
      %v3162 = vpack.c.b16 %v3152, %v3151
      %v3163 = vpack.c.b16 %v3154, %v3153
      %v3164 = vpack.c.b16 %v3156, %v3155
      %3173 = vmatprep.subr.bf16.mxu0 0
      %3174 = vmatpush1.bf16.msra.mxu0 %v3157
      %3175 = vmatprep.subr.bf16.mxu0 0
      %3176 = vmatpush1.bf16.msra.mxu0 %v3158
      %3177 = vmatprep.subr.bf16.mxu0 0
      %3178 = vmatpush1.bf16.msra.mxu0 %v3159
      %3179 = vmatprep.subr.bf16.mxu0 0
      %3180 = vmatpush1.bf16.msra.mxu0 %v3160
      %3181 = vmatprep.subr.bf16.mxu0 0
      %3182 = vmatpush1.bf16.msra.mxu0 %v3161
      %3183 = vmatprep.subr.bf16.mxu0 0
      %3184 = vmatpush1.bf16.msra.mxu0 %v3162
      %3185 = vmatprep.subr.bf16.mxu0 0
      %3186 = vmatpush1.bf16.msra.mxu0 %v3163
      %3187 = vmatprep.subr.bf16.mxu0 0
      %3188 = vmatpush1.bf16.msra.mxu0 %v3164
      %3189 = vmatprep.subr.bf16.mxu0 0
      %3190 = vmatpush1.bf16.msra.mxu0 0
      %3191 = vmatprep.subr.bf16.mxu0 0
      %3192 = vmatpush1.bf16.msra.mxu0 0
      %3193 = vmatprep.subr.bf16.mxu0 0
      %3194 = vmatpush1.bf16.msra.mxu0 0
      %3195 = vmatprep.subr.bf16.mxu0 0
      %3196 = vmatpush1.bf16.msra.mxu0 0
      %3197 = vmatprep.subr.bf16.mxu0 0
      %3198 = vmatpush1.bf16.msra.mxu0 0
      %3199 = vmatprep.subr.bf16.mxu0 0
      %3200 = vmatpush1.bf16.msra.mxu0 0
      %3201 = vmatprep.subr.bf16.mxu0 0
      %3202 = vmatpush1.bf16.msra.mxu0 0
      %3203 = vmatprep.subr.bf16.mxu0 0
      %3204 = vmatpush1.bf16.msra.mxu0 0
      %3205 = vmatprep.mubr.bf16.mxu0 0
      %3206 = vmatmul.mubr.bf16.gmra.mrb[0].mxu0 %v2911
      %v3207 = vpop.f32.mrb[0].mxu0
      %v3208 = vadd.f32 0.0, %v3207
      %v3209 = vpop.f32.mrb[0].mxu0
      %v3210 = vpop.f32.mrb[0].mxu0
      %v3211 = vadd.f32 0.0, %v3210
      %v3212 = vpop.f32.mrb[0].mxu0
      %3213 = vmatprep.mubr.bf16.mxu0 0
      %3214 = vmatmul.mubr.bf16.gmra.mrb[0].mxu0 %v2923
      %v3215 = vpop.f32.mrb[0].mxu0
      %v3216 = vadd.f32 0.0, %v3215
      %v3217 = vpop.f32.mrb[0].mxu0
      %v3218 = vpop.f32.mrb[0].mxu0
      %v3219 = vadd.f32 0.0, %v3218
      %v3220 = vpop.f32.mrb[0].mxu0
      %3221 = vmatprep.mubr.bf16.mxu0 0
      %3222 = vmatmul.mubr.bf16.gmra.mrb[0].mxu0 %v2935
      %v3223 = vpop.f32.mrb[0].mxu0
      %v3224 = vadd.f32 0.0, %v3223
      %v3225 = vpop.f32.mrb[0].mxu0
      %v3226 = vpop.f32.mrb[0].mxu0
      %v3227 = vadd.f32 0.0, %v3226
      %v3228 = vpop.f32.mrb[0].mxu0
      %3229 = vmatprep.mubr.bf16.mxu0 0
      %3230 = vmatmul.mubr.bf16.gmra.mrb[0].mxu0 %v2947
      %v3231 = vpop.f32.mrb[0].mxu0
      %v3232 = vadd.f32 0.0, %v3231
      %v3233 = vpop.f32.mrb[0].mxu0
      %v3234 = vpop.f32.mrb[0].mxu0
      %v3235 = vadd.f32 0.0, %v3234
      %v3236 = vpop.f32.mrb[0].mxu0
      %3237 = vmatprep.mubr.bf16.mxu0 0
      %3238 = vmatmul.mubr.bf16.gmra.mrb[0].mxu0 %v2959
      %v3239 = vpop.f32.mrb[0].mxu0
      %v3240 = vadd.f32 0.0, %v3239
      %v3241 = vpop.f32.mrb[0].mxu0
      %v3242 = vpop.f32.mrb[0].mxu0
      %v3243 = vadd.f32 0.0, %v3242
      %v3244 = vpop.f32.mrb[0].mxu0
      %3245 = vmatprep.mubr.bf16.mxu0 0
      %3246 = vmatmul.mubr.bf16.gmra.mrb[0].mxu0 %v2971
      %v3247 = vpop.f32.mrb[0].mxu0
      %v3248 = vadd.f32 0.0, %v3247
      %v3249 = vpop.f32.mrb[0].mxu0
      %v3250 = vpop.f32.mrb[0].mxu0
      %v3251 = vadd.f32 0.0, %v3250
      %v3252 = vpop.f32.mrb[0].mxu0
      %3253 = vmatprep.mubr.bf16.mxu0 0
      %3254 = vmatmul.mubr.bf16.gmra.mrb[0].mxu0 %v2983
      %v3255 = vpop.f32.mrb[0].mxu0
      %v3256 = vadd.f32 0.0, %v3255
      %v3257 = vpop.f32.mrb[0].mxu0
      %v3258 = vpop.f32.mrb[0].mxu0
      %v3259 = vadd.f32 0.0, %v3258
      %v3260 = vpop.f32.mrb[0].mxu0
      %3261 = vmatprep.mubr.bf16.mxu0 0
      %3262 = vmatmul.mubr.bf16.gmra.mrb[0].mxu0 %v2995
      %v3263 = vpop.f32.mrb[0].mxu0
      %v3264 = vadd.f32 0.0, %v3263
      %v3265 = vpop.f32.mrb[0].mxu0
      %v3266 = vpop.f32.mrb[0].mxu0
      %v3267 = vadd.f32 0.0, %v3266
      %v3268 = vpop.f32.mrb[0].mxu0
      %3269 = vmatprep.mubr.bf16.mxu0 0
      %3270 = vmatmul.mubr.bf16.gmra.mrb[0].mxu0 %v3007
      %v3271 = vpop.f32.mrb[0].mxu0
      %v3272 = vadd.f32 0.0, %v3271
      %v3273 = vpop.f32.mrb[0].mxu0
      %v3274 = vpop.f32.mrb[0].mxu0
      %v3275 = vadd.f32 0.0, %v3274
      %v3276 = vpop.f32.mrb[0].mxu0
      %3277 = vmatprep.mubr.bf16.mxu0 0
      %3278 = vmatmul.mubr.bf16.gmra.mrb[0].mxu0 %v3019
      %v3279 = vpop.f32.mrb[0].mxu0
      %v3280 = vadd.f32 0.0, %v3279
      %v3281 = vpop.f32.mrb[0].mxu0
      %v3282 = vpop.f32.mrb[0].mxu0
      %v3283 = vadd.f32 0.0, %v3282
      %v3284 = vpop.f32.mrb[0].mxu0
      %3285 = vmatprep.mubr.bf16.mxu0 0
      %3286 = vmatmul.mubr.bf16.gmra.mrb[0].mxu0 %v3031
      %v3287 = vpop.f32.mrb[0].mxu0
      %v3288 = vadd.f32 0.0, %v3287
      %v3289 = vpop.f32.mrb[0].mxu0
      %v3290 = vpop.f32.mrb[0].mxu0
      %v3291 = vadd.f32 0.0, %v3290
      %v3292 = vpop.f32.mrb[0].mxu0
      %3293 = vmatprep.mubr.bf16.mxu0 0
      %3294 = vmatmul.mubr.bf16.gmra.mrb[0].mxu0 %v3043
      %v3295 = vpop.f32.mrb[0].mxu0
      %v3296 = vadd.f32 0.0, %v3295
      %v3297 = vpop.f32.mrb[0].mxu0
      %v3298 = vpop.f32.mrb[0].mxu0
      %v3299 = vadd.f32 0.0, %v3298
      %v3300 = vpop.f32.mrb[0].mxu0
      %3301 = vmatprep.mubr.bf16.mxu0 0
      %3302 = vmatmul.mubr.bf16.gmra.mrb[0].mxu0 %v3055
      %v3303 = vpop.f32.mrb[0].mxu0
      %v3304 = vadd.f32 0.0, %v3303
      %v3305 = vpop.f32.mrb[0].mxu0
      %v3306 = vpop.f32.mrb[0].mxu0
      %v3307 = vadd.f32 0.0, %v3306
      %v3308 = vpop.f32.mrb[0].mxu0
      %3309 = vmatprep.mubr.bf16.mxu0 0
      %3310 = vmatmul.mubr.bf16.gmra.mrb[0].mxu0 %v3067
      %v3311 = vpop.f32.mrb[0].mxu0
      %v3312 = vadd.f32 0.0, %v3311
      %v3313 = vpop.f32.mrb[0].mxu0
      %v3314 = vpop.f32.mrb[0].mxu0
      %v3315 = vadd.f32 0.0, %v3314
      %v3316 = vpop.f32.mrb[0].mxu0
      %3317 = vmatprep.mubr.bf16.mxu0 0
      %3318 = vmatmul.mubr.bf16.gmra.mrb[0].mxu0 %v3079
      %v3319 = vpop.f32.mrb[0].mxu0
      %v3320 = vadd.f32 0.0, %v3319
      %v3321 = vpop.f32.mrb[0].mxu0
      %v3322 = vpop.f32.mrb[0].mxu0
      %v3323 = vadd.f32 0.0, %v3322
      %v3324 = vpop.f32.mrb[0].mxu0
      %3325 = vmatprep.mubr.bf16.mxu0 0
      %3326 = vmatmul.mubr.bf16.gmra.mrb[0].mxu0 %v3091
      %v3327 = vpop.f32.mrb[0].mxu0
      %v3328 = vadd.f32 0.0, %v3327
      %v3329 = vpop.f32.mrb[0].mxu0
      %v3330 = vpop.f32.mrb[0].mxu0
      %v3331 = vadd.f32 0.0, %v3330
      %v3332 = vpop.f32.mrb[0].mxu0
      %3333 = vdwg.mxu0
      %v3334 = vadd.f32 %v2804, %v3208
      %v3335 = vadd.f32 %v2805, %v3211
      %v3336 = vadd.f32 %v2806, %v3216
      %v3337 = vadd.f32 %v2807, %v3219
      %v3338 = vadd.f32 %v2808, %v3224
      %v3339 = vadd.f32 %v2809, %v3227
      %v3340 = vadd.f32 %v2810, %v3232
      %v3341 = vadd.f32 %v2811, %v3235
      %v3342 = vadd.f32 %v2812, %v3240
      %v3343 = vadd.f32 %v2813, %v3243
      %v3344 = vadd.f32 %v2814, %v3248
      %v3345 = vadd.f32 %v2815, %v3251
      %v3346 = vadd.f32 %v2816, %v3256
      %v3347 = vadd.f32 %v2817, %v3259
      %v3348 = vadd.f32 %v2818, %v3264
      %v3349 = vadd.f32 %v2819, %v3267
      %v3350 = vadd.f32 %v2820, %v3272
      %v3351 = vadd.f32 %v2821, %v3275
      %v3352 = vadd.f32 %v2822, %v3280
      %v3353 = vadd.f32 %v2823, %v3283
      %v3354 = vadd.f32 %v2824, %v3288
      %v3355 = vadd.f32 %v2825, %v3291
      %v3356 = vadd.f32 %v2826, %v3296
      %v3357 = vadd.f32 %v2827, %v3299
      %v3358 = vadd.f32 %v2828, %v3304
      %v3359 = vadd.f32 %v2829, %v3307
      %v3360 = vadd.f32 %v2830, %v3312
      %v3361 = vadd.f32 %v2831, %v3315
      %v3362 = vadd.f32 %v2832, %v3320
      %v3363 = vadd.f32 %v2833, %v3323
      %v3364 = vadd.f32 %v2834, %v3328
      %v3365 = vadd.f32 %v2835, %v3331
      %v3366 = vld [vmem:[%s633 + $0x8] sm:$0xff]
      %v3367 = vld [vmem:[%s633 + $0x18] sm:$0xff]
      %v3368 = vld [vmem:[%s633 + $0x28] sm:$0xff]
      %v3369 = vld [vmem:[%s633 + $0x38] sm:$0xff]
      %v3370 = vld [vmem:[%s633 + $0x48] sm:$0xff]
      %v3371 = vld [vmem:[%s633 + $0x58] sm:$0xff]
      %v3372 = vld [vmem:[%s633 + $0x68] sm:$0xff]
      %v3373 = vld [vmem:[%s633 + $0x78] sm:$0xff]
      %v3374 = vld [vmem:[%s633 + $0x88] sm:$0xff]
      %v3375 = vld [vmem:[%s633 + $0x98] sm:$0xff]
      %v3376 = vld [vmem:[%s633 + $0xa8] sm:$0xff]
      %v3377 = vld [vmem:[%s633 + $0xb8] sm:$0xff]
      %v3378 = vld [vmem:[%s633 + $0xc8] sm:$0xff]
      %v3379 = vld [vmem:[%s633 + $0xd8] sm:$0xff]
      %v3380 = vld [vmem:[%s633 + $0xe8] sm:$0xff]
      %v3381 = vld [vmem:[%s633 + $0xf8] sm:$0xff]
      %s3382 = scalar_lea.vmem %s3, 256
      %v3383 = vld [vmem:[%s3382] sm:$0xf]
      %v3384 = vld [vmem:[%s3382 + $0x4] sm:$0xf]
      %v3385 = vld [vmem:[%s3382 + $0x8] sm:$0xf]
      %v3386 = vld [vmem:[%s3382 + $0xc] sm:$0xf]
      %v3387 = vld [vmem:[%s3382 + $0x10] sm:$0xf]
      %v3388 = vld [vmem:[%s3382 + $0x14] sm:$0xf]
      %v3389 = vld [vmem:[%s3382 + $0x18] sm:$0xf]
      %v3390 = vld [vmem:[%s3382 + $0x1c] sm:$0xf]
      %v3391 = vld [vmem:[%s3382 + $0x20] sm:$0xf]
      %v3392 = vld [vmem:[%s3382 + $0x24] sm:$0xf]
      %v3393 = vld [vmem:[%s3382 + $0x28] sm:$0xf]
      %v3394 = vld [vmem:[%s3382 + $0x2c] sm:$0xf]
      %v3395 = vld [vmem:[%s3382 + $0x30] sm:$0xf]
      %v3396 = vld [vmem:[%s3382 + $0x34] sm:$0xf]
      %v3397 = vld [vmem:[%s3382 + $0x38] sm:$0xf]
      %v3398 = vld [vmem:[%s3382 + $0x3c] sm:$0xf]
      %v3415 = vunpack.c.l.b16 %v3383
      %v3416 = vunpack.c.l.b16 %v3384
      %v3417 = vunpack.c.l.b16 %v3385
      %v3418 = vunpack.c.l.b16 %v3386
      %v3419 = vunpack.c.l.b16 %v3387
      %v3420 = vunpack.c.l.b16 %v3388
      %v3421 = vunpack.c.l.b16 %v3389
      %v3422 = vunpack.c.l.b16 %v3390
      %v3423 = vunpack.c.l.b16 %v3391
      %v3424 = vunpack.c.l.b16 %v3392
      %v3425 = vunpack.c.l.b16 %v3393
      %v3426 = vunpack.c.l.b16 %v3394
      %v3427 = vunpack.c.l.b16 %v3395
      %v3428 = vunpack.c.l.b16 %v3396
      %v3429 = vunpack.c.l.b16 %v3397
      %v3430 = vunpack.c.l.b16 %v3398
      %v3431 = vpack.c.b16 %v3416, %v3415
      %v3432 = vpack.c.b16 %v3418, %v3417
      %v3433 = vpack.c.b16 %v3420, %v3419
      %v3434 = vpack.c.b16 %v3422, %v3421
      %v3435 = vpack.c.b16 %v3424, %v3423
      %v3436 = vpack.c.b16 %v3426, %v3425
      %v3437 = vpack.c.b16 %v3428, %v3427
      %v3438 = vpack.c.b16 %v3430, %v3429
      %3447 = vmatprep.subr.bf16.mxu0 0
      %3448 = vmatpush1.bf16.msra.mxu0 %v3431
      %3449 = vmatprep.subr.bf16.mxu0 0
      %3450 = vmatpush1.bf16.msra.mxu0 %v3432
      %3451 = vmatprep.subr.bf16.mxu0 0
      %3452 = vmatpush1.bf16.msra.mxu0 %v3433
      %3453 = vmatprep.subr.bf16.mxu0 0
      %3454 = vmatpush1.bf16.msra.mxu0 %v3434
      %3455 = vmatprep.subr.bf16.mxu0 0
      %3456 = vmatpush1.bf16.msra.mxu0 %v3435
      %3457 = vmatprep.subr.bf16.mxu0 0
      %3458 = vmatpush1.bf16.msra.mxu0 %v3436
      %3459 = vmatprep.subr.bf16.mxu0 0
      %3460 = vmatpush1.bf16.msra.mxu0 %v3437
      %3461 = vmatprep.subr.bf16.mxu0 0
      %3462 = vmatpush1.bf16.msra.mxu0 %v3438
      %3463 = vmatprep.subr.bf16.mxu0 0
      %3464 = vmatpush1.bf16.msra.mxu0 0
      %3465 = vmatprep.subr.bf16.mxu0 0
      %3466 = vmatpush1.bf16.msra.mxu0 0
      %3467 = vmatprep.subr.bf16.mxu0 0
      %3468 = vmatpush1.bf16.msra.mxu0 0
      %3469 = vmatprep.subr.bf16.mxu0 0
      %3470 = vmatpush1.bf16.msra.mxu0 0
      %3471 = vmatprep.subr.bf16.mxu0 0
      %3472 = vmatpush1.bf16.msra.mxu0 0
      %3473 = vmatprep.subr.bf16.mxu0 0
      %3474 = vmatpush1.bf16.msra.mxu0 0
      %3475 = vmatprep.subr.bf16.mxu0 0
      %3476 = vmatpush1.bf16.msra.mxu0 0
      %3477 = vmatprep.subr.bf16.mxu0 0
      %3478 = vmatpush1.bf16.msra.mxu0 0
      %3479 = vmatprep.mubr.bf16.mxu0 0
      %3480 = vmatmul.mubr.bf16.gmra.mrb[0].mxu0 %v3366
      %v3481 = vpop.f32.mrb[0].mxu0
      %v3482 = vadd.f32 0.0, %v3481
      %v3483 = vpop.f32.mrb[0].mxu0
      %v3484 = vpop.f32.mrb[0].mxu0
      %v3485 = vadd.f32 0.0, %v3484
      %v3486 = vpop.f32.mrb[0].mxu0
      %3487 = vmatprep.mubr.bf16.mxu0 0
      %3488 = vmatmul.mubr.bf16.gmra.mrb[0].mxu0 %v3367
      %v3489 = vpop.f32.mrb[0].mxu0
      %v3490 = vadd.f32 0.0, %v3489
      %v3491 = vpop.f32.mrb[0].mxu0
      %v3492 = vpop.f32.mrb[0].mxu0
      %v3493 = vadd.f32 0.0, %v3492
      %v3494 = vpop.f32.mrb[0].mxu0
      %3495 = vmatprep.mubr.bf16.mxu0 0
      %3496 = vmatmul.mubr.bf16.gmra.mrb[0].mxu0 %v3368
      %v3497 = vpop.f32.mrb[0].mxu0
      %v3498 = vadd.f32 0.0, %v3497
      %v3499 = vpop.f32.mrb[0].mxu0
      %v3500 = vpop.f32.mrb[0].mxu0
      %v3501 = vadd.f32 0.0, %v3500
      %v3502 = vpop.f32.mrb[0].mxu0
      %3503 = vmatprep.mubr.bf16.mxu0 0
      %3504 = vmatmul.mubr.bf16.gmra.mrb[0].mxu0 %v3369
      %v3505 = vpop.f32.mrb[0].mxu0
      %v3506 = vadd.f32 0.0, %v3505
      %v3507 = vpop.f32.mrb[0].mxu0
      %v3508 = vpop.f32.mrb[0].mxu0
      %v3509 = vadd.f32 0.0, %v3508
      %v3510 = vpop.f32.mrb[0].mxu0
      %3511 = vmatprep.mubr.bf16.mxu0 0
      %3512 = vmatmul.mubr.bf16.gmra.mrb[0].mxu0 %v3370
      %v3513 = vpop.f32.mrb[0].mxu0
      %v3514 = vadd.f32 0.0, %v3513
      %v3515 = vpop.f32.mrb[0].mxu0
      %v3516 = vpop.f32.mrb[0].mxu0
      %v3517 = vadd.f32 0.0, %v3516
      %v3518 = vpop.f32.mrb[0].mxu0
      %3519 = vmatprep.mubr.bf16.mxu0 0
      %3520 = vmatmul.mubr.bf16.gmra.mrb[0].mxu0 %v3371
      %v3521 = vpop.f32.mrb[0].mxu0
      %v3522 = vadd.f32 0.0, %v3521
      %v3523 = vpop.f32.mrb[0].mxu0
      %v3524 = vpop.f32.mrb[0].mxu0
      %v3525 = vadd.f32 0.0, %v3524
      %v3526 = vpop.f32.mrb[0].mxu0
      %3527 = vmatprep.mubr.bf16.mxu0 0
      %3528 = vmatmul.mubr.bf16.gmra.mrb[0].mxu0 %v3372
      %v3529 = vpop.f32.mrb[0].mxu0
      %v3530 = vadd.f32 0.0, %v3529
      %v3531 = vpop.f32.mrb[0].mxu0
      %v3532 = vpop.f32.mrb[0].mxu0
      %v3533 = vadd.f32 0.0, %v3532
      %v3534 = vpop.f32.mrb[0].mxu0
      %3535 = vmatprep.mubr.bf16.mxu0 0
      %3536 = vmatmul.mubr.bf16.gmra.mrb[0].mxu0 %v3373
      %v3537 = vpop.f32.mrb[0].mxu0
      %v3538 = vadd.f32 0.0, %v3537
      %v3539 = vpop.f32.mrb[0].mxu0
      %v3540 = vpop.f32.mrb[0].mxu0
      %v3541 = vadd.f32 0.0, %v3540
      %v3542 = vpop.f32.mrb[0].mxu0
      %3543 = vmatprep.mubr.bf16.mxu0 0
      %3544 = vmatmul.mubr.bf16.gmra.mrb[0].mxu0 %v3374
      %v3545 = vpop.f32.mrb[0].mxu0
      %v3546 = vadd.f32 0.0, %v3545
      %v3547 = vpop.f32.mrb[0].mxu0
      %v3548 = vpop.f32.mrb[0].mxu0
      %v3549 = vadd.f32 0.0, %v3548
      %v3550 = vpop.f32.mrb[0].mxu0
      %3551 = vmatprep.mubr.bf16.mxu0 0
      %3552 = vmatmul.mubr.bf16.gmra.mrb[0].mxu0 %v3375
      %v3553 = vpop.f32.mrb[0].mxu0
      %v3554 = vadd.f32 0.0, %v3553
      %v3555 = vpop.f32.mrb[0].mxu0
      %v3556 = vpop.f32.mrb[0].mxu0
      %v3557 = vadd.f32 0.0, %v3556
      %v3558 = vpop.f32.mrb[0].mxu0
      %3559 = vmatprep.mubr.bf16.mxu0 0
      %3560 = vmatmul.mubr.bf16.gmra.mrb[0].mxu0 %v3376
      %v3561 = vpop.f32.mrb[0].mxu0
      %v3562 = vadd.f32 0.0, %v3561
      %v3563 = vpop.f32.mrb[0].mxu0
      %v3564 = vpop.f32.mrb[0].mxu0
      %v3565 = vadd.f32 0.0, %v3564
      %v3566 = vpop.f32.mrb[0].mxu0
      %3567 = vmatprep.mubr.bf16.mxu0 0
      %3568 = vmatmul.mubr.bf16.gmra.mrb[0].mxu0 %v3377
      %v3569 = vpop.f32.mrb[0].mxu0
      %v3570 = vadd.f32 0.0, %v3569
      %v3571 = vpop.f32.mrb[0].mxu0
      %v3572 = vpop.f32.mrb[0].mxu0
      %v3573 = vadd.f32 0.0, %v3572
      %v3574 = vpop.f32.mrb[0].mxu0
      %3575 = vmatprep.mubr.bf16.mxu0 0
      %3576 = vmatmul.mubr.bf16.gmra.mrb[0].mxu0 %v3378
      %v3577 = vpop.f32.mrb[0].mxu0
      %v3578 = vadd.f32 0.0, %v3577
      %v3579 = vpop.f32.mrb[0].mxu0
      %v3580 = vpop.f32.mrb[0].mxu0
      %v3581 = vadd.f32 0.0, %v3580
      %v3582 = vpop.f32.mrb[0].mxu0
      %3583 = vmatprep.mubr.bf16.mxu0 0
      %3584 = vmatmul.mubr.bf16.gmra.mrb[0].mxu0 %v3379
      %v3585 = vpop.f32.mrb[0].mxu0
      %v3586 = vadd.f32 0.0, %v3585
      %v3587 = vpop.f32.mrb[0].mxu0
      %v3588 = vpop.f32.mrb[0].mxu0
      %v3589 = vadd.f32 0.0, %v3588
      %v3590 = vpop.f32.mrb[0].mxu0
      %3591 = vmatprep.mubr.bf16.mxu0 0
      %3592 = vmatmul.mubr.bf16.gmra.mrb[0].mxu0 %v3380
      %v3593 = vpop.f32.mrb[0].mxu0
      %v3594 = vadd.f32 0.0, %v3593
      %v3595 = vpop.f32.mrb[0].mxu0
      %v3596 = vpop.f32.mrb[0].mxu0
      %v3597 = vadd.f32 0.0, %v3596
      %v3598 = vpop.f32.mrb[0].mxu0
      %3599 = vmatprep.mubr.bf16.mxu0 0
      %3600 = vmatmul.mubr.bf16.gmra.mrb[0].mxu0 %v3381
      %v3601 = vpop.f32.mrb[0].mxu0
      %v3602 = vadd.f32 0.0, %v3601
      %v3603 = vpop.f32.mrb[0].mxu0
      %v3604 = vpop.f32.mrb[0].mxu0
      %v3605 = vadd.f32 0.0, %v3604
      %v3606 = vpop.f32.mrb[0].mxu0
      %3607 = vdwg.mxu0
      %v3608 = vadd.f32 %v3334, %v3482
      %v3609 = vadd.f32 %v3335, %v3485
      %v3610 = vadd.f32 %v3336, %v3490
      %v3611 = vadd.f32 %v3337, %v3493
      %v3612 = vadd.f32 %v3338, %v3498
      %v3613 = vadd.f32 %v3339, %v3501
      %v3614 = vadd.f32 %v3340, %v3506
      %v3615 = vadd.f32 %v3341, %v3509
      %v3616 = vadd.f32 %v3342, %v3514
      %v3617 = vadd.f32 %v3343, %v3517
      %v3618 = vadd.f32 %v3344, %v3522
      %v3619 = vadd.f32 %v3345, %v3525
      %v3620 = vadd.f32 %v3346, %v3530
      %v3621 = vadd.f32 %v3347, %v3533
      %v3622 = vadd.f32 %v3348, %v3538
      %v3623 = vadd.f32 %v3349, %v3541
      %v3624 = vadd.f32 %v3350, %v3546
      %v3625 = vadd.f32 %v3351, %v3549
      %v3626 = vadd.f32 %v3352, %v3554
      %v3627 = vadd.f32 %v3353, %v3557
      %v3628 = vadd.f32 %v3354, %v3562
      %v3629 = vadd.f32 %v3355, %v3565
      %v3630 = vadd.f32 %v3356, %v3570
      %v3631 = vadd.f32 %v3357, %v3573
      %v3632 = vadd.f32 %v3358, %v3578
      %v3633 = vadd.f32 %v3359, %v3581
      %v3634 = vadd.f32 %v3360, %v3586
      %v3635 = vadd.f32 %v3361, %v3589
      %v3636 = vadd.f32 %v3362, %v3594
      %v3637 = vadd.f32 %v3363, %v3597
      %v3638 = vadd.f32 %v3364, %v3602
      %v3639 = vadd.f32 %v3365, %v3605
      %s3640 = scalar_lea.vmem %s3, 320
      %v3641 = vld [vmem:[%s3640] sm:$0xf]
      %v3642 = vld [vmem:[%s3640 + $0x4] sm:$0xf]
      %v3643 = vld [vmem:[%s3640 + $0x8] sm:$0xf]
      %v3644 = vld [vmem:[%s3640 + $0xc] sm:$0xf]
      %v3645 = vld [vmem:[%s3640 + $0x10] sm:$0xf]
      %v3646 = vld [vmem:[%s3640 + $0x14] sm:$0xf]
      %v3647 = vld [vmem:[%s3640 + $0x18] sm:$0xf]
      %v3648 = vld [vmem:[%s3640 + $0x1c] sm:$0xf]
      %v3649 = vld [vmem:[%s3640 + $0x20] sm:$0xf]
      %v3650 = vld [vmem:[%s3640 + $0x24] sm:$0xf]
      %v3651 = vld [vmem:[%s3640 + $0x28] sm:$0xf]
      %v3652 = vld [vmem:[%s3640 + $0x2c] sm:$0xf]
      %v3653 = vld [vmem:[%s3640 + $0x30] sm:$0xf]
      %v3654 = vld [vmem:[%s3640 + $0x34] sm:$0xf]
      %v3655 = vld [vmem:[%s3640 + $0x38] sm:$0xf]
      %v3656 = vld [vmem:[%s3640 + $0x3c] sm:$0xf]
      %v3673 = vunpack.c.l.b16 %v3641
      %v3674 = vunpack.c.l.b16 %v3642
      %v3675 = vunpack.c.l.b16 %v3643
      %v3676 = vunpack.c.l.b16 %v3644
      %v3677 = vunpack.c.l.b16 %v3645
      %v3678 = vunpack.c.l.b16 %v3646
      %v3679 = vunpack.c.l.b16 %v3647
      %v3680 = vunpack.c.l.b16 %v3648
      %v3681 = vunpack.c.l.b16 %v3649
      %v3682 = vunpack.c.l.b16 %v3650
      %v3683 = vunpack.c.l.b16 %v3651
      %v3684 = vunpack.c.l.b16 %v3652
      %v3685 = vunpack.c.l.b16 %v3653
      %v3686 = vunpack.c.l.b16 %v3654
      %v3687 = vunpack.c.l.b16 %v3655
      %v3688 = vunpack.c.l.b16 %v3656
      %v3689 = vpack.c.b16 %v3674, %v3673
      %v3690 = vpack.c.b16 %v3676, %v3675
      %v3691 = vpack.c.b16 %v3678, %v3677
      %v3692 = vpack.c.b16 %v3680, %v3679
      %v3693 = vpack.c.b16 %v3682, %v3681
      %v3694 = vpack.c.b16 %v3684, %v3683
      %v3695 = vpack.c.b16 %v3686, %v3685
      %v3696 = vpack.c.b16 %v3688, %v3687
      %3705 = vmatprep.subr.bf16.mxu0 0
      %3706 = vmatpush1.bf16.msra.mxu0 %v3689
      %3707 = vmatprep.subr.bf16.mxu0 0
      %3708 = vmatpush1.bf16.msra.mxu0 %v3690
      %3709 = vmatprep.subr.bf16.mxu0 0
      %3710 = vmatpush1.bf16.msra.mxu0 %v3691
      %3711 = vmatprep.subr.bf16.mxu0 0
      %3712 = vmatpush1.bf16.msra.mxu0 %v3692
      %3713 = vmatprep.subr.bf16.mxu0 0
      %3714 = vmatpush1.bf16.msra.mxu0 %v3693
      %3715 = vmatprep.subr.bf16.mxu0 0
      %3716 = vmatpush1.bf16.msra.mxu0 %v3694
      %3717 = vmatprep.subr.bf16.mxu0 0
      %3718 = vmatpush1.bf16.msra.mxu0 %v3695
      %3719 = vmatprep.subr.bf16.mxu0 0
      %3720 = vmatpush1.bf16.msra.mxu0 %v3696
      %3721 = vmatprep.subr.bf16.mxu0 0
      %3722 = vmatpush1.bf16.msra.mxu0 0
      %3723 = vmatprep.subr.bf16.mxu0 0
      %3724 = vmatpush1.bf16.msra.mxu0 0
      %3725 = vmatprep.subr.bf16.mxu0 0
      %3726 = vmatpush1.bf16.msra.mxu0 0
      %3727 = vmatprep.subr.bf16.mxu0 0
      %3728 = vmatpush1.bf16.msra.mxu0 0
      %3729 = vmatprep.subr.bf16.mxu0 0
      %3730 = vmatpush1.bf16.msra.mxu0 0
      %3731 = vmatprep.subr.bf16.mxu0 0
      %3732 = vmatpush1.bf16.msra.mxu0 0
      %3733 = vmatprep.subr.bf16.mxu0 0
      %3734 = vmatpush1.bf16.msra.mxu0 0
      %3735 = vmatprep.subr.bf16.mxu0 0
      %3736 = vmatpush1.bf16.msra.mxu0 0
      %3737 = vmatprep.mubr.bf16.mxu0 0
      %3738 = vmatmul.mubr.bf16.gmra.mrb[0].mxu0 %v2837
      %v3739 = vpop.f32.mrb[0].mxu0
      %v3740 = vadd.f32 0.0, %v3739
      %v3741 = vpop.f32.mrb[0].mxu0
      %v3742 = vpop.f32.mrb[0].mxu0
      %v3743 = vadd.f32 0.0, %v3742
      %v3744 = vpop.f32.mrb[0].mxu0
      %3745 = vmatprep.mubr.bf16.mxu0 0
      %3746 = vmatmul.mubr.bf16.gmra.mrb[0].mxu0 %v2839
      %v3747 = vpop.f32.mrb[0].mxu0
      %v3748 = vadd.f32 0.0, %v3747
      %v3749 = vpop.f32.mrb[0].mxu0
      %v3750 = vpop.f32.mrb[0].mxu0
      %v3751 = vadd.f32 0.0, %v3750
      %v3752 = vpop.f32.mrb[0].mxu0
      %3753 = vmatprep.mubr.bf16.mxu0 0
      %3754 = vmatmul.mubr.bf16.gmra.mrb[0].mxu0 %v2841
      %v3755 = vpop.f32.mrb[0].mxu0
      %v3756 = vadd.f32 0.0, %v3755
      %v3757 = vpop.f32.mrb[0].mxu0
      %v3758 = vpop.f32.mrb[0].mxu0
      %v3759 = vadd.f32 0.0, %v3758
      %v3760 = vpop.f32.mrb[0].mxu0
      %3761 = vmatprep.mubr.bf16.mxu0 0
      %3762 = vmatmul.mubr.bf16.gmra.mrb[0].mxu0 %v2843
      %v3763 = vpop.f32.mrb[0].mxu0
      %v3764 = vadd.f32 0.0, %v3763
      %v3765 = vpop.f32.mrb[0].mxu0
      %v3766 = vpop.f32.mrb[0].mxu0
      %v3767 = vadd.f32 0.0, %v3766
      %v3768 = vpop.f32.mrb[0].mxu0
      %3769 = vmatprep.mubr.bf16.mxu0 0
      %3770 = vmatmul.mubr.bf16.gmra.mrb[0].mxu0 %v2845
      %v3771 = vpop.f32.mrb[0].mxu0
      %v3772 = vadd.f32 0.0, %v3771
      %v3773 = vpop.f32.mrb[0].mxu0
      %v3774 = vpop.f32.mrb[0].mxu0
      %v3775 = vadd.f32 0.0, %v3774
      %v3776 = vpop.f32.mrb[0].mxu0
      %3777 = vmatprep.mubr.bf16.mxu0 0
      %3778 = vmatmul.mubr.bf16.gmra.mrb[0].mxu0 %v2847
      %v3779 = vpop.f32.mrb[0].mxu0
      %v3780 = vadd.f32 0.0, %v3779
      %v3781 = vpop.f32.mrb[0].mxu0
      %v3782 = vpop.f32.mrb[0].mxu0
      %v3783 = vadd.f32 0.0, %v3782
      %v3784 = vpop.f32.mrb[0].mxu0
      %3785 = vmatprep.mubr.bf16.mxu0 0
      %3786 = vmatmul.mubr.bf16.gmra.mrb[0].mxu0 %v2849
      %v3787 = vpop.f32.mrb[0].mxu0
      %v3788 = vadd.f32 0.0, %v3787
      %v3789 = vpop.f32.mrb[0].mxu0
      %v3790 = vpop.f32.mrb[0].mxu0
      %v3791 = vadd.f32 0.0, %v3790
      %v3792 = vpop.f32.mrb[0].mxu0
      %3793 = vmatprep.mubr.bf16.mxu0 0
      %3794 = vmatmul.mubr.bf16.gmra.mrb[0].mxu0 %v2851
      %v3795 = vpop.f32.mrb[0].mxu0
      %v3796 = vadd.f32 0.0, %v3795
      %v3797 = vpop.f32.mrb[0].mxu0
      %v3798 = vpop.f32.mrb[0].mxu0
      %v3799 = vadd.f32 0.0, %v3798
      %v3800 = vpop.f32.mrb[0].mxu0
      %3801 = vmatprep.mubr.bf16.mxu0 0
      %3802 = vmatmul.mubr.bf16.gmra.mrb[0].mxu0 %v2853
      %v3803 = vpop.f32.mrb[0].mxu0
      %v3804 = vadd.f32 0.0, %v3803
      %v3805 = vpop.f32.mrb[0].mxu0
      %v3806 = vpop.f32.mrb[0].mxu0
      %v3807 = vadd.f32 0.0, %v3806
      %v3808 = vpop.f32.mrb[0].mxu0
      %3809 = vmatprep.mubr.bf16.mxu0 0
      %3810 = vmatmul.mubr.bf16.gmra.mrb[0].mxu0 %v2855
      %v3811 = vpop.f32.mrb[0].mxu0
      %v3812 = vadd.f32 0.0, %v3811
      %v3813 = vpop.f32.mrb[0].mxu0
      %v3814 = vpop.f32.mrb[0].mxu0
      %v3815 = vadd.f32 0.0, %v3814
      %v3816 = vpop.f32.mrb[0].mxu0
      %3817 = vmatprep.mubr.bf16.mxu0 0
      %3818 = vmatmul.mubr.bf16.gmra.mrb[0].mxu0 %v2857
      %v3819 = vpop.f32.mrb[0].mxu0
      %v3820 = vadd.f32 0.0, %v3819
      %v3821 = vpop.f32.mrb[0].mxu0
      %v3822 = vpop.f32.mrb[0].mxu0
      %v3823 = vadd.f32 0.0, %v3822
      %v3824 = vpop.f32.mrb[0].mxu0
      %3825 = vmatprep.mubr.bf16.mxu0 0
      %3826 = vmatmul.mubr.bf16.gmra.mrb[0].mxu0 %v2859
      %v3827 = vpop.f32.mrb[0].mxu0
      %v3828 = vadd.f32 0.0, %v3827
      %v3829 = vpop.f32.mrb[0].mxu0
      %v3830 = vpop.f32.mrb[0].mxu0
      %v3831 = vadd.f32 0.0, %v3830
      %v3832 = vpop.f32.mrb[0].mxu0
      %3833 = vmatprep.mubr.bf16.mxu0 0
      %3834 = vmatmul.mubr.bf16.gmra.mrb[0].mxu0 %v2861
      %v3835 = vpop.f32.mrb[0].mxu0
      %v3836 = vadd.f32 0.0, %v3835
      %v3837 = vpop.f32.mrb[0].mxu0
      %v3838 = vpop.f32.mrb[0].mxu0
      %v3839 = vadd.f32 0.0, %v3838
      %v3840 = vpop.f32.mrb[0].mxu0
      %3841 = vmatprep.mubr.bf16.mxu0 0
      %3842 = vmatmul.mubr.bf16.gmra.mrb[0].mxu0 %v2863
      %v3843 = vpop.f32.mrb[0].mxu0
      %v3844 = vadd.f32 0.0, %v3843
      %v3845 = vpop.f32.mrb[0].mxu0
      %v3846 = vpop.f32.mrb[0].mxu0
      %v3847 = vadd.f32 0.0, %v3846
      %v3848 = vpop.f32.mrb[0].mxu0
      %3849 = vmatprep.mubr.bf16.mxu0 0
      %3850 = vmatmul.mubr.bf16.gmra.mrb[0].mxu0 %v2865
      %v3851 = vpop.f32.mrb[0].mxu0
      %v3852 = vadd.f32 0.0, %v3851
      %v3853 = vpop.f32.mrb[0].mxu0
      %v3854 = vpop.f32.mrb[0].mxu0
      %v3855 = vadd.f32 0.0, %v3854
      %v3856 = vpop.f32.mrb[0].mxu0
      %3857 = vmatprep.mubr.bf16.mxu0 0
      %3858 = vmatmul.mubr.bf16.gmra.mrb[0].mxu0 %v2867
      %v3859 = vpop.f32.mrb[0].mxu0
      %v3860 = vadd.f32 0.0, %v3859
      %v3861 = vpop.f32.mrb[0].mxu0
      %v3862 = vpop.f32.mrb[0].mxu0
      %v3863 = vadd.f32 0.0, %v3862
      %v3864 = vpop.f32.mrb[0].mxu0
      %3865 = vdwg.mxu0
      %v3866 = vadd.f32 %v3608, %v3740
      %v3867 = vadd.f32 %v3609, %v3743
      %v3868 = vadd.f32 %v3610, %v3748
      %v3869 = vadd.f32 %v3611, %v3751
      %v3870 = vadd.f32 %v3612, %v3756
      %v3871 = vadd.f32 %v3613, %v3759
      %v3872 = vadd.f32 %v3614, %v3764
      %v3873 = vadd.f32 %v3615, %v3767
      %v3874 = vadd.f32 %v3616, %v3772
      %v3875 = vadd.f32 %v3617, %v3775
      %v3876 = vadd.f32 %v3618, %v3780
      %v3877 = vadd.f32 %v3619, %v3783
      %v3878 = vadd.f32 %v3620, %v3788
      %v3879 = vadd.f32 %v3621, %v3791
      %v3880 = vadd.f32 %v3622, %v3796
      %v3881 = vadd.f32 %v3623, %v3799
      %v3882 = vadd.f32 %v3624, %v3804
      %v3883 = vadd.f32 %v3625, %v3807
      %v3884 = vadd.f32 %v3626, %v3812
      %v3885 = vadd.f32 %v3627, %v3815
      %v3886 = vadd.f32 %v3628, %v3820
      %v3887 = vadd.f32 %v3629, %v3823
      %v3888 = vadd.f32 %v3630, %v3828
      %v3889 = vadd.f32 %v3631, %v3831
      %v3890 = vadd.f32 %v3632, %v3836
      %v3891 = vadd.f32 %v3633, %v3839
      %v3892 = vadd.f32 %v3634, %v3844
      %v3893 = vadd.f32 %v3635, %v3847
      %v3894 = vadd.f32 %v3636, %v3852
      %v3895 = vadd.f32 %v3637, %v3855
      %v3896 = vadd.f32 %v3638, %v3860
      %v3897 = vadd.f32 %v3639, %v3863
      %v3898 = vld [vmem:[%s1794] sm:$0x80]
      %v3899 = vld [vmem:[%s1794 + $0x8] sm:$0xff]
      %v3900 = vld [vmem:[%s1794 + $0x10] sm:$0x80]
      %v3901 = vld [vmem:[%s1794 + $0x18] sm:$0xff]
      %v3902 = vld [vmem:[%s1794 + $0x20] sm:$0x80]
      %v3903 = vld [vmem:[%s1794 + $0x28] sm:$0xff]
      %v3904 = vld [vmem:[%s1794 + $0x30] sm:$0x80]
      %v3905 = vld [vmem:[%s1794 + $0x38] sm:$0xff]
      %v3906 = vld [vmem:[%s1794 + $0x40] sm:$0x80]
      %v3907 = vld [vmem:[%s1794 + $0x48] sm:$0xff]
      %v3908 = vld [vmem:[%s1794 + $0x50] sm:$0x80]
      %v3909 = vld [vmem:[%s1794 + $0x58] sm:$0xff]
      %v3910 = vld [vmem:[%s1794 + $0x60] sm:$0x80]
      %v3911 = vld [vmem:[%s1794 + $0x68] sm:$0xff]
      %v3912 = vld [vmem:[%s1794 + $0x70] sm:$0x80]
      %v3913 = vld [vmem:[%s1794 + $0x78] sm:$0xff]
      %v3914 = vld [vmem:[%s1794 + $0x80] sm:$0x80]
      %v3915 = vld [vmem:[%s1794 + $0x88] sm:$0xff]
      %v3916 = vld [vmem:[%s1794 + $0x90] sm:$0x80]
      %v3917 = vld [vmem:[%s1794 + $0x98] sm:$0xff]
      %v3918 = vld [vmem:[%s1794 + $0xa0] sm:$0x80]
      %v3919 = vld [vmem:[%s1794 + $0xa8] sm:$0xff]
      %v3920 = vld [vmem:[%s1794 + $0xb0] sm:$0x80]
      %v3921 = vld [vmem:[%s1794 + $0xb8] sm:$0xff]
      %v3922 = vld [vmem:[%s1794 + $0xc0] sm:$0x80]
      %v3923 = vld [vmem:[%s1794 + $0xc8] sm:$0xff]
      %v3924 = vld [vmem:[%s1794 + $0xd0] sm:$0x80]
      %v3925 = vld [vmem:[%s1794 + $0xd8] sm:$0xff]
      %v3926 = vld [vmem:[%s1794 + $0xe0] sm:$0x80]
      %v3927 = vld [vmem:[%s1794 + $0xe8] sm:$0xff]
      %v3928 = vld [vmem:[%s1794 + $0xf0] sm:$0x80]
      %v3929 = vld [vmem:[%s1794 + $0xf8] sm:$0xff]
      %v3930 = vsel %vm1867, 0, %v3898
      %v3931 = vsel %vm1868, 0, %v3899
      %v3932 = vsel %vm1867, 0, %v3900
      %v3933 = vsel %vm1868, 0, %v3901
      %v3934 = vsel %vm1867, 0, %v3902
      %v3935 = vsel %vm1868, 0, %v3903
      %v3936 = vsel %vm1867, 0, %v3904
      %v3937 = vsel %vm1868, 0, %v3905
      %v3938 = vsel %vm1867, 0, %v3906
      %v3939 = vsel %vm1868, 0, %v3907
      %v3940 = vsel %vm1867, 0, %v3908
      %v3941 = vsel %vm1868, 0, %v3909
      %v3942 = vsel %vm1867, 0, %v3910
      %v3943 = vsel %vm1868, 0, %v3911
      %v3944 = vsel %vm1867, 0, %v3912
      %v3945 = vsel %vm1868, 0, %v3913
      %v3946 = vsel %vm1867, 0, %v3914
      %v3947 = vsel %vm1868, 0, %v3915
      %v3948 = vsel %vm1867, 0, %v3916
      %v3949 = vsel %vm1868, 0, %v3917
      %v3950 = vsel %vm1867, 0, %v3918
      %v3951 = vsel %vm1868, 0, %v3919
      %v3952 = vsel %vm1867, 0, %v3920
      %v3953 = vsel %vm1868, 0, %v3921
      %v3954 = vsel %vm1867, 0, %v3922
      %v3955 = vsel %vm1868, 0, %v3923
      %v3956 = vsel %vm1867, 0, %v3924
      %v3957 = vsel %vm1868, 0, %v3925
      %v3958 = vsel %vm1867, 0, %v3926
      %v3959 = vsel %vm1868, 0, %v3927
      %v3960 = vsel %vm1867, 0, %v3928
      %v3961 = vsel %vm1868, 0, %v3929
      %v3963 = vshrl.u32 %v3930, 16
      %v3965 = vrot.slane %v3963, 7
      %v3967 = vshrl.u32 %v3931, 16
      %v3969 = vrot.slane %v3967, 7
      %v3970 = vshll.u32 %v3931, 16
      %v3972 = vor.u32 %v3969, %v3970
      %v3973 = vsel %vm1901, %v3965, %v3972
      %v3975 = vshrl.u32 %v3932, 16
      %v3977 = vrot.slane %v3975, 7
      %v3979 = vshrl.u32 %v3933, 16
      %v3981 = vrot.slane %v3979, 7
      %v3982 = vshll.u32 %v3933, 16
      %v3984 = vor.u32 %v3981, %v3982
      %v3985 = vsel %vm1901, %v3977, %v3984
      %v3987 = vshrl.u32 %v3934, 16
      %v3989 = vrot.slane %v3987, 7
      %v3991 = vshrl.u32 %v3935, 16
      %v3993 = vrot.slane %v3991, 7
      %v3994 = vshll.u32 %v3935, 16
      %v3996 = vor.u32 %v3993, %v3994
      %v3997 = vsel %vm1901, %v3989, %v3996
      %v3999 = vshrl.u32 %v3936, 16
      %v4001 = vrot.slane %v3999, 7
      %v4003 = vshrl.u32 %v3937, 16
      %v4005 = vrot.slane %v4003, 7
      %v4006 = vshll.u32 %v3937, 16
      %v4008 = vor.u32 %v4005, %v4006
      %v4009 = vsel %vm1901, %v4001, %v4008
      %v4011 = vshrl.u32 %v3938, 16
      %v4013 = vrot.slane %v4011, 7
      %v4015 = vshrl.u32 %v3939, 16
      %v4017 = vrot.slane %v4015, 7
      %v4018 = vshll.u32 %v3939, 16
      %v4020 = vor.u32 %v4017, %v4018
      %v4021 = vsel %vm1901, %v4013, %v4020
      %v4023 = vshrl.u32 %v3940, 16
      %v4025 = vrot.slane %v4023, 7
      %v4027 = vshrl.u32 %v3941, 16
      %v4029 = vrot.slane %v4027, 7
      %v4030 = vshll.u32 %v3941, 16
      %v4032 = vor.u32 %v4029, %v4030
      %v4033 = vsel %vm1901, %v4025, %v4032
      %v4035 = vshrl.u32 %v3942, 16
      %v4037 = vrot.slane %v4035, 7
      %v4039 = vshrl.u32 %v3943, 16
      %v4041 = vrot.slane %v4039, 7
      %v4042 = vshll.u32 %v3943, 16
      %v4044 = vor.u32 %v4041, %v4042
      %v4045 = vsel %vm1901, %v4037, %v4044
      %v4047 = vshrl.u32 %v3944, 16
      %v4049 = vrot.slane %v4047, 7
      %v4051 = vshrl.u32 %v3945, 16
      %v4053 = vrot.slane %v4051, 7
      %v4054 = vshll.u32 %v3945, 16
      %v4056 = vor.u32 %v4053, %v4054
      %v4057 = vsel %vm1901, %v4049, %v4056
      %v4059 = vshrl.u32 %v3946, 16
      %v4061 = vrot.slane %v4059, 7
      %v4063 = vshrl.u32 %v3947, 16
      %v4065 = vrot.slane %v4063, 7
      %v4066 = vshll.u32 %v3947, 16
      %v4068 = vor.u32 %v4065, %v4066
      %v4069 = vsel %vm1901, %v4061, %v4068
      %v4071 = vshrl.u32 %v3948, 16
      %v4073 = vrot.slane %v4071, 7
      %v4075 = vshrl.u32 %v3949, 16
      %v4077 = vrot.slane %v4075, 7
      %v4078 = vshll.u32 %v3949, 16
      %v4080 = vor.u32 %v4077, %v4078
      %v4081 = vsel %vm1901, %v4073, %v4080
      %v4083 = vshrl.u32 %v3950, 16
      %v4085 = vrot.slane %v4083, 7
      %v4087 = vshrl.u32 %v3951, 16
      %v4089 = vrot.slane %v4087, 7
      %v4090 = vshll.u32 %v3951, 16
      %v4092 = vor.u32 %v4089, %v4090
      %v4093 = vsel %vm1901, %v4085, %v4092
      %v4095 = vshrl.u32 %v3952, 16
      %v4097 = vrot.slane %v4095, 7
      %v4099 = vshrl.u32 %v3953, 16
      %v4101 = vrot.slane %v4099, 7
      %v4102 = vshll.u32 %v3953, 16
      %v4104 = vor.u32 %v4101, %v4102
      %v4105 = vsel %vm1901, %v4097, %v4104
      %v4107 = vshrl.u32 %v3954, 16
      %v4109 = vrot.slane %v4107, 7
      %v4111 = vshrl.u32 %v3955, 16
      %v4113 = vrot.slane %v4111, 7
      %v4114 = vshll.u32 %v3955, 16
      %v4116 = vor.u32 %v4113, %v4114
      %v4117 = vsel %vm1901, %v4109, %v4116
      %v4119 = vshrl.u32 %v3956, 16
      %v4121 = vrot.slane %v4119, 7
      %v4123 = vshrl.u32 %v3957, 16
      %v4125 = vrot.slane %v4123, 7
      %v4126 = vshll.u32 %v3957, 16
      %v4128 = vor.u32 %v4125, %v4126
      %v4129 = vsel %vm1901, %v4121, %v4128
      %v4131 = vshrl.u32 %v3958, 16
      %v4133 = vrot.slane %v4131, 7
      %v4135 = vshrl.u32 %v3959, 16
      %v4137 = vrot.slane %v4135, 7
      %v4138 = vshll.u32 %v3959, 16
      %v4140 = vor.u32 %v4137, %v4138
      %v4141 = vsel %vm1901, %v4133, %v4140
      %v4143 = vshrl.u32 %v3960, 16
      %v4145 = vrot.slane %v4143, 7
      %v4147 = vshrl.u32 %v3961, 16
      %v4149 = vrot.slane %v4147, 7
      %v4150 = vshll.u32 %v3961, 16
      %v4152 = vor.u32 %v4149, %v4150
      %v4153 = vsel %vm1901, %v4145, %v4152
      %s4170 = scalar_lea.vmem %s3, 384
      %v4171 = vld [vmem:[%s4170] sm:$0xf]
      %v4172 = vld [vmem:[%s4170 + $0x4] sm:$0xf]
      %v4173 = vld [vmem:[%s4170 + $0x8] sm:$0xf]
      %v4174 = vld [vmem:[%s4170 + $0xc] sm:$0xf]
      %v4175 = vld [vmem:[%s4170 + $0x10] sm:$0xf]
      %v4176 = vld [vmem:[%s4170 + $0x14] sm:$0xf]
      %v4177 = vld [vmem:[%s4170 + $0x18] sm:$0xf]
      %v4178 = vld [vmem:[%s4170 + $0x1c] sm:$0xf]
      %v4179 = vld [vmem:[%s4170 + $0x20] sm:$0xf]
      %v4180 = vld [vmem:[%s4170 + $0x24] sm:$0xf]
      %v4181 = vld [vmem:[%s4170 + $0x28] sm:$0xf]
      %v4182 = vld [vmem:[%s4170 + $0x2c] sm:$0xf]
      %v4183 = vld [vmem:[%s4170 + $0x30] sm:$0xf]
      %v4184 = vld [vmem:[%s4170 + $0x34] sm:$0xf]
      %v4185 = vld [vmem:[%s4170 + $0x38] sm:$0xf]
      %v4186 = vld [vmem:[%s4170 + $0x3c] sm:$0xf]
      %v4203 = vunpack.c.l.b16 %v4171
      %v4204 = vunpack.c.l.b16 %v4172
      %v4205 = vunpack.c.l.b16 %v4173
      %v4206 = vunpack.c.l.b16 %v4174
      %v4207 = vunpack.c.l.b16 %v4175
      %v4208 = vunpack.c.l.b16 %v4176
      %v4209 = vunpack.c.l.b16 %v4177
      %v4210 = vunpack.c.l.b16 %v4178
      %v4211 = vunpack.c.l.b16 %v4179
      %v4212 = vunpack.c.l.b16 %v4180
      %v4213 = vunpack.c.l.b16 %v4181
      %v4214 = vunpack.c.l.b16 %v4182
      %v4215 = vunpack.c.l.b16 %v4183
      %v4216 = vunpack.c.l.b16 %v4184
      %v4217 = vunpack.c.l.b16 %v4185
      %v4218 = vunpack.c.l.b16 %v4186
      %v4219 = vpack.c.b16 %v4204, %v4203
      %v4220 = vpack.c.b16 %v4206, %v4205
      %v4221 = vpack.c.b16 %v4208, %v4207
      %v4222 = vpack.c.b16 %v4210, %v4209
      %v4223 = vpack.c.b16 %v4212, %v4211
      %v4224 = vpack.c.b16 %v4214, %v4213
      %v4225 = vpack.c.b16 %v4216, %v4215
      %v4226 = vpack.c.b16 %v4218, %v4217
      %4235 = vmatprep.subr.bf16.mxu0 0
      %4236 = vmatpush1.bf16.msra.mxu0 %v4219
      %4237 = vmatprep.subr.bf16.mxu0 0
      %4238 = vmatpush1.bf16.msra.mxu0 %v4220
      %4239 = vmatprep.subr.bf16.mxu0 0
      %4240 = vmatpush1.bf16.msra.mxu0 %v4221
      %4241 = vmatprep.subr.bf16.mxu0 0
      %4242 = vmatpush1.bf16.msra.mxu0 %v4222
      %4243 = vmatprep.subr.bf16.mxu0 0
      %4244 = vmatpush1.bf16.msra.mxu0 %v4223
      %4245 = vmatprep.subr.bf16.mxu0 0
      %4246 = vmatpush1.bf16.msra.mxu0 %v4224
      %4247 = vmatprep.subr.bf16.mxu0 0
      %4248 = vmatpush1.bf16.msra.mxu0 %v4225
      %4249 = vmatprep.subr.bf16.mxu0 0
      %4250 = vmatpush1.bf16.msra.mxu0 %v4226
      %4251 = vmatprep.subr.bf16.mxu0 0
      %4252 = vmatpush1.bf16.msra.mxu0 0
      %4253 = vmatprep.subr.bf16.mxu0 0
      %4254 = vmatpush1.bf16.msra.mxu0 0
      %4255 = vmatprep.subr.bf16.mxu0 0
      %4256 = vmatpush1.bf16.msra.mxu0 0
      %4257 = vmatprep.subr.bf16.mxu0 0
      %4258 = vmatpush1.bf16.msra.mxu0 0
      %4259 = vmatprep.subr.bf16.mxu0 0
      %4260 = vmatpush1.bf16.msra.mxu0 0
      %4261 = vmatprep.subr.bf16.mxu0 0
      %4262 = vmatpush1.bf16.msra.mxu0 0
      %4263 = vmatprep.subr.bf16.mxu0 0
      %4264 = vmatpush1.bf16.msra.mxu0 0
      %4265 = vmatprep.subr.bf16.mxu0 0
      %4266 = vmatpush1.bf16.msra.mxu0 0
      %4267 = vmatprep.mubr.bf16.mxu0 0
      %4268 = vmatmul.mubr.bf16.gmra.mrb[0].mxu0 %v3973
      %v4269 = vpop.f32.mrb[0].mxu0
      %v4270 = vadd.f32 0.0, %v4269
      %v4271 = vpop.f32.mrb[0].mxu0
      %v4272 = vpop.f32.mrb[0].mxu0
      %v4273 = vadd.f32 0.0, %v4272
      %v4274 = vpop.f32.mrb[0].mxu0
      %4275 = vmatprep.mubr.bf16.mxu0 0
      %4276 = vmatmul.mubr.bf16.gmra.mrb[0].mxu0 %v3985
      %v4277 = vpop.f32.mrb[0].mxu0
      %v4278 = vadd.f32 0.0, %v4277
      %v4279 = vpop.f32.mrb[0].mxu0
      %v4280 = vpop.f32.mrb[0].mxu0
      %v4281 = vadd.f32 0.0, %v4280
      %v4282 = vpop.f32.mrb[0].mxu0
      %4283 = vmatprep.mubr.bf16.mxu0 0
      %4284 = vmatmul.mubr.bf16.gmra.mrb[0].mxu0 %v3997
      %v4285 = vpop.f32.mrb[0].mxu0
      %v4286 = vadd.f32 0.0, %v4285
      %v4287 = vpop.f32.mrb[0].mxu0
      %v4288 = vpop.f32.mrb[0].mxu0
      %v4289 = vadd.f32 0.0, %v4288
      %v4290 = vpop.f32.mrb[0].mxu0
      %4291 = vmatprep.mubr.bf16.mxu0 0
      %4292 = vmatmul.mubr.bf16.gmra.mrb[0].mxu0 %v4009
      %v4293 = vpop.f32.mrb[0].mxu0
      %v4294 = vadd.f32 0.0, %v4293
      %v4295 = vpop.f32.mrb[0].mxu0
      %v4296 = vpop.f32.mrb[0].mxu0
      %v4297 = vadd.f32 0.0, %v4296
      %v4298 = vpop.f32.mrb[0].mxu0
      %4299 = vmatprep.mubr.bf16.mxu0 0
      %4300 = vmatmul.mubr.bf16.gmra.mrb[0].mxu0 %v4021
      %v4301 = vpop.f32.mrb[0].mxu0
      %v4302 = vadd.f32 0.0, %v4301
      %v4303 = vpop.f32.mrb[0].mxu0
      %v4304 = vpop.f32.mrb[0].mxu0
      %v4305 = vadd.f32 0.0, %v4304
      %v4306 = vpop.f32.mrb[0].mxu0
      %4307 = vmatprep.mubr.bf16.mxu0 0
      %4308 = vmatmul.mubr.bf16.gmra.mrb[0].mxu0 %v4033
      %v4309 = vpop.f32.mrb[0].mxu0
      %v4310 = vadd.f32 0.0, %v4309
      %v4311 = vpop.f32.mrb[0].mxu0
      %v4312 = vpop.f32.mrb[0].mxu0
      %v4313 = vadd.f32 0.0, %v4312
      %v4314 = vpop.f32.mrb[0].mxu0
      %4315 = vmatprep.mubr.bf16.mxu0 0
      %4316 = vmatmul.mubr.bf16.gmra.mrb[0].mxu0 %v4045
      %v4317 = vpop.f32.mrb[0].mxu0
      %v4318 = vadd.f32 0.0, %v4317
      %v4319 = vpop.f32.mrb[0].mxu0
      %v4320 = vpop.f32.mrb[0].mxu0
      %v4321 = vadd.f32 0.0, %v4320
      %v4322 = vpop.f32.mrb[0].mxu0
      %4323 = vmatprep.mubr.bf16.mxu0 0
      %4324 = vmatmul.mubr.bf16.gmra.mrb[0].mxu0 %v4057
      %v4325 = vpop.f32.mrb[0].mxu0
      %v4326 = vadd.f32 0.0, %v4325
      %v4327 = vpop.f32.mrb[0].mxu0
      %v4328 = vpop.f32.mrb[0].mxu0
      %v4329 = vadd.f32 0.0, %v4328
      %v4330 = vpop.f32.mrb[0].mxu0
      %4331 = vmatprep.mubr.bf16.mxu0 0
      %4332 = vmatmul.mubr.bf16.gmra.mrb[0].mxu0 %v4069
      %v4333 = vpop.f32.mrb[0].mxu0
      %v4334 = vadd.f32 0.0, %v4333
      %v4335 = vpop.f32.mrb[0].mxu0
      %v4336 = vpop.f32.mrb[0].mxu0
      %v4337 = vadd.f32 0.0, %v4336
      %v4338 = vpop.f32.mrb[0].mxu0
      %4339 = vmatprep.mubr.bf16.mxu0 0
      %4340 = vmatmul.mubr.bf16.gmra.mrb[0].mxu0 %v4081
      %v4341 = vpop.f32.mrb[0].mxu0
      %v4342 = vadd.f32 0.0, %v4341
      %v4343 = vpop.f32.mrb[0].mxu0
      %v4344 = vpop.f32.mrb[0].mxu0
      %v4345 = vadd.f32 0.0, %v4344
      %v4346 = vpop.f32.mrb[0].mxu0
      %4347 = vmatprep.mubr.bf16.mxu0 0
      %4348 = vmatmul.mubr.bf16.gmra.mrb[0].mxu0 %v4093
      %v4349 = vpop.f32.mrb[0].mxu0
      %v4350 = vadd.f32 0.0, %v4349
      %v4351 = vpop.f32.mrb[0].mxu0
      %v4352 = vpop.f32.mrb[0].mxu0
      %v4353 = vadd.f32 0.0, %v4352
      %v4354 = vpop.f32.mrb[0].mxu0
      %4355 = vmatprep.mubr.bf16.mxu0 0
      %4356 = vmatmul.mubr.bf16.gmra.mrb[0].mxu0 %v4105
      %v4357 = vpop.f32.mrb[0].mxu0
      %v4358 = vadd.f32 0.0, %v4357
      %v4359 = vpop.f32.mrb[0].mxu0
      %v4360 = vpop.f32.mrb[0].mxu0
      %v4361 = vadd.f32 0.0, %v4360
      %v4362 = vpop.f32.mrb[0].mxu0
      %4363 = vmatprep.mubr.bf16.mxu0 0
      %4364 = vmatmul.mubr.bf16.gmra.mrb[0].mxu0 %v4117
      %v4365 = vpop.f32.mrb[0].mxu0
      %v4366 = vadd.f32 0.0, %v4365
      %v4367 = vpop.f32.mrb[0].mxu0
      %v4368 = vpop.f32.mrb[0].mxu0
      %v4369 = vadd.f32 0.0, %v4368
      %v4370 = vpop.f32.mrb[0].mxu0
      %4371 = vmatprep.mubr.bf16.mxu0 0
      %4372 = vmatmul.mubr.bf16.gmra.mrb[0].mxu0 %v4129
      %v4373 = vpop.f32.mrb[0].mxu0
      %v4374 = vadd.f32 0.0, %v4373
      %v4375 = vpop.f32.mrb[0].mxu0
      %v4376 = vpop.f32.mrb[0].mxu0
      %v4377 = vadd.f32 0.0, %v4376
      %v4378 = vpop.f32.mrb[0].mxu0
      %4379 = vmatprep.mubr.bf16.mxu0 0
      %4380 = vmatmul.mubr.bf16.gmra.mrb[0].mxu0 %v4141
      %v4381 = vpop.f32.mrb[0].mxu0
      %v4382 = vadd.f32 0.0, %v4381
      %v4383 = vpop.f32.mrb[0].mxu0
      %v4384 = vpop.f32.mrb[0].mxu0
      %v4385 = vadd.f32 0.0, %v4384
      %v4386 = vpop.f32.mrb[0].mxu0
      %4387 = vmatprep.mubr.bf16.mxu0 0
      %4388 = vmatmul.mubr.bf16.gmra.mrb[0].mxu0 %v4153
      %v4389 = vpop.f32.mrb[0].mxu0
      %v4390 = vadd.f32 0.0, %v4389
      %v4391 = vpop.f32.mrb[0].mxu0
      %v4392 = vpop.f32.mrb[0].mxu0
      %v4393 = vadd.f32 0.0, %v4392
      %v4394 = vpop.f32.mrb[0].mxu0
      %4395 = vdwg.mxu0
      %v4396 = vadd.f32 %v3866, %v4270
      %v4397 = vadd.f32 %v3867, %v4273
      %v4398 = vadd.f32 %v3868, %v4278
      %v4399 = vadd.f32 %v3869, %v4281
      %v4400 = vadd.f32 %v3870, %v4286
      %v4401 = vadd.f32 %v3871, %v4289
      %v4402 = vadd.f32 %v3872, %v4294
      %v4403 = vadd.f32 %v3873, %v4297
      %v4404 = vadd.f32 %v3874, %v4302
      %v4405 = vadd.f32 %v3875, %v4305
      %v4406 = vadd.f32 %v3876, %v4310
      %v4407 = vadd.f32 %v3877, %v4313
      %v4408 = vadd.f32 %v3878, %v4318
      %v4409 = vadd.f32 %v3879, %v4321
      %v4410 = vadd.f32 %v3880, %v4326
      %v4411 = vadd.f32 %v3881, %v4329
      %v4412 = vadd.f32 %v3882, %v4334
      %v4413 = vadd.f32 %v3883, %v4337
      %v4414 = vadd.f32 %v3884, %v4342
      %v4415 = vadd.f32 %v3885, %v4345
      %v4416 = vadd.f32 %v3886, %v4350
      %v4417 = vadd.f32 %v3887, %v4353
      %v4418 = vadd.f32 %v3888, %v4358
      %v4419 = vadd.f32 %v3889, %v4361
      %v4420 = vadd.f32 %v3890, %v4366
      %v4421 = vadd.f32 %v3891, %v4369
      %v4422 = vadd.f32 %v3892, %v4374
      %v4423 = vadd.f32 %v3893, %v4377
      %v4424 = vadd.f32 %v3894, %v4382
      %v4425 = vadd.f32 %v3895, %v4385
      %v4426 = vadd.f32 %v3896, %v4390
      %v4427 = vadd.f32 %v3897, %v4393
      %v4428 = vld [vmem:[%s1407 + $0x8] sm:$0xff]
      %v4429 = vld [vmem:[%s1407 + $0x18] sm:$0xff]
      %v4430 = vld [vmem:[%s1407 + $0x28] sm:$0xff]
      %v4431 = vld [vmem:[%s1407 + $0x38] sm:$0xff]
      %v4432 = vld [vmem:[%s1407 + $0x48] sm:$0xff]
      %v4433 = vld [vmem:[%s1407 + $0x58] sm:$0xff]
      %v4434 = vld [vmem:[%s1407 + $0x68] sm:$0xff]
      %v4435 = vld [vmem:[%s1407 + $0x78] sm:$0xff]
      %v4436 = vld [vmem:[%s1407 + $0x88] sm:$0xff]
      %v4437 = vld [vmem:[%s1407 + $0x98] sm:$0xff]
      %v4438 = vld [vmem:[%s1407 + $0xa8] sm:$0xff]
      %v4439 = vld [vmem:[%s1407 + $0xb8] sm:$0xff]
      %v4440 = vld [vmem:[%s1407 + $0xc8] sm:$0xff]
      %v4441 = vld [vmem:[%s1407 + $0xd8] sm:$0xff]
      %v4442 = vld [vmem:[%s1407 + $0xe8] sm:$0xff]
      %v4443 = vld [vmem:[%s1407 + $0xf8] sm:$0xff]
      %s4444 = scalar_lea.vmem %s3, 448
      %v4445 = vld [vmem:[%s4444] sm:$0xf]
      %v4446 = vld [vmem:[%s4444 + $0x4] sm:$0xf]
      %v4447 = vld [vmem:[%s4444 + $0x8] sm:$0xf]
      %v4448 = vld [vmem:[%s4444 + $0xc] sm:$0xf]
      %v4449 = vld [vmem:[%s4444 + $0x10] sm:$0xf]
      %v4450 = vld [vmem:[%s4444 + $0x14] sm:$0xf]
      %v4451 = vld [vmem:[%s4444 + $0x18] sm:$0xf]
      %v4452 = vld [vmem:[%s4444 + $0x1c] sm:$0xf]
      %v4453 = vld [vmem:[%s4444 + $0x20] sm:$0xf]
      %v4454 = vld [vmem:[%s4444 + $0x24] sm:$0xf]
      %v4455 = vld [vmem:[%s4444 + $0x28] sm:$0xf]
      %v4456 = vld [vmem:[%s4444 + $0x2c] sm:$0xf]
      %v4457 = vld [vmem:[%s4444 + $0x30] sm:$0xf]
      %v4458 = vld [vmem:[%s4444 + $0x34] sm:$0xf]
      %v4459 = vld [vmem:[%s4444 + $0x38] sm:$0xf]
      %v4460 = vld [vmem:[%s4444 + $0x3c] sm:$0xf]
      %v4477 = vunpack.c.l.b16 %v4445
      %v4478 = vunpack.c.l.b16 %v4446
      %v4479 = vunpack.c.l.b16 %v4447
      %v4480 = vunpack.c.l.b16 %v4448
      %v4481 = vunpack.c.l.b16 %v4449
      %v4482 = vunpack.c.l.b16 %v4450
      %v4483 = vunpack.c.l.b16 %v4451
      %v4484 = vunpack.c.l.b16 %v4452
      %v4485 = vunpack.c.l.b16 %v4453
      %v4486 = vunpack.c.l.b16 %v4454
      %v4487 = vunpack.c.l.b16 %v4455
      %v4488 = vunpack.c.l.b16 %v4456
      %v4489 = vunpack.c.l.b16 %v4457
      %v4490 = vunpack.c.l.b16 %v4458
      %v4491 = vunpack.c.l.b16 %v4459
      %v4492 = vunpack.c.l.b16 %v4460
      %v4493 = vpack.c.b16 %v4478, %v4477
      %v4494 = vpack.c.b16 %v4480, %v4479
      %v4495 = vpack.c.b16 %v4482, %v4481
      %v4496 = vpack.c.b16 %v4484, %v4483
      %v4497 = vpack.c.b16 %v4486, %v4485
      %v4498 = vpack.c.b16 %v4488, %v4487
      %v4499 = vpack.c.b16 %v4490, %v4489
      %v4500 = vpack.c.b16 %v4492, %v4491
      %4509 = vmatprep.subr.bf16.mxu0 0
      %4510 = vmatpush1.bf16.msra.mxu0 %v4493
      %4511 = vmatprep.subr.bf16.mxu0 0
      %4512 = vmatpush1.bf16.msra.mxu0 %v4494
      %4513 = vmatprep.subr.bf16.mxu0 0
      %4514 = vmatpush1.bf16.msra.mxu0 %v4495
      %4515 = vmatprep.subr.bf16.mxu0 0
      %4516 = vmatpush1.bf16.msra.mxu0 %v4496
      %4517 = vmatprep.subr.bf16.mxu0 0
      %4518 = vmatpush1.bf16.msra.mxu0 %v4497
      %4519 = vmatprep.subr.bf16.mxu0 0
      %4520 = vmatpush1.bf16.msra.mxu0 %v4498
      %4521 = vmatprep.subr.bf16.mxu0 0
      %4522 = vmatpush1.bf16.msra.mxu0 %v4499
      %4523 = vmatprep.subr.bf16.mxu0 0
      %4524 = vmatpush1.bf16.msra.mxu0 %v4500
      %4525 = vmatprep.subr.bf16.mxu0 0
      %4526 = vmatpush1.bf16.msra.mxu0 0
      %4527 = vmatprep.subr.bf16.mxu0 0
      %4528 = vmatpush1.bf16.msra.mxu0 0
      %4529 = vmatprep.subr.bf16.mxu0 0
      %4530 = vmatpush1.bf16.msra.mxu0 0
      %4531 = vmatprep.subr.bf16.mxu0 0
      %4532 = vmatpush1.bf16.msra.mxu0 0
      %4533 = vmatprep.subr.bf16.mxu0 0
      %4534 = vmatpush1.bf16.msra.mxu0 0
      %4535 = vmatprep.subr.bf16.mxu0 0
      %4536 = vmatpush1.bf16.msra.mxu0 0
      %4537 = vmatprep.subr.bf16.mxu0 0
      %4538 = vmatpush1.bf16.msra.mxu0 0
      %4539 = vmatprep.subr.bf16.mxu0 0
      %4540 = vmatpush1.bf16.msra.mxu0 0
      %4541 = vmatprep.mubr.bf16.mxu0 0
      %4542 = vmatmul.mubr.bf16.gmra.mrb[0].mxu0 %v4428
      %v4543 = vpop.f32.mrb[0].mxu0
      %v4544 = vadd.f32 0.0, %v4543
      %v4545 = vpop.f32.mrb[0].mxu0
      %v4546 = vpop.f32.mrb[0].mxu0
      %v4547 = vadd.f32 0.0, %v4546
      %v4548 = vpop.f32.mrb[0].mxu0
      %4549 = vmatprep.mubr.bf16.mxu0 0
      %4550 = vmatmul.mubr.bf16.gmra.mrb[0].mxu0 %v4429
      %v4551 = vpop.f32.mrb[0].mxu0
      %v4552 = vadd.f32 0.0, %v4551
      %v4553 = vpop.f32.mrb[0].mxu0
      %v4554 = vpop.f32.mrb[0].mxu0
      %v4555 = vadd.f32 0.0, %v4554
      %v4556 = vpop.f32.mrb[0].mxu0
      %4557 = vmatprep.mubr.bf16.mxu0 0
      %4558 = vmatmul.mubr.bf16.gmra.mrb[0].mxu0 %v4430
      %v4559 = vpop.f32.mrb[0].mxu0
      %v4560 = vadd.f32 0.0, %v4559
      %v4561 = vpop.f32.mrb[0].mxu0
      %v4562 = vpop.f32.mrb[0].mxu0
      %v4563 = vadd.f32 0.0, %v4562
      %v4564 = vpop.f32.mrb[0].mxu0
      %4565 = vmatprep.mubr.bf16.mxu0 0
      %4566 = vmatmul.mubr.bf16.gmra.mrb[0].mxu0 %v4431
      %v4567 = vpop.f32.mrb[0].mxu0
      %v4568 = vadd.f32 0.0, %v4567
      %v4569 = vpop.f32.mrb[0].mxu0
      %v4570 = vpop.f32.mrb[0].mxu0
      %v4571 = vadd.f32 0.0, %v4570
      %v4572 = vpop.f32.mrb[0].mxu0
      %4573 = vmatprep.mubr.bf16.mxu0 0
      %4574 = vmatmul.mubr.bf16.gmra.mrb[0].mxu0 %v4432
      %v4575 = vpop.f32.mrb[0].mxu0
      %v4576 = vadd.f32 0.0, %v4575
      %v4577 = vpop.f32.mrb[0].mxu0
      %v4578 = vpop.f32.mrb[0].mxu0
      %v4579 = vadd.f32 0.0, %v4578
      %v4580 = vpop.f32.mrb[0].mxu0
      %4581 = vmatprep.mubr.bf16.mxu0 0
      %4582 = vmatmul.mubr.bf16.gmra.mrb[0].mxu0 %v4433
      %v4583 = vpop.f32.mrb[0].mxu0
      %v4584 = vadd.f32 0.0, %v4583
      %v4585 = vpop.f32.mrb[0].mxu0
      %v4586 = vpop.f32.mrb[0].mxu0
      %v4587 = vadd.f32 0.0, %v4586
      %v4588 = vpop.f32.mrb[0].mxu0
      %4589 = vmatprep.mubr.bf16.mxu0 0
      %4590 = vmatmul.mubr.bf16.gmra.mrb[0].mxu0 %v4434
      %v4591 = vpop.f32.mrb[0].mxu0
      %v4592 = vadd.f32 0.0, %v4591
      %v4593 = vpop.f32.mrb[0].mxu0
      %v4594 = vpop.f32.mrb[0].mxu0
      %v4595 = vadd.f32 0.0, %v4594
      %v4596 = vpop.f32.mrb[0].mxu0
      %4597 = vmatprep.mubr.bf16.mxu0 0
      %4598 = vmatmul.mubr.bf16.gmra.mrb[0].mxu0 %v4435
      %v4599 = vpop.f32.mrb[0].mxu0
      %v4600 = vadd.f32 0.0, %v4599
      %v4601 = vpop.f32.mrb[0].mxu0
      %v4602 = vpop.f32.mrb[0].mxu0
      %v4603 = vadd.f32 0.0, %v4602
      %v4604 = vpop.f32.mrb[0].mxu0
      %4605 = vmatprep.mubr.bf16.mxu0 0
      %4606 = vmatmul.mubr.bf16.gmra.mrb[0].mxu0 %v4436
      %v4607 = vpop.f32.mrb[0].mxu0
      %v4608 = vadd.f32 0.0, %v4607
      %v4609 = vpop.f32.mrb[0].mxu0
      %v4610 = vpop.f32.mrb[0].mxu0
      %v4611 = vadd.f32 0.0, %v4610
      %v4612 = vpop.f32.mrb[0].mxu0
      %4613 = vmatprep.mubr.bf16.mxu0 0
      %4614 = vmatmul.mubr.bf16.gmra.mrb[0].mxu0 %v4437
      %v4615 = vpop.f32.mrb[0].mxu0
      %v4616 = vadd.f32 0.0, %v4615
      %v4617 = vpop.f32.mrb[0].mxu0
      %v4618 = vpop.f32.mrb[0].mxu0
      %v4619 = vadd.f32 0.0, %v4618
      %v4620 = vpop.f32.mrb[0].mxu0
      %4621 = vmatprep.mubr.bf16.mxu0 0
      %4622 = vmatmul.mubr.bf16.gmra.mrb[0].mxu0 %v4438
      %v4623 = vpop.f32.mrb[0].mxu0
      %v4624 = vadd.f32 0.0, %v4623
      %v4625 = vpop.f32.mrb[0].mxu0
      %v4626 = vpop.f32.mrb[0].mxu0
      %v4627 = vadd.f32 0.0, %v4626
      %v4628 = vpop.f32.mrb[0].mxu0
      %4629 = vmatprep.mubr.bf16.mxu0 0
      %4630 = vmatmul.mubr.bf16.gmra.mrb[0].mxu0 %v4439
      %v4631 = vpop.f32.mrb[0].mxu0
      %v4632 = vadd.f32 0.0, %v4631
      %v4633 = vpop.f32.mrb[0].mxu0
      %v4634 = vpop.f32.mrb[0].mxu0
      %v4635 = vadd.f32 0.0, %v4634
      %v4636 = vpop.f32.mrb[0].mxu0
      %4637 = vmatprep.mubr.bf16.mxu0 0
      %4638 = vmatmul.mubr.bf16.gmra.mrb[0].mxu0 %v4440
      %v4639 = vpop.f32.mrb[0].mxu0
      %v4640 = vadd.f32 0.0, %v4639
      %v4641 = vpop.f32.mrb[0].mxu0
      %v4642 = vpop.f32.mrb[0].mxu0
      %v4643 = vadd.f32 0.0, %v4642
      %v4644 = vpop.f32.mrb[0].mxu0
      %4645 = vmatprep.mubr.bf16.mxu0 0
      %4646 = vmatmul.mubr.bf16.gmra.mrb[0].mxu0 %v4441
      %v4647 = vpop.f32.mrb[0].mxu0
      %v4648 = vadd.f32 0.0, %v4647
      %v4649 = vpop.f32.mrb[0].mxu0
      %v4650 = vpop.f32.mrb[0].mxu0
      %v4651 = vadd.f32 0.0, %v4650
      %v4652 = vpop.f32.mrb[0].mxu0
      %4653 = vmatprep.mubr.bf16.mxu0 0
      %4654 = vmatmul.mubr.bf16.gmra.mrb[0].mxu0 %v4442
      %v4655 = vpop.f32.mrb[0].mxu0
      %v4656 = vadd.f32 0.0, %v4655
      %v4657 = vpop.f32.mrb[0].mxu0
      %v4658 = vpop.f32.mrb[0].mxu0
      %v4659 = vadd.f32 0.0, %v4658
      %v4660 = vpop.f32.mrb[0].mxu0
      %4661 = vmatprep.mubr.bf16.mxu0 0
      %4662 = vmatmul.mubr.bf16.gmra.mrb[0].mxu0 %v4443
      %v4663 = vpop.f32.mrb[0].mxu0
      %v4664 = vadd.f32 0.0, %v4663
      %v4665 = vpop.f32.mrb[0].mxu0
      %v4666 = vpop.f32.mrb[0].mxu0
      %v4667 = vadd.f32 0.0, %v4666
      %v4668 = vpop.f32.mrb[0].mxu0
      %4669 = vdwg.mxu0
      %v4670 = vadd.f32 %v4396, %v4544
      %v4671 = vadd.f32 %v4397, %v4547
      %v4672 = vadd.f32 %v4398, %v4552
      %v4673 = vadd.f32 %v4399, %v4555
      %v4674 = vadd.f32 %v4400, %v4560
      %v4675 = vadd.f32 %v4401, %v4563
      %v4676 = vadd.f32 %v4402, %v4568
      %v4677 = vadd.f32 %v4403, %v4571
      %v4678 = vadd.f32 %v4404, %v4576
      %v4679 = vadd.f32 %v4405, %v4579
      %v4680 = vadd.f32 %v4406, %v4584
      %v4681 = vadd.f32 %v4407, %v4587
      %v4682 = vadd.f32 %v4408, %v4592
      %v4683 = vadd.f32 %v4409, %v4595
      %v4684 = vadd.f32 %v4410, %v4600
      %v4685 = vadd.f32 %v4411, %v4603
      %v4686 = vadd.f32 %v4412, %v4608
      %v4687 = vadd.f32 %v4413, %v4611
      %v4688 = vadd.f32 %v4414, %v4616
      %v4689 = vadd.f32 %v4415, %v4619
      %v4690 = vadd.f32 %v4416, %v4624
      %v4691 = vadd.f32 %v4417, %v4627
      %v4692 = vadd.f32 %v4418, %v4632
      %v4693 = vadd.f32 %v4419, %v4635
      %v4694 = vadd.f32 %v4420, %v4640
      %v4695 = vadd.f32 %v4421, %v4643
      %v4696 = vadd.f32 %v4422, %v4648
      %v4697 = vadd.f32 %v4423, %v4651
      %v4698 = vadd.f32 %v4424, %v4656
      %v4699 = vadd.f32 %v4425, %v4659
      %v4700 = vadd.f32 %v4426, %v4664
      %v4701 = vadd.f32 %v4427, %v4667
      %s4702 = scalar_lea.vmem %s3, 512
      %v4703 = vld [vmem:[%s4702] sm:$0xf]
      %v4704 = vld [vmem:[%s4702 + $0x4] sm:$0xf]
      %v4705 = vld [vmem:[%s4702 + $0x8] sm:$0xf]
      %v4706 = vld [vmem:[%s4702 + $0xc] sm:$0xf]
      %v4707 = vld [vmem:[%s4702 + $0x10] sm:$0xf]
      %v4708 = vld [vmem:[%s4702 + $0x14] sm:$0xf]
      %v4709 = vld [vmem:[%s4702 + $0x18] sm:$0xf]
      %v4710 = vld [vmem:[%s4702 + $0x1c] sm:$0xf]
      %v4711 = vld [vmem:[%s4702 + $0x20] sm:$0xf]
      %v4712 = vld [vmem:[%s4702 + $0x24] sm:$0xf]
      %v4713 = vld [vmem:[%s4702 + $0x28] sm:$0xf]
      %v4714 = vld [vmem:[%s4702 + $0x2c] sm:$0xf]
      %v4715 = vld [vmem:[%s4702 + $0x30] sm:$0xf]
      %v4716 = vld [vmem:[%s4702 + $0x34] sm:$0xf]
      %v4717 = vld [vmem:[%s4702 + $0x38] sm:$0xf]
      %v4718 = vld [vmem:[%s4702 + $0x3c] sm:$0xf]
      %v4735 = vunpack.c.l.b16 %v4703
      %v4736 = vunpack.c.l.b16 %v4704
      %v4737 = vunpack.c.l.b16 %v4705
      %v4738 = vunpack.c.l.b16 %v4706
      %v4739 = vunpack.c.l.b16 %v4707
      %v4740 = vunpack.c.l.b16 %v4708
      %v4741 = vunpack.c.l.b16 %v4709
      %v4742 = vunpack.c.l.b16 %v4710
      %v4743 = vunpack.c.l.b16 %v4711
      %v4744 = vunpack.c.l.b16 %v4712
      %v4745 = vunpack.c.l.b16 %v4713
      %v4746 = vunpack.c.l.b16 %v4714
      %v4747 = vunpack.c.l.b16 %v4715
      %v4748 = vunpack.c.l.b16 %v4716
      %v4749 = vunpack.c.l.b16 %v4717
      %v4750 = vunpack.c.l.b16 %v4718
      %v4751 = vpack.c.b16 %v4736, %v4735
      %v4752 = vpack.c.b16 %v4738, %v4737
      %v4753 = vpack.c.b16 %v4740, %v4739
      %v4754 = vpack.c.b16 %v4742, %v4741
      %v4755 = vpack.c.b16 %v4744, %v4743
      %v4756 = vpack.c.b16 %v4746, %v4745
      %v4757 = vpack.c.b16 %v4748, %v4747
      %v4758 = vpack.c.b16 %v4750, %v4749
      %4767 = vmatprep.subr.bf16.mxu0 0
      %4768 = vmatpush1.bf16.msra.mxu0 %v4751
      %4769 = vmatprep.subr.bf16.mxu0 0
      %4770 = vmatpush1.bf16.msra.mxu0 %v4752
      %4771 = vmatprep.subr.bf16.mxu0 0
      %4772 = vmatpush1.bf16.msra.mxu0 %v4753
      %4773 = vmatprep.subr.bf16.mxu0 0
      %4774 = vmatpush1.bf16.msra.mxu0 %v4754
      %4775 = vmatprep.subr.bf16.mxu0 0
      %4776 = vmatpush1.bf16.msra.mxu0 %v4755
      %4777 = vmatprep.subr.bf16.mxu0 0
      %4778 = vmatpush1.bf16.msra.mxu0 %v4756
      %4779 = vmatprep.subr.bf16.mxu0 0
      %4780 = vmatpush1.bf16.msra.mxu0 %v4757
      %4781 = vmatprep.subr.bf16.mxu0 0
      %4782 = vmatpush1.bf16.msra.mxu0 %v4758
      %4783 = vmatprep.subr.bf16.mxu0 0
      %4784 = vmatpush1.bf16.msra.mxu0 0
      %4785 = vmatprep.subr.bf16.mxu0 0
      %4786 = vmatpush1.bf16.msra.mxu0 0
      %4787 = vmatprep.subr.bf16.mxu0 0
      %4788 = vmatpush1.bf16.msra.mxu0 0
      %4789 = vmatprep.subr.bf16.mxu0 0
      %4790 = vmatpush1.bf16.msra.mxu0 0
      %4791 = vmatprep.subr.bf16.mxu0 0
      %4792 = vmatpush1.bf16.msra.mxu0 0
      %4793 = vmatprep.subr.bf16.mxu0 0
      %4794 = vmatpush1.bf16.msra.mxu0 0
      %4795 = vmatprep.subr.bf16.mxu0 0
      %4796 = vmatpush1.bf16.msra.mxu0 0
      %4797 = vmatprep.subr.bf16.mxu0 0
      %4798 = vmatpush1.bf16.msra.mxu0 0
      %4799 = vmatprep.mubr.bf16.mxu0 0
      %4800 = vmatmul.mubr.bf16.gmra.mrb[0].mxu0 %v3899
      %v4801 = vpop.f32.mrb[0].mxu0
      %v4802 = vadd.f32 0.0, %v4801
      %v4803 = vpop.f32.mrb[0].mxu0
      %v4804 = vpop.f32.mrb[0].mxu0
      %v4805 = vadd.f32 0.0, %v4804
      %v4806 = vpop.f32.mrb[0].mxu0
      %4807 = vmatprep.mubr.bf16.mxu0 0
      %4808 = vmatmul.mubr.bf16.gmra.mrb[0].mxu0 %v3901
      %v4809 = vpop.f32.mrb[0].mxu0
      %v4810 = vadd.f32 0.0, %v4809
      %v4811 = vpop.f32.mrb[0].mxu0
      %v4812 = vpop.f32.mrb[0].mxu0
      %v4813 = vadd.f32 0.0, %v4812
      %v4814 = vpop.f32.mrb[0].mxu0
      %4815 = vmatprep.mubr.bf16.mxu0 0
      %4816 = vmatmul.mubr.bf16.gmra.mrb[0].mxu0 %v3903
      %v4817 = vpop.f32.mrb[0].mxu0
      %v4818 = vadd.f32 0.0, %v4817
      %v4819 = vpop.f32.mrb[0].mxu0
      %v4820 = vpop.f32.mrb[0].mxu0
      %v4821 = vadd.f32 0.0, %v4820
      %v4822 = vpop.f32.mrb[0].mxu0
      %4823 = vmatprep.mubr.bf16.mxu0 0
      %4824 = vmatmul.mubr.bf16.gmra.mrb[0].mxu0 %v3905
      %v4825 = vpop.f32.mrb[0].mxu0
      %v4826 = vadd.f32 0.0, %v4825
      %v4827 = vpop.f32.mrb[0].mxu0
      %v4828 = vpop.f32.mrb[0].mxu0
      %v4829 = vadd.f32 0.0, %v4828
      %v4830 = vpop.f32.mrb[0].mxu0
      %4831 = vmatprep.mubr.bf16.mxu0 0
      %4832 = vmatmul.mubr.bf16.gmra.mrb[0].mxu0 %v3907
      %v4833 = vpop.f32.mrb[0].mxu0
      %v4834 = vadd.f32 0.0, %v4833
      %v4835 = vpop.f32.mrb[0].mxu0
      %v4836 = vpop.f32.mrb[0].mxu0
      %v4837 = vadd.f32 0.0, %v4836
      %v4838 = vpop.f32.mrb[0].mxu0
      %4839 = vmatprep.mubr.bf16.mxu0 0
      %4840 = vmatmul.mubr.bf16.gmra.mrb[0].mxu0 %v3909
      %v4841 = vpop.f32.mrb[0].mxu0
      %v4842 = vadd.f32 0.0, %v4841
      %v4843 = vpop.f32.mrb[0].mxu0
      %v4844 = vpop.f32.mrb[0].mxu0
      %v4845 = vadd.f32 0.0, %v4844
      %v4846 = vpop.f32.mrb[0].mxu0
      %4847 = vmatprep.mubr.bf16.mxu0 0
      %4848 = vmatmul.mubr.bf16.gmra.mrb[0].mxu0 %v3911
      %v4849 = vpop.f32.mrb[0].mxu0
      %v4850 = vadd.f32 0.0, %v4849
      %v4851 = vpop.f32.mrb[0].mxu0
      %v4852 = vpop.f32.mrb[0].mxu0
      %v4853 = vadd.f32 0.0, %v4852
      %v4854 = vpop.f32.mrb[0].mxu0
      %4855 = vmatprep.mubr.bf16.mxu0 0
      %4856 = vmatmul.mubr.bf16.gmra.mrb[0].mxu0 %v3913
      %v4857 = vpop.f32.mrb[0].mxu0
      %v4858 = vadd.f32 0.0, %v4857
      %v4859 = vpop.f32.mrb[0].mxu0
      %v4860 = vpop.f32.mrb[0].mxu0
      %v4861 = vadd.f32 0.0, %v4860
      %v4862 = vpop.f32.mrb[0].mxu0
      %4863 = vmatprep.mubr.bf16.mxu0 0
      %4864 = vmatmul.mubr.bf16.gmra.mrb[0].mxu0 %v3915
      %v4865 = vpop.f32.mrb[0].mxu0
      %v4866 = vadd.f32 0.0, %v4865
      %v4867 = vpop.f32.mrb[0].mxu0
      %v4868 = vpop.f32.mrb[0].mxu0
      %v4869 = vadd.f32 0.0, %v4868
      %v4870 = vpop.f32.mrb[0].mxu0
      %4871 = vmatprep.mubr.bf16.mxu0 0
      %4872 = vmatmul.mubr.bf16.gmra.mrb[0].mxu0 %v3917
      %v4873 = vpop.f32.mrb[0].mxu0
      %v4874 = vadd.f32 0.0, %v4873
      %v4875 = vpop.f32.mrb[0].mxu0
      %v4876 = vpop.f32.mrb[0].mxu0
      %v4877 = vadd.f32 0.0, %v4876
      %v4878 = vpop.f32.mrb[0].mxu0
      %4879 = vmatprep.mubr.bf16.mxu0 0
      %4880 = vmatmul.mubr.bf16.gmra.mrb[0].mxu0 %v3919
      %v4881 = vpop.f32.mrb[0].mxu0
      %v4882 = vadd.f32 0.0, %v4881
      %v4883 = vpop.f32.mrb[0].mxu0
      %v4884 = vpop.f32.mrb[0].mxu0
      %v4885 = vadd.f32 0.0, %v4884
      %v4886 = vpop.f32.mrb[0].mxu0
      %4887 = vmatprep.mubr.bf16.mxu0 0
      %4888 = vmatmul.mubr.bf16.gmra.mrb[0].mxu0 %v3921
      %v4889 = vpop.f32.mrb[0].mxu0
      %v4890 = vadd.f32 0.0, %v4889
      %v4891 = vpop.f32.mrb[0].mxu0
      %v4892 = vpop.f32.mrb[0].mxu0
      %v4893 = vadd.f32 0.0, %v4892
      %v4894 = vpop.f32.mrb[0].mxu0
      %4895 = vmatprep.mubr.bf16.mxu0 0
      %4896 = vmatmul.mubr.bf16.gmra.mrb[0].mxu0 %v3923
      %v4897 = vpop.f32.mrb[0].mxu0
      %v4898 = vadd.f32 0.0, %v4897
      %v4899 = vpop.f32.mrb[0].mxu0
      %v4900 = vpop.f32.mrb[0].mxu0
      %v4901 = vadd.f32 0.0, %v4900
      %v4902 = vpop.f32.mrb[0].mxu0
      %4903 = vmatprep.mubr.bf16.mxu0 0
      %4904 = vmatmul.mubr.bf16.gmra.mrb[0].mxu0 %v3925
      %v4905 = vpop.f32.mrb[0].mxu0
      %v4906 = vadd.f32 0.0, %v4905
      %v4907 = vpop.f32.mrb[0].mxu0
      %v4908 = vpop.f32.mrb[0].mxu0
      %v4909 = vadd.f32 0.0, %v4908
      %v4910 = vpop.f32.mrb[0].mxu0
      %4911 = vmatprep.mubr.bf16.mxu0 0
      %4912 = vmatmul.mubr.bf16.gmra.mrb[0].mxu0 %v3927
      %v4913 = vpop.f32.mrb[0].mxu0
      %v4914 = vadd.f32 0.0, %v4913
      %v4915 = vpop.f32.mrb[0].mxu0
      %v4916 = vpop.f32.mrb[0].mxu0
      %v4917 = vadd.f32 0.0, %v4916
      %v4918 = vpop.f32.mrb[0].mxu0
      %4919 = vmatprep.mubr.bf16.mxu0 0
      %4920 = vmatmul.mubr.bf16.gmra.mrb[0].mxu0 %v3929
      %v4921 = vpop.f32.mrb[0].mxu0
      %v4922 = vadd.f32 0.0, %v4921
      %v4923 = vpop.f32.mrb[0].mxu0
      %v4924 = vpop.f32.mrb[0].mxu0
      %v4925 = vadd.f32 0.0, %v4924
      %v4926 = vpop.f32.mrb[0].mxu0
      %4927 = vdwg.mxu0
      %v4928 = vadd.f32 %v4670, %v4802
      %v4929 = vadd.f32 %v4671, %v4805
      %v4930 = vadd.f32 %v4672, %v4810
      %v4931 = vadd.f32 %v4673, %v4813
      %v4932 = vadd.f32 %v4674, %v4818
      %v4933 = vadd.f32 %v4675, %v4821
      %v4934 = vadd.f32 %v4676, %v4826
      %v4935 = vadd.f32 %v4677, %v4829
      %v4936 = vadd.f32 %v4678, %v4834
      %v4937 = vadd.f32 %v4679, %v4837
      %v4938 = vadd.f32 %v4680, %v4842
      %v4939 = vadd.f32 %v4681, %v4845
      %v4940 = vadd.f32 %v4682, %v4850
      %v4941 = vadd.f32 %v4683, %v4853
      %v4942 = vadd.f32 %v4684, %v4858
      %v4943 = vadd.f32 %v4685, %v4861
      %v4944 = vadd.f32 %v4686, %v4866
      %v4945 = vadd.f32 %v4687, %v4869
      %v4946 = vadd.f32 %v4688, %v4874
      %v4947 = vadd.f32 %v4689, %v4877
      %v4948 = vadd.f32 %v4690, %v4882
      %v4949 = vadd.f32 %v4691, %v4885
      %v4950 = vadd.f32 %v4692, %v4890
      %v4951 = vadd.f32 %v4693, %v4893
      %v4952 = vadd.f32 %v4694, %v4898
      %v4953 = vadd.f32 %v4695, %v4901
      %v4954 = vadd.f32 %v4696, %v4906
      %v4955 = vadd.f32 %v4697, %v4909
      %v4956 = vadd.f32 %v4698, %v4914
      %v4957 = vadd.f32 %v4699, %v4917
      %v4958 = vadd.f32 %v4700, %v4922
      %v4959 = vadd.f32 %v4701, %v4925
      %v4960 = vld [vmem:[%s4] sm:$0x1]
      %v4962 = vlaneseq
      %v4963 = vshrl.u32 %v4962, 7
      %v4964 = vsub.s32 0, %v4963
      %v4965 = vrot.slane %v4960, %v4964
      %v4967 = vadd.f32 %v4928, %v4965
      %v4968 = vadd.f32 %v4929, %v4965
      %v4969 = vadd.f32 %v4930, %v4965
      %v4970 = vadd.f32 %v4931, %v4965
      %v4971 = vadd.f32 %v4932, %v4965
      %v4972 = vadd.f32 %v4933, %v4965
      %v4973 = vadd.f32 %v4934, %v4965
      %v4974 = vadd.f32 %v4935, %v4965
      %v4975 = vadd.f32 %v4936, %v4965
      %v4976 = vadd.f32 %v4937, %v4965
      %v4977 = vadd.f32 %v4938, %v4965
      %v4978 = vadd.f32 %v4939, %v4965
      %v4979 = vadd.f32 %v4940, %v4965
      %v4980 = vadd.f32 %v4941, %v4965
      %v4981 = vadd.f32 %v4942, %v4965
      %v4982 = vadd.f32 %v4943, %v4965
      %v4983 = vadd.f32 %v4944, %v4965
      %v4984 = vadd.f32 %v4945, %v4965
      %v4985 = vadd.f32 %v4946, %v4965
      %v4986 = vadd.f32 %v4947, %v4965
      %v4987 = vadd.f32 %v4948, %v4965
      %v4988 = vadd.f32 %v4949, %v4965
      %v4989 = vadd.f32 %v4950, %v4965
      %v4990 = vadd.f32 %v4951, %v4965
      %v4991 = vadd.f32 %v4952, %v4965
      %v4992 = vadd.f32 %v4953, %v4965
      %v4993 = vadd.f32 %v4954, %v4965
      %v4994 = vadd.f32 %v4955, %v4965
      %v4995 = vadd.f32 %v4956, %v4965
      %v4996 = vadd.f32 %v4957, %v4965
      %v4997 = vadd.f32 %v4958, %v4965
      %v4998 = vadd.f32 %v4959, %v4965
      %v4999 = vmax.f32 %v4967, 0.0
      %v5000 = vmax.f32 %v4968, 0.0
      %v5001 = vmax.f32 %v4969, 0.0
      %v5002 = vmax.f32 %v4970, 0.0
      %v5003 = vmax.f32 %v4971, 0.0
      %v5004 = vmax.f32 %v4972, 0.0
      %v5005 = vmax.f32 %v4973, 0.0
      %v5006 = vmax.f32 %v4974, 0.0
      %v5007 = vmax.f32 %v4975, 0.0
      %v5008 = vmax.f32 %v4976, 0.0
      %v5009 = vmax.f32 %v4977, 0.0
      %v5010 = vmax.f32 %v4978, 0.0
      %v5011 = vmax.f32 %v4979, 0.0
      %v5012 = vmax.f32 %v4980, 0.0
      %v5013 = vmax.f32 %v4981, 0.0
      %v5014 = vmax.f32 %v4982, 0.0
      %v5015 = vmax.f32 %v4983, 0.0
      %v5016 = vmax.f32 %v4984, 0.0
      %v5017 = vmax.f32 %v4985, 0.0
      %v5018 = vmax.f32 %v4986, 0.0
      %v5019 = vmax.f32 %v4987, 0.0
      %v5020 = vmax.f32 %v4988, 0.0
      %v5021 = vmax.f32 %v4989, 0.0
      %v5022 = vmax.f32 %v4990, 0.0
      %v5023 = vmax.f32 %v4991, 0.0
      %v5024 = vmax.f32 %v4992, 0.0
      %v5025 = vmax.f32 %v4993, 0.0
      %v5026 = vmax.f32 %v4994, 0.0
      %v5027 = vmax.f32 %v4995, 0.0
      %v5028 = vmax.f32 %v4996, 0.0
      %v5029 = vmax.f32 %v4997, 0.0
      %v5030 = vmax.f32 %v4998, 0.0
      %v5031 = vpack.c.bf16 %v5000, %v4999
      %v5032 = vpack.c.bf16 %v5002, %v5001
      %v5033 = vpack.c.bf16 %v5004, %v5003
      %v5034 = vpack.c.bf16 %v5006, %v5005
      %v5035 = vpack.c.bf16 %v5008, %v5007
      %v5036 = vpack.c.bf16 %v5010, %v5009
      %v5037 = vpack.c.bf16 %v5012, %v5011
      %v5038 = vpack.c.bf16 %v5014, %v5013
      %v5039 = vpack.c.bf16 %v5016, %v5015
      %v5040 = vpack.c.bf16 %v5018, %v5017
      %v5041 = vpack.c.bf16 %v5020, %v5019
      %v5042 = vpack.c.bf16 %v5022, %v5021
      %v5043 = vpack.c.bf16 %v5024, %v5023
      %v5044 = vpack.c.bf16 %v5026, %v5025
      %v5045 = vpack.c.bf16 %v5028, %v5027
      %v5046 = vpack.c.bf16 %v5030, %v5029
      %v5063 = vunpack.c.l.b16 %v5031
      %v5064 = vunpack.c.h.b16 %v5031
      %v5065 = vunpack.c.l.b16 %v5032
      %v5066 = vunpack.c.h.b16 %v5032
      %v5067 = vunpack.c.l.b16 %v5033
      %v5068 = vunpack.c.h.b16 %v5033
      %v5069 = vunpack.c.l.b16 %v5034
      %v5070 = vunpack.c.h.b16 %v5034
      %v5071 = vunpack.c.l.b16 %v5035
      %v5072 = vunpack.c.h.b16 %v5035
      %v5073 = vunpack.c.l.b16 %v5036
      %v5074 = vunpack.c.h.b16 %v5036
      %v5075 = vunpack.c.l.b16 %v5037
      %v5076 = vunpack.c.h.b16 %v5037
      %v5077 = vunpack.c.l.b16 %v5038
      %v5078 = vunpack.c.h.b16 %v5038
      %v5079 = vunpack.c.l.b16 %v5039
      %v5080 = vunpack.c.h.b16 %v5039
      %v5081 = vunpack.c.l.b16 %v5040
      %v5082 = vunpack.c.h.b16 %v5040
      %v5083 = vunpack.c.l.b16 %v5041
      %v5084 = vunpack.c.h.b16 %v5041
      %v5085 = vunpack.c.l.b16 %v5042
      %v5086 = vunpack.c.h.b16 %v5042
      %v5087 = vunpack.c.l.b16 %v5043
      %v5088 = vunpack.c.h.b16 %v5043
      %v5089 = vunpack.c.l.b16 %v5044
      %v5090 = vunpack.c.h.b16 %v5044
      %v5091 = vunpack.c.l.b16 %v5045
      %v5092 = vunpack.c.h.b16 %v5045
      %v5093 = vunpack.c.l.b16 %v5046
      %v5094 = vunpack.c.h.b16 %v5046
      %v5095 = vpack.c.b16 %v5063, %v5063
      %v5096 = vpack.c.b16 %v5064, %v5064
      %v5097 = vpack.c.b16 %v5065, %v5065
      %v5098 = vpack.c.b16 %v5066, %v5066
      %v5099 = vpack.c.b16 %v5067, %v5067
      %v5100 = vpack.c.b16 %v5068, %v5068
      %v5101 = vpack.c.b16 %v5069, %v5069
      %v5102 = vpack.c.b16 %v5070, %v5070
      %v5103 = vpack.c.b16 %v5071, %v5071
      %v5104 = vpack.c.b16 %v5072, %v5072
      %v5105 = vpack.c.b16 %v5073, %v5073
      %v5106 = vpack.c.b16 %v5074, %v5074
      %v5107 = vpack.c.b16 %v5075, %v5075
      %v5108 = vpack.c.b16 %v5076, %v5076
      %v5109 = vpack.c.b16 %v5077, %v5077
      %v5110 = vpack.c.b16 %v5078, %v5078
      %v5111 = vpack.c.b16 %v5079, %v5079
      %v5112 = vpack.c.b16 %v5080, %v5080
      %v5113 = vpack.c.b16 %v5081, %v5081
      %v5114 = vpack.c.b16 %v5082, %v5082
      %v5115 = vpack.c.b16 %v5083, %v5083
      %v5116 = vpack.c.b16 %v5084, %v5084
      %v5117 = vpack.c.b16 %v5085, %v5085
      %v5118 = vpack.c.b16 %v5086, %v5086
      %v5119 = vpack.c.b16 %v5087, %v5087
      %v5120 = vpack.c.b16 %v5088, %v5088
      %v5121 = vpack.c.b16 %v5089, %v5089
      %v5122 = vpack.c.b16 %v5090, %v5090
      %v5123 = vpack.c.b16 %v5091, %v5091
      %v5124 = vpack.c.b16 %v5092, %v5092
      %v5125 = vpack.c.b16 %v5093, %v5093
      %v5126 = vpack.c.b16 %v5094, %v5094
      %vm5159 = vcmask 519168
      %5160 = vst.msk [vmem:[%s224] sm:$0xf] %vm5159, %v5095
      %5161 = vst.msk [vmem:[%s224 + $0x4] sm:$0xf] %vm5159, %v5096
      %5162 = vst.msk [vmem:[%s224 + $0x8] sm:$0xf] %vm5159, %v5097
      %5163 = vst.msk [vmem:[%s224 + $0xc] sm:$0xf] %vm5159, %v5098
      %5164 = vst.msk [vmem:[%s224 + $0x10] sm:$0xf] %vm5159, %v5099
      %5165 = vst.msk [vmem:[%s224 + $0x14] sm:$0xf] %vm5159, %v5100
      %5166 = vst.msk [vmem:[%s224 + $0x18] sm:$0xf] %vm5159, %v5101
      %5167 = vst.msk [vmem:[%s224 + $0x1c] sm:$0xf] %vm5159, %v5102
      %5168 = vst.msk [vmem:[%s224 + $0x20] sm:$0xf] %vm5159, %v5103
      %5169 = vst.msk [vmem:[%s224 + $0x24] sm:$0xf] %vm5159, %v5104
      %5170 = vst.msk [vmem:[%s224 + $0x28] sm:$0xf] %vm5159, %v5105
      %5171 = vst.msk [vmem:[%s224 + $0x2c] sm:$0xf] %vm5159, %v5106
      %5172 = vst.msk [vmem:[%s224 + $0x30] sm:$0xf] %vm5159, %v5107
      %5173 = vst.msk [vmem:[%s224 + $0x34] sm:$0xf] %vm5159, %v5108
      %5174 = vst.msk [vmem:[%s224 + $0x38] sm:$0xf] %vm5159, %v5109
      %5175 = vst.msk [vmem:[%s224 + $0x3c] sm:$0xf] %vm5159, %v5110
      %5176 = vst.msk [vmem:[%s224 + $0x40] sm:$0xf] %vm5159, %v5111
      %5177 = vst.msk [vmem:[%s224 + $0x44] sm:$0xf] %vm5159, %v5112
      %5178 = vst.msk [vmem:[%s224 + $0x48] sm:$0xf] %vm5159, %v5113
      %5179 = vst.msk [vmem:[%s224 + $0x4c] sm:$0xf] %vm5159, %v5114
      %5180 = vst.msk [vmem:[%s224 + $0x50] sm:$0xf] %vm5159, %v5115
      %5181 = vst.msk [vmem:[%s224 + $0x54] sm:$0xf] %vm5159, %v5116
      %5182 = vst.msk [vmem:[%s224 + $0x58] sm:$0xf] %vm5159, %v5117
      %5183 = vst.msk [vmem:[%s224 + $0x5c] sm:$0xf] %vm5159, %v5118
      %5184 = vst.msk [vmem:[%s224 + $0x60] sm:$0xf] %vm5159, %v5119
      %5185 = vst.msk [vmem:[%s224 + $0x64] sm:$0xf] %vm5159, %v5120
      %5186 = vst.msk [vmem:[%s224 + $0x68] sm:$0xf] %vm5159, %v5121
      %5187 = vst.msk [vmem:[%s224 + $0x6c] sm:$0xf] %vm5159, %v5122
      %5188 = vst.msk [vmem:[%s224 + $0x70] sm:$0xf] %vm5159, %v5123
      %5189 = vst.msk [vmem:[%s224 + $0x74] sm:$0xf] %vm5159, %v5124
      %5190 = vst.msk [vmem:[%s224 + $0x78] sm:$0xf] %vm5159, %v5125
      %5191 = vst.msk [vmem:[%s224 + $0x7c] sm:$0xf] %vm5159, %v5126
      %p5192 = scmp.lt.s32.totalorder %s16, 1
      %s5193 = scalar_select %p5192, %s16, 1
      %s5194 = smul.addr %s5193, 32
      %s5195 = smul.addr %s5194, 4
      %s5196 = scalar_lea.vmem %s5, %s5195
      // Predicated region
      $region41: #{lidar_cnn_forward.2} parent=39 // pred_check
        %p5197 = pneg %p144
      $region42: #{lidar_cnn_forward.2} parent=39 // pred_check_branch
        %5199 = sbr.rel (%p5197) target = $region44
      $region43: #{lidar_cnn_forward.2} parent=39 // pred_region
        _
      $region44: #{lidar_cnn_forward.2} parent=39 // pred_fallthru
        _
    $region40: #{lidar_cnn_forward.2} parent=5 // pred_fallthru
      _
    %p5200 = scmp.le.s32.totalorder 2, %s11
    // Predicated region
    $region45: #{lidar_cnn_forward.2} parent=5 // pred_check
      %p5201 = pneg %p5200
    $region46: #{lidar_cnn_forward.2} parent=5 // pred_check_branch
      %5203 = sbr.rel (%p5201) target = $region48
    $region47: #{lidar_cnn_forward.2} parent=5 // pred_region
      %s5204 = ssub.s32 %s11, 2
      // Predicated region
      $region49: #{lidar_cnn_forward.2} parent=47 // pred_check
        %p5205 = pneg %p150
      $region50: #{lidar_cnn_forward.2} parent=47 // pred_check_branch
        %5207 = sbr.rel (%p5205) target = $region52
      $region51: #{lidar_cnn_forward.2} parent=47 // pred_region
        %p5208 = scmp.lt.s32.totalorder %s17, 1
        %s5209 = scalar_select %p5208, %s17, 1
        %s5210 = smul.addr %s5209, 32
        %s5211 = smul.addr %s5210, 4
        %s5212 = scalar_lea.vmem %s5, %s5211
      $region52: #{lidar_cnn_forward.2} parent=47 // pred_fallthru
        _
    $region48: #{lidar_cnn_forward.2} parent=5 // pred_fallthru
      _
  $region6: #{lidar_cnn_forward.2} parent=0 // loop_footer
    %s15 = sadd.s32 1, %s11
  $region7: #{lidar_cnn_forward.2} parent=0 // loop_footer_branch
    %10 = sbr.rel target = $region3
  $region8: #{lidar_cnn_forward.2} parent=0 // loop_exit
    _

// kernel: lidar_cnn_forward.3
$region0: #{lidar_cnn_forward.3}
  #allocation0 [shape = 'u32[]', space=smem, size = 0x4, offset = 0x4, fixed_abs, tag = 'smem constant byte address 0x4 - core index']
  #allocation1 [shape = 'u32[144,128]{1,0:T(1,128)}', space=vmem, size = 0x12000, scoped, tag = 'internal scratch']
  #allocation2 [shape = 'f32[16,64]{1,0:T(8,128)}', space=vmem, size = 0x2000, scoped, tag = 'scratch operand']
  %s0 = inlined_call_operand.vmem [shape: bf16[16,16384], index: 0, kind: input, shape index: {}]
  %s1 = inlined_call_operand.vmem [shape: bf16[16384,64], index: 1, kind: input, shape index: {}]
  %s2 = inlined_call_operand.vmem [shape: f32[1,64], index: 2, kind: input, shape index: {}]
  %s3 = inlined_call_operand.vmem [shape: f32[16,64], index: 3, kind: output, shape index: {}]
  %s4 = sld [smem:[#allocation0]]
  $region76: #{lidar_cnn_forward.3} parent=0
    _
  %s6 = ssub.s32 1, %s4
  %s7 = scalar_select 0, %s6, %s4
  $region1: #{lidar_cnn_forward.3} parent=0
    #allocation3 [shape = 'u8[524288]{0}', space=vmem, size = 0x80000, scoped, tag = 'input window, operand 0']
    loop: start=0, step=1, limit=4
    $region2: #{lidar_cnn_forward.3} parent=1 // loop_pre_header
      _
    $region3: #{lidar_cnn_forward.3} parent=1 // loop_header
      %s9 = sphi 0, %s13
      %p10 = scmp.ge.s32.totalorder %s9, 4
      %s16 = sphi 0, %s28
      %s17 = sphi 0, %s24
      %s18 = sphi 0, %s16
      %s19 = sphi 0, %s17
      %s20 = sphi 0, %s18
      %s21 = sphi 0, %s19
      %s33 = sphi 0, %s35
      %s36 = sphi 0, %s33
      %s37 = sphi 0, %s36
      %s53 = sphi 0, %s37
      %s59 = sphi 0, %s61
      %s62 = sphi 0, %s59
      %s63 = sphi 0, %s62
      %s79 = sphi 0, %s63
      %s83 = sphi 0, %s83
      %s85 = sphi 0, %s83
      %s86 = sphi 0, %s85
      %s100 = sphi 0, %s86
      %s106 = sphi 0, %s108
      %s109 = sphi 0, %s106
      %s110 = sphi 0, %s109
      %s126 = sphi 0, %s110
    $region4: #{lidar_cnn_forward.3} parent=1 // loop_header_branch
      %12 = sbr.rel (%p10) target = $region8
    $region5: #{lidar_cnn_forward.3} parent=1 // loop_body
      %s14 = ssub.s32 %s9, 1
      %s15 = ssub.s32 %s9, 2
      %s22 = sadd.s32 1, %s17
      %p23 = scmp.ge.s32.totalorder %s22, 2
      %s24 = scalar_select %p23, 0, %s22
      %s25 = sadd.s32 1, %s16
      %s26 = scalar_select %p23, %s25, %s16
      %p27 = scmp.ge.s32.totalorder %s26, 1
      %s28 = scalar_select %p27, 0, %s26
      %s29 = ssub.s32 %s16, %s28
      %s30 = ssub.s32 %s17, %s24
      %s31 = sor.u32 %s29, %s30
      %p32 = scmp.eq.s32.totalorder %s31, 0
      %s34 = sadd.s32 %s33, 1
      %s35 = scalar_select %p32, %s33, %s34
      %p38 = pneg %p32
      %p39 = scmp.eq.s32.totalorder %s9, 1
      %p40 = por %p38, %p39
      %p41 = scmp.ne.s32.totalorder %s33, %s36
      %p42 = scmp.eq.s32.totalorder %s9, 0
      %p43 = por %p41, %p42
      %p44 = scmp.ne.s32.totalorder %s33, %s36
      %p45 = scmp.eq.s32.totalorder %s14, 1
      %p46 = por %p44, %p45
      %p47 = scmp.ne.s32.totalorder %s36, %s37
      %p48 = scmp.eq.s32.totalorder %s14, 0
      %p49 = por %p47, %p48
      %p50 = scmp.ne.s32.totalorder %s36, %s37
      %p51 = scmp.eq.s32.totalorder %s15, 1
      %p52 = por %p50, %p51
      %p54 = scmp.ne.s32.totalorder %s37, %s53
      %p55 = scmp.eq.s32.totalorder %s15, 0
      %p56 = por %p54, %p55
      %s57 = ssub.s32 %s17, %s24
      %p58 = scmp.eq.s32.totalorder %s57, 0
      %s60 = sadd.s32 %s59, 1
      %s61 = scalar_select %p58, %s59, %s60
      %p64 = pneg %p58
      %p65 = scmp.eq.s32.totalorder %s9, 1
      %p66 = por %p64, %p65
      %p67 = scmp.ne.s32.totalorder %s59, %s62
      %p68 = scmp.eq.s32.totalorder %s9, 0
      %p69 = por %p67, %p68
      %p70 = scmp.ne.s32.totalorder %s59, %s62
      %p71 = scmp.eq.s32.totalorder %s14, 1
      %p72 = por %p70, %p71
      %p73 = scmp.ne.s32.totalorder %s62, %s63
      %p74 = scmp.eq.s32.totalorder %s14, 0
      %p75 = por %p73, %p74
      %p76 = scmp.ne.s32.totalorder %s62, %s63
      %p77 = scmp.eq.s32.totalorder %s15, 1
      %p78 = por %p76, %p77
      %p80 = scmp.ne.s32.totalorder %s63, %s79
      %p81 = scmp.eq.s32.totalorder %s15, 0
      %p82 = por %p80, %p81
      %s84 = sadd.s32 %s83, 1
      %p87 = scmp.eq.s32.totalorder %s9, 1
      %p88 = scmp.ne.s32.totalorder %s83, %s85
      %p89 = scmp.eq.s32.totalorder %s9, 0
      %p90 = por %p88, %p89
      %p91 = scmp.ne.s32.totalorder %s83, %s85
      %p92 = scmp.eq.s32.totalorder %s14, 1
      %p93 = por %p91, %p92
      %p94 = scmp.ne.s32.totalorder %s85, %s86
      %p95 = scmp.eq.s32.totalorder %s14, 0
      %p96 = por %p94, %p95
      %p97 = scmp.ne.s32.totalorder %s85, %s86
      %p98 = scmp.eq.s32.totalorder %s15, 1
      %p99 = por %p97, %p98
      %p101 = scmp.ne.s32.totalorder %s86, %s100
      %p102 = scmp.eq.s32.totalorder %s15, 0
      %p103 = por %p101, %p102
      %s104 = ssub.s32 %s16, %s28
      %p105 = scmp.eq.s32.totalorder %s104, 0
      %s107 = sadd.s32 %s106, 1
      %s108 = scalar_select %p105, %s106, %s107
      %p111 = pneg %p105
      %p112 = scmp.eq.s32.totalorder %s9, 1
      %p113 = por %p111, %p112
      %p114 = scmp.ne.s32.totalorder %s106, %s109
      %p115 = scmp.eq.s32.totalorder %s9, 0
      %p116 = por %p114, %p115
      %p117 = scmp.ne.s32.totalorder %s106, %s109
      %p118 = scmp.eq.s32.totalorder %s14, 1
      %p119 = por %p117, %p118
      %p120 = scmp.ne.s32.totalorder %s109, %s110
      %p121 = scmp.eq.s32.totalorder %s14, 0
      %p122 = por %p120, %p121
      %p123 = scmp.ne.s32.totalorder %s109, %s110
      %p124 = scmp.eq.s32.totalorder %s15, 1
      %p125 = por %p123, %p124
      %p127 = scmp.ne.s32.totalorder %s110, %s126
      %p128 = scmp.eq.s32.totalorder %s15, 0
      %p129 = por %p127, %p128
      %p130 = scmp.le.s32.totalorder 1, %s9
      %p131 = scmp.lt.s32.totalorder %s9, 3
      %p132 = pnand %p130, %p131
      %p133 = pneg %p132
      // Predicated region
      $region9: #{lidar_cnn_forward.3} parent=5 // pred_check
        _
      $region10: #{lidar_cnn_forward.3} parent=5 // pred_check_branch
        %135 = sbr.rel (%p132) target = $region12
      $region11: #{lidar_cnn_forward.3} parent=5 // pred_region
        %s136 = ssub.s32 %s9, 1
        // Predicated region
        $region13: #{lidar_cnn_forward.3} parent=11 // pred_check
          %p137 = pneg %p96
        $region14: #{lidar_cnn_forward.3} parent=11 // pred_check_branch
          %139 = sbr.rel (%p137) target = $region16
        $region15: #{lidar_cnn_forward.3} parent=11 // pred_region
          _
        $region16: #{lidar_cnn_forward.3} parent=11 // pred_fallthru
          _
      $region12: #{lidar_cnn_forward.3} parent=5 // pred_fallthru
        _
      %p140 = scmp.lt.s32.totalorder %s9, 2
      // Predicated region
      $region17: #{lidar_cnn_forward.3} parent=5 // pred_check
        %p141 = pneg %p140
      $region18: #{lidar_cnn_forward.3} parent=5 // pred_check_branch
        %143 = sbr.rel (%p141) target = $region20
      $region19: #{lidar_cnn_forward.3} parent=5 // pred_region
        // Predicated region
        $region21: #{lidar_cnn_forward.3} parent=19 // pred_check
          %p144 = pneg %p43
        $region22: #{lidar_cnn_forward.3} parent=19 // pred_check_branch
          %146 = sbr.rel (%p144) target = $region24
        $region23: #{lidar_cnn_forward.3} parent=19 // pred_region
          %s147 = sand.u32 %s33, 1
          %s148 = sand.u32 %s33, 1
          %s149 = smul.addr %s148, 512
          %s150 = scalar_lea.vmem [#allocation3], %s149
          %s151 = smul.u32 2, %s16
          %s152 = smul.u32 64, %s17
          %s153 = smul.addr %s151, 128
          %s154 = sadd.s32 %s152, %s153
          %s155 = smul.addr %s154, 4
          %s156 = scalar_lea.vmem %s0, %s155
          // Predicated region
          $region25: #{lidar_cnn_forward.3} parent=23 // pred_check
            _
          $region26: #{lidar_cnn_forward.3} parent=23 // pred_check_branch
            %158 = sbr.rel (0) target = $region28
          $region27: #{lidar_cnn_forward.3} parent=23 // pred_region
            // Predicated region
            $region29: #{lidar_cnn_forward.3} parent=27 // pred_check
              _
            $region30: #{lidar_cnn_forward.3} parent=27 // pred_check_branch
              %160 = sbr.rel (0) target = $region32
            $region31: #{lidar_cnn_forward.3} parent=27 // pred_region
              loop: start=0, step=1, limit=1
              $region33: #{lidar_cnn_forward.3} parent=31 // loop_pre_header
                _
              $region34: #{lidar_cnn_forward.3} parent=31 // loop_header
                %s162 = sphi 0, %s166
                %p163 = scmp.ge.s32.totalorder %s162, 1
                %s167 = sphi %s156, %s156
                %s168 = sphi %s150, %s150
              $region35: #{lidar_cnn_forward.3} parent=31 // loop_header_branch
                %165 = sbr.rel (%p163) target = $region39
              $region36: #{lidar_cnn_forward.3} parent=31 // loop_body
                %v169 = vld [vmem:[%s167] sm:$0xff]
                %170 = vst [vmem:[%s168] sm:$0xff] %v169
                %v171 = vld [vmem:[%s167 + $0x8] sm:$0xff]
                %172 = vst [vmem:[%s168 + $0x8] sm:$0xff] %v171
                %v173 = vld [vmem:[%s167 + $0x10] sm:$0xff]
                %174 = vst [vmem:[%s168 + $0x10] sm:$0xff] %v173
                %v175 = vld [vmem:[%s167 + $0x18] sm:$0xff]
                %176 = vst [vmem:[%s168 + $0x18] sm:$0xff] %v175
                %v177 = vld [vmem:[%s167 + $0x20] sm:$0xff]
                %178 = vst [vmem:[%s168 + $0x20] sm:$0xff] %v177
                %v179 = vld [vmem:[%s167 + $0x28] sm:$0xff]
                %180 = vst [vmem:[%s168 + $0x28] sm:$0xff] %v179
                %v181 = vld [vmem:[%s167 + $0x30] sm:$0xff]
                %182 = vst [vmem:[%s168 + $0x30] sm:$0xff] %v181
                %v183 = vld [vmem:[%s167 + $0x38] sm:$0xff]
                %184 = vst [vmem:[%s168 + $0x38] sm:$0xff] %v183
                %v185 = vld [vmem:[%s167 + $0x40] sm:$0xff]
                %186 = vst [vmem:[%s168 + $0x40] sm:$0xff] %v185
                %v187 = vld [vmem:[%s167 + $0x48] sm:$0xff]
                %188 = vst [vmem:[%s168 + $0x48] sm:$0xff] %v187
                %v189 = vld [vmem:[%s167 + $0x50] sm:$0xff]
                %190 = vst [vmem:[%s168 + $0x50] sm:$0xff] %v189
                %v191 = vld [vmem:[%s167 + $0x58] sm:$0xff]
                %192 = vst [vmem:[%s168 + $0x58] sm:$0xff] %v191
                %v193 = vld [vmem:[%s167 + $0x60] sm:$0xff]
                %194 = vst [vmem:[%s168 + $0x60] sm:$0xff] %v193
                %v195 = vld [vmem:[%s167 + $0x68] sm:$0xff]
                %196 = vst [vmem:[%s168 + $0x68] sm:$0xff] %v195
                %v197 = vld [vmem:[%s167 + $0x70] sm:$0xff]
                %198 = vst [vmem:[%s168 + $0x70] sm:$0xff] %v197
                %v199 = vld [vmem:[%s167 + $0x78] sm:$0xff]
                %200 = vst [vmem:[%s168 + $0x78] sm:$0xff] %v199
                %v201 = vld [vmem:[%s167 + $0x80] sm:$0xff]
                %202 = vst [vmem:[%s168 + $0x80] sm:$0xff] %v201
                %v203 = vld [vmem:[%s167 + $0x88] sm:$0xff]
                %204 = vst [vmem:[%s168 + $0x88] sm:$0xff] %v203
                %v205 = vld [vmem:[%s167 + $0x90] sm:$0xff]
                %206 = vst [vmem:[%s168 + $0x90] sm:$0xff] %v205
                %v207 = vld [vmem:[%s167 + $0x98] sm:$0xff]
                %208 = vst [vmem:[%s168 + $0x98] sm:$0xff] %v207
                %v209 = vld [vmem:[%s167 + $0xa0] sm:$0xff]
                %210 = vst [vmem:[%s168 + $0xa0] sm:$0xff] %v209
                %v211 = vld [vmem:[%s167 + $0xa8] sm:$0xff]
                %212 = vst [vmem:[%s168 + $0xa8] sm:$0xff] %v211
                %v213 = vld [vmem:[%s167 + $0xb0] sm:$0xff]
                %214 = vst [vmem:[%s168 + $0xb0] sm:$0xff] %v213
                %v215 = vld [vmem:[%s167 + $0xb8] sm:$0xff]
                %216 = vst [vmem:[%s168 + $0xb8] sm:$0xff] %v215
                %v217 = vld [vmem:[%s167 + $0xc0] sm:$0xff]
                %218 = vst [vmem:[%s168 + $0xc0] sm:$0xff] %v217
                %v219 = vld [vmem:[%s167 + $0xc8] sm:$0xff]
                %220 = vst [vmem:[%s168 + $0xc8] sm:$0xff] %v219
                %v221 = vld [vmem:[%s167 + $0xd0] sm:$0xff]
                %222 = vst [vmem:[%s168 + $0xd0] sm:$0xff] %v221
                %v223 = vld [vmem:[%s167 + $0xd8] sm:$0xff]
                %224 = vst [vmem:[%s168 + $0xd8] sm:$0xff] %v223
                %v225 = vld [vmem:[%s167 + $0xe0] sm:$0xff]
                %226 = vst [vmem:[%s168 + $0xe0] sm:$0xff] %v225
                %v227 = vld [vmem:[%s167 + $0xe8] sm:$0xff]
                %228 = vst [vmem:[%s168 + $0xe8] sm:$0xff] %v227
                %v229 = vld [vmem:[%s167 + $0xf0] sm:$0xff]
                %230 = vst [vmem:[%s168 + $0xf0] sm:$0xff] %v229
                %v231 = vld [vmem:[%s167 + $0xf8] sm:$0xff]
                %232 = vst [vmem:[%s168 + $0xf8] sm:$0xff] %v231
                %v233 = vld [vmem:[%s167 + $0x200] sm:$0xff]
                %234 = vst [vmem:[%s168 + $0x100] sm:$0xff] %v233
                %v235 = vld [vmem:[%s167 + $0x208] sm:$0xff]
                %236 = vst [vmem:[%s168 + $0x108] sm:$0xff] %v235
                %v237 = vld [vmem:[%s167 + $0x210] sm:$0xff]
                %238 = vst [vmem:[%s168 + $0x110] sm:$0xff] %v237
                %v239 = vld [vmem:[%s167 + $0x218] sm:$0xff]
                %240 = vst [vmem:[%s168 + $0x118] sm:$0xff] %v239
                %v241 = vld [vmem:[%s167 + $0x220] sm:$0xff]
                %242 = vst [vmem:[%s168 + $0x120] sm:$0xff] %v241
                %v243 = vld [vmem:[%s167 + $0x228] sm:$0xff]
                %244 = vst [vmem:[%s168 + $0x128] sm:$0xff] %v243
                %v245 = vld [vmem:[%s167 + $0x230] sm:$0xff]
                %246 = vst [vmem:[%s168 + $0x130] sm:$0xff] %v245
                %v247 = vld [vmem:[%s167 + $0x238] sm:$0xff]
                %248 = vst [vmem:[%s168 + $0x138] sm:$0xff] %v247
                %v249 = vld [vmem:[%s167 + $0x240] sm:$0xff]
                %250 = vst [vmem:[%s168 + $0x140] sm:$0xff] %v249
                %v251 = vld [vmem:[%s167 + $0x248] sm:$0xff]
                %252 = vst [vmem:[%s168 + $0x148] sm:$0xff] %v251
                %v253 = vld [vmem:[%s167 + $0x250] sm:$0xff]
                %254 = vst [vmem:[%s168 + $0x150] sm:$0xff] %v253
                %v255 = vld [vmem:[%s167 + $0x258] sm:$0xff]
                %256 = vst [vmem:[%s168 + $0x158] sm:$0xff] %v255
                %v257 = vld [vmem:[%s167 + $0x260] sm:$0xff]
                %258 = vst [vmem:[%s168 + $0x160] sm:$0xff] %v257
                %v259 = vld [vmem:[%s167 + $0x268] sm:$0xff]
                %260 = vst [vmem:[%s168 + $0x168] sm:$0xff] %v259
                %v261 = vld [vmem:[%s167 + $0x270] sm:$0xff]
                %262 = vst [vmem:[%s168 + $0x170] sm:$0xff] %v261
                %v263 = vld [vmem:[%s167 + $0x278] sm:$0xff]
                %264 = vst [vmem:[%s168 + $0x178] sm:$0xff] %v263
                %v265 = vld [vmem:[%s167 + $0x280] sm:$0xff]
                %266 = vst [vmem:[%s168 + $0x180] sm:$0xff] %v265
                %v267 = vld [vmem:[%s167 + $0x288] sm:$0xff]
                %268 = vst [vmem:[%s168 + $0x188] sm:$0xff] %v267
                %v269 = vld [vmem:[%s167 + $0x290] sm:$0xff]
                %270 = vst [vmem:[%s168 + $0x190] sm:$0xff] %v269
                %v271 = vld [vmem:[%s167 + $0x298] sm:$0xff]
                %272 = vst [vmem:[%s168 + $0x198] sm:$0xff] %v271
                %v273 = vld [vmem:[%s167 + $0x2a0] sm:$0xff]
                %274 = vst [vmem:[%s168 + $0x1a0] sm:$0xff] %v273
                %v275 = vld [vmem:[%s167 + $0x2a8] sm:$0xff]
                %276 = vst [vmem:[%s168 + $0x1a8] sm:$0xff] %v275
                %v277 = vld [vmem:[%s167 + $0x2b0] sm:$0xff]
                %278 = vst [vmem:[%s168 + $0x1b0] sm:$0xff] %v277
                %v279 = vld [vmem:[%s167 + $0x2b8] sm:$0xff]
                %280 = vst [vmem:[%s168 + $0x1b8] sm:$0xff] %v279
                %v281 = vld [vmem:[%s167 + $0x2c0] sm:$0xff]
                %282 = vst [vmem:[%s168 + $0x1c0] sm:$0xff] %v281
                %v283 = vld [vmem:[%s167 + $0x2c8] sm:$0xff]
                %284 = vst [vmem:[%s168 + $0x1c8] sm:$0xff] %v283
                %v285 = vld [vmem:[%s167 + $0x2d0] sm:$0xff]
                %286 = vst [vmem:[%s168 + $0x1d0] sm:$0xff] %v285
                %v287 = vld [vmem:[%s167 + $0x2d8] sm:$0xff]
                %288 = vst [vmem:[%s168 + $0x1d8] sm:$0xff] %v287
                %v289 = vld [vmem:[%s167 + $0x2e0] sm:$0xff]
                %290 = vst [vmem:[%s168 + $0x1e0] sm:$0xff] %v289
                %v291 = vld [vmem:[%s167 + $0x2e8] sm:$0xff]
                %292 = vst [vmem:[%s168 + $0x1e8] sm:$0xff] %v291
                %v293 = vld [vmem:[%s167 + $0x2f0] sm:$0xff]
                %294 = vst [vmem:[%s168 + $0x1f0] sm:$0xff] %v293
                %v295 = vld [vmem:[%s167 + $0x2f8] sm:$0xff]
                %296 = vst [vmem:[%s168 + $0x1f8] sm:$0xff] %v295
              $region37: #{lidar_cnn_forward.3} parent=31 // loop_footer
                %s166 = sadd.s32 1, %s162
              $region38: #{lidar_cnn_forward.3} parent=31 // loop_footer_branch
                %161 = sbr.rel target = $region34
              $region39: #{lidar_cnn_forward.3} parent=31 // loop_exit
                _
            $region32: #{lidar_cnn_forward.3} parent=27 // pred_fallthru
              _
            // Predicated region
            $region40: #{lidar_cnn_forward.3} parent=27 // pred_check
              _
            $region41: #{lidar_cnn_forward.3} parent=27 // pred_check_branch
              %298 = sbr.rel target = $region43
            $region42: #{lidar_cnn_forward.3} parent=27 // pred_region
              _
            $region43: #{lidar_cnn_forward.3} parent=27 // pred_fallthru
              _
          $region28: #{lidar_cnn_forward.3} parent=23 // pred_fallthru
            _
          %299 = vnop
        $region24: #{lidar_cnn_forward.3} parent=19 // pred_fallthru
          _
        // Predicated region
        $region44: #{lidar_cnn_forward.3} parent=19 // pred_check
          %p300 = pneg %p69
        $region45: #{lidar_cnn_forward.3} parent=19 // pred_check_branch
          %302 = sbr.rel (%p300) target = $region47
        $region46: #{lidar_cnn_forward.3} parent=19 // pred_region
          %s303 = smul.u32 1024, %s17
          %p304 = scmp.lt.s32.totalorder %s303, 2047
          %s305 = scalar_select %p304, %s303, 2047
          %s306 = smul.addr %s305, 4
          %s307 = scalar_lea.vmem %s1, %s306
          %s308 = smul.u32 1024, %s17
        $region47: #{lidar_cnn_forward.3} parent=19 // pred_fallthru
          _
      $region20: #{lidar_cnn_forward.3} parent=5 // pred_fallthru
        _
      %p309 = scmp.le.s32.totalorder 1, %s9
      %p310 = scmp.lt.s32.totalorder %s9, 3
      %p311 = pnand %p309, %p310
      %p312 = pneg %p311
      // Predicated region
      $region48: #{lidar_cnn_forward.3} parent=5 // pred_check
        _
      $region49: #{lidar_cnn_forward.3} parent=5 // pred_check_branch
        %314 = sbr.rel (%p311) target = $region51
      $region50: #{lidar_cnn_forward.3} parent=5 // pred_region
        %s315 = ssub.s32 %s9, 1
        %s316 = sand.u32 %s36, 1
        %s317 = sand.u32 %s36, 1
        %s318 = smul.addr %s317, 512
        %s319 = scalar_lea.vmem [#allocation3], %s318
        // Predicated region
        $region52: #{lidar_cnn_forward.3} parent=50 // pred_check
          %p320 = pneg %p49
        $region53: #{lidar_cnn_forward.3} parent=50 // pred_check_branch
          %322 = sbr.rel (%p320) target = $region55
        $region54: #{lidar_cnn_forward.3} parent=50 // pred_region
          _
        $region55: #{lidar_cnn_forward.3} parent=50 // pred_fallthru
          _
        %s323 = sand.u32 %s36, 1
        %s324 = sand.u32 %s36, 1
        %s325 = smul.addr %s324, 512
        %s326 = scalar_lea.vmem [#allocation3], %s325
        %p327 = pneg %p49
        %p328 = pneg %p46
        %s329 = smul.u32 1024, %s19
        %p330 = scmp.lt.s32.totalorder %s329, 2047
        %s331 = scalar_select %p330, %s329, 2047
        %s332 = smul.addr %s331, 4
        %s333 = scalar_lea.vmem %s1, %s332
        %p334 = pneg %p75
        %p335 = pneg %p72
        %p336 = pneg %p96
        %p337 = pneg %p93
        %p338 = pneg %p122
        %p339 = pneg %p119
        %s340 = smul.u32 2, %s18
        %p341 = scmp.lt.s32.totalorder %s340, 1
        %s342 = scalar_select %p341, %s340, 1
        %s343 = smul.addr %s342, 8
        %s344 = scalar_lea.vmem %s3, %s343
        %s345 = smul.u32 2, %s18
        %s346 = smul.u32 64, %s19
        %s347 = smul.u32 1024, %s19
        %p348 = scmp.lt.s32.totalorder %s347, 2047
        %s349 = scalar_select %p348, %s347, 2047
        %s350 = smul.addr %s349, 4
        %s351 = scalar_lea.vmem %s1, %s350
        %s352 = smul.u32 1024, %s19
        %s353 = smul.u32 2, %s18
        %p354 = scmp.lt.s32.totalorder %s353, 1
        %s355 = scalar_select %p354, %s353, 1
        %s356 = smul.addr %s355, 8
        %s357 = scalar_lea.vmem %s3, %s356
        %s358 = smul.u32 2, %s18
        %p360 = scmp.eq.s32.totalorder %s19, 0
        // Predicated region
        $region56: #{lidar_cnn_forward.3} parent=50 // pred_check
          %p361 = pneg %p360
        $region57: #{lidar_cnn_forward.3} parent=50 // pred_check_branch
          %363 = sbr.rel (%p361) target = $region59
        $region58: #{lidar_cnn_forward.3} parent=50 // pred_region
          %vm364 = vcmask 523264
          %365 = vst.msk [vmem:[#allocation2] sm:$0xff] %vm364, 0.0
          %366 = vst.msk [vmem:[#allocation2 + $0x8] sm:$0xff] %vm364, 0.0
        $region59: #{lidar_cnn_forward.3} parent=50 // pred_fallthru
          _
        %v367 = vld [vmem:[#allocation2] sm:$0xff]
        %v368 = vld [vmem:[#allocation2 + $0x8] sm:$0xff]
        %v369 = vld [vmem:[%s319] sm:$0xff]
        %v370 = vld [vmem:[%s319 + $0x8] sm:$0xff]
        %v371 = vld [vmem:[%s319 + $0x10] sm:$0xff]
        %v372 = vld [vmem:[%s319 + $0x18] sm:$0xff]
        %v373 = vld [vmem:[%s319 + $0x20] sm:$0xff]
        %v374 = vld [vmem:[%s319 + $0x28] sm:$0xff]
        %v375 = vld [vmem:[%s319 + $0x30] sm:$0xff]
        %v376 = vld [vmem:[%s319 + $0x38] sm:$0xff]
        %v377 = vld [vmem:[%s319 + $0x40] sm:$0xff]
        %v378 = vld [vmem:[%s319 + $0x48] sm:$0xff]
        %v379 = vld [vmem:[%s319 + $0x50] sm:$0xff]
        %v380 = vld [vmem:[%s319 + $0x58] sm:$0xff]
        %v381 = vld [vmem:[%s319 + $0x60] sm:$0xff]
        %v382 = vld [vmem:[%s319 + $0x68] sm:$0xff]
        %v383 = vld [vmem:[%s319 + $0x70] sm:$0xff]
        %v384 = vld [vmem:[%s319 + $0x78] sm:$0xff]
        %v385 = vld [vmem:[%s319 + $0x80] sm:$0xff]
        %v386 = vld [vmem:[%s319 + $0x88] sm:$0xff]
        %v387 = vld [vmem:[%s319 + $0x90] sm:$0xff]
        %v388 = vld [vmem:[%s319 + $0x98] sm:$0xff]
        %v389 = vld [vmem:[%s319 + $0xa0] sm:$0xff]
        %v390 = vld [vmem:[%s319 + $0xa8] sm:$0xff]
        %v391 = vld [vmem:[%s319 + $0xb0] sm:$0xff]
        %v392 = vld [vmem:[%s319 + $0xb8] sm:$0xff]
        %v393 = vld [vmem:[%s319 + $0xc0] sm:$0xff]
        %v394 = vld [vmem:[%s319 + $0xc8] sm:$0xff]
        %v395 = vld [vmem:[%s319 + $0xd0] sm:$0xff]
        %v396 = vld [vmem:[%s319 + $0xd8] sm:$0xff]
        %v397 = vld [vmem:[%s319 + $0xe0] sm:$0xff]
        %v398 = vld [vmem:[%s319 + $0xe8] sm:$0xff]
        %v399 = vld [vmem:[%s319 + $0xf0] sm:$0xff]
        %v400 = vld [vmem:[%s319 + $0xf8] sm:$0xff]
        %v401 = vld [vmem:[%s319 + $0x100] sm:$0xff]
        %v402 = vld [vmem:[%s319 + $0x108] sm:$0xff]
        %v403 = vld [vmem:[%s319 + $0x110] sm:$0xff]
        %v404 = vld [vmem:[%s319 + $0x118] sm:$0xff]
        %v405 = vld [vmem:[%s319 + $0x120] sm:$0xff]
        %v406 = vld [vmem:[%s319 + $0x128] sm:$0xff]
        %v407 = vld [vmem:[%s319 + $0x130] sm:$0xff]
        %v408 = vld [vmem:[%s319 + $0x138] sm:$0xff]
        %v409 = vld [vmem:[%s319 + $0x140] sm:$0xff]
        %v410 = vld [vmem:[%s319 + $0x148] sm:$0xff]
        %v411 = vld [vmem:[%s319 + $0x150] sm:$0xff]
        %v412 = vld [vmem:[%s319 + $0x158] sm:$0xff]
        %v413 = vld [vmem:[%s319 + $0x160] sm:$0xff]
        %v414 = vld [vmem:[%s319 + $0x168] sm:$0xff]
        %v415 = vld [vmem:[%s319 + $0x170] sm:$0xff]
        %v416 = vld [vmem:[%s319 + $0x178] sm:$0xff]
        %v417 = vld [vmem:[%s319 + $0x180] sm:$0xff]
        %v418 = vld [vmem:[%s319 + $0x188] sm:$0xff]
        %v419 = vld [vmem:[%s319 + $0x190] sm:$0xff]
        %v420 = vld [vmem:[%s319 + $0x198] sm:$0xff]
        %v421 = vld [vmem:[%s319 + $0x1a0] sm:$0xff]
        %v422 = vld [vmem:[%s319 + $0x1a8] sm:$0xff]
        %v423 = vld [vmem:[%s319 + $0x1b0] sm:$0xff]
        %v424 = vld [vmem:[%s319 + $0x1b8] sm:$0xff]
        %v425 = vld [vmem:[%s319 + $0x1c0] sm:$0xff]
        %v426 = vld [vmem:[%s319 + $0x1c8] sm:$0xff]
        %v427 = vld [vmem:[%s319 + $0x1d0] sm:$0xff]
        %v428 = vld [vmem:[%s319 + $0x1d8] sm:$0xff]
        %v429 = vld [vmem:[%s319 + $0x1e0] sm:$0xff]
        %v430 = vld [vmem:[%s319 + $0x1e8] sm:$0xff]
        %v431 = vld [vmem:[%s319 + $0x1f0] sm:$0xff]
        %v432 = vld [vmem:[%s319 + $0x1f8] sm:$0xff]
        %v433 = vld [vmem:[%s351] sm:$0xf]
        %v434 = vld [vmem:[%s351 + $0x4] sm:$0xf]
        %v435 = vld [vmem:[%s351 + $0x8] sm:$0xf]
        %v436 = vld [vmem:[%s351 + $0xc] sm:$0xf]
        %v437 = vld [vmem:[%s351 + $0x10] sm:$0xf]
        %v438 = vld [vmem:[%s351 + $0x14] sm:$0xf]
        %v439 = vld [vmem:[%s351 + $0x18] sm:$0xf]
        %v440 = vld [vmem:[%s351 + $0x1c] sm:$0xf]
        %v441 = vld [vmem:[%s351 + $0x20] sm:$0xf]
        %v442 = vld [vmem:[%s351 + $0x24] sm:$0xf]
        %v443 = vld [vmem:[%s351 + $0x28] sm:$0xf]
        %v444 = vld [vmem:[%s351 + $0x2c] sm:$0xf]
        %v445 = vld [vmem:[%s351 + $0x30] sm:$0xf]
        %v446 = vld [vmem:[%s351 + $0x34] sm:$0xf]
        %v447 = vld [vmem:[%s351 + $0x38] sm:$0xf]
        %v448 = vld [vmem:[%s351 + $0x3c] sm:$0xf]
        %v449 = vld [vmem:[%s351 + $0x40] sm:$0xf]
        %v450 = vld [vmem:[%s351 + $0x44] sm:$0xf]
        %v451 = vld [vmem:[%s351 + $0x48] sm:$0xf]
        %v452 = vld [vmem:[%s351 + $0x4c] sm:$0xf]
        %v453 = vld [vmem:[%s351 + $0x50] sm:$0xf]
        %v454 = vld [vmem:[%s351 + $0x54] sm:$0xf]
        %v455 = vld [vmem:[%s351 + $0x58] sm:$0xf]
        %v456 = vld [vmem:[%s351 + $0x5c] sm:$0xf]
        %v457 = vld [vmem:[%s351 + $0x60] sm:$0xf]
        %v458 = vld [vmem:[%s351 + $0x64] sm:$0xf]
        %v459 = vld [vmem:[%s351 + $0x68] sm:$0xf]
        %v460 = vld [vmem:[%s351 + $0x6c] sm:$0xf]
        %v461 = vld [vmem:[%s351 + $0x70] sm:$0xf]
        %v462 = vld [vmem:[%s351 + $0x74] sm:$0xf]
        %v463 = vld [vmem:[%s351 + $0x78] sm:$0xf]
        %v464 = vld [vmem:[%s351 + $0x7c] sm:$0xf]
        %v465 = vld [vmem:[%s351 + $0x80] sm:$0xf]
        %v466 = vld [vmem:[%s351 + $0x84] sm:$0xf]
        %v467 = vld [vmem:[%s351 + $0x88] sm:$0xf]
        %v468 = vld [vmem:[%s351 + $0x8c] sm:$0xf]
        %v469 = vld [vmem:[%s351 + $0x90] sm:$0xf]
        %v470 = vld [vmem:[%s351 + $0x94] sm:$0xf]
        %v471 = vld [vmem:[%s351 + $0x98] sm:$0xf]
        %v472 = vld [vmem:[%s351 + $0x9c] sm:$0xf]
        %v473 = vld [vmem:[%s351 + $0xa0] sm:$0xf]
        %v474 = vld [vmem:[%s351 + $0xa4] sm:$0xf]
        %v475 = vld [vmem:[%s351 + $0xa8] sm:$0xf]
        %v476 = vld [vmem:[%s351 + $0xac] sm:$0xf]
        %v477 = vld [vmem:[%s351 + $0xb0] sm:$0xf]
        %v478 = vld [vmem:[%s351 + $0xb4] sm:$0xf]
        %v479 = vld [vmem:[%s351 + $0xb8] sm:$0xf]
        %v480 = vld [vmem:[%s351 + $0xbc] sm:$0xf]
        %v481 = vld [vmem:[%s351 + $0xc0] sm:$0xf]
        %v482 = vld [vmem:[%s351 + $0xc4] sm:$0xf]
        %v483 = vld [vmem:[%s351 + $0xc8] sm:$0xf]
        %v484 = vld [vmem:[%s351 + $0xcc] sm:$0xf]
        %v485 = vld [vmem:[%s351 + $0xd0] sm:$0xf]
        %v486 = vld [vmem:[%s351 + $0xd4] sm:$0xf]
        %v487 = vld [vmem:[%s351 + $0xd8] sm:$0xf]
        %v488 = vld [vmem:[%s351 + $0xdc] sm:$0xf]
        %v489 = vld [vmem:[%s351 + $0xe0] sm:$0xf]
        %v490 = vld [vmem:[%s351 + $0xe4] sm:$0xf]
        %v491 = vld [vmem:[%s351 + $0xe8] sm:$0xf]
        %v492 = vld [vmem:[%s351 + $0xec] sm:$0xf]
        %v493 = vld [vmem:[%s351 + $0xf0] sm:$0xf]
        %v494 = vld [vmem:[%s351 + $0xf4] sm:$0xf]
        %v495 = vld [vmem:[%s351 + $0xf8] sm:$0xf]
        %v496 = vld [vmem:[%s351 + $0xfc] sm:$0xf]
        %v497 = vld [vmem:[%s351 + $0x100] sm:$0xf]
        %v498 = vld [vmem:[%s351 + $0x104] sm:$0xf]
        %v499 = vld [vmem:[%s351 + $0x108] sm:$0xf]
        %v500 = vld [vmem:[%s351 + $0x10c] sm:$0xf]
        %v501 = vld [vmem:[%s351 + $0x110] sm:$0xf]
        %v502 = vld [vmem:[%s351 + $0x114] sm:$0xf]
        %v503 = vld [vmem:[%s351 + $0x118] sm:$0xf]
        %v504 = vld [vmem:[%s351 + $0x11c] sm:$0xf]
        %v505 = vld [vmem:[%s351 + $0x120] sm:$0xf]
        %v506 = vld [vmem:[%s351 + $0x124] sm:$0xf]
        %v507 = vld [vmem:[%s351 + $0x128] sm:$0xf]
        %v508 = vld [vmem:[%s351 + $0x12c] sm:$0xf]
        %v509 = vld [vmem:[%s351 + $0x130] sm:$0xf]
        %v510 = vld [vmem:[%s351 + $0x134] sm:$0xf]
        %v511 = vld [vmem:[%s351 + $0x138] sm:$0xf]
        %v512 = vld [vmem:[%s351 + $0x13c] sm:$0xf]
        %v513 = vld [vmem:[%s351 + $0x140] sm:$0xf]
        %v514 = vld [vmem:[%s351 + $0x144] sm:$0xf]
        %v515 = vld [vmem:[%s351 + $0x148] sm:$0xf]
        %v516 = vld [vmem:[%s351 + $0x14c] sm:$0xf]
        %v517 = vld [vmem:[%s351 + $0x150] sm:$0xf]
        %v518 = vld [vmem:[%s351 + $0x154] sm:$0xf]
        %v519 = vld [vmem:[%s351 + $0x158] sm:$0xf]
        %v520 = vld [vmem:[%s351 + $0x15c] sm:$0xf]
        %v521 = vld [vmem:[%s351 + $0x160] sm:$0xf]
        %v522 = vld [vmem:[%s351 + $0x164] sm:$0xf]
        %v523 = vld [vmem:[%s351 + $0x168] sm:$0xf]
        %v524 = vld [vmem:[%s351 + $0x16c] sm:$0xf]
        %v525 = vld [vmem:[%s351 + $0x170] sm:$0xf]
        %v526 = vld [vmem:[%s351 + $0x174] sm:$0xf]
        %v527 = vld [vmem:[%s351 + $0x178] sm:$0xf]
        %v528 = vld [vmem:[%s351 + $0x17c] sm:$0xf]
        %v529 = vld [vmem:[%s351 + $0x180] sm:$0xf]
        %v530 = vld [vmem:[%s351 + $0x184] sm:$0xf]
        %v531 = vld [vmem:[%s351 + $0x188] sm:$0xf]
        %v532 = vld [vmem:[%s351 + $0x18c] sm:$0xf]
        %v533 = vld [vmem:[%s351 + $0x190] sm:$0xf]
        %v534 = vld [vmem:[%s351 + $0x194] sm:$0xf]
        %v535 = vld [vmem:[%s351 + $0x198] sm:$0xf]
        %v536 = vld [vmem:[%s351 + $0x19c] sm:$0xf]
        %v537 = vld [vmem:[%s351 + $0x1a0] sm:$0xf]
        %v538 = vld [vmem:[%s351 + $0x1a4] sm:$0xf]
        %v539 = vld [vmem:[%s351 + $0x1a8] sm:$0xf]
        %v540 = vld [vmem:[%s351 + $0x1ac] sm:$0xf]
        %v541 = vld [vmem:[%s351 + $0x1b0] sm:$0xf]
        %v542 = vld [vmem:[%s351 + $0x1b4] sm:$0xf]
        %v543 = vld [vmem:[%s351 + $0x1b8] sm:$0xf]
        %v544 = vld [vmem:[%s351 + $0x1bc] sm:$0xf]
        %v545 = vld [vmem:[%s351 + $0x1c0] sm:$0xf]
        %v546 = vld [vmem:[%s351 + $0x1c4] sm:$0xf]
        %v547 = vld [vmem:[%s351 + $0x1c8] sm:$0xf]
        %v548 = vld [vmem:[%s351 + $0x1cc] sm:$0xf]
        %v549 = vld [vmem:[%s351 + $0x1d0] sm:$0xf]
        %v550 = vld [vmem:[%s351 + $0x1d4] sm:$0xf]
        %v551 = vld [vmem:[%s351 + $0x1d8] sm:$0xf]
        %v552 = vld [vmem:[%s351 + $0x1dc] sm:$0xf]
        %v553 = vld [vmem:[%s351 + $0x1e0] sm:$0xf]
        %v554 = vld [vmem:[%s351 + $0x1e4] sm:$0xf]
        %v555 = vld [vmem:[%s351 + $0x1e8] sm:$0xf]
        %v556 = vld [vmem:[%s351 + $0x1ec] sm:$0xf]
        %v557 = vld [vmem:[%s351 + $0x1f0] sm:$0xf]
        %v558 = vld [vmem:[%s351 + $0x1f4] sm:$0xf]
        %v559 = vld [vmem:[%s351 + $0x1f8] sm:$0xf]
        %v560 = vld [vmem:[%s351 + $0x1fc] sm:$0xf]
        %v561 = vld [vmem:[%s351 + $0x200] sm:$0xf]
        %v562 = vld [vmem:[%s351 + $0x204] sm:$0xf]
        %v563 = vld [vmem:[%s351 + $0x208] sm:$0xf]
        %v564 = vld [vmem:[%s351 + $0x20c] sm:$0xf]
        %v565 = vld [vmem:[%s351 + $0x210] sm:$0xf]
        %v566 = vld [vmem:[%s351 + $0x214] sm:$0xf]
        %v567 = vld [vmem:[%s351 + $0x218] sm:$0xf]
        %v568 = vld [vmem:[%s351 + $0x21c] sm:$0xf]
        %v569 = vld [vmem:[%s351 + $0x220] sm:$0xf]
        %v570 = vld [vmem:[%s351 + $0x224] sm:$0xf]
        %v571 = vld [vmem:[%s351 + $0x228] sm:$0xf]
        %v572 = vld [vmem:[%s351 + $0x22c] sm:$0xf]
        %v573 = vld [vmem:[%s351 + $0x230] sm:$0xf]
        %v574 = vld [vmem:[%s351 + $0x234] sm:$0xf]
        %v575 = vld [vmem:[%s351 + $0x238] sm:$0xf]
        %v576 = vld [vmem:[%s351 + $0x23c] sm:$0xf]
        %v577 = vld [vmem:[%s351 + $0x240] sm:$0xf]
        %v578 = vld [vmem:[%s351 + $0x244] sm:$0xf]
        %v579 = vld [vmem:[%s351 + $0x248] sm:$0xf]
        %v580 = vld [vmem:[%s351 + $0x24c] sm:$0xf]
        %v581 = vld [vmem:[%s351 + $0x250] sm:$0xf]
        %v582 = vld [vmem:[%s351 + $0x254] sm:$0xf]
        %v583 = vld [vmem:[%s351 + $0x258] sm:$0xf]
        %v584 = vld [vmem:[%s351 + $0x25c] sm:$0xf]
        %v585 = vld [vmem:[%s351 + $0x260] sm:$0xf]
        %v586 = vld [vmem:[%s351 + $0x264] sm:$0xf]
        %v587 = vld [vmem:[%s351 + $0x268] sm:$0xf]
        %v588 = vld [vmem:[%s351 + $0x26c] sm:$0xf]
        %v589 = vld [vmem:[%s351 + $0x270] sm:$0xf]
        %v590 = vld [vmem:[%s351 + $0x274] sm:$0xf]
        %v591 = vld [vmem:[%s351 + $0x278] sm:$0xf]
        %v592 = vld [vmem:[%s351 + $0x27c] sm:$0xf]
        %v593 = vld [vmem:[%s351 + $0x280] sm:$0xf]
        %v594 = vld [vmem:[%s351 + $0x284] sm:$0xf]
        %v595 = vld [vmem:[%s351 + $0x288] sm:$0xf]
        %v596 = vld [vmem:[%s351 + $0x28c] sm:$0xf]
        %v597 = vld [vmem:[%s351 + $0x290] sm:$0xf]
        %v598 = vld [vmem:[%s351 + $0x294] sm:$0xf]
        %v599 = vld [vmem:[%s351 + $0x298] sm:$0xf]
        %v600 = vld [vmem:[%s351 + $0x29c] sm:$0xf]
        %v601 = vld [vmem:[%s351 + $0x2a0] sm:$0xf]
        %v602 = vld [vmem:[%s351 + $0x2a4] sm:$0xf]
        %v603 = vld [vmem:[%s351 + $0x2a8] sm:$0xf]
        %v604 = vld [vmem:[%s351 + $0x2ac] sm:$0xf]
        %v605 = vld [vmem:[%s351 + $0x2b0] sm:$0xf]
        %v606 = vld [vmem:[%s351 + $0x2b4] sm:$0xf]
        %v607 = vld [vmem:[%s351 + $0x2b8] sm:$0xf]
        %v608 = vld [vmem:[%s351 + $0x2bc] sm:$0xf]
        %v609 = vld [vmem:[%s351 + $0x2c0] sm:$0xf]
        %v610 = vld [vmem:[%s351 + $0x2c4] sm:$0xf]
        %v611 = vld [vmem:[%s351 + $0x2c8] sm:$0xf]
        %v612 = vld [vmem:[%s351 + $0x2cc] sm:$0xf]
        %v613 = vld [vmem:[%s351 + $0x2d0] sm:$0xf]
        %v614 = vld [vmem:[%s351 + $0x2d4] sm:$0xf]
        %v615 = vld [vmem:[%s351 + $0x2d8] sm:$0xf]
        %v616 = vld [vmem:[%s351 + $0x2dc] sm:$0xf]
        %v617 = vld [vmem:[%s351 + $0x2e0] sm:$0xf]
        %v618 = vld [vmem:[%s351 + $0x2e4] sm:$0xf]
        %v619 = vld [vmem:[%s351 + $0x2e8] sm:$0xf]
        %v620 = vld [vmem:[%s351 + $0x2ec] sm:$0xf]
        %v621 = vld [vmem:[%s351 + $0x2f0] sm:$0xf]
        %v622 = vld [vmem:[%s351 + $0x2f4] sm:$0xf]
        %v623 = vld [vmem:[%s351 + $0x2f8] sm:$0xf]
        %v624 = vld [vmem:[%s351 + $0x2fc] sm:$0xf]
        %v625 = vld [vmem:[%s351 + $0x300] sm:$0xf]
        %v626 = vld [vmem:[%s351 + $0x304] sm:$0xf]
        %v627 = vld [vmem:[%s351 + $0x308] sm:$0xf]
        %v628 = vld [vmem:[%s351 + $0x30c] sm:$0xf]
        %v629 = vld [vmem:[%s351 + $0x310] sm:$0xf]
        %v630 = vld [vmem:[%s351 + $0x314] sm:$0xf]
        %v631 = vld [vmem:[%s351 + $0x318] sm:$0xf]
        %v632 = vld [vmem:[%s351 + $0x31c] sm:$0xf]
        %v633 = vld [vmem:[%s351 + $0x320] sm:$0xf]
        %v634 = vld [vmem:[%s351 + $0x324] sm:$0xf]
        %v635 = vld [vmem:[%s351 + $0x328] sm:$0xf]
        %v636 = vld [vmem:[%s351 + $0x32c] sm:$0xf]
        %v637 = vld [vmem:[%s351 + $0x330] sm:$0xf]
        %v638 = vld [vmem:[%s351 + $0x334] sm:$0xf]
        %v639 = vld [vmem:[%s351 + $0x338] sm:$0xf]
        %v640 = vld [vmem:[%s351 + $0x33c] sm:$0xf]
        %v641 = vld [vmem:[%s351 + $0x340] sm:$0xf]
        %v642 = vld [vmem:[%s351 + $0x344] sm:$0xf]
        %v643 = vld [vmem:[%s351 + $0x348] sm:$0xf]
        %v644 = vld [vmem:[%s351 + $0x34c] sm:$0xf]
        %v645 = vld [vmem:[%s351 + $0x350] sm:$0xf]
        %v646 = vld [vmem:[%s351 + $0x354] sm:$0xf]
        %v647 = vld [vmem:[%s351 + $0x358] sm:$0xf]
        %v648 = vld [vmem:[%s351 + $0x35c] sm:$0xf]
        %v649 = vld [vmem:[%s351 + $0x360] sm:$0xf]
        %v650 = vld [vmem:[%s351 + $0x364] sm:$0xf]
        %v651 = vld [vmem:[%s351 + $0x368] sm:$0xf]
        %v652 = vld [vmem:[%s351 + $0x36c] sm:$0xf]
        %v653 = vld [vmem:[%s351 + $0x370] sm:$0xf]
        %v654 = vld [vmem:[%s351 + $0x374] sm:$0xf]
        %v655 = vld [vmem:[%s351 + $0x378] sm:$0xf]
        %v656 = vld [vmem:[%s351 + $0x37c] sm:$0xf]
        %v657 = vld [vmem:[%s351 + $0x380] sm:$0xf]
        %v658 = vld [vmem:[%s351 + $0x384] sm:$0xf]
        %v659 = vld [vmem:[%s351 + $0x388] sm:$0xf]
        %v660 = vld [vmem:[%s351 + $0x38c] sm:$0xf]
        %v661 = vld [vmem:[%s351 + $0x390] sm:$0xf]
        %v662 = vld [vmem:[%s351 + $0x394] sm:$0xf]
        %v663 = vld [vmem:[%s351 + $0x398] sm:$0xf]
        %v664 = vld [vmem:[%s351 + $0x39c] sm:$0xf]
        %v665 = vld [vmem:[%s351 + $0x3a0] sm:$0xf]
        %v666 = vld [vmem:[%s351 + $0x3a4] sm:$0xf]
        %v667 = vld [vmem:[%s351 + $0x3a8] sm:$0xf]
        %v668 = vld [vmem:[%s351 + $0x3ac] sm:$0xf]
        %v669 = vld [vmem:[%s351 + $0x3b0] sm:$0xf]
        %v670 = vld [vmem:[%s351 + $0x3b4] sm:$0xf]
        %v671 = vld [vmem:[%s351 + $0x3b8] sm:$0xf]
        %v672 = vld [vmem:[%s351 + $0x3bc] sm:$0xf]
        %v673 = vld [vmem:[%s351 + $0x3c0] sm:$0xf]
        %v674 = vld [vmem:[%s351 + $0x3c4] sm:$0xf]
        %v675 = vld [vmem:[%s351 + $0x3c8] sm:$0xf]
        %v676 = vld [vmem:[%s351 + $0x3cc] sm:$0xf]
        %v677 = vld [vmem:[%s351 + $0x3d0] sm:$0xf]
        %v678 = vld [vmem:[%s351 + $0x3d4] sm:$0xf]
        %v679 = vld [vmem:[%s351 + $0x3d8] sm:$0xf]
        %v680 = vld [vmem:[%s351 + $0x3dc] sm:$0xf]
        %v681 = vld [vmem:[%s351 + $0x3e0] sm:$0xf]
        %v682 = vld [vmem:[%s351 + $0x3e4] sm:$0xf]
        %v683 = vld [vmem:[%s351 + $0x3e8] sm:$0xf]
        %v684 = vld [vmem:[%s351 + $0x3ec] sm:$0xf]
        %v685 = vld [vmem:[%s351 + $0x3f0] sm:$0xf]
        %v686 = vld [vmem:[%s351 + $0x3f4] sm:$0xf]
        %v687 = vld [vmem:[%s351 + $0x3f8] sm:$0xf]
        %v688 = vld [vmem:[%s351 + $0x3fc] sm:$0xf]
        %v689 = vld [vmem:[%s351 + $0x400] sm:$0xf]
        %v690 = vld [vmem:[%s351 + $0x404] sm:$0xf]
        %v691 = vld [vmem:[%s351 + $0x408] sm:$0xf]
        %v692 = vld [vmem:[%s351 + $0x40c] sm:$0xf]
        %v693 = vld [vmem:[%s351 + $0x410] sm:$0xf]
        %v694 = vld [vmem:[%s351 + $0x414] sm:$0xf]
        %v695 = vld [vmem:[%s351 + $0x418] sm:$0xf]
        %v696 = vld [vmem:[%s351 + $0x41c] sm:$0xf]
        %v697 = vld [vmem:[%s351 + $0x420] sm:$0xf]
        %v698 = vld [vmem:[%s351 + $0x424] sm:$0xf]
        %v699 = vld [vmem:[%s351 + $0x428] sm:$0xf]
        %v700 = vld [vmem:[%s351 + $0x42c] sm:$0xf]
        %v701 = vld [vmem:[%s351 + $0x430] sm:$0xf]
        %v702 = vld [vmem:[%s351 + $0x434] sm:$0xf]
        %v703 = vld [vmem:[%s351 + $0x438] sm:$0xf]
        %v704 = vld [vmem:[%s351 + $0x43c] sm:$0xf]
        %v705 = vld [vmem:[%s351 + $0x440] sm:$0xf]
        %v706 = vld [vmem:[%s351 + $0x444] sm:$0xf]
        %v707 = vld [vmem:[%s351 + $0x448] sm:$0xf]
        %v708 = vld [vmem:[%s351 + $0x44c] sm:$0xf]
        %v709 = vld [vmem:[%s351 + $0x450] sm:$0xf]
        %v710 = vld [vmem:[%s351 + $0x454] sm:$0xf]
        %v711 = vld [vmem:[%s351 + $0x458] sm:$0xf]
        %v712 = vld [vmem:[%s351 + $0x45c] sm:$0xf]
        %v713 = vld [vmem:[%s351 + $0x460] sm:$0xf]
        %v714 = vld [vmem:[%s351 + $0x464] sm:$0xf]
        %v715 = vld [vmem:[%s351 + $0x468] sm:$0xf]
        %v716 = vld [vmem:[%s351 + $0x46c] sm:$0xf]
        %v717 = vld [vmem:[%s351 + $0x470] sm:$0xf]
        %v718 = vld [vmem:[%s351 + $0x474] sm:$0xf]
        %v719 = vld [vmem:[%s351 + $0x478] sm:$0xf]
        %v720 = vld [vmem:[%s351 + $0x47c] sm:$0xf]
        %v721 = vld [vmem:[%s351 + $0x480] sm:$0xf]
        %v722 = vld [vmem:[%s351 + $0x484] sm:$0xf]
        %v723 = vld [vmem:[%s351 + $0x488] sm:$0xf]
        %v724 = vld [vmem:[%s351 + $0x48c] sm:$0xf]
        %v725 = vld [vmem:[%s351 + $0x490] sm:$0xf]
        %v726 = vld [vmem:[%s351 + $0x494] sm:$0xf]
        %v727 = vld [vmem:[%s351 + $0x498] sm:$0xf]
        %v728 = vld [vmem:[%s351 + $0x49c] sm:$0xf]
        %v729 = vld [vmem:[%s351 + $0x4a0] sm:$0xf]
        %v730 = vld [vmem:[%s351 + $0x4a4] sm:$0xf]
        %v731 = vld [vmem:[%s351 + $0x4a8] sm:$0xf]
        %v732 = vld [vmem:[%s351 + $0x4ac] sm:$0xf]
        %v733 = vld [vmem:[%s351 + $0x4b0] sm:$0xf]
        %v734 = vld [vmem:[%s351 + $0x4b4] sm:$0xf]
        %v735 = vld [vmem:[%s351 + $0x4b8] sm:$0xf]
        %v736 = vld [vmem:[%s351 + $0x4bc] sm:$0xf]
        %v737 = vld [vmem:[%s351 + $0x4c0] sm:$0xf]
        %v738 = vld [vmem:[%s351 + $0x4c4] sm:$0xf]
        %v739 = vld [vmem:[%s351 + $0x4c8] sm:$0xf]
        %v740 = vld [vmem:[%s351 + $0x4cc] sm:$0xf]
        %v741 = vld [vmem:[%s351 + $0x4d0] sm:$0xf]
        %v742 = vld [vmem:[%s351 + $0x4d4] sm:$0xf]
        %v743 = vld [vmem:[%s351 + $0x4d8] sm:$0xf]
        %v744 = vld [vmem:[%s351 + $0x4dc] sm:$0xf]
        %v745 = vld [vmem:[%s351 + $0x4e0] sm:$0xf]
        %v746 = vld [vmem:[%s351 + $0x4e4] sm:$0xf]
        %v747 = vld [vmem:[%s351 + $0x4e8] sm:$0xf]
        %v748 = vld [vmem:[%s351 + $0x4ec] sm:$0xf]
        %v749 = vld [vmem:[%s351 + $0x4f0] sm:$0xf]
        %v750 = vld [vmem:[%s351 + $0x4f4] sm:$0xf]
        %v751 = vld [vmem:[%s351 + $0x4f8] sm:$0xf]
        %v752 = vld [vmem:[%s351 + $0x4fc] sm:$0xf]
        %v753 = vld [vmem:[%s351 + $0x500] sm:$0xf]
        %v754 = vld [vmem:[%s351 + $0x504] sm:$0xf]
        %v755 = vld [vmem:[%s351 + $0x508] sm:$0xf]
        %v756 = vld [vmem:[%s351 + $0x50c] sm:$0xf]
        %v757 = vld [vmem:[%s351 + $0x510] sm:$0xf]
        %v758 = vld [vmem:[%s351 + $0x514] sm:$0xf]
        %v759 = vld [vmem:[%s351 + $0x518] sm:$0xf]
        %v760 = vld [vmem:[%s351 + $0x51c] sm:$0xf]
        %v761 = vld [vmem:[%s351 + $0x520] sm:$0xf]
        %v762 = vld [vmem:[%s351 + $0x524] sm:$0xf]
        %v763 = vld [vmem:[%s351 + $0x528] sm:$0xf]
        %v764 = vld [vmem:[%s351 + $0x52c] sm:$0xf]
        %v765 = vld [vmem:[%s351 + $0x530] sm:$0xf]
        %v766 = vld [vmem:[%s351 + $0x534] sm:$0xf]
        %v767 = vld [vmem:[%s351 + $0x538] sm:$0xf]
        %v768 = vld [vmem:[%s351 + $0x53c] sm:$0xf]
        %v769 = vld [vmem:[%s351 + $0x540] sm:$0xf]
        %v770 = vld [vmem:[%s351 + $0x544] sm:$0xf]
        %v771 = vld [vmem:[%s351 + $0x548] sm:$0xf]
        %v772 = vld [vmem:[%s351 + $0x54c] sm:$0xf]
        %v773 = vld [vmem:[%s351 + $0x550] sm:$0xf]
        %v774 = vld [vmem:[%s351 + $0x554] sm:$0xf]
        %v775 = vld [vmem:[%s351 + $0x558] sm:$0xf]
        %v776 = vld [vmem:[%s351 + $0x55c] sm:$0xf]
        %v777 = vld [vmem:[%s351 + $0x560] sm:$0xf]
        %v778 = vld [vmem:[%s351 + $0x564] sm:$0xf]
        %v779 = vld [vmem:[%s351 + $0x568] sm:$0xf]
        %v780 = vld [vmem:[%s351 + $0x56c] sm:$0xf]
        %v781 = vld [vmem:[%s351 + $0x570] sm:$0xf]
        %v782 = vld [vmem:[%s351 + $0x574] sm:$0xf]
        %v783 = vld [vmem:[%s351 + $0x578] sm:$0xf]
        %v784 = vld [vmem:[%s351 + $0x57c] sm:$0xf]
        %v785 = vld [vmem:[%s351 + $0x580] sm:$0xf]
        %v786 = vld [vmem:[%s351 + $0x584] sm:$0xf]
        %v787 = vld [vmem:[%s351 + $0x588] sm:$0xf]
        %v788 = vld [vmem:[%s351 + $0x58c] sm:$0xf]
        %v789 = vld [vmem:[%s351 + $0x590] sm:$0xf]
        %v790 = vld [vmem:[%s351 + $0x594] sm:$0xf]
        %v791 = vld [vmem:[%s351 + $0x598] sm:$0xf]
        %v792 = vld [vmem:[%s351 + $0x59c] sm:$0xf]
        %v793 = vld [vmem:[%s351 + $0x5a0] sm:$0xf]
        %v794 = vld [vmem:[%s351 + $0x5a4] sm:$0xf]
        %v795 = vld [vmem:[%s351 + $0x5a8] sm:$0xf]
        %v796 = vld [vmem:[%s351 + $0x5ac] sm:$0xf]
        %v797 = vld [vmem:[%s351 + $0x5b0] sm:$0xf]
        %v798 = vld [vmem:[%s351 + $0x5b4] sm:$0xf]
        %v799 = vld [vmem:[%s351 + $0x5b8] sm:$0xf]
        %v800 = vld [vmem:[%s351 + $0x5bc] sm:$0xf]
        %v801 = vld [vmem:[%s351 + $0x5c0] sm:$0xf]
        %v802 = vld [vmem:[%s351 + $0x5c4] sm:$0xf]
        %v803 = vld [vmem:[%s351 + $0x5c8] sm:$0xf]
        %v804 = vld [vmem:[%s351 + $0x5cc] sm:$0xf]
        %v805 = vld [vmem:[%s351 + $0x5d0] sm:$0xf]
        %v806 = vld [vmem:[%s351 + $0x5d4] sm:$0xf]
        %v807 = vld [vmem:[%s351 + $0x5d8] sm:$0xf]
        %v808 = vld [vmem:[%s351 + $0x5dc] sm:$0xf]
        %v809 = vld [vmem:[%s351 + $0x5e0] sm:$0xf]
        %v810 = vld [vmem:[%s351 + $0x5e4] sm:$0xf]
        %v811 = vld [vmem:[%s351 + $0x5e8] sm:$0xf]
        %v812 = vld [vmem:[%s351 + $0x5ec] sm:$0xf]
        %v813 = vld [vmem:[%s351 + $0x5f0] sm:$0xf]
        %v814 = vld [vmem:[%s351 + $0x5f4] sm:$0xf]
        %v815 = vld [vmem:[%s351 + $0x5f8] sm:$0xf]
        %v816 = vld [vmem:[%s351 + $0x5fc] sm:$0xf]
        %v817 = vld [vmem:[%s351 + $0x600] sm:$0xf]
        %v818 = vld [vmem:[%s351 + $0x604] sm:$0xf]
        %v819 = vld [vmem:[%s351 + $0x608] sm:$0xf]
        %v820 = vld [vmem:[%s351 + $0x60c] sm:$0xf]
        %v821 = vld [vmem:[%s351 + $0x610] sm:$0xf]
        %v822 = vld [vmem:[%s351 + $0x614] sm:$0xf]
        %v823 = vld [vmem:[%s351 + $0x618] sm:$0xf]
        %v824 = vld [vmem:[%s351 + $0x61c] sm:$0xf]
        %v825 = vld [vmem:[%s351 + $0x620] sm:$0xf]
        %v826 = vld [vmem:[%s351 + $0x624] sm:$0xf]
        %v827 = vld [vmem:[%s351 + $0x628] sm:$0xf]
        %v828 = vld [vmem:[%s351 + $0x62c] sm:$0xf]
        %v829 = vld [vmem:[%s351 + $0x630] sm:$0xf]
        %v830 = vld [vmem:[%s351 + $0x634] sm:$0xf]
        %v831 = vld [vmem:[%s351 + $0x638] sm:$0xf]
        %v832 = vld [vmem:[%s351 + $0x63c] sm:$0xf]
        %v833 = vld [vmem:[%s351 + $0x640] sm:$0xf]
        %v834 = vld [vmem:[%s351 + $0x644] sm:$0xf]
        %v835 = vld [vmem:[%s351 + $0x648] sm:$0xf]
        %v836 = vld [vmem:[%s351 + $0x64c] sm:$0xf]
        %v837 = vld [vmem:[%s351 + $0x650] sm:$0xf]
        %v838 = vld [vmem:[%s351 + $0x654] sm:$0xf]
        %v839 = vld [vmem:[%s351 + $0x658] sm:$0xf]
        %v840 = vld [vmem:[%s351 + $0x65c] sm:$0xf]
        %v841 = vld [vmem:[%s351 + $0x660] sm:$0xf]
        %v842 = vld [vmem:[%s351 + $0x664] sm:$0xf]
        %v843 = vld [vmem:[%s351 + $0x668] sm:$0xf]
        %v844 = vld [vmem:[%s351 + $0x66c] sm:$0xf]
        %v845 = vld [vmem:[%s351 + $0x670] sm:$0xf]
        %v846 = vld [vmem:[%s351 + $0x674] sm:$0xf]
        %v847 = vld [vmem:[%s351 + $0x678] sm:$0xf]
        %v848 = vld [vmem:[%s351 + $0x67c] sm:$0xf]
        %v849 = vld [vmem:[%s351 + $0x680] sm:$0xf]
        %v850 = vld [vmem:[%s351 + $0x684] sm:$0xf]
        %v851 = vld [vmem:[%s351 + $0x688] sm:$0xf]
        %v852 = vld [vmem:[%s351 + $0x68c] sm:$0xf]
        %v853 = vld [vmem:[%s351 + $0x690] sm:$0xf]
        %v854 = vld [vmem:[%s351 + $0x694] sm:$0xf]
        %v855 = vld [vmem:[%s351 + $0x698] sm:$0xf]
        %v856 = vld [vmem:[%s351 + $0x69c] sm:$0xf]
        %v857 = vld [vmem:[%s351 + $0x6a0] sm:$0xf]
        %v858 = vld [vmem:[%s351 + $0x6a4] sm:$0xf]
        %v859 = vld [vmem:[%s351 + $0x6a8] sm:$0xf]
        %v860 = vld [vmem:[%s351 + $0x6ac] sm:$0xf]
        %v861 = vld [vmem:[%s351 + $0x6b0] sm:$0xf]
        %v862 = vld [vmem:[%s351 + $0x6b4] sm:$0xf]
        %v863 = vld [vmem:[%s351 + $0x6b8] sm:$0xf]
        %v864 = vld [vmem:[%s351 + $0x6bc] sm:$0xf]
        %v865 = vld [vmem:[%s351 + $0x6c0] sm:$0xf]
        %v866 = vld [vmem:[%s351 + $0x6c4] sm:$0xf]
        %v867 = vld [vmem:[%s351 + $0x6c8] sm:$0xf]
        %v868 = vld [vmem:[%s351 + $0x6cc] sm:$0xf]
        %v869 = vld [vmem:[%s351 + $0x6d0] sm:$0xf]
        %v870 = vld [vmem:[%s351 + $0x6d4] sm:$0xf]
        %v871 = vld [vmem:[%s351 + $0x6d8] sm:$0xf]
        %v872 = vld [vmem:[%s351 + $0x6dc] sm:$0xf]
        %v873 = vld [vmem:[%s351 + $0x6e0] sm:$0xf]
        %v874 = vld [vmem:[%s351 + $0x6e4] sm:$0xf]
        %v875 = vld [vmem:[%s351 + $0x6e8] sm:$0xf]
        %v876 = vld [vmem:[%s351 + $0x6ec] sm:$0xf]
        %v877 = vld [vmem:[%s351 + $0x6f0] sm:$0xf]
        %v878 = vld [vmem:[%s351 + $0x6f4] sm:$0xf]
        %v879 = vld [vmem:[%s351 + $0x6f8] sm:$0xf]
        %v880 = vld [vmem:[%s351 + $0x6fc] sm:$0xf]
        %v881 = vld [vmem:[%s351 + $0x700] sm:$0xf]
        %v882 = vld [vmem:[%s351 + $0x704] sm:$0xf]
        %v883 = vld [vmem:[%s351 + $0x708] sm:$0xf]
        %v884 = vld [vmem:[%s351 + $0x70c] sm:$0xf]
        %v885 = vld [vmem:[%s351 + $0x710] sm:$0xf]
        %v886 = vld [vmem:[%s351 + $0x714] sm:$0xf]
        %v887 = vld [vmem:[%s351 + $0x718] sm:$0xf]
        %v888 = vld [vmem:[%s351 + $0x71c] sm:$0xf]
        %v889 = vld [vmem:[%s351 + $0x720] sm:$0xf]
        %v890 = vld [vmem:[%s351 + $0x724] sm:$0xf]
        %v891 = vld [vmem:[%s351 + $0x728] sm:$0xf]
        %v892 = vld [vmem:[%s351 + $0x72c] sm:$0xf]
        %v893 = vld [vmem:[%s351 + $0x730] sm:$0xf]
        %v894 = vld [vmem:[%s351 + $0x734] sm:$0xf]
        %v895 = vld [vmem:[%s351 + $0x738] sm:$0xf]
        %v896 = vld [vmem:[%s351 + $0x73c] sm:$0xf]
        %v897 = vld [vmem:[%s351 + $0x740] sm:$0xf]
        %v898 = vld [vmem:[%s351 + $0x744] sm:$0xf]
        %v899 = vld [vmem:[%s351 + $0x748] sm:$0xf]
        %v900 = vld [vmem:[%s351 + $0x74c] sm:$0xf]
        %v901 = vld [vmem:[%s351 + $0x750] sm:$0xf]
        %v902 = vld [vmem:[%s351 + $0x754] sm:$0xf]
        %v903 = vld [vmem:[%s351 + $0x758] sm:$0xf]
        %v904 = vld [vmem:[%s351 + $0x75c] sm:$0xf]
        %v905 = vld [vmem:[%s351 + $0x760] sm:$0xf]
        %v906 = vld [vmem:[%s351 + $0x764] sm:$0xf]
        %v907 = vld [vmem:[%s351 + $0x768] sm:$0xf]
        %v908 = vld [vmem:[%s351 + $0x76c] sm:$0xf]
        %v909 = vld [vmem:[%s351 + $0x770] sm:$0xf]
        %v910 = vld [vmem:[%s351 + $0x774] sm:$0xf]
        %v911 = vld [vmem:[%s351 + $0x778] sm:$0xf]
        %v912 = vld [vmem:[%s351 + $0x77c] sm:$0xf]
        %v913 = vld [vmem:[%s351 + $0x780] sm:$0xf]
        %v914 = vld [vmem:[%s351 + $0x784] sm:$0xf]
        %v915 = vld [vmem:[%s351 + $0x788] sm:$0xf]
        %v916 = vld [vmem:[%s351 + $0x78c] sm:$0xf]
        %v917 = vld [vmem:[%s351 + $0x790] sm:$0xf]
        %v918 = vld [vmem:[%s351 + $0x794] sm:$0xf]
        %v919 = vld [vmem:[%s351 + $0x798] sm:$0xf]
        %v920 = vld [vmem:[%s351 + $0x79c] sm:$0xf]
        %v921 = vld [vmem:[%s351 + $0x7a0] sm:$0xf]
        %v922 = vld [vmem:[%s351 + $0x7a4] sm:$0xf]
        %v923 = vld [vmem:[%s351 + $0x7a8] sm:$0xf]
        %v924 = vld [vmem:[%s351 + $0x7ac] sm:$0xf]
        %v925 = vld [vmem:[%s351 + $0x7b0] sm:$0xf]
        %v926 = vld [vmem:[%s351 + $0x7b4] sm:$0xf]
        %v927 = vld [vmem:[%s351 + $0x7b8] sm:$0xf]
        %v928 = vld [vmem:[%s351 + $0x7bc] sm:$0xf]
        %v929 = vld [vmem:[%s351 + $0x7c0] sm:$0xf]
        %v930 = vld [vmem:[%s351 + $0x7c4] sm:$0xf]
        %v931 = vld [vmem:[%s351 + $0x7c8] sm:$0xf]
        %v932 = vld [vmem:[%s351 + $0x7cc] sm:$0xf]
        %v933 = vld [vmem:[%s351 + $0x7d0] sm:$0xf]
        %v934 = vld [vmem:[%s351 + $0x7d4] sm:$0xf]
        %v935 = vld [vmem:[%s351 + $0x7d8] sm:$0xf]
        %v936 = vld [vmem:[%s351 + $0x7dc] sm:$0xf]
        %v937 = vld [vmem:[%s351 + $0x7e0] sm:$0xf]
        %v938 = vld [vmem:[%s351 + $0x7e4] sm:$0xf]
        %v939 = vld [vmem:[%s351 + $0x7e8] sm:$0xf]
        %v940 = vld [vmem:[%s351 + $0x7ec] sm:$0xf]
        %v941 = vld [vmem:[%s351 + $0x7f0] sm:$0xf]
        %v942 = vld [vmem:[%s351 + $0x7f4] sm:$0xf]
        %v943 = vld [vmem:[%s351 + $0x7f8] sm:$0xf]
        %v944 = vld [vmem:[%s351 + $0x7fc] sm:$0xf]
        %v945 = vld [vmem:[%s351 + $0x800] sm:$0xf]
        %v946 = vld [vmem:[%s351 + $0x804] sm:$0xf]
        %v947 = vld [vmem:[%s351 + $0x808] sm:$0xf]
        %v948 = vld [vmem:[%s351 + $0x80c] sm:$0xf]
        %v949 = vld [vmem:[%s351 + $0x810] sm:$0xf]
        %v950 = vld [vmem:[%s351 + $0x814] sm:$0xf]
        %v951 = vld [vmem:[%s351 + $0x818] sm:$0xf]
        %v952 = vld [vmem:[%s351 + $0x81c] sm:$0xf]
        %v953 = vld [vmem:[%s351 + $0x820] sm:$0xf]
        %v954 = vld [vmem:[%s351 + $0x824] sm:$0xf]
        %v955 = vld [vmem:[%s351 + $0x828] sm:$0xf]
        %v956 = vld [vmem:[%s351 + $0x82c] sm:$0xf]
        %v957 = vld [vmem:[%s351 + $0x830] sm:$0xf]
        %v958 = vld [vmem:[%s351 + $0x834] sm:$0xf]
        %v959 = vld [vmem:[%s351 + $0x838] sm:$0xf]
        %v960 = vld [vmem:[%s351 + $0x83c] sm:$0xf]
        %v961 = vld [vmem:[%s351 + $0x840] sm:$0xf]
        %v962 = vld [vmem:[%s351 + $0x844] sm:$0xf]
        %v963 = vld [vmem:[%s351 + $0x848] sm:$0xf]
        %v964 = vld [vmem:[%s351 + $0x84c] sm:$0xf]
        %v965 = vld [vmem:[%s351 + $0x850] sm:$0xf]
        %v966 = vld [vmem:[%s351 + $0x854] sm:$0xf]
        %v967 = vld [vmem:[%s351 + $0x858] sm:$0xf]
        %v968 = vld [vmem:[%s351 + $0x85c] sm:$0xf]
        %v969 = vld [vmem:[%s351 + $0x860] sm:$0xf]
        %v970 = vld [vmem:[%s351 + $0x864] sm:$0xf]
        %v971 = vld [vmem:[%s351 + $0x868] sm:$0xf]
        %v972 = vld [vmem:[%s351 + $0x86c] sm:$0xf]
        %v973 = vld [vmem:[%s351 + $0x870] sm:$0xf]
        %v974 = vld [vmem:[%s351 + $0x874] sm:$0xf]
        %v975 = vld [vmem:[%s351 + $0x878] sm:$0xf]
        %v976 = vld [vmem:[%s351 + $0x87c] sm:$0xf]
        %v977 = vld [vmem:[%s351 + $0x880] sm:$0xf]
        %v978 = vld [vmem:[%s351 + $0x884] sm:$0xf]
        %v979 = vld [vmem:[%s351 + $0x888] sm:$0xf]
        %v980 = vld [vmem:[%s351 + $0x88c] sm:$0xf]
        %v981 = vld [vmem:[%s351 + $0x890] sm:$0xf]
        %v982 = vld [vmem:[%s351 + $0x894] sm:$0xf]
        %v983 = vld [vmem:[%s351 + $0x898] sm:$0xf]
        %v984 = vld [vmem:[%s351 + $0x89c] sm:$0xf]
        %v985 = vld [vmem:[%s351 + $0x8a0] sm:$0xf]
        %v986 = vld [vmem:[%s351 + $0x8a4] sm:$0xf]
        %v987 = vld [vmem:[%s351 + $0x8a8] sm:$0xf]
        %v988 = vld [vmem:[%s351 + $0x8ac] sm:$0xf]
        %v989 = vld [vmem:[%s351 + $0x8b0] sm:$0xf]
        %v990 = vld [vmem:[%s351 + $0x8b4] sm:$0xf]
        %v991 = vld [vmem:[%s351 + $0x8b8] sm:$0xf]
        %v992 = vld [vmem:[%s351 + $0x8bc] sm:$0xf]
        %v993 = vld [vmem:[%s351 + $0x8c0] sm:$0xf]
        %v994 = vld [vmem:[%s351 + $0x8c4] sm:$0xf]
        %v995 = vld [vmem:[%s351 + $0x8c8] sm:$0xf]
        %v996 = vld [vmem:[%s351 + $0x8cc] sm:$0xf]
        %v997 = vld [vmem:[%s351 + $0x8d0] sm:$0xf]
        %v998 = vld [vmem:[%s351 + $0x8d4] sm:$0xf]
        %v999 = vld [vmem:[%s351 + $0x8d8] sm:$0xf]
        %v1000 = vld [vmem:[%s351 + $0x8dc] sm:$0xf]
        %v1001 = vld [vmem:[%s351 + $0x8e0] sm:$0xf]
        %v1002 = vld [vmem:[%s351 + $0x8e4] sm:$0xf]
        %v1003 = vld [vmem:[%s351 + $0x8e8] sm:$0xf]
        %v1004 = vld [vmem:[%s351 + $0x8ec] sm:$0xf]
        %v1005 = vld [vmem:[%s351 + $0x8f0] sm:$0xf]
        %v1006 = vld [vmem:[%s351 + $0x8f4] sm:$0xf]
        %v1007 = vld [vmem:[%s351 + $0x8f8] sm:$0xf]
        %v1008 = vld [vmem:[%s351 + $0x8fc] sm:$0xf]
        %v1009 = vld [vmem:[%s351 + $0x900] sm:$0xf]
        %v1010 = vld [vmem:[%s351 + $0x904] sm:$0xf]
        %v1011 = vld [vmem:[%s351 + $0x908] sm:$0xf]
        %v1012 = vld [vmem:[%s351 + $0x90c] sm:$0xf]
        %v1013 = vld [vmem:[%s351 + $0x910] sm:$0xf]
        %v1014 = vld [vmem:[%s351 + $0x914] sm:$0xf]
        %v1015 = vld [vmem:[%s351 + $0x918] sm:$0xf]
        %v1016 = vld [vmem:[%s351 + $0x91c] sm:$0xf]
        %v1017 = vld [vmem:[%s351 + $0x920] sm:$0xf]
        %v1018 = vld [vmem:[%s351 + $0x924] sm:$0xf]
        %v1019 = vld [vmem:[%s351 + $0x928] sm:$0xf]
        %v1020 = vld [vmem:[%s351 + $0x92c] sm:$0xf]
        %v1021 = vld [vmem:[%s351 + $0x930] sm:$0xf]
        %v1022 = vld [vmem:[%s351 + $0x934] sm:$0xf]
        %v1023 = vld [vmem:[%s351 + $0x938] sm:$0xf]
        %v1024 = vld [vmem:[%s351 + $0x93c] sm:$0xf]
        %v1025 = vld [vmem:[%s351 + $0x940] sm:$0xf]
        %v1026 = vld [vmem:[%s351 + $0x944] sm:$0xf]
        %v1027 = vld [vmem:[%s351 + $0x948] sm:$0xf]
        %v1028 = vld [vmem:[%s351 + $0x94c] sm:$0xf]
        %v1029 = vld [vmem:[%s351 + $0x950] sm:$0xf]
        %v1030 = vld [vmem:[%s351 + $0x954] sm:$0xf]
        %v1031 = vld [vmem:[%s351 + $0x958] sm:$0xf]
        %v1032 = vld [vmem:[%s351 + $0x95c] sm:$0xf]
        %v1033 = vld [vmem:[%s351 + $0x960] sm:$0xf]
        %v1034 = vld [vmem:[%s351 + $0x964] sm:$0xf]
        %v1035 = vld [vmem:[%s351 + $0x968] sm:$0xf]
        %v1036 = vld [vmem:[%s351 + $0x96c] sm:$0xf]
        %v1037 = vld [vmem:[%s351 + $0x970] sm:$0xf]
        %v1038 = vld [vmem:[%s351 + $0x974] sm:$0xf]
        %v1039 = vld [vmem:[%s351 + $0x978] sm:$0xf]
        %v1040 = vld [vmem:[%s351 + $0x97c] sm:$0xf]
        %v1041 = vld [vmem:[%s351 + $0x980] sm:$0xf]
        %v1042 = vld [vmem:[%s351 + $0x984] sm:$0xf]
        %v1043 = vld [vmem:[%s351 + $0x988] sm:$0xf]
        %v1044 = vld [vmem:[%s351 + $0x98c] sm:$0xf]
        %v1045 = vld [vmem:[%s351 + $0x990] sm:$0xf]
        %v1046 = vld [vmem:[%s351 + $0x994] sm:$0xf]
        %v1047 = vld [vmem:[%s351 + $0x998] sm:$0xf]
        %v1048 = vld [vmem:[%s351 + $0x99c] sm:$0xf]
        %v1049 = vld [vmem:[%s351 + $0x9a0] sm:$0xf]
        %v1050 = vld [vmem:[%s351 + $0x9a4] sm:$0xf]
        %v1051 = vld [vmem:[%s351 + $0x9a8] sm:$0xf]
        %v1052 = vld [vmem:[%s351 + $0x9ac] sm:$0xf]
        %v1053 = vld [vmem:[%s351 + $0x9b0] sm:$0xf]
        %v1054 = vld [vmem:[%s351 + $0x9b4] sm:$0xf]
        %v1055 = vld [vmem:[%s351 + $0x9b8] sm:$0xf]
        %v1056 = vld [vmem:[%s351 + $0x9bc] sm:$0xf]
        %v1057 = vld [vmem:[%s351 + $0x9c0] sm:$0xf]
        %v1058 = vld [vmem:[%s351 + $0x9c4] sm:$0xf]
        %v1059 = vld [vmem:[%s351 + $0x9c8] sm:$0xf]
        %v1060 = vld [vmem:[%s351 + $0x9cc] sm:$0xf]
        %v1061 = vld [vmem:[%s351 + $0x9d0] sm:$0xf]
        %v1062 = vld [vmem:[%s351 + $0x9d4] sm:$0xf]
        %v1063 = vld [vmem:[%s351 + $0x9d8] sm:$0xf]
        %v1064 = vld [vmem:[%s351 + $0x9dc] sm:$0xf]
        %v1065 = vld [vmem:[%s351 + $0x9e0] sm:$0xf]
        %v1066 = vld [vmem:[%s351 + $0x9e4] sm:$0xf]
        %v1067 = vld [vmem:[%s351 + $0x9e8] sm:$0xf]
        %v1068 = vld [vmem:[%s351 + $0x9ec] sm:$0xf]
        %v1069 = vld [vmem:[%s351 + $0x9f0] sm:$0xf]
        %v1070 = vld [vmem:[%s351 + $0x9f4] sm:$0xf]
        %v1071 = vld [vmem:[%s351 + $0x9f8] sm:$0xf]
        %v1072 = vld [vmem:[%s351 + $0x9fc] sm:$0xf]
        %v1073 = vld [vmem:[%s351 + $0xa00] sm:$0xf]
        %v1074 = vld [vmem:[%s351 + $0xa04] sm:$0xf]
        %v1075 = vld [vmem:[%s351 + $0xa08] sm:$0xf]
        %v1076 = vld [vmem:[%s351 + $0xa0c] sm:$0xf]
        %v1077 = vld [vmem:[%s351 + $0xa10] sm:$0xf]
        %v1078 = vld [vmem:[%s351 + $0xa14] sm:$0xf]
        %v1079 = vld [vmem:[%s351 + $0xa18] sm:$0xf]
        %v1080 = vld [vmem:[%s351 + $0xa1c] sm:$0xf]
        %v1081 = vld [vmem:[%s351 + $0xa20] sm:$0xf]
        %v1082 = vld [vmem:[%s351 + $0xa24] sm:$0xf]
        %v1083 = vld [vmem:[%s351 + $0xa28] sm:$0xf]
        %v1084 = vld [vmem:[%s351 + $0xa2c] sm:$0xf]
        %v1085 = vld [vmem:[%s351 + $0xa30] sm:$0xf]
        %v1086 = vld [vmem:[%s351 + $0xa34] sm:$0xf]
        %v1087 = vld [vmem:[%s351 + $0xa38] sm:$0xf]
        %v1088 = vld [vmem:[%s351 + $0xa3c] sm:$0xf]
        %v1089 = vld [vmem:[%s351 + $0xa40] sm:$0xf]
        %v1090 = vld [vmem:[%s351 + $0xa44] sm:$0xf]
        %v1091 = vld [vmem:[%s351 + $0xa48] sm:$0xf]
        %v1092 = vld [vmem:[%s351 + $0xa4c] sm:$0xf]
        %v1093 = vld [vmem:[%s351 + $0xa50] sm:$0xf]
        %v1094 = vld [vmem:[%s351 + $0xa54] sm:$0xf]
        %v1095 = vld [vmem:[%s351 + $0xa58] sm:$0xf]
        %v1096 = vld [vmem:[%s351 + $0xa5c] sm:$0xf]
        %v1097 = vld [vmem:[%s351 + $0xa60] sm:$0xf]
        %v1098 = vld [vmem:[%s351 + $0xa64] sm:$0xf]
        %v1099 = vld [vmem:[%s351 + $0xa68] sm:$0xf]
        %v1100 = vld [vmem:[%s351 + $0xa6c] sm:$0xf]
        %v1101 = vld [vmem:[%s351 + $0xa70] sm:$0xf]
        %v1102 = vld [vmem:[%s351 + $0xa74] sm:$0xf]
        %v1103 = vld [vmem:[%s351 + $0xa78] sm:$0xf]
        %v1104 = vld [vmem:[%s351 + $0xa7c] sm:$0xf]
        %v1105 = vld [vmem:[%s351 + $0xa80] sm:$0xf]
        %v1106 = vld [vmem:[%s351 + $0xa84] sm:$0xf]
        %v1107 = vld [vmem:[%s351 + $0xa88] sm:$0xf]
        %v1108 = vld [vmem:[%s351 + $0xa8c] sm:$0xf]
        %v1109 = vld [vmem:[%s351 + $0xa90] sm:$0xf]
        %v1110 = vld [vmem:[%s351 + $0xa94] sm:$0xf]
        %v1111 = vld [vmem:[%s351 + $0xa98] sm:$0xf]
        %v1112 = vld [vmem:[%s351 + $0xa9c] sm:$0xf]
        %v1113 = vld [vmem:[%s351 + $0xaa0] sm:$0xf]
        %v1114 = vld [vmem:[%s351 + $0xaa4] sm:$0xf]
        %v1115 = vld [vmem:[%s351 + $0xaa8] sm:$0xf]
        %v1116 = vld [vmem:[%s351 + $0xaac] sm:$0xf]
        %v1117 = vld [vmem:[%s351 + $0xab0] sm:$0xf]
        %v1118 = vld [vmem:[%s351 + $0xab4] sm:$0xf]
        %v1119 = vld [vmem:[%s351 + $0xab8] sm:$0xf]
        %v1120 = vld [vmem:[%s351 + $0xabc] sm:$0xf]
        %v1121 = vld [vmem:[%s351 + $0xac0] sm:$0xf]
        %v1122 = vld [vmem:[%s351 + $0xac4] sm:$0xf]
        %v1123 = vld [vmem:[%s351 + $0xac8] sm:$0xf]
        %v1124 = vld [vmem:[%s351 + $0xacc] sm:$0xf]
        %v1125 = vld [vmem:[%s351 + $0xad0] sm:$0xf]
        %v1126 = vld [vmem:[%s351 + $0xad4] sm:$0xf]
        %v1127 = vld [vmem:[%s351 + $0xad8] sm:$0xf]
        %v1128 = vld [vmem:[%s351 + $0xadc] sm:$0xf]
        %v1129 = vld [vmem:[%s351 + $0xae0] sm:$0xf]
        %v1130 = vld [vmem:[%s351 + $0xae4] sm:$0xf]
        %v1131 = vld [vmem:[%s351 + $0xae8] sm:$0xf]
        %v1132 = vld [vmem:[%s351 + $0xaec] sm:$0xf]
        %v1133 = vld [vmem:[%s351 + $0xaf0] sm:$0xf]
        %v1134 = vld [vmem:[%s351 + $0xaf4] sm:$0xf]
        %v1135 = vld [vmem:[%s351 + $0xaf8] sm:$0xf]
        %v1136 = vld [vmem:[%s351 + $0xafc] sm:$0xf]
        %v1137 = vld [vmem:[%s351 + $0xb00] sm:$0xf]
        %v1138 = vld [vmem:[%s351 + $0xb04] sm:$0xf]
        %v1139 = vld [vmem:[%s351 + $0xb08] sm:$0xf]
        %v1140 = vld [vmem:[%s351 + $0xb0c] sm:$0xf]
        %v1141 = vld [vmem:[%s351 + $0xb10] sm:$0xf]
        %v1142 = vld [vmem:[%s351 + $0xb14] sm:$0xf]
        %v1143 = vld [vmem:[%s351 + $0xb18] sm:$0xf]
        %v1144 = vld [vmem:[%s351 + $0xb1c] sm:$0xf]
        %v1145 = vld [vmem:[%s351 + $0xb20] sm:$0xf]
        %v1146 = vld [vmem:[%s351 + $0xb24] sm:$0xf]
        %v1147 = vld [vmem:[%s351 + $0xb28] sm:$0xf]
        %v1148 = vld [vmem:[%s351 + $0xb2c] sm:$0xf]
        %v1149 = vld [vmem:[%s351 + $0xb30] sm:$0xf]
        %v1150 = vld [vmem:[%s351 + $0xb34] sm:$0xf]
        %v1151 = vld [vmem:[%s351 + $0xb38] sm:$0xf]
        %v1152 = vld [vmem:[%s351 + $0xb3c] sm:$0xf]
        %v1153 = vld [vmem:[%s351 + $0xb40] sm:$0xf]
        %v1154 = vld [vmem:[%s351 + $0xb44] sm:$0xf]
        %v1155 = vld [vmem:[%s351 + $0xb48] sm:$0xf]
        %v1156 = vld [vmem:[%s351 + $0xb4c] sm:$0xf]
        %v1157 = vld [vmem:[%s351 + $0xb50] sm:$0xf]
        %v1158 = vld [vmem:[%s351 + $0xb54] sm:$0xf]
        %v1159 = vld [vmem:[%s351 + $0xb58] sm:$0xf]
        %v1160 = vld [vmem:[%s351 + $0xb5c] sm:$0xf]
        %v1161 = vld [vmem:[%s351 + $0xb60] sm:$0xf]
        %v1162 = vld [vmem:[%s351 + $0xb64] sm:$0xf]
        %v1163 = vld [vmem:[%s351 + $0xb68] sm:$0xf]
        %v1164 = vld [vmem:[%s351 + $0xb6c] sm:$0xf]
        %v1165 = vld [vmem:[%s351 + $0xb70] sm:$0xf]
        %v1166 = vld [vmem:[%s351 + $0xb74] sm:$0xf]
        %v1167 = vld [vmem:[%s351 + $0xb78] sm:$0xf]
        %v1168 = vld [vmem:[%s351 + $0xb7c] sm:$0xf]
        %v1169 = vld [vmem:[%s351 + $0xb80] sm:$0xf]
        %v1170 = vld [vmem:[%s351 + $0xb84] sm:$0xf]
        %v1171 = vld [vmem:[%s351 + $0xb88] sm:$0xf]
        %v1172 = vld [vmem:[%s351 + $0xb8c] sm:$0xf]
        %v1173 = vld [vmem:[%s351 + $0xb90] sm:$0xf]
        %v1174 = vld [vmem:[%s351 + $0xb94] sm:$0xf]
        %v1175 = vld [vmem:[%s351 + $0xb98] sm:$0xf]
        %v1176 = vld [vmem:[%s351 + $0xb9c] sm:$0xf]
        %v1177 = vld [vmem:[%s351 + $0xba0] sm:$0xf]
        %v1178 = vld [vmem:[%s351 + $0xba4] sm:$0xf]
        %v1179 = vld [vmem:[%s351 + $0xba8] sm:$0xf]
        %v1180 = vld [vmem:[%s351 + $0xbac] sm:$0xf]
        %v1181 = vld [vmem:[%s351 + $0xbb0] sm:$0xf]
        %v1182 = vld [vmem:[%s351 + $0xbb4] sm:$0xf]
        %v1183 = vld [vmem:[%s351 + $0xbb8] sm:$0xf]
        %v1184 = vld [vmem:[%s351 + $0xbbc] sm:$0xf]
        %v1185 = vld [vmem:[%s351 + $0xbc0] sm:$0xf]
        %v1186 = vld [vmem:[%s351 + $0xbc4] sm:$0xf]
        %v1187 = vld [vmem:[%s351 + $0xbc8] sm:$0xf]
        %v1188 = vld [vmem:[%s351 + $0xbcc] sm:$0xf]
        %v1189 = vld [vmem:[%s351 + $0xbd0] sm:$0xf]
        %v1190 = vld [vmem:[%s351 + $0xbd4] sm:$0xf]
        %v1191 = vld [vmem:[%s351 + $0xbd8] sm:$0xf]
        %v1192 = vld [vmem:[%s351 + $0xbdc] sm:$0xf]
        %v1193 = vld [vmem:[%s351 + $0xbe0] sm:$0xf]
        %v1194 = vld [vmem:[%s351 + $0xbe4] sm:$0xf]
        %v1195 = vld [vmem:[%s351 + $0xbe8] sm:$0xf]
        %v1196 = vld [vmem:[%s351 + $0xbec] sm:$0xf]
        %v1197 = vld [vmem:[%s351 + $0xbf0] sm:$0xf]
        %v1198 = vld [vmem:[%s351 + $0xbf4] sm:$0xf]
        %v1199 = vld [vmem:[%s351 + $0xbf8] sm:$0xf]
        %v1200 = vld [vmem:[%s351 + $0xbfc] sm:$0xf]
        %v1201 = vld [vmem:[%s351 + $0xc00] sm:$0xf]
        %v1202 = vld [vmem:[%s351 + $0xc04] sm:$0xf]
        %v1203 = vld [vmem:[%s351 + $0xc08] sm:$0xf]
        %v1204 = vld [vmem:[%s351 + $0xc0c] sm:$0xf]
        %v1205 = vld [vmem:[%s351 + $0xc10] sm:$0xf]
        %v1206 = vld [vmem:[%s351 + $0xc14] sm:$0xf]
        %v1207 = vld [vmem:[%s351 + $0xc18] sm:$0xf]
        %v1208 = vld [vmem:[%s351 + $0xc1c] sm:$0xf]
        %v1209 = vld [vmem:[%s351 + $0xc20] sm:$0xf]
        %v1210 = vld [vmem:[%s351 + $0xc24] sm:$0xf]
        %v1211 = vld [vmem:[%s351 + $0xc28] sm:$0xf]
        %v1212 = vld [vmem:[%s351 + $0xc2c] sm:$0xf]
        %v1213 = vld [vmem:[%s351 + $0xc30] sm:$0xf]
        %v1214 = vld [vmem:[%s351 + $0xc34] sm:$0xf]
        %v1215 = vld [vmem:[%s351 + $0xc38] sm:$0xf]
        %v1216 = vld [vmem:[%s351 + $0xc3c] sm:$0xf]
        %v1217 = vld [vmem:[%s351 + $0xc40] sm:$0xf]
        %v1218 = vld [vmem:[%s351 + $0xc44] sm:$0xf]
        %v1219 = vld [vmem:[%s351 + $0xc48] sm:$0xf]
        %v1220 = vld [vmem:[%s351 + $0xc4c] sm:$0xf]
        %v1221 = vld [vmem:[%s351 + $0xc50] sm:$0xf]
        %v1222 = vld [vmem:[%s351 + $0xc54] sm:$0xf]
        %v1223 = vld [vmem:[%s351 + $0xc58] sm:$0xf]
        %v1224 = vld [vmem:[%s351 + $0xc5c] sm:$0xf]
        %v1225 = vld [vmem:[%s351 + $0xc60] sm:$0xf]
        %v1226 = vld [vmem:[%s351 + $0xc64] sm:$0xf]
        %v1227 = vld [vmem:[%s351 + $0xc68] sm:$0xf]
        %v1228 = vld [vmem:[%s351 + $0xc6c] sm:$0xf]
        %v1229 = vld [vmem:[%s351 + $0xc70] sm:$0xf]
        %v1230 = vld [vmem:[%s351 + $0xc74] sm:$0xf]
        %v1231 = vld [vmem:[%s351 + $0xc78] sm:$0xf]
        %v1232 = vld [vmem:[%s351 + $0xc7c] sm:$0xf]
        %v1233 = vld [vmem:[%s351 + $0xc80] sm:$0xf]
        %v1234 = vld [vmem:[%s351 + $0xc84] sm:$0xf]
        %v1235 = vld [vmem:[%s351 + $0xc88] sm:$0xf]
        %v1236 = vld [vmem:[%s351 + $0xc8c] sm:$0xf]
        %v1237 = vld [vmem:[%s351 + $0xc90] sm:$0xf]
        %v1238 = vld [vmem:[%s351 + $0xc94] sm:$0xf]
        %v1239 = vld [vmem:[%s351 + $0xc98] sm:$0xf]
        %v1240 = vld [vmem:[%s351 + $0xc9c] sm:$0xf]
        %v1241 = vld [vmem:[%s351 + $0xca0] sm:$0xf]
        %v1242 = vld [vmem:[%s351 + $0xca4] sm:$0xf]
        %v1243 = vld [vmem:[%s351 + $0xca8] sm:$0xf]
        %v1244 = vld [vmem:[%s351 + $0xcac] sm:$0xf]
        %v1245 = vld [vmem:[%s351 + $0xcb0] sm:$0xf]
        %v1246 = vld [vmem:[%s351 + $0xcb4] sm:$0xf]
        %v1247 = vld [vmem:[%s351 + $0xcb8] sm:$0xf]
        %v1248 = vld [vmem:[%s351 + $0xcbc] sm:$0xf]
        %v1249 = vld [vmem:[%s351 + $0xcc0] sm:$0xf]
        %v1250 = vld [vmem:[%s351 + $0xcc4] sm:$0xf]
        %v1251 = vld [vmem:[%s351 + $0xcc8] sm:$0xf]
        %v1252 = vld [vmem:[%s351 + $0xccc] sm:$0xf]
        %v1253 = vld [vmem:[%s351 + $0xcd0] sm:$0xf]
        %v1254 = vld [vmem:[%s351 + $0xcd4] sm:$0xf]
        %v1255 = vld [vmem:[%s351 + $0xcd8] sm:$0xf]
        %v1256 = vld [vmem:[%s351 + $0xcdc] sm:$0xf]
        %v1257 = vld [vmem:[%s351 + $0xce0] sm:$0xf]
        %v1258 = vld [vmem:[%s351 + $0xce4] sm:$0xf]
        %v1259 = vld [vmem:[%s351 + $0xce8] sm:$0xf]
        %v1260 = vld [vmem:[%s351 + $0xcec] sm:$0xf]
        %v1261 = vld [vmem:[%s351 + $0xcf0] sm:$0xf]
        %v1262 = vld [vmem:[%s351 + $0xcf4] sm:$0xf]
        %v1263 = vld [vmem:[%s351 + $0xcf8] sm:$0xf]
        %v1264 = vld [vmem:[%s351 + $0xcfc] sm:$0xf]
        %v1265 = vld [vmem:[%s351 + $0xd00] sm:$0xf]
        %v1266 = vld [vmem:[%s351 + $0xd04] sm:$0xf]
        %v1267 = vld [vmem:[%s351 + $0xd08] sm:$0xf]
        %v1268 = vld [vmem:[%s351 + $0xd0c] sm:$0xf]
        %v1269 = vld [vmem:[%s351 + $0xd10] sm:$0xf]
        %v1270 = vld [vmem:[%s351 + $0xd14] sm:$0xf]
        %v1271 = vld [vmem:[%s351 + $0xd18] sm:$0xf]
        %v1272 = vld [vmem:[%s351 + $0xd1c] sm:$0xf]
        %v1273 = vld [vmem:[%s351 + $0xd20] sm:$0xf]
        %v1274 = vld [vmem:[%s351 + $0xd24] sm:$0xf]
        %v1275 = vld [vmem:[%s351 + $0xd28] sm:$0xf]
        %v1276 = vld [vmem:[%s351 + $0xd2c] sm:$0xf]
        %v1277 = vld [vmem:[%s351 + $0xd30] sm:$0xf]
        %v1278 = vld [vmem:[%s351 + $0xd34] sm:$0xf]
        %v1279 = vld [vmem:[%s351 + $0xd38] sm:$0xf]
        %v1280 = vld [vmem:[%s351 + $0xd3c] sm:$0xf]
        %v1281 = vld [vmem:[%s351 + $0xd40] sm:$0xf]
        %v1282 = vld [vmem:[%s351 + $0xd44] sm:$0xf]
        %v1283 = vld [vmem:[%s351 + $0xd48] sm:$0xf]
        %v1284 = vld [vmem:[%s351 + $0xd4c] sm:$0xf]
        %v1285 = vld [vmem:[%s351 + $0xd50] sm:$0xf]
        %v1286 = vld [vmem:[%s351 + $0xd54] sm:$0xf]
        %v1287 = vld [vmem:[%s351 + $0xd58] sm:$0xf]
        %v1288 = vld [vmem:[%s351 + $0xd5c] sm:$0xf]
        %v1289 = vld [vmem:[%s351 + $0xd60] sm:$0xf]
        %v1290 = vld [vmem:[%s351 + $0xd64] sm:$0xf]
        %v1291 = vld [vmem:[%s351 + $0xd68] sm:$0xf]
        %v1292 = vld [vmem:[%s351 + $0xd6c] sm:$0xf]
        %v1293 = vld [vmem:[%s351 + $0xd70] sm:$0xf]
        %v1294 = vld [vmem:[%s351 + $0xd74] sm:$0xf]
        %v1295 = vld [vmem:[%s351 + $0xd78] sm:$0xf]
        %v1296 = vld [vmem:[%s351 + $0xd7c] sm:$0xf]
        %v1297 = vld [vmem:[%s351 + $0xd80] sm:$0xf]
        %v1298 = vld [vmem:[%s351 + $0xd84] sm:$0xf]
        %v1299 = vld [vmem:[%s351 + $0xd88] sm:$0xf]
        %v1300 = vld [vmem:[%s351 + $0xd8c] sm:$0xf]
        %v1301 = vld [vmem:[%s351 + $0xd90] sm:$0xf]
        %v1302 = vld [vmem:[%s351 + $0xd94] sm:$0xf]
        %v1303 = vld [vmem:[%s351 + $0xd98] sm:$0xf]
        %v1304 = vld [vmem:[%s351 + $0xd9c] sm:$0xf]
        %v1305 = vld [vmem:[%s351 + $0xda0] sm:$0xf]
        %v1306 = vld [vmem:[%s351 + $0xda4] sm:$0xf]
        %v1307 = vld [vmem:[%s351 + $0xda8] sm:$0xf]
        %v1308 = vld [vmem:[%s351 + $0xdac] sm:$0xf]
        %v1309 = vld [vmem:[%s351 + $0xdb0] sm:$0xf]
        %v1310 = vld [vmem:[%s351 + $0xdb4] sm:$0xf]
        %v1311 = vld [vmem:[%s351 + $0xdb8] sm:$0xf]
        %v1312 = vld [vmem:[%s351 + $0xdbc] sm:$0xf]
        %v1313 = vld [vmem:[%s351 + $0xdc0] sm:$0xf]
        %v1314 = vld [vmem:[%s351 + $0xdc4] sm:$0xf]
        %v1315 = vld [vmem:[%s351 + $0xdc8] sm:$0xf]
        %v1316 = vld [vmem:[%s351 + $0xdcc] sm:$0xf]
        %v1317 = vld [vmem:[%s351 + $0xdd0] sm:$0xf]
        %v1318 = vld [vmem:[%s351 + $0xdd4] sm:$0xf]
        %v1319 = vld [vmem:[%s351 + $0xdd8] sm:$0xf]
        %v1320 = vld [vmem:[%s351 + $0xddc] sm:$0xf]
        %v1321 = vld [vmem:[%s351 + $0xde0] sm:$0xf]
        %v1322 = vld [vmem:[%s351 + $0xde4] sm:$0xf]
        %v1323 = vld [vmem:[%s351 + $0xde8] sm:$0xf]
        %v1324 = vld [vmem:[%s351 + $0xdec] sm:$0xf]
        %v1325 = vld [vmem:[%s351 + $0xdf0] sm:$0xf]
        %v1326 = vld [vmem:[%s351 + $0xdf4] sm:$0xf]
        %v1327 = vld [vmem:[%s351 + $0xdf8] sm:$0xf]
        %v1328 = vld [vmem:[%s351 + $0xdfc] sm:$0xf]
        %v1329 = vld [vmem:[%s351 + $0xe00] sm:$0xf]
        %v1330 = vld [vmem:[%s351 + $0xe04] sm:$0xf]
        %v1331 = vld [vmem:[%s351 + $0xe08] sm:$0xf]
        %v1332 = vld [vmem:[%s351 + $0xe0c] sm:$0xf]
        %v1333 = vld [vmem:[%s351 + $0xe10] sm:$0xf]
        %v1334 = vld [vmem:[%s351 + $0xe14] sm:$0xf]
        %v1335 = vld [vmem:[%s351 + $0xe18] sm:$0xf]
        %v1336 = vld [vmem:[%s351 + $0xe1c] sm:$0xf]
        %v1337 = vld [vmem:[%s351 + $0xe20] sm:$0xf]
        %v1338 = vld [vmem:[%s351 + $0xe24] sm:$0xf]
        %v1339 = vld [vmem:[%s351 + $0xe28] sm:$0xf]
        %v1340 = vld [vmem:[%s351 + $0xe2c] sm:$0xf]
        %v1341 = vld [vmem:[%s351 + $0xe30] sm:$0xf]
        %v1342 = vld [vmem:[%s351 + $0xe34] sm:$0xf]
        %v1343 = vld [vmem:[%s351 + $0xe38] sm:$0xf]
        %v1344 = vld [vmem:[%s351 + $0xe3c] sm:$0xf]
        %v1345 = vld [vmem:[%s351 + $0xe40] sm:$0xf]
        %v1346 = vld [vmem:[%s351 + $0xe44] sm:$0xf]
        %v1347 = vld [vmem:[%s351 + $0xe48] sm:$0xf]
        %v1348 = vld [vmem:[%s351 + $0xe4c] sm:$0xf]
        %v1349 = vld [vmem:[%s351 + $0xe50] sm:$0xf]
        %v1350 = vld [vmem:[%s351 + $0xe54] sm:$0xf]
        %v1351 = vld [vmem:[%s351 + $0xe58] sm:$0xf]
        %v1352 = vld [vmem:[%s351 + $0xe5c] sm:$0xf]
        %v1353 = vld [vmem:[%s351 + $0xe60] sm:$0xf]
        %v1354 = vld [vmem:[%s351 + $0xe64] sm:$0xf]
        %v1355 = vld [vmem:[%s351 + $0xe68] sm:$0xf]
        %v1356 = vld [vmem:[%s351 + $0xe6c] sm:$0xf]
        %v1357 = vld [vmem:[%s351 + $0xe70] sm:$0xf]
        %v1358 = vld [vmem:[%s351 + $0xe74] sm:$0xf]
        %v1359 = vld [vmem:[%s351 + $0xe78] sm:$0xf]
        %v1360 = vld [vmem:[%s351 + $0xe7c] sm:$0xf]
        %v1361 = vld [vmem:[%s351 + $0xe80] sm:$0xf]
        %v1362 = vld [vmem:[%s351 + $0xe84] sm:$0xf]
        %v1363 = vld [vmem:[%s351 + $0xe88] sm:$0xf]
        %v1364 = vld [vmem:[%s351 + $0xe8c] sm:$0xf]
        %v1365 = vld [vmem:[%s351 + $0xe90] sm:$0xf]
        %v1366 = vld [vmem:[%s351 + $0xe94] sm:$0xf]
        %v1367 = vld [vmem:[%s351 + $0xe98] sm:$0xf]
        %v1368 = vld [vmem:[%s351 + $0xe9c] sm:$0xf]
        %v1369 = vld [vmem:[%s351 + $0xea0] sm:$0xf]
        %v1370 = vld [vmem:[%s351 + $0xea4] sm:$0xf]
        %v1371 = vld [vmem:[%s351 + $0xea8] sm:$0xf]
        %v1372 = vld [vmem:[%s351 + $0xeac] sm:$0xf]
        %v1373 = vld [vmem:[%s351 + $0xeb0] sm:$0xf]
        %v1374 = vld [vmem:[%s351 + $0xeb4] sm:$0xf]
        %v1375 = vld [vmem:[%s351 + $0xeb8] sm:$0xf]
        %v1376 = vld [vmem:[%s351 + $0xebc] sm:$0xf]
        %v1377 = vld [vmem:[%s351 + $0xec0] sm:$0xf]
        %v1378 = vld [vmem:[%s351 + $0xec4] sm:$0xf]
        %v1379 = vld [vmem:[%s351 + $0xec8] sm:$0xf]
        %v1380 = vld [vmem:[%s351 + $0xecc] sm:$0xf]
        %v1381 = vld [vmem:[%s351 + $0xed0] sm:$0xf]
        %v1382 = vld [vmem:[%s351 + $0xed4] sm:$0xf]
        %v1383 = vld [vmem:[%s351 + $0xed8] sm:$0xf]
        %v1384 = vld [vmem:[%s351 + $0xedc] sm:$0xf]
        %v1385 = vld [vmem:[%s351 + $0xee0] sm:$0xf]
        %v1386 = vld [vmem:[%s351 + $0xee4] sm:$0xf]
        %v1387 = vld [vmem:[%s351 + $0xee8] sm:$0xf]
        %v1388 = vld [vmem:[%s351 + $0xeec] sm:$0xf]
        %v1389 = vld [vmem:[%s351 + $0xef0] sm:$0xf]
        %v1390 = vld [vmem:[%s351 + $0xef4] sm:$0xf]
        %v1391 = vld [vmem:[%s351 + $0xef8] sm:$0xf]
        %v1392 = vld [vmem:[%s351 + $0xefc] sm:$0xf]
        %v1393 = vld [vmem:[%s351 + $0xf00] sm:$0xf]
        %v1394 = vld [vmem:[%s351 + $0xf04] sm:$0xf]
        %v1395 = vld [vmem:[%s351 + $0xf08] sm:$0xf]
        %v1396 = vld [vmem:[%s351 + $0xf0c] sm:$0xf]
        %v1397 = vld [vmem:[%s351 + $0xf10] sm:$0xf]
        %v1398 = vld [vmem:[%s351 + $0xf14] sm:$0xf]
        %v1399 = vld [vmem:[%s351 + $0xf18] sm:$0xf]
        %v1400 = vld [vmem:[%s351 + $0xf1c] sm:$0xf]
        %v1401 = vld [vmem:[%s351 + $0xf20] sm:$0xf]
        %v1402 = vld [vmem:[%s351 + $0xf24] sm:$0xf]
        %v1403 = vld [vmem:[%s351 + $0xf28] sm:$0xf]
        %v1404 = vld [vmem:[%s351 + $0xf2c] sm:$0xf]
        %v1405 = vld [vmem:[%s351 + $0xf30] sm:$0xf]
        %v1406 = vld [vmem:[%s351 + $0xf34] sm:$0xf]
        %v1407 = vld [vmem:[%s351 + $0xf38] sm:$0xf]
        %v1408 = vld [vmem:[%s351 + $0xf3c] sm:$0xf]
        %v1409 = vld [vmem:[%s351 + $0xf40] sm:$0xf]
        %v1410 = vld [vmem:[%s351 + $0xf44] sm:$0xf]
        %v1411 = vld [vmem:[%s351 + $0xf48] sm:$0xf]
        %v1412 = vld [vmem:[%s351 + $0xf4c] sm:$0xf]
        %v1413 = vld [vmem:[%s351 + $0xf50] sm:$0xf]
        %v1414 = vld [vmem:[%s351 + $0xf54] sm:$0xf]
        %v1415 = vld [vmem:[%s351 + $0xf58] sm:$0xf]
        %v1416 = vld [vmem:[%s351 + $0xf5c] sm:$0xf]
        %v1417 = vld [vmem:[%s351 + $0xf60] sm:$0xf]
        %v1418 = vld [vmem:[%s351 + $0xf64] sm:$0xf]
        %v1419 = vld [vmem:[%s351 + $0xf68] sm:$0xf]
        %v1420 = vld [vmem:[%s351 + $0xf6c] sm:$0xf]
        %v1421 = vld [vmem:[%s351 + $0xf70] sm:$0xf]
        %v1422 = vld [vmem:[%s351 + $0xf74] sm:$0xf]
        %v1423 = vld [vmem:[%s351 + $0xf78] sm:$0xf]
        %v1424 = vld [vmem:[%s351 + $0xf7c] sm:$0xf]
        %v1425 = vld [vmem:[%s351 + $0xf80] sm:$0xf]
        %v1426 = vld [vmem:[%s351 + $0xf84] sm:$0xf]
        %v1427 = vld [vmem:[%s351 + $0xf88] sm:$0xf]
        %v1428 = vld [vmem:[%s351 + $0xf8c] sm:$0xf]
        %v1429 = vld [vmem:[%s351 + $0xf90] sm:$0xf]
        %v1430 = vld [vmem:[%s351 + $0xf94] sm:$0xf]
        %v1431 = vld [vmem:[%s351 + $0xf98] sm:$0xf]
        %v1432 = vld [vmem:[%s351 + $0xf9c] sm:$0xf]
        %v1433 = vld [vmem:[%s351 + $0xfa0] sm:$0xf]
        %v1434 = vld [vmem:[%s351 + $0xfa4] sm:$0xf]
        %v1435 = vld [vmem:[%s351 + $0xfa8] sm:$0xf]
        %v1436 = vld [vmem:[%s351 + $0xfac] sm:$0xf]
        %v1437 = vld [vmem:[%s351 + $0xfb0] sm:$0xf]
        %v1438 = vld [vmem:[%s351 + $0xfb4] sm:$0xf]
        %v1439 = vld [vmem:[%s351 + $0xfb8] sm:$0xf]
        %v1440 = vld [vmem:[%s351 + $0xfbc] sm:$0xf]
        %v1441 = vld [vmem:[%s351 + $0xfc0] sm:$0xf]
        %v1442 = vld [vmem:[%s351 + $0xfc4] sm:$0xf]
        %v1443 = vld [vmem:[%s351 + $0xfc8] sm:$0xf]
        %v1444 = vld [vmem:[%s351 + $0xfcc] sm:$0xf]
        %v1445 = vld [vmem:[%s351 + $0xfd0] sm:$0xf]
        %v1446 = vld [vmem:[%s351 + $0xfd4] sm:$0xf]
        %v1447 = vld [vmem:[%s351 + $0xfd8] sm:$0xf]
        %v1448 = vld [vmem:[%s351 + $0xfdc] sm:$0xf]
        %v1449 = vld [vmem:[%s351 + $0xfe0] sm:$0xf]
        %v1450 = vld [vmem:[%s351 + $0xfe4] sm:$0xf]
        %v1451 = vld [vmem:[%s351 + $0xfe8] sm:$0xf]
        %v1452 = vld [vmem:[%s351 + $0xfec] sm:$0xf]
        %v1453 = vld [vmem:[%s351 + $0xff0] sm:$0xf]
        %v1454 = vld [vmem:[%s351 + $0xff4] sm:$0xf]
        %v1455 = vld [vmem:[%s351 + $0xff8] sm:$0xf]
        %v1456 = vld [vmem:[%s351 + $0xffc] sm:$0xf]
        %v1521 = vunpack.c.l.b16 %v369
        %v1522 = vunpack.c.h.b16 %v369
        %v1523 = vunpack.c.l.b16 %v370
        %v1524 = vunpack.c.h.b16 %v370
        %v1525 = vunpack.c.l.b16 %v371
        %v1526 = vunpack.c.h.b16 %v371
        %v1527 = vunpack.c.l.b16 %v372
        %v1528 = vunpack.c.h.b16 %v372
        %v1529 = vunpack.c.l.b16 %v373
        %v1530 = vunpack.c.h.b16 %v373
        %v1531 = vunpack.c.l.b16 %v374
        %v1532 = vunpack.c.h.b16 %v374
        %v1533 = vunpack.c.l.b16 %v375
        %v1534 = vunpack.c.h.b16 %v375
        %v1535 = vunpack.c.l.b16 %v376
        %v1536 = vunpack.c.h.b16 %v376
        %v1537 = vunpack.c.l.b16 %v377
        %v1538 = vunpack.c.h.b16 %v377
        %v1539 = vunpack.c.l.b16 %v378
        %v1540 = vunpack.c.h.b16 %v378
        %v1541 = vunpack.c.l.b16 %v379
        %v1542 = vunpack.c.h.b16 %v379
        %v1543 = vunpack.c.l.b16 %v380
        %v1544 = vunpack.c.h.b16 %v380
        %v1545 = vunpack.c.l.b16 %v381
        %v1546 = vunpack.c.h.b16 %v381
        %v1547 = vunpack.c.l.b16 %v382
        %v1548 = vunpack.c.h.b16 %v382
        %v1549 = vunpack.c.l.b16 %v383
        %v1550 = vunpack.c.h.b16 %v383
        %v1551 = vunpack.c.l.b16 %v384
        %v1552 = vunpack.c.h.b16 %v384
        %v1553 = vunpack.c.l.b16 %v385
        %v1554 = vunpack.c.h.b16 %v385
        %v1555 = vunpack.c.l.b16 %v386
        %v1556 = vunpack.c.h.b16 %v386
        %v1557 = vunpack.c.l.b16 %v387
        %v1558 = vunpack.c.h.b16 %v387
        %v1559 = vunpack.c.l.b16 %v388
        %v1560 = vunpack.c.h.b16 %v388
        %v1561 = vunpack.c.l.b16 %v389
        %v1562 = vunpack.c.h.b16 %v389
        %v1563 = vunpack.c.l.b16 %v390
        %v1564 = vunpack.c.h.b16 %v390
        %v1565 = vunpack.c.l.b16 %v391
        %v1566 = vunpack.c.h.b16 %v391
        %v1567 = vunpack.c.l.b16 %v392
        %v1568 = vunpack.c.h.b16 %v392
        %v1569 = vunpack.c.l.b16 %v393
        %v1570 = vunpack.c.h.b16 %v393
        %v1571 = vunpack.c.l.b16 %v394
        %v1572 = vunpack.c.h.b16 %v394
        %v1573 = vunpack.c.l.b16 %v395
        %v1574 = vunpack.c.h.b16 %v395
        %v1575 = vunpack.c.l.b16 %v396
        %v1576 = vunpack.c.h.b16 %v396
        %v1577 = vunpack.c.l.b16 %v397
        %v1578 = vunpack.c.h.b16 %v397
        %v1579 = vunpack.c.l.b16 %v398
        %v1580 = vunpack.c.h.b16 %v398
        %v1581 = vunpack.c.l.b16 %v399
        %v1582 = vunpack.c.h.b16 %v399
        %v1583 = vunpack.c.l.b16 %v400
        %v1584 = vunpack.c.h.b16 %v400
        %v1585 = vunpack.c.l.b16 %v401
        %v1586 = vunpack.c.h.b16 %v401
        %v1587 = vunpack.c.l.b16 %v402
        %v1588 = vunpack.c.h.b16 %v402
        %v1589 = vunpack.c.l.b16 %v403
        %v1590 = vunpack.c.h.b16 %v403
        %v1591 = vunpack.c.l.b16 %v404
        %v1592 = vunpack.c.h.b16 %v404
        %v1593 = vunpack.c.l.b16 %v405
        %v1594 = vunpack.c.h.b16 %v405
        %v1595 = vunpack.c.l.b16 %v406
        %v1596 = vunpack.c.h.b16 %v406
        %v1597 = vunpack.c.l.b16 %v407
        %v1598 = vunpack.c.h.b16 %v407
        %v1599 = vunpack.c.l.b16 %v408
        %v1600 = vunpack.c.h.b16 %v408
        %v1601 = vunpack.c.l.b16 %v409
        %v1602 = vunpack.c.h.b16 %v409
        %v1603 = vunpack.c.l.b16 %v410
        %v1604 = vunpack.c.h.b16 %v410
        %v1605 = vunpack.c.l.b16 %v411
        %v1606 = vunpack.c.h.b16 %v411
        %v1607 = vunpack.c.l.b16 %v412
        %v1608 = vunpack.c.h.b16 %v412
        %v1609 = vunpack.c.l.b16 %v413
        %v1610 = vunpack.c.h.b16 %v413
        %v1611 = vunpack.c.l.b16 %v414
        %v1612 = vunpack.c.h.b16 %v414
        %v1613 = vunpack.c.l.b16 %v415
        %v1614 = vunpack.c.h.b16 %v415
        %v1615 = vunpack.c.l.b16 %v416
        %v1616 = vunpack.c.h.b16 %v416
        %v1617 = vunpack.c.l.b16 %v417
        %v1618 = vunpack.c.h.b16 %v417
        %v1619 = vunpack.c.l.b16 %v418
        %v1620 = vunpack.c.h.b16 %v418
        %v1621 = vunpack.c.l.b16 %v419
        %v1622 = vunpack.c.h.b16 %v419
        %v1623 = vunpack.c.l.b16 %v420
        %v1624 = vunpack.c.h.b16 %v420
        %v1625 = vunpack.c.l.b16 %v421
        %v1626 = vunpack.c.h.b16 %v421
        %v1627 = vunpack.c.l.b16 %v422
        %v1628 = vunpack.c.h.b16 %v422
        %v1629 = vunpack.c.l.b16 %v423
        %v1630 = vunpack.c.h.b16 %v423
        %v1631 = vunpack.c.l.b16 %v424
        %v1632 = vunpack.c.h.b16 %v424
        %v1633 = vunpack.c.l.b16 %v425
        %v1634 = vunpack.c.h.b16 %v425
        %v1635 = vunpack.c.l.b16 %v426
        %v1636 = vunpack.c.h.b16 %v426
        %v1637 = vunpack.c.l.b16 %v427
        %v1638 = vunpack.c.h.b16 %v427
        %v1639 = vunpack.c.l.b16 %v428
        %v1640 = vunpack.c.h.b16 %v428
        %v1641 = vunpack.c.l.b16 %v429
        %v1642 = vunpack.c.h.b16 %v429
        %v1643 = vunpack.c.l.b16 %v430
        %v1644 = vunpack.c.h.b16 %v430
        %v1645 = vunpack.c.l.b16 %v431
        %v1646 = vunpack.c.h.b16 %v431
        %v1647 = vunpack.c.l.b16 %v432
        %v1648 = vunpack.c.h.b16 %v432
        %v1649 = vpack.c.b16 %v1585, %v1521
        %v1650 = vpack.c.b16 %v1586, %v1522
        %v1651 = vpack.c.b16 %v1587, %v1523
        %v1652 = vpack.c.b16 %v1588, %v1524
        %v1653 = vpack.c.b16 %v1589, %v1525
        %v1654 = vpack.c.b16 %v1590, %v1526
        %v1655 = vpack.c.b16 %v1591, %v1527
        %v1656 = vpack.c.b16 %v1592, %v1528
        %v1657 = vpack.c.b16 %v1593, %v1529
        %v1658 = vpack.c.b16 %v1594, %v1530
        %v1659 = vpack.c.b16 %v1595, %v1531
        %v1660 = vpack.c.b16 %v1596, %v1532
        %v1661 = vpack.c.b16 %v1597, %v1533
        %v1662 = vpack.c.b16 %v1598, %v1534
        %v1663 = vpack.c.b16 %v1599, %v1535
        %v1664 = vpack.c.b16 %v1600, %v1536
        %v1665 = vpack.c.b16 %v1601, %v1537
        %v1666 = vpack.c.b16 %v1602, %v1538
        %v1667 = vpack.c.b16 %v1603, %v1539
        %v1668 = vpack.c.b16 %v1604, %v1540
        %v1669 = vpack.c.b16 %v1605, %v1541
        %v1670 = vpack.c.b16 %v1606, %v1542
        %v1671 = vpack.c.b16 %v1607, %v1543
        %v1672 = vpack.c.b16 %v1608, %v1544
        %v1673 = vpack.c.b16 %v1609, %v1545
        %v1674 = vpack.c.b16 %v1610, %v1546
        %v1675 = vpack.c.b16 %v1611, %v1547
        %v1676 = vpack.c.b16 %v1612, %v1548
        %v1677 = vpack.c.b16 %v1613, %v1549
        %v1678 = vpack.c.b16 %v1614, %v1550
        %v1679 = vpack.c.b16 %v1615, %v1551
        %v1680 = vpack.c.b16 %v1616, %v1552
        %v1681 = vpack.c.b16 %v1617, %v1553
        %v1682 = vpack.c.b16 %v1618, %v1554
        %v1683 = vpack.c.b16 %v1619, %v1555
        %v1684 = vpack.c.b16 %v1620, %v1556
        %v1685 = vpack.c.b16 %v1621, %v1557
        %v1686 = vpack.c.b16 %v1622, %v1558
        %v1687 = vpack.c.b16 %v1623, %v1559
        %v1688 = vpack.c.b16 %v1624, %v1560
        %v1689 = vpack.c.b16 %v1625, %v1561
        %v1690 = vpack.c.b16 %v1626, %v1562
        %v1691 = vpack.c.b16 %v1627, %v1563
        %v1692 = vpack.c.b16 %v1628, %v1564
        %v1693 = vpack.c.b16 %v1629, %v1565
        %v1694 = vpack.c.b16 %v1630, %v1566
        %v1695 = vpack.c.b16 %v1631, %v1567
        %v1696 = vpack.c.b16 %v1632, %v1568
        %v1697 = vpack.c.b16 %v1633, %v1569
        %v1698 = vpack.c.b16 %v1634, %v1570
        %v1699 = vpack.c.b16 %v1635, %v1571
        %v1700 = vpack.c.b16 %v1636, %v1572
        %v1701 = vpack.c.b16 %v1637, %v1573
        %v1702 = vpack.c.b16 %v1638, %v1574
        %v1703 = vpack.c.b16 %v1639, %v1575
        %v1704 = vpack.c.b16 %v1640, %v1576
        %v1705 = vpack.c.b16 %v1641, %v1577
        %v1706 = vpack.c.b16 %v1642, %v1578
        %v1707 = vpack.c.b16 %v1643, %v1579
        %v1708 = vpack.c.b16 %v1644, %v1580
        %v1709 = vpack.c.b16 %v1645, %v1581
        %v1710 = vpack.c.b16 %v1646, %v1582
        %v1711 = vpack.c.b16 %v1647, %v1583
        %v1712 = vpack.c.b16 %v1648, %v1584
        %v2801 = vunpack.c.l.b16 %v433
        %v2802 = vunpack.c.l.b16 %v434
        %v2803 = vunpack.c.l.b16 %v435
        %v2804 = vunpack.c.l.b16 %v436
        %v2805 = vunpack.c.l.b16 %v437
        %v2806 = vunpack.c.l.b16 %v438
        %v2807 = vunpack.c.l.b16 %v439
        %v2808 = vunpack.c.l.b16 %v440
        %v2809 = vunpack.c.l.b16 %v441
        %v2810 = vunpack.c.l.b16 %v442
        %v2811 = vunpack.c.l.b16 %v443
        %v2812 = vunpack.c.l.b16 %v444
        %v2813 = vunpack.c.l.b16 %v445
        %v2814 = vunpack.c.l.b16 %v446
        %v2815 = vunpack.c.l.b16 %v447
        %v2816 = vunpack.c.l.b16 %v448
        %v2817 = vunpack.c.l.b16 %v449
        %v2818 = vunpack.c.l.b16 %v450
        %v2819 = vunpack.c.l.b16 %v451
        %v2820 = vunpack.c.l.b16 %v452
        %v2821 = vunpack.c.l.b16 %v453
        %v2822 = vunpack.c.l.b16 %v454
        %v2823 = vunpack.c.l.b16 %v455
        %v2824 = vunpack.c.l.b16 %v456
        %v2825 = vunpack.c.l.b16 %v457
        %v2826 = vunpack.c.l.b16 %v458
        %v2827 = vunpack.c.l.b16 %v459
        %v2828 = vunpack.c.l.b16 %v460
        %v2829 = vunpack.c.l.b16 %v461
        %v2830 = vunpack.c.l.b16 %v462
        %v2831 = vunpack.c.l.b16 %v463
        %v2832 = vunpack.c.l.b16 %v464
        %v2833 = vunpack.c.l.b16 %v465
        %v2834 = vunpack.c.l.b16 %v466
        %v2835 = vunpack.c.l.b16 %v467
        %v2836 = vunpack.c.l.b16 %v468
        %v2837 = vunpack.c.l.b16 %v469
        %v2838 = vunpack.c.l.b16 %v470
        %v2839 = vunpack.c.l.b16 %v471
        %v2840 = vunpack.c.l.b16 %v472
        %v2841 = vunpack.c.l.b16 %v473
        %v2842 = vunpack.c.l.b16 %v474
        %v2843 = vunpack.c.l.b16 %v475
        %v2844 = vunpack.c.l.b16 %v476
        %v2845 = vunpack.c.l.b16 %v477
        %v2846 = vunpack.c.l.b16 %v478
        %v2847 = vunpack.c.l.b16 %v479
        %v2848 = vunpack.c.l.b16 %v480
        %v2849 = vunpack.c.l.b16 %v481
        %v2850 = vunpack.c.l.b16 %v482
        %v2851 = vunpack.c.l.b16 %v483
        %v2852 = vunpack.c.l.b16 %v484
        %v2853 = vunpack.c.l.b16 %v485
        %v2854 = vunpack.c.l.b16 %v486
        %v2855 = vunpack.c.l.b16 %v487
        %v2856 = vunpack.c.l.b16 %v488
        %v2857 = vunpack.c.l.b16 %v489
        %v2858 = vunpack.c.l.b16 %v490
        %v2859 = vunpack.c.l.b16 %v491
        %v2860 = vunpack.c.l.b16 %v492
        %v2861 = vunpack.c.l.b16 %v493
        %v2862 = vunpack.c.l.b16 %v494
        %v2863 = vunpack.c.l.b16 %v495
        %v2864 = vunpack.c.l.b16 %v496
        %v2865 = vunpack.c.l.b16 %v497
        %v2866 = vunpack.c.l.b16 %v498
        %v2867 = vunpack.c.l.b16 %v499
        %v2868 = vunpack.c.l.b16 %v500
        %v2869 = vunpack.c.l.b16 %v501
        %v2870 = vunpack.c.l.b16 %v502
        %v2871 = vunpack.c.l.b16 %v503
        %v2872 = vunpack.c.l.b16 %v504
        %v2873 = vunpack.c.l.b16 %v505
        %v2874 = vunpack.c.l.b16 %v506
        %v2875 = vunpack.c.l.b16 %v507
        %v2876 = vunpack.c.l.b16 %v508
        %v2877 = vunpack.c.l.b16 %v509
        %v2878 = vunpack.c.l.b16 %v510
        %v2879 = vunpack.c.l.b16 %v511
        %v2880 = vunpack.c.l.b16 %v512
        %v2881 = vunpack.c.l.b16 %v513
        %v2882 = vunpack.c.l.b16 %v514
        %v2883 = vunpack.c.l.b16 %v515
        %v2884 = vunpack.c.l.b16 %v516
        %v2885 = vunpack.c.l.b16 %v517
        %v2886 = vunpack.c.l.b16 %v518
        %v2887 = vunpack.c.l.b16 %v519
        %v2888 = vunpack.c.l.b16 %v520
        %v2889 = vunpack.c.l.b16 %v521
        %v2890 = vunpack.c.l.b16 %v522
        %v2891 = vunpack.c.l.b16 %v523
        %v2892 = vunpack.c.l.b16 %v524
        %v2893 = vunpack.c.l.b16 %v525
        %v2894 = vunpack.c.l.b16 %v526
        %v2895 = vunpack.c.l.b16 %v527
        %v2896 = vunpack.c.l.b16 %v528
        %v2897 = vunpack.c.l.b16 %v529
        %v2898 = vunpack.c.l.b16 %v530
        %v2899 = vunpack.c.l.b16 %v531
        %v2900 = vunpack.c.l.b16 %v532
        %v2901 = vunpack.c.l.b16 %v533
        %v2902 = vunpack.c.l.b16 %v534
        %v2903 = vunpack.c.l.b16 %v535
        %v2904 = vunpack.c.l.b16 %v536
        %v2905 = vunpack.c.l.b16 %v537
        %v2906 = vunpack.c.l.b16 %v538
        %v2907 = vunpack.c.l.b16 %v539
        %v2908 = vunpack.c.l.b16 %v540
        %v2909 = vunpack.c.l.b16 %v541
        %v2910 = vunpack.c.l.b16 %v542
        %v2911 = vunpack.c.l.b16 %v543
        %v2912 = vunpack.c.l.b16 %v544
        %v2913 = vunpack.c.l.b16 %v545
        %v2914 = vunpack.c.l.b16 %v546
        %v2915 = vunpack.c.l.b16 %v547
        %v2916 = vunpack.c.l.b16 %v548
        %v2917 = vunpack.c.l.b16 %v549
        %v2918 = vunpack.c.l.b16 %v550
        %v2919 = vunpack.c.l.b16 %v551
        %v2920 = vunpack.c.l.b16 %v552
        %v2921 = vunpack.c.l.b16 %v553
        %v2922 = vunpack.c.l.b16 %v554
        %v2923 = vunpack.c.l.b16 %v555
        %v2924 = vunpack.c.l.b16 %v556
        %v2925 = vunpack.c.l.b16 %v557
        %v2926 = vunpack.c.l.b16 %v558
        %v2927 = vunpack.c.l.b16 %v559
        %v2928 = vunpack.c.l.b16 %v560
        %v2929 = vunpack.c.l.b16 %v561
        %v2930 = vunpack.c.l.b16 %v562
        %v2931 = vunpack.c.l.b16 %v563
        %v2932 = vunpack.c.l.b16 %v564
        %v2933 = vunpack.c.l.b16 %v565
        %v2934 = vunpack.c.l.b16 %v566
        %v2935 = vunpack.c.l.b16 %v567
        %v2936 = vunpack.c.l.b16 %v568
        %v2937 = vunpack.c.l.b16 %v569
        %v2938 = vunpack.c.l.b16 %v570
        %v2939 = vunpack.c.l.b16 %v571
        %v2940 = vunpack.c.l.b16 %v572
        %v2941 = vunpack.c.l.b16 %v573
        %v2942 = vunpack.c.l.b16 %v574
        %v2943 = vunpack.c.l.b16 %v575
        %v2944 = vunpack.c.l.b16 %v576
        %v2945 = vunpack.c.l.b16 %v577
        %v2946 = vunpack.c.l.b16 %v578
        %v2947 = vunpack.c.l.b16 %v579
        %v2948 = vunpack.c.l.b16 %v580
        %v2949 = vunpack.c.l.b16 %v581
        %v2950 = vunpack.c.l.b16 %v582
        %v2951 = vunpack.c.l.b16 %v583
        %v2952 = vunpack.c.l.b16 %v584
        %v2953 = vunpack.c.l.b16 %v585
        %v2954 = vunpack.c.l.b16 %v586
        %v2955 = vunpack.c.l.b16 %v587
        %v2956 = vunpack.c.l.b16 %v588
        %v2957 = vunpack.c.l.b16 %v589
        %v2958 = vunpack.c.l.b16 %v590
        %v2959 = vunpack.c.l.b16 %v591
        %v2960 = vunpack.c.l.b16 %v592
        %v2961 = vunpack.c.l.b16 %v593
        %v2962 = vunpack.c.l.b16 %v594
        %v2963 = vunpack.c.l.b16 %v595
        %v2964 = vunpack.c.l.b16 %v596
        %v2965 = vunpack.c.l.b16 %v597
        %v2966 = vunpack.c.l.b16 %v598
        %v2967 = vunpack.c.l.b16 %v599
        %v2968 = vunpack.c.l.b16 %v600
        %v2969 = vunpack.c.l.b16 %v601
        %v2970 = vunpack.c.l.b16 %v602
        %v2971 = vunpack.c.l.b16 %v603
        %v2972 = vunpack.c.l.b16 %v604
        %v2973 = vunpack.c.l.b16 %v605
        %v2974 = vunpack.c.l.b16 %v606
        %v2975 = vunpack.c.l.b16 %v607
        %v2976 = vunpack.c.l.b16 %v608
        %v2977 = vunpack.c.l.b16 %v609
        %v2978 = vunpack.c.l.b16 %v610
        %v2979 = vunpack.c.l.b16 %v611
        %v2980 = vunpack.c.l.b16 %v612
        %v2981 = vunpack.c.l.b16 %v613
        %v2982 = vunpack.c.l.b16 %v614
        %v2983 = vunpack.c.l.b16 %v615
        %v2984 = vunpack.c.l.b16 %v616
        %v2985 = vunpack.c.l.b16 %v617
        %v2986 = vunpack.c.l.b16 %v618
        %v2987 = vunpack.c.l.b16 %v619
        %v2988 = vunpack.c.l.b16 %v620
        %v2989 = vunpack.c.l.b16 %v621
        %v2990 = vunpack.c.l.b16 %v622
        %v2991 = vunpack.c.l.b16 %v623
        %v2992 = vunpack.c.l.b16 %v624
        %v2993 = vunpack.c.l.b16 %v625
        %v2994 = vunpack.c.l.b16 %v626
        %v2995 = vunpack.c.l.b16 %v627
        %v2996 = vunpack.c.l.b16 %v628
        %v2997 = vunpack.c.l.b16 %v629
        %v2998 = vunpack.c.l.b16 %v630
        %v2999 = vunpack.c.l.b16 %v631
        %v3000 = vunpack.c.l.b16 %v632
        %v3001 = vunpack.c.l.b16 %v633
        %v3002 = vunpack.c.l.b16 %v634
        %v3003 = vunpack.c.l.b16 %v635
        %v3004 = vunpack.c.l.b16 %v636
        %v3005 = vunpack.c.l.b16 %v637
        %v3006 = vunpack.c.l.b16 %v638
        %v3007 = vunpack.c.l.b16 %v639
        %v3008 = vunpack.c.l.b16 %v640
        %v3009 = vunpack.c.l.b16 %v641
        %v3010 = vunpack.c.l.b16 %v642
        %v3011 = vunpack.c.l.b16 %v643
        %v3012 = vunpack.c.l.b16 %v644
        %v3013 = vunpack.c.l.b16 %v645
        %v3014 = vunpack.c.l.b16 %v646
        %v3015 = vunpack.c.l.b16 %v647
        %v3016 = vunpack.c.l.b16 %v648
        %v3017 = vunpack.c.l.b16 %v649
        %v3018 = vunpack.c.l.b16 %v650
        %v3019 = vunpack.c.l.b16 %v651
        %v3020 = vunpack.c.l.b16 %v652
        %v3021 = vunpack.c.l.b16 %v653
        %v3022 = vunpack.c.l.b16 %v654
        %v3023 = vunpack.c.l.b16 %v655
        %v3024 = vunpack.c.l.b16 %v656
        %v3025 = vunpack.c.l.b16 %v657
        %v3026 = vunpack.c.l.b16 %v658
        %v3027 = vunpack.c.l.b16 %v659
        %v3028 = vunpack.c.l.b16 %v660
        %v3029 = vunpack.c.l.b16 %v661
        %v3030 = vunpack.c.l.b16 %v662
        %v3031 = vunpack.c.l.b16 %v663
        %v3032 = vunpack.c.l.b16 %v664
        %v3033 = vunpack.c.l.b16 %v665
        %v3034 = vunpack.c.l.b16 %v666
        %v3035 = vunpack.c.l.b16 %v667
        %v3036 = vunpack.c.l.b16 %v668
        %v3037 = vunpack.c.l.b16 %v669
        %v3038 = vunpack.c.l.b16 %v670
        %v3039 = vunpack.c.l.b16 %v671
        %v3040 = vunpack.c.l.b16 %v672
        %v3041 = vunpack.c.l.b16 %v673
        %v3042 = vunpack.c.l.b16 %v674
        %v3043 = vunpack.c.l.b16 %v675
        %v3044 = vunpack.c.l.b16 %v676
        %v3045 = vunpack.c.l.b16 %v677
        %v3046 = vunpack.c.l.b16 %v678
        %v3047 = vunpack.c.l.b16 %v679
        %v3048 = vunpack.c.l.b16 %v680
        %v3049 = vunpack.c.l.b16 %v681
        %v3050 = vunpack.c.l.b16 %v682
        %v3051 = vunpack.c.l.b16 %v683
        %v3052 = vunpack.c.l.b16 %v684
        %v3053 = vunpack.c.l.b16 %v685
        %v3054 = vunpack.c.l.b16 %v686
        %v3055 = vunpack.c.l.b16 %v687
        %v3056 = vunpack.c.l.b16 %v688
        %v3057 = vunpack.c.l.b16 %v689
        %v3058 = vunpack.c.l.b16 %v690
        %v3059 = vunpack.c.l.b16 %v691
        %v3060 = vunpack.c.l.b16 %v692
        %v3061 = vunpack.c.l.b16 %v693
        %v3062 = vunpack.c.l.b16 %v694
        %v3063 = vunpack.c.l.b16 %v695
        %v3064 = vunpack.c.l.b16 %v696
        %v3065 = vunpack.c.l.b16 %v697
        %v3066 = vunpack.c.l.b16 %v698
        %v3067 = vunpack.c.l.b16 %v699
        %v3068 = vunpack.c.l.b16 %v700
        %v3069 = vunpack.c.l.b16 %v701
        %v3070 = vunpack.c.l.b16 %v702
        %v3071 = vunpack.c.l.b16 %v703
        %v3072 = vunpack.c.l.b16 %v704
        %v3073 = vunpack.c.l.b16 %v705
        %v3074 = vunpack.c.l.b16 %v706
        %v3075 = vunpack.c.l.b16 %v707
        %v3076 = vunpack.c.l.b16 %v708
        %v3077 = vunpack.c.l.b16 %v709
        %v3078 = vunpack.c.l.b16 %v710
        %v3079 = vunpack.c.l.b16 %v711
        %v3080 = vunpack.c.l.b16 %v712
        %v3081 = vunpack.c.l.b16 %v713
        %v3082 = vunpack.c.l.b16 %v714
        %v3083 = vunpack.c.l.b16 %v715
        %v3084 = vunpack.c.l.b16 %v716
        %v3085 = vunpack.c.l.b16 %v717
        %v3086 = vunpack.c.l.b16 %v718
        %v3087 = vunpack.c.l.b16 %v719
        %v3088 = vunpack.c.l.b16 %v720
        %v3089 = vunpack.c.l.b16 %v721
        %v3090 = vunpack.c.l.b16 %v722
        %v3091 = vunpack.c.l.b16 %v723
        %v3092 = vunpack.c.l.b16 %v724
        %v3093 = vunpack.c.l.b16 %v725
        %v3094 = vunpack.c.l.b16 %v726
        %v3095 = vunpack.c.l.b16 %v727
        %v3096 = vunpack.c.l.b16 %v728
        %v3097 = vunpack.c.l.b16 %v729
        %v3098 = vunpack.c.l.b16 %v730
        %v3099 = vunpack.c.l.b16 %v731
        %v3100 = vunpack.c.l.b16 %v732
        %v3101 = vunpack.c.l.b16 %v733
        %v3102 = vunpack.c.l.b16 %v734
        %v3103 = vunpack.c.l.b16 %v735
        %v3104 = vunpack.c.l.b16 %v736
        %v3105 = vunpack.c.l.b16 %v737
        %v3106 = vunpack.c.l.b16 %v738
        %v3107 = vunpack.c.l.b16 %v739
        %v3108 = vunpack.c.l.b16 %v740
        %v3109 = vunpack.c.l.b16 %v741
        %v3110 = vunpack.c.l.b16 %v742
        %v3111 = vunpack.c.l.b16 %v743
        %v3112 = vunpack.c.l.b16 %v744
        %v3113 = vunpack.c.l.b16 %v745
        %v3114 = vunpack.c.l.b16 %v746
        %v3115 = vunpack.c.l.b16 %v747
        %v3116 = vunpack.c.l.b16 %v748
        %v3117 = vunpack.c.l.b16 %v749
        %v3118 = vunpack.c.l.b16 %v750
        %v3119 = vunpack.c.l.b16 %v751
        %v3120 = vunpack.c.l.b16 %v752
        %v3121 = vunpack.c.l.b16 %v753
        %v3122 = vunpack.c.l.b16 %v754
        %v3123 = vunpack.c.l.b16 %v755
        %v3124 = vunpack.c.l.b16 %v756
        %v3125 = vunpack.c.l.b16 %v757
        %v3126 = vunpack.c.l.b16 %v758
        %v3127 = vunpack.c.l.b16 %v759
        %v3128 = vunpack.c.l.b16 %v760
        %v3129 = vunpack.c.l.b16 %v761
        %v3130 = vunpack.c.l.b16 %v762
        %v3131 = vunpack.c.l.b16 %v763
        %v3132 = vunpack.c.l.b16 %v764
        %v3133 = vunpack.c.l.b16 %v765
        %v3134 = vunpack.c.l.b16 %v766
        %v3135 = vunpack.c.l.b16 %v767
        %v3136 = vunpack.c.l.b16 %v768
        %v3137 = vunpack.c.l.b16 %v769
        %v3138 = vunpack.c.l.b16 %v770
        %v3139 = vunpack.c.l.b16 %v771
        %v3140 = vunpack.c.l.b16 %v772
        %v3141 = vunpack.c.l.b16 %v773
        %v3142 = vunpack.c.l.b16 %v774
        %v3143 = vunpack.c.l.b16 %v775
        %v3144 = vunpack.c.l.b16 %v776
        %v3145 = vunpack.c.l.b16 %v777
        %v3146 = vunpack.c.l.b16 %v778
        %v3147 = vunpack.c.l.b16 %v779
        %v3148 = vunpack.c.l.b16 %v780
        %v3149 = vunpack.c.l.b16 %v781
        %v3150 = vunpack.c.l.b16 %v782
        %v3151 = vunpack.c.l.b16 %v783
        %v3152 = vunpack.c.l.b16 %v784
        %v3153 = vunpack.c.l.b16 %v785
        %v3154 = vunpack.c.l.b16 %v786
        %v3155 = vunpack.c.l.b16 %v787
        %v3156 = vunpack.c.l.b16 %v788
        %v3157 = vunpack.c.l.b16 %v789
        %v3158 = vunpack.c.l.b16 %v790
        %v3159 = vunpack.c.l.b16 %v791
        %v3160 = vunpack.c.l.b16 %v792
        %v3161 = vunpack.c.l.b16 %v793
        %v3162 = vunpack.c.l.b16 %v794
        %v3163 = vunpack.c.l.b16 %v795
        %v3164 = vunpack.c.l.b16 %v796
        %v3165 = vunpack.c.l.b16 %v797
        %v3166 = vunpack.c.l.b16 %v798
        %v3167 = vunpack.c.l.b16 %v799
        %v3168 = vunpack.c.l.b16 %v800
        %v3169 = vunpack.c.l.b16 %v801
        %v3170 = vunpack.c.l.b16 %v802
        %v3171 = vunpack.c.l.b16 %v803
        %v3172 = vunpack.c.l.b16 %v804
        %v3173 = vunpack.c.l.b16 %v805
        %v3174 = vunpack.c.l.b16 %v806
        %v3175 = vunpack.c.l.b16 %v807
        %v3176 = vunpack.c.l.b16 %v808
        %v3177 = vunpack.c.l.b16 %v809
        %v3178 = vunpack.c.l.b16 %v810
        %v3179 = vunpack.c.l.b16 %v811
        %v3180 = vunpack.c.l.b16 %v812
        %v3181 = vunpack.c.l.b16 %v813
        %v3182 = vunpack.c.l.b16 %v814
        %v3183 = vunpack.c.l.b16 %v815
        %v3184 = vunpack.c.l.b16 %v816
        %v3185 = vunpack.c.l.b16 %v817
        %v3186 = vunpack.c.l.b16 %v818
        %v3187 = vunpack.c.l.b16 %v819
        %v3188 = vunpack.c.l.b16 %v820
        %v3189 = vunpack.c.l.b16 %v821
        %v3190 = vunpack.c.l.b16 %v822
        %v3191 = vunpack.c.l.b16 %v823
        %v3192 = vunpack.c.l.b16 %v824
        %v3193 = vunpack.c.l.b16 %v825
        %v3194 = vunpack.c.l.b16 %v826
        %v3195 = vunpack.c.l.b16 %v827
        %v3196 = vunpack.c.l.b16 %v828
        %v3197 = vunpack.c.l.b16 %v829
        %v3198 = vunpack.c.l.b16 %v830
        %v3199 = vunpack.c.l.b16 %v831
        %v3200 = vunpack.c.l.b16 %v832
        %v3201 = vunpack.c.l.b16 %v833
        %v3202 = vunpack.c.l.b16 %v834
        %v3203 = vunpack.c.l.b16 %v835
        %v3204 = vunpack.c.l.b16 %v836
        %v3205 = vunpack.c.l.b16 %v837
        %v3206 = vunpack.c.l.b16 %v838
        %v3207 = vunpack.c.l.b16 %v839
        %v3208 = vunpack.c.l.b16 %v840
        %v3209 = vunpack.c.l.b16 %v841
        %v3210 = vunpack.c.l.b16 %v842
        %v3211 = vunpack.c.l.b16 %v843
        %v3212 = vunpack.c.l.b16 %v844
        %v3213 = vunpack.c.l.b16 %v845
        %v3214 = vunpack.c.l.b16 %v846
        %v3215 = vunpack.c.l.b16 %v847
        %v3216 = vunpack.c.l.b16 %v848
        %v3217 = vunpack.c.l.b16 %v849
        %v3218 = vunpack.c.l.b16 %v850
        %v3219 = vunpack.c.l.b16 %v851
        %v3220 = vunpack.c.l.b16 %v852
        %v3221 = vunpack.c.l.b16 %v853
        %v3222 = vunpack.c.l.b16 %v854
        %v3223 = vunpack.c.l.b16 %v855
        %v3224 = vunpack.c.l.b16 %v856
        %v3225 = vunpack.c.l.b16 %v857
        %v3226 = vunpack.c.l.b16 %v858
        %v3227 = vunpack.c.l.b16 %v859
        %v3228 = vunpack.c.l.b16 %v860
        %v3229 = vunpack.c.l.b16 %v861
        %v3230 = vunpack.c.l.b16 %v862
        %v3231 = vunpack.c.l.b16 %v863
        %v3232 = vunpack.c.l.b16 %v864
        %v3233 = vunpack.c.l.b16 %v865
        %v3234 = vunpack.c.l.b16 %v866
        %v3235 = vunpack.c.l.b16 %v867
        %v3236 = vunpack.c.l.b16 %v868
        %v3237 = vunpack.c.l.b16 %v869
        %v3238 = vunpack.c.l.b16 %v870
        %v3239 = vunpack.c.l.b16 %v871
        %v3240 = vunpack.c.l.b16 %v872
        %v3241 = vunpack.c.l.b16 %v873
        %v3242 = vunpack.c.l.b16 %v874
        %v3243 = vunpack.c.l.b16 %v875
        %v3244 = vunpack.c.l.b16 %v876
        %v3245 = vunpack.c.l.b16 %v877
        %v3246 = vunpack.c.l.b16 %v878
        %v3247 = vunpack.c.l.b16 %v879
        %v3248 = vunpack.c.l.b16 %v880
        %v3249 = vunpack.c.l.b16 %v881
        %v3250 = vunpack.c.l.b16 %v882
        %v3251 = vunpack.c.l.b16 %v883
        %v3252 = vunpack.c.l.b16 %v884
        %v3253 = vunpack.c.l.b16 %v885
        %v3254 = vunpack.c.l.b16 %v886
        %v3255 = vunpack.c.l.b16 %v887
        %v3256 = vunpack.c.l.b16 %v888
        %v3257 = vunpack.c.l.b16 %v889
        %v3258 = vunpack.c.l.b16 %v890
        %v3259 = vunpack.c.l.b16 %v891
        %v3260 = vunpack.c.l.b16 %v892
        %v3261 = vunpack.c.l.b16 %v893
        %v3262 = vunpack.c.l.b16 %v894
        %v3263 = vunpack.c.l.b16 %v895
        %v3264 = vunpack.c.l.b16 %v896
        %v3265 = vunpack.c.l.b16 %v897
        %v3266 = vunpack.c.l.b16 %v898
        %v3267 = vunpack.c.l.b16 %v899
        %v3268 = vunpack.c.l.b16 %v900
        %v3269 = vunpack.c.l.b16 %v901
        %v3270 = vunpack.c.l.b16 %v902
        %v3271 = vunpack.c.l.b16 %v903
        %v3272 = vunpack.c.l.b16 %v904
        %v3273 = vunpack.c.l.b16 %v905
        %v3274 = vunpack.c.l.b16 %v906
        %v3275 = vunpack.c.l.b16 %v907
        %v3276 = vunpack.c.l.b16 %v908
        %v3277 = vunpack.c.l.b16 %v909
        %v3278 = vunpack.c.l.b16 %v910
        %v3279 = vunpack.c.l.b16 %v911
        %v3280 = vunpack.c.l.b16 %v912
        %v3281 = vunpack.c.l.b16 %v913
        %v3282 = vunpack.c.l.b16 %v914
        %v3283 = vunpack.c.l.b16 %v915
        %v3284 = vunpack.c.l.b16 %v916
        %v3285 = vunpack.c.l.b16 %v917
        %v3286 = vunpack.c.l.b16 %v918
        %v3287 = vunpack.c.l.b16 %v919
        %v3288 = vunpack.c.l.b16 %v920
        %v3289 = vunpack.c.l.b16 %v921
        %v3290 = vunpack.c.l.b16 %v922
        %v3291 = vunpack.c.l.b16 %v923
        %v3292 = vunpack.c.l.b16 %v924
        %v3293 = vunpack.c.l.b16 %v925
        %v3294 = vunpack.c.l.b16 %v926
        %v3295 = vunpack.c.l.b16 %v927
        %v3296 = vunpack.c.l.b16 %v928
        %v3297 = vunpack.c.l.b16 %v929
        %v3298 = vunpack.c.l.b16 %v930
        %v3299 = vunpack.c.l.b16 %v931
        %v3300 = vunpack.c.l.b16 %v932
        %v3301 = vunpack.c.l.b16 %v933
        %v3302 = vunpack.c.l.b16 %v934
        %v3303 = vunpack.c.l.b16 %v935
        %v3304 = vunpack.c.l.b16 %v936
        %v3305 = vunpack.c.l.b16 %v937
        %v3306 = vunpack.c.l.b16 %v938
        %v3307 = vunpack.c.l.b16 %v939
        %v3308 = vunpack.c.l.b16 %v940
        %v3309 = vunpack.c.l.b16 %v941
        %v3310 = vunpack.c.l.b16 %v942
        %v3311 = vunpack.c.l.b16 %v943
        %v3312 = vunpack.c.l.b16 %v944
        %v3313 = vunpack.c.l.b16 %v945
        %v3314 = vunpack.c.l.b16 %v946
        %v3315 = vunpack.c.l.b16 %v947
        %v3316 = vunpack.c.l.b16 %v948
        %v3317 = vunpack.c.l.b16 %v949
        %v3318 = vunpack.c.l.b16 %v950
        %v3319 = vunpack.c.l.b16 %v951
        %v3320 = vunpack.c.l.b16 %v952
        %v3321 = vunpack.c.l.b16 %v953
        %v3322 = vunpack.c.l.b16 %v954
        %v3323 = vunpack.c.l.b16 %v955
        %v3324 = vunpack.c.l.b16 %v956
        %v3325 = vunpack.c.l.b16 %v957
        %v3326 = vunpack.c.l.b16 %v958
        %v3327 = vunpack.c.l.b16 %v959
        %v3328 = vunpack.c.l.b16 %v960
        %v3329 = vunpack.c.l.b16 %v961
        %v3330 = vunpack.c.l.b16 %v962
        %v3331 = vunpack.c.l.b16 %v963
        %v3332 = vunpack.c.l.b16 %v964
        %v3333 = vunpack.c.l.b16 %v965
        %v3334 = vunpack.c.l.b16 %v966
        %v3335 = vunpack.c.l.b16 %v967
        %v3336 = vunpack.c.l.b16 %v968
        %v3337 = vunpack.c.l.b16 %v969
        %v3338 = vunpack.c.l.b16 %v970
        %v3339 = vunpack.c.l.b16 %v971
        %v3340 = vunpack.c.l.b16 %v972
        %v3341 = vunpack.c.l.b16 %v973
        %v3342 = vunpack.c.l.b16 %v974
        %v3343 = vunpack.c.l.b16 %v975
        %v3344 = vunpack.c.l.b16 %v976
        %v3345 = vunpack.c.l.b16 %v977
        %v3346 = vunpack.c.l.b16 %v978
        %v3347 = vunpack.c.l.b16 %v979
        %v3348 = vunpack.c.l.b16 %v980
        %v3349 = vunpack.c.l.b16 %v981
        %v3350 = vunpack.c.l.b16 %v982
        %v3351 = vunpack.c.l.b16 %v983
        %v3352 = vunpack.c.l.b16 %v984
        %v3353 = vunpack.c.l.b16 %v985
        %v3354 = vunpack.c.l.b16 %v986
        %v3355 = vunpack.c.l.b16 %v987
        %v3356 = vunpack.c.l.b16 %v988
        %v3357 = vunpack.c.l.b16 %v989
        %v3358 = vunpack.c.l.b16 %v990
        %v3359 = vunpack.c.l.b16 %v991
        %v3360 = vunpack.c.l.b16 %v992
        %v3361 = vunpack.c.l.b16 %v993
        %v3362 = vunpack.c.l.b16 %v994
        %v3363 = vunpack.c.l.b16 %v995
        %v3364 = vunpack.c.l.b16 %v996
        %v3365 = vunpack.c.l.b16 %v997
        %v3366 = vunpack.c.l.b16 %v998
        %v3367 = vunpack.c.l.b16 %v999
        %v3368 = vunpack.c.l.b16 %v1000
        %v3369 = vunpack.c.l.b16 %v1001
        %v3370 = vunpack.c.l.b16 %v1002
        %v3371 = vunpack.c.l.b16 %v1003
        %v3372 = vunpack.c.l.b16 %v1004
        %v3373 = vunpack.c.l.b16 %v1005
        %v3374 = vunpack.c.l.b16 %v1006
        %v3375 = vunpack.c.l.b16 %v1007
        %v3376 = vunpack.c.l.b16 %v1008
        %v3377 = vunpack.c.l.b16 %v1009
        %v3378 = vunpack.c.l.b16 %v1010
        %v3379 = vunpack.c.l.b16 %v1011
        %v3380 = vunpack.c.l.b16 %v1012
        %v3381 = vunpack.c.l.b16 %v1013
        %v3382 = vunpack.c.l.b16 %v1014
        %v3383 = vunpack.c.l.b16 %v1015
        %v3384 = vunpack.c.l.b16 %v1016
        %v3385 = vunpack.c.l.b16 %v1017
        %v3386 = vunpack.c.l.b16 %v1018
        %v3387 = vunpack.c.l.b16 %v1019
        %v3388 = vunpack.c.l.b16 %v1020
        %v3389 = vunpack.c.l.b16 %v1021
        %v3390 = vunpack.c.l.b16 %v1022
        %v3391 = vunpack.c.l.b16 %v1023
        %v3392 = vunpack.c.l.b16 %v1024
        %v3393 = vunpack.c.l.b16 %v1025
        %v3394 = vunpack.c.l.b16 %v1026
        %v3395 = vunpack.c.l.b16 %v1027
        %v3396 = vunpack.c.l.b16 %v1028
        %v3397 = vunpack.c.l.b16 %v1029
        %v3398 = vunpack.c.l.b16 %v1030
        %v3399 = vunpack.c.l.b16 %v1031
        %v3400 = vunpack.c.l.b16 %v1032
        %v3401 = vunpack.c.l.b16 %v1033
        %v3402 = vunpack.c.l.b16 %v1034
        %v3403 = vunpack.c.l.b16 %v1035
        %v3404 = vunpack.c.l.b16 %v1036
        %v3405 = vunpack.c.l.b16 %v1037
        %v3406 = vunpack.c.l.b16 %v1038
        %v3407 = vunpack.c.l.b16 %v1039
        %v3408 = vunpack.c.l.b16 %v1040
        %v3409 = vunpack.c.l.b16 %v1041
        %v3410 = vunpack.c.l.b16 %v1042
        %v3411 = vunpack.c.l.b16 %v1043
        %v3412 = vunpack.c.l.b16 %v1044
        %v3413 = vunpack.c.l.b16 %v1045
        %v3414 = vunpack.c.l.b16 %v1046
        %v3415 = vunpack.c.l.b16 %v1047
        %v3416 = vunpack.c.l.b16 %v1048
        %v3417 = vunpack.c.l.b16 %v1049
        %v3418 = vunpack.c.l.b16 %v1050
        %v3419 = vunpack.c.l.b16 %v1051
        %v3420 = vunpack.c.l.b16 %v1052
        %v3421 = vunpack.c.l.b16 %v1053
        %v3422 = vunpack.c.l.b16 %v1054
        %v3423 = vunpack.c.l.b16 %v1055
        %v3424 = vunpack.c.l.b16 %v1056
        %v3425 = vunpack.c.l.b16 %v1057
        %v3426 = vunpack.c.l.b16 %v1058
        %v3427 = vunpack.c.l.b16 %v1059
        %v3428 = vunpack.c.l.b16 %v1060
        %v3429 = vunpack.c.l.b16 %v1061
        %v3430 = vunpack.c.l.b16 %v1062
        %v3431 = vunpack.c.l.b16 %v1063
        %v3432 = vunpack.c.l.b16 %v1064
        %v3433 = vunpack.c.l.b16 %v1065
        %v3434 = vunpack.c.l.b16 %v1066
        %v3435 = vunpack.c.l.b16 %v1067
        %v3436 = vunpack.c.l.b16 %v1068
        %v3437 = vunpack.c.l.b16 %v1069
        %v3438 = vunpack.c.l.b16 %v1070
        %v3439 = vunpack.c.l.b16 %v1071
        %v3440 = vunpack.c.l.b16 %v1072
        %v3441 = vunpack.c.l.b16 %v1073
        %v3442 = vunpack.c.l.b16 %v1074
        %v3443 = vunpack.c.l.b16 %v1075
        %v3444 = vunpack.c.l.b16 %v1076
        %v3445 = vunpack.c.l.b16 %v1077
        %v3446 = vunpack.c.l.b16 %v1078
        %v3447 = vunpack.c.l.b16 %v1079
        %v3448 = vunpack.c.l.b16 %v1080
        %v3449 = vunpack.c.l.b16 %v1081
        %v3450 = vunpack.c.l.b16 %v1082
        %v3451 = vunpack.c.l.b16 %v1083
        %v3452 = vunpack.c.l.b16 %v1084
        %v3453 = vunpack.c.l.b16 %v1085
        %v3454 = vunpack.c.l.b16 %v1086
        %v3455 = vunpack.c.l.b16 %v1087
        %v3456 = vunpack.c.l.b16 %v1088
        %v3457 = vunpack.c.l.b16 %v1089
        %v3458 = vunpack.c.l.b16 %v1090
        %v3459 = vunpack.c.l.b16 %v1091
        %v3460 = vunpack.c.l.b16 %v1092
        %v3461 = vunpack.c.l.b16 %v1093
        %v3462 = vunpack.c.l.b16 %v1094
        %v3463 = vunpack.c.l.b16 %v1095
        %v3464 = vunpack.c.l.b16 %v1096
        %v3465 = vunpack.c.l.b16 %v1097
        %v3466 = vunpack.c.l.b16 %v1098
        %v3467 = vunpack.c.l.b16 %v1099
        %v3468 = vunpack.c.l.b16 %v1100
        %v3469 = vunpack.c.l.b16 %v1101
        %v3470 = vunpack.c.l.b16 %v1102
        %v3471 = vunpack.c.l.b16 %v1103
        %v3472 = vunpack.c.l.b16 %v1104
        %v3473 = vunpack.c.l.b16 %v1105
        %v3474 = vunpack.c.l.b16 %v1106
        %v3475 = vunpack.c.l.b16 %v1107
        %v3476 = vunpack.c.l.b16 %v1108
        %v3477 = vunpack.c.l.b16 %v1109
        %v3478 = vunpack.c.l.b16 %v1110
        %v3479 = vunpack.c.l.b16 %v1111
        %v3480 = vunpack.c.l.b16 %v1112
        %v3481 = vunpack.c.l.b16 %v1113
        %v3482 = vunpack.c.l.b16 %v1114
        %v3483 = vunpack.c.l.b16 %v1115
        %v3484 = vunpack.c.l.b16 %v1116
        %v3485 = vunpack.c.l.b16 %v1117
        %v3486 = vunpack.c.l.b16 %v1118
        %v3487 = vunpack.c.l.b16 %v1119
        %v3488 = vunpack.c.l.b16 %v1120
        %v3489 = vunpack.c.l.b16 %v1121
        %v3490 = vunpack.c.l.b16 %v1122
        %v3491 = vunpack.c.l.b16 %v1123
        %v3492 = vunpack.c.l.b16 %v1124
        %v3493 = vunpack.c.l.b16 %v1125
        %v3494 = vunpack.c.l.b16 %v1126
        %v3495 = vunpack.c.l.b16 %v1127
        %v3496 = vunpack.c.l.b16 %v1128
        %v3497 = vunpack.c.l.b16 %v1129
        %v3498 = vunpack.c.l.b16 %v1130
        %v3499 = vunpack.c.l.b16 %v1131
        %v3500 = vunpack.c.l.b16 %v1132
        %v3501 = vunpack.c.l.b16 %v1133
        %v3502 = vunpack.c.l.b16 %v1134
        %v3503 = vunpack.c.l.b16 %v1135
        %v3504 = vunpack.c.l.b16 %v1136
        %v3505 = vunpack.c.l.b16 %v1137
        %v3506 = vunpack.c.l.b16 %v1138
        %v3507 = vunpack.c.l.b16 %v1139
        %v3508 = vunpack.c.l.b16 %v1140
        %v3509 = vunpack.c.l.b16 %v1141
        %v3510 = vunpack.c.l.b16 %v1142
        %v3511 = vunpack.c.l.b16 %v1143
        %v3512 = vunpack.c.l.b16 %v1144
        %v3513 = vunpack.c.l.b16 %v1145
        %v3514 = vunpack.c.l.b16 %v1146
        %v3515 = vunpack.c.l.b16 %v1147
        %v3516 = vunpack.c.l.b16 %v1148
        %v3517 = vunpack.c.l.b16 %v1149
        %v3518 = vunpack.c.l.b16 %v1150
        %v3519 = vunpack.c.l.b16 %v1151
        %v3520 = vunpack.c.l.b16 %v1152
        %v3521 = vunpack.c.l.b16 %v1153
        %v3522 = vunpack.c.l.b16 %v1154
        %v3523 = vunpack.c.l.b16 %v1155
        %v3524 = vunpack.c.l.b16 %v1156
        %v3525 = vunpack.c.l.b16 %v1157
        %v3526 = vunpack.c.l.b16 %v1158
        %v3527 = vunpack.c.l.b16 %v1159
        %v3528 = vunpack.c.l.b16 %v1160
        %v3529 = vunpack.c.l.b16 %v1161
        %v3530 = vunpack.c.l.b16 %v1162
        %v3531 = vunpack.c.l.b16 %v1163
        %v3532 = vunpack.c.l.b16 %v1164
        %v3533 = vunpack.c.l.b16 %v1165
        %v3534 = vunpack.c.l.b16 %v1166
        %v3535 = vunpack.c.l.b16 %v1167
        %v3536 = vunpack.c.l.b16 %v1168
        %v3537 = vunpack.c.l.b16 %v1169
        %v3538 = vunpack.c.l.b16 %v1170
        %v3539 = vunpack.c.l.b16 %v1171
        %v3540 = vunpack.c.l.b16 %v1172
        %v3541 = vunpack.c.l.b16 %v1173
        %v3542 = vunpack.c.l.b16 %v1174
        %v3543 = vunpack.c.l.b16 %v1175
        %v3544 = vunpack.c.l.b16 %v1176
        %v3545 = vunpack.c.l.b16 %v1177
        %v3546 = vunpack.c.l.b16 %v1178
        %v3547 = vunpack.c.l.b16 %v1179
        %v3548 = vunpack.c.l.b16 %v1180
        %v3549 = vunpack.c.l.b16 %v1181
        %v3550 = vunpack.c.l.b16 %v1182
        %v3551 = vunpack.c.l.b16 %v1183
        %v3552 = vunpack.c.l.b16 %v1184
        %v3553 = vunpack.c.l.b16 %v1185
        %v3554 = vunpack.c.l.b16 %v1186
        %v3555 = vunpack.c.l.b16 %v1187
        %v3556 = vunpack.c.l.b16 %v1188
        %v3557 = vunpack.c.l.b16 %v1189
        %v3558 = vunpack.c.l.b16 %v1190
        %v3559 = vunpack.c.l.b16 %v1191
        %v3560 = vunpack.c.l.b16 %v1192
        %v3561 = vunpack.c.l.b16 %v1193
        %v3562 = vunpack.c.l.b16 %v1194
        %v3563 = vunpack.c.l.b16 %v1195
        %v3564 = vunpack.c.l.b16 %v1196
        %v3565 = vunpack.c.l.b16 %v1197
        %v3566 = vunpack.c.l.b16 %v1198
        %v3567 = vunpack.c.l.b16 %v1199
        %v3568 = vunpack.c.l.b16 %v1200
        %v3569 = vunpack.c.l.b16 %v1201
        %v3570 = vunpack.c.l.b16 %v1202
        %v3571 = vunpack.c.l.b16 %v1203
        %v3572 = vunpack.c.l.b16 %v1204
        %v3573 = vunpack.c.l.b16 %v1205
        %v3574 = vunpack.c.l.b16 %v1206
        %v3575 = vunpack.c.l.b16 %v1207
        %v3576 = vunpack.c.l.b16 %v1208
        %v3577 = vunpack.c.l.b16 %v1209
        %v3578 = vunpack.c.l.b16 %v1210
        %v3579 = vunpack.c.l.b16 %v1211
        %v3580 = vunpack.c.l.b16 %v1212
        %v3581 = vunpack.c.l.b16 %v1213
        %v3582 = vunpack.c.l.b16 %v1214
        %v3583 = vunpack.c.l.b16 %v1215
        %v3584 = vunpack.c.l.b16 %v1216
        %v3585 = vunpack.c.l.b16 %v1217
        %v3586 = vunpack.c.l.b16 %v1218
        %v3587 = vunpack.c.l.b16 %v1219
        %v3588 = vunpack.c.l.b16 %v1220
        %v3589 = vunpack.c.l.b16 %v1221
        %v3590 = vunpack.c.l.b16 %v1222
        %v3591 = vunpack.c.l.b16 %v1223
        %v3592 = vunpack.c.l.b16 %v1224
        %v3593 = vunpack.c.l.b16 %v1225
        %v3594 = vunpack.c.l.b16 %v1226
        %v3595 = vunpack.c.l.b16 %v1227
        %v3596 = vunpack.c.l.b16 %v1228
        %v3597 = vunpack.c.l.b16 %v1229
        %v3598 = vunpack.c.l.b16 %v1230
        %v3599 = vunpack.c.l.b16 %v1231
        %v3600 = vunpack.c.l.b16 %v1232
        %v3601 = vunpack.c.l.b16 %v1233
        %v3602 = vunpack.c.l.b16 %v1234
        %v3603 = vunpack.c.l.b16 %v1235
        %v3604 = vunpack.c.l.b16 %v1236
        %v3605 = vunpack.c.l.b16 %v1237
        %v3606 = vunpack.c.l.b16 %v1238
        %v3607 = vunpack.c.l.b16 %v1239
        %v3608 = vunpack.c.l.b16 %v1240
        %v3609 = vunpack.c.l.b16 %v1241
        %v3610 = vunpack.c.l.b16 %v1242
        %v3611 = vunpack.c.l.b16 %v1243
        %v3612 = vunpack.c.l.b16 %v1244
        %v3613 = vunpack.c.l.b16 %v1245
        %v3614 = vunpack.c.l.b16 %v1246
        %v3615 = vunpack.c.l.b16 %v1247
        %v3616 = vunpack.c.l.b16 %v1248
        %v3617 = vunpack.c.l.b16 %v1249
        %v3618 = vunpack.c.l.b16 %v1250
        %v3619 = vunpack.c.l.b16 %v1251
        %v3620 = vunpack.c.l.b16 %v1252
        %v3621 = vunpack.c.l.b16 %v1253
        %v3622 = vunpack.c.l.b16 %v1254
        %v3623 = vunpack.c.l.b16 %v1255
        %v3624 = vunpack.c.l.b16 %v1256
        %v3625 = vunpack.c.l.b16 %v1257
        %v3626 = vunpack.c.l.b16 %v1258
        %v3627 = vunpack.c.l.b16 %v1259
        %v3628 = vunpack.c.l.b16 %v1260
        %v3629 = vunpack.c.l.b16 %v1261
        %v3630 = vunpack.c.l.b16 %v1262
        %v3631 = vunpack.c.l.b16 %v1263
        %v3632 = vunpack.c.l.b16 %v1264
        %v3633 = vunpack.c.l.b16 %v1265
        %v3634 = vunpack.c.l.b16 %v1266
        %v3635 = vunpack.c.l.b16 %v1267
        %v3636 = vunpack.c.l.b16 %v1268
        %v3637 = vunpack.c.l.b16 %v1269
        %v3638 = vunpack.c.l.b16 %v1270
        %v3639 = vunpack.c.l.b16 %v1271
        %v3640 = vunpack.c.l.b16 %v1272
        %v3641 = vunpack.c.l.b16 %v1273
        %v3642 = vunpack.c.l.b16 %v1274
        %v3643 = vunpack.c.l.b16 %v1275
        %v3644 = vunpack.c.l.b16 %v1276
        %v3645 = vunpack.c.l.b16 %v1277
        %v3646 = vunpack.c.l.b16 %v1278
        %v3647 = vunpack.c.l.b16 %v1279
        %v3648 = vunpack.c.l.b16 %v1280
        %v3649 = vunpack.c.l.b16 %v1281
        %v3650 = vunpack.c.l.b16 %v1282
        %v3651 = vunpack.c.l.b16 %v1283
        %v3652 = vunpack.c.l.b16 %v1284
        %v3653 = vunpack.c.l.b16 %v1285
        %v3654 = vunpack.c.l.b16 %v1286
        %v3655 = vunpack.c.l.b16 %v1287
        %v3656 = vunpack.c.l.b16 %v1288
        %v3657 = vunpack.c.l.b16 %v1289
        %v3658 = vunpack.c.l.b16 %v1290
        %v3659 = vunpack.c.l.b16 %v1291
        %v3660 = vunpack.c.l.b16 %v1292
        %v3661 = vunpack.c.l.b16 %v1293
        %v3662 = vunpack.c.l.b16 %v1294
        %v3663 = vunpack.c.l.b16 %v1295
        %v3664 = vunpack.c.l.b16 %v1296
        %v3665 = vunpack.c.l.b16 %v1297
        %v3666 = vunpack.c.l.b16 %v1298
        %v3667 = vunpack.c.l.b16 %v1299
        %v3668 = vunpack.c.l.b16 %v1300
        %v3669 = vunpack.c.l.b16 %v1301
        %v3670 = vunpack.c.l.b16 %v1302
        %v3671 = vunpack.c.l.b16 %v1303
        %v3672 = vunpack.c.l.b16 %v1304
        %v3673 = vunpack.c.l.b16 %v1305
        %v3674 = vunpack.c.l.b16 %v1306
        %v3675 = vunpack.c.l.b16 %v1307
        %v3676 = vunpack.c.l.b16 %v1308
        %v3677 = vunpack.c.l.b16 %v1309
        %v3678 = vunpack.c.l.b16 %v1310
        %v3679 = vunpack.c.l.b16 %v1311
        %v3680 = vunpack.c.l.b16 %v1312
        %v3681 = vunpack.c.l.b16 %v1313
        %v3682 = vunpack.c.l.b16 %v1314
        %v3683 = vunpack.c.l.b16 %v1315
        %v3684 = vunpack.c.l.b16 %v1316
        %v3685 = vunpack.c.l.b16 %v1317
        %v3686 = vunpack.c.l.b16 %v1318
        %v3687 = vunpack.c.l.b16 %v1319
        %v3688 = vunpack.c.l.b16 %v1320
        %v3689 = vunpack.c.l.b16 %v1321
        %v3690 = vunpack.c.l.b16 %v1322
        %v3691 = vunpack.c.l.b16 %v1323
        %v3692 = vunpack.c.l.b16 %v1324
        %v3693 = vunpack.c.l.b16 %v1325
        %v3694 = vunpack.c.l.b16 %v1326
        %v3695 = vunpack.c.l.b16 %v1327
        %v3696 = vunpack.c.l.b16 %v1328
        %v3697 = vunpack.c.l.b16 %v1329
        %v3698 = vunpack.c.l.b16 %v1330
        %v3699 = vunpack.c.l.b16 %v1331
        %v3700 = vunpack.c.l.b16 %v1332
        %v3701 = vunpack.c.l.b16 %v1333
        %v3702 = vunpack.c.l.b16 %v1334
        %v3703 = vunpack.c.l.b16 %v1335
        %v3704 = vunpack.c.l.b16 %v1336
        %v3705 = vunpack.c.l.b16 %v1337
        %v3706 = vunpack.c.l.b16 %v1338
        %v3707 = vunpack.c.l.b16 %v1339
        %v3708 = vunpack.c.l.b16 %v1340
        %v3709 = vunpack.c.l.b16 %v1341
        %v3710 = vunpack.c.l.b16 %v1342
        %v3711 = vunpack.c.l.b16 %v1343
        %v3712 = vunpack.c.l.b16 %v1344
        %v3713 = vunpack.c.l.b16 %v1345
        %v3714 = vunpack.c.l.b16 %v1346
        %v3715 = vunpack.c.l.b16 %v1347
        %v3716 = vunpack.c.l.b16 %v1348
        %v3717 = vunpack.c.l.b16 %v1349
        %v3718 = vunpack.c.l.b16 %v1350
        %v3719 = vunpack.c.l.b16 %v1351
        %v3720 = vunpack.c.l.b16 %v1352
        %v3721 = vunpack.c.l.b16 %v1353
        %v3722 = vunpack.c.l.b16 %v1354
        %v3723 = vunpack.c.l.b16 %v1355
        %v3724 = vunpack.c.l.b16 %v1356
        %v3725 = vunpack.c.l.b16 %v1357
        %v3726 = vunpack.c.l.b16 %v1358
        %v3727 = vunpack.c.l.b16 %v1359
        %v3728 = vunpack.c.l.b16 %v1360
        %v3729 = vunpack.c.l.b16 %v1361
        %v3730 = vunpack.c.l.b16 %v1362
        %v3731 = vunpack.c.l.b16 %v1363
        %v3732 = vunpack.c.l.b16 %v1364
        %v3733 = vunpack.c.l.b16 %v1365
        %v3734 = vunpack.c.l.b16 %v1366
        %v3735 = vunpack.c.l.b16 %v1367
        %v3736 = vunpack.c.l.b16 %v1368
        %v3737 = vunpack.c.l.b16 %v1369
        %v3738 = vunpack.c.l.b16 %v1370
        %v3739 = vunpack.c.l.b16 %v1371
        %v3740 = vunpack.c.l.b16 %v1372
        %v3741 = vunpack.c.l.b16 %v1373
        %v3742 = vunpack.c.l.b16 %v1374
        %v3743 = vunpack.c.l.b16 %v1375
        %v3744 = vunpack.c.l.b16 %v1376
        %v3745 = vunpack.c.l.b16 %v1377
        %v3746 = vunpack.c.l.b16 %v1378
        %v3747 = vunpack.c.l.b16 %v1379
        %v3748 = vunpack.c.l.b16 %v1380
        %v3749 = vunpack.c.l.b16 %v1381
        %v3750 = vunpack.c.l.b16 %v1382
        %v3751 = vunpack.c.l.b16 %v1383
        %v3752 = vunpack.c.l.b16 %v1384
        %v3753 = vunpack.c.l.b16 %v1385
        %v3754 = vunpack.c.l.b16 %v1386
        %v3755 = vunpack.c.l.b16 %v1387
        %v3756 = vunpack.c.l.b16 %v1388
        %v3757 = vunpack.c.l.b16 %v1389
        %v3758 = vunpack.c.l.b16 %v1390
        %v3759 = vunpack.c.l.b16 %v1391
        %v3760 = vunpack.c.l.b16 %v1392
        %v3761 = vunpack.c.l.b16 %v1393
        %v3762 = vunpack.c.l.b16 %v1394
        %v3763 = vunpack.c.l.b16 %v1395
        %v3764 = vunpack.c.l.b16 %v1396
        %v3765 = vunpack.c.l.b16 %v1397
        %v3766 = vunpack.c.l.b16 %v1398
        %v3767 = vunpack.c.l.b16 %v1399
        %v3768 = vunpack.c.l.b16 %v1400
        %v3769 = vunpack.c.l.b16 %v1401
        %v3770 = vunpack.c.l.b16 %v1402
        %v3771 = vunpack.c.l.b16 %v1403
        %v3772 = vunpack.c.l.b16 %v1404
        %v3773 = vunpack.c.l.b16 %v1405
        %v3774 = vunpack.c.l.b16 %v1406
        %v3775 = vunpack.c.l.b16 %v1407
        %v3776 = vunpack.c.l.b16 %v1408
        %v3777 = vunpack.c.l.b16 %v1409
        %v3778 = vunpack.c.l.b16 %v1410
        %v3779 = vunpack.c.l.b16 %v1411
        %v3780 = vunpack.c.l.b16 %v1412
        %v3781 = vunpack.c.l.b16 %v1413
        %v3782 = vunpack.c.l.b16 %v1414
        %v3783 = vunpack.c.l.b16 %v1415
        %v3784 = vunpack.c.l.b16 %v1416
        %v3785 = vunpack.c.l.b16 %v1417
        %v3786 = vunpack.c.l.b16 %v1418
        %v3787 = vunpack.c.l.b16 %v1419
        %v3788 = vunpack.c.l.b16 %v1420
        %v3789 = vunpack.c.l.b16 %v1421
        %v3790 = vunpack.c.l.b16 %v1422
        %v3791 = vunpack.c.l.b16 %v1423
        %v3792 = vunpack.c.l.b16 %v1424
        %v3793 = vunpack.c.l.b16 %v1425
        %v3794 = vunpack.c.l.b16 %v1426
        %v3795 = vunpack.c.l.b16 %v1427
        %v3796 = vunpack.c.l.b16 %v1428
        %v3797 = vunpack.c.l.b16 %v1429
        %v3798 = vunpack.c.l.b16 %v1430
        %v3799 = vunpack.c.l.b16 %v1431
        %v3800 = vunpack.c.l.b16 %v1432
        %v3801 = vunpack.c.l.b16 %v1433
        %v3802 = vunpack.c.l.b16 %v1434
        %v3803 = vunpack.c.l.b16 %v1435
        %v3804 = vunpack.c.l.b16 %v1436
        %v3805 = vunpack.c.l.b16 %v1437
        %v3806 = vunpack.c.l.b16 %v1438
        %v3807 = vunpack.c.l.b16 %v1439
        %v3808 = vunpack.c.l.b16 %v1440
        %v3809 = vunpack.c.l.b16 %v1441
        %v3810 = vunpack.c.l.b16 %v1442
        %v3811 = vunpack.c.l.b16 %v1443
        %v3812 = vunpack.c.l.b16 %v1444
        %v3813 = vunpack.c.l.b16 %v1445
        %v3814 = vunpack.c.l.b16 %v1446
        %v3815 = vunpack.c.l.b16 %v1447
        %v3816 = vunpack.c.l.b16 %v1448
        %v3817 = vunpack.c.l.b16 %v1449
        %v3818 = vunpack.c.l.b16 %v1450
        %v3819 = vunpack.c.l.b16 %v1451
        %v3820 = vunpack.c.l.b16 %v1452
        %v3821 = vunpack.c.l.b16 %v1453
        %v3822 = vunpack.c.l.b16 %v1454
        %v3823 = vunpack.c.l.b16 %v1455
        %v3824 = vunpack.c.l.b16 %v1456
        %v3825 = vpack.c.b16 %v2802, %v2801
        %v3826 = vpack.c.b16 %v2804, %v2803
        %v3827 = vpack.c.b16 %v2806, %v2805
        %v3828 = vpack.c.b16 %v2808, %v2807
        %v3829 = vpack.c.b16 %v2810, %v2809
        %v3830 = vpack.c.b16 %v2812, %v2811
        %v3831 = vpack.c.b16 %v2814, %v2813
        %v3832 = vpack.c.b16 %v2816, %v2815
        %v3833 = vpack.c.b16 %v2818, %v2817
        %v3834 = vpack.c.b16 %v2820, %v2819
        %v3835 = vpack.c.b16 %v2822, %v2821
        %v3836 = vpack.c.b16 %v2824, %v2823
        %v3837 = vpack.c.b16 %v2826, %v2825
        %v3838 = vpack.c.b16 %v2828, %v2827
        %v3839 = vpack.c.b16 %v2830, %v2829
        %v3840 = vpack.c.b16 %v2832, %v2831
        %v3841 = vpack.c.b16 %v2834, %v2833
        %v3842 = vpack.c.b16 %v2836, %v2835
        %v3843 = vpack.c.b16 %v2838, %v2837
        %v3844 = vpack.c.b16 %v2840, %v2839
        %v3845 = vpack.c.b16 %v2842, %v2841
        %v3846 = vpack.c.b16 %v2844, %v2843
        %v3847 = vpack.c.b16 %v2846, %v2845
        %v3848 = vpack.c.b16 %v2848, %v2847
        %v3849 = vpack.c.b16 %v2850, %v2849
        %v3850 = vpack.c.b16 %v2852, %v2851
        %v3851 = vpack.c.b16 %v2854, %v2853
        %v3852 = vpack.c.b16 %v2856, %v2855
        %v3853 = vpack.c.b16 %v2858, %v2857
        %v3854 = vpack.c.b16 %v2860, %v2859
        %v3855 = vpack.c.b16 %v2862, %v2861
        %v3856 = vpack.c.b16 %v2864, %v2863
        %v3857 = vpack.c.b16 %v2866, %v2865
        %v3858 = vpack.c.b16 %v2868, %v2867
        %v3859 = vpack.c.b16 %v2870, %v2869
        %v3860 = vpack.c.b16 %v2872, %v2871
        %v3861 = vpack.c.b16 %v2874, %v2873
        %v3862 = vpack.c.b16 %v2876, %v2875
        %v3863 = vpack.c.b16 %v2878, %v2877
        %v3864 = vpack.c.b16 %v2880, %v2879
        %v3865 = vpack.c.b16 %v2882, %v2881
        %v3866 = vpack.c.b16 %v2884, %v2883
        %v3867 = vpack.c.b16 %v2886, %v2885
        %v3868 = vpack.c.b16 %v2888, %v2887
        %v3869 = vpack.c.b16 %v2890, %v2889
        %v3870 = vpack.c.b16 %v2892, %v2891
        %v3871 = vpack.c.b16 %v2894, %v2893
        %v3872 = vpack.c.b16 %v2896, %v2895
        %v3873 = vpack.c.b16 %v2898, %v2897
        %v3874 = vpack.c.b16 %v2900, %v2899
        %v3875 = vpack.c.b16 %v2902, %v2901
        %v3876 = vpack.c.b16 %v2904, %v2903
        %v3877 = vpack.c.b16 %v2906, %v2905
        %v3878 = vpack.c.b16 %v2908, %v2907
        %v3879 = vpack.c.b16 %v2910, %v2909
        %v3880 = vpack.c.b16 %v2912, %v2911
        %v3881 = vpack.c.b16 %v2914, %v2913
        %v3882 = vpack.c.b16 %v2916, %v2915
        %v3883 = vpack.c.b16 %v2918, %v2917
        %v3884 = vpack.c.b16 %v2920, %v2919
        %v3885 = vpack.c.b16 %v2922, %v2921
        %v3886 = vpack.c.b16 %v2924, %v2923
        %v3887 = vpack.c.b16 %v2926, %v2925
        %v3888 = vpack.c.b16 %v2928, %v2927
        %v3889 = vpack.c.b16 %v2930, %v2929
        %v3890 = vpack.c.b16 %v2932, %v2931
        %v3891 = vpack.c.b16 %v2934, %v2933
        %v3892 = vpack.c.b16 %v2936, %v2935
        %v3893 = vpack.c.b16 %v2938, %v2937
        %v3894 = vpack.c.b16 %v2940, %v2939
        %v3895 = vpack.c.b16 %v2942, %v2941
        %v3896 = vpack.c.b16 %v2944, %v2943
        %v3897 = vpack.c.b16 %v2946, %v2945
        %v3898 = vpack.c.b16 %v2948, %v2947
        %v3899 = vpack.c.b16 %v2950, %v2949
        %v3900 = vpack.c.b16 %v2952, %v2951
        %v3901 = vpack.c.b16 %v2954, %v2953
        %v3902 = vpack.c.b16 %v2956, %v2955
        %v3903 = vpack.c.b16 %v2958, %v2957
        %v3904 = vpack.c.b16 %v2960, %v2959
        %v3905 = vpack.c.b16 %v2962, %v2961
        %v3906 = vpack.c.b16 %v2964, %v2963
        %v3907 = vpack.c.b16 %v2966, %v2965
        %v3908 = vpack.c.b16 %v2968, %v2967
        %v3909 = vpack.c.b16 %v2970, %v2969
        %v3910 = vpack.c.b16 %v2972, %v2971
        %v3911 = vpack.c.b16 %v2974, %v2973
        %v3912 = vpack.c.b16 %v2976, %v2975
        %v3913 = vpack.c.b16 %v2978, %v2977
        %v3914 = vpack.c.b16 %v2980, %v2979
        %v3915 = vpack.c.b16 %v2982, %v2981
        %v3916 = vpack.c.b16 %v2984, %v2983
        %v3917 = vpack.c.b16 %v2986, %v2985
        %v3918 = vpack.c.b16 %v2988, %v2987
        %v3919 = vpack.c.b16 %v2990, %v2989
        %v3920 = vpack.c.b16 %v2992, %v2991
        %v3921 = vpack.c.b16 %v2994, %v2993
        %v3922 = vpack.c.b16 %v2996, %v2995
        %v3923 = vpack.c.b16 %v2998, %v2997
        %v3924 = vpack.c.b16 %v3000, %v2999
        %v3925 = vpack.c.b16 %v3002, %v3001
        %v3926 = vpack.c.b16 %v3004, %v3003
        %v3927 = vpack.c.b16 %v3006, %v3005
        %v3928 = vpack.c.b16 %v3008, %v3007
        %v3929 = vpack.c.b16 %v3010, %v3009
        %v3930 = vpack.c.b16 %v3012, %v3011
        %v3931 = vpack.c.b16 %v3014, %v3013
        %v3932 = vpack.c.b16 %v3016, %v3015
        %v3933 = vpack.c.b16 %v3018, %v3017
        %v3934 = vpack.c.b16 %v3020, %v3019
        %v3935 = vpack.c.b16 %v3022, %v3021
        %v3936 = vpack.c.b16 %v3024, %v3023
        %v3937 = vpack.c.b16 %v3026, %v3025
        %v3938 = vpack.c.b16 %v3028, %v3027
        %v3939 = vpack.c.b16 %v3030, %v3029
        %v3940 = vpack.c.b16 %v3032, %v3031
        %v3941 = vpack.c.b16 %v3034, %v3033
        %v3942 = vpack.c.b16 %v3036, %v3035
        %v3943 = vpack.c.b16 %v3038, %v3037
        %v3944 = vpack.c.b16 %v3040, %v3039
        %v3945 = vpack.c.b16 %v3042, %v3041
        %v3946 = vpack.c.b16 %v3044, %v3043
        %v3947 = vpack.c.b16 %v3046, %v3045
        %v3948 = vpack.c.b16 %v3048, %v3047
        %v3949 = vpack.c.b16 %v3050, %v3049
        %v3950 = vpack.c.b16 %v3052, %v3051
        %v3951 = vpack.c.b16 %v3054, %v3053
        %v3952 = vpack.c.b16 %v3056, %v3055
        %v3953 = vpack.c.b16 %v3058, %v3057
        %v3954 = vpack.c.b16 %v3060, %v3059
        %v3955 = vpack.c.b16 %v3062, %v3061
        %v3956 = vpack.c.b16 %v3064, %v3063
        %v3957 = vpack.c.b16 %v3066, %v3065
        %v3958 = vpack.c.b16 %v3068, %v3067
        %v3959 = vpack.c.b16 %v3070, %v3069
        %v3960 = vpack.c.b16 %v3072, %v3071
        %v3961 = vpack.c.b16 %v3074, %v3073
        %v3962 = vpack.c.b16 %v3076, %v3075
        %v3963 = vpack.c.b16 %v3078, %v3077
        %v3964 = vpack.c.b16 %v3080, %v3079
        %v3965 = vpack.c.b16 %v3082, %v3081
        %v3966 = vpack.c.b16 %v3084, %v3083
        %v3967 = vpack.c.b16 %v3086, %v3085
        %v3968 = vpack.c.b16 %v3088, %v3087
        %v3969 = vpack.c.b16 %v3090, %v3089
        %v3970 = vpack.c.b16 %v3092, %v3091
        %v3971 = vpack.c.b16 %v3094, %v3093
        %v3972 = vpack.c.b16 %v3096, %v3095
        %v3973 = vpack.c.b16 %v3098, %v3097
        %v3974 = vpack.c.b16 %v3100, %v3099
        %v3975 = vpack.c.b16 %v3102, %v3101
        %v3976 = vpack.c.b16 %v3104, %v3103
        %v3977 = vpack.c.b16 %v3106, %v3105
        %v3978 = vpack.c.b16 %v3108, %v3107
        %v3979 = vpack.c.b16 %v3110, %v3109
        %v3980 = vpack.c.b16 %v3112, %v3111
        %v3981 = vpack.c.b16 %v3114, %v3113
        %v3982 = vpack.c.b16 %v3116, %v3115
        %v3983 = vpack.c.b16 %v3118, %v3117
        %v3984 = vpack.c.b16 %v3120, %v3119
        %v3985 = vpack.c.b16 %v3122, %v3121
        %v3986 = vpack.c.b16 %v3124, %v3123
        %v3987 = vpack.c.b16 %v3126, %v3125
        %v3988 = vpack.c.b16 %v3128, %v3127
        %v3989 = vpack.c.b16 %v3130, %v3129
        %v3990 = vpack.c.b16 %v3132, %v3131
        %v3991 = vpack.c.b16 %v3134, %v3133
        %v3992 = vpack.c.b16 %v3136, %v3135
        %v3993 = vpack.c.b16 %v3138, %v3137
        %v3994 = vpack.c.b16 %v3140, %v3139
        %v3995 = vpack.c.b16 %v3142, %v3141
        %v3996 = vpack.c.b16 %v3144, %v3143
        %v3997 = vpack.c.b16 %v3146, %v3145
        %v3998 = vpack.c.b16 %v3148, %v3147
        %v3999 = vpack.c.b16 %v3150, %v3149
        %v4000 = vpack.c.b16 %v3152, %v3151
        %v4001 = vpack.c.b16 %v3154, %v3153
        %v4002 = vpack.c.b16 %v3156, %v3155
        %v4003 = vpack.c.b16 %v3158, %v3157
        %v4004 = vpack.c.b16 %v3160, %v3159
        %v4005 = vpack.c.b16 %v3162, %v3161
        %v4006 = vpack.c.b16 %v3164, %v3163
        %v4007 = vpack.c.b16 %v3166, %v3165
        %v4008 = vpack.c.b16 %v3168, %v3167
        %v4009 = vpack.c.b16 %v3170, %v3169
        %v4010 = vpack.c.b16 %v3172, %v3171
        %v4011 = vpack.c.b16 %v3174, %v3173
        %v4012 = vpack.c.b16 %v3176, %v3175
        %v4013 = vpack.c.b16 %v3178, %v3177
        %v4014 = vpack.c.b16 %v3180, %v3179
        %v4015 = vpack.c.b16 %v3182, %v3181
        %v4016 = vpack.c.b16 %v3184, %v3183
        %v4017 = vpack.c.b16 %v3186, %v3185
        %v4018 = vpack.c.b16 %v3188, %v3187
        %v4019 = vpack.c.b16 %v3190, %v3189
        %v4020 = vpack.c.b16 %v3192, %v3191
        %v4021 = vpack.c.b16 %v3194, %v3193
        %v4022 = vpack.c.b16 %v3196, %v3195
        %v4023 = vpack.c.b16 %v3198, %v3197
        %v4024 = vpack.c.b16 %v3200, %v3199
        %v4025 = vpack.c.b16 %v3202, %v3201
        %v4026 = vpack.c.b16 %v3204, %v3203
        %v4027 = vpack.c.b16 %v3206, %v3205
        %v4028 = vpack.c.b16 %v3208, %v3207
        %v4029 = vpack.c.b16 %v3210, %v3209
        %v4030 = vpack.c.b16 %v3212, %v3211
        %v4031 = vpack.c.b16 %v3214, %v3213
        %v4032 = vpack.c.b16 %v3216, %v3215
        %v4033 = vpack.c.b16 %v3218, %v3217
        %v4034 = vpack.c.b16 %v3220, %v3219
        %v4035 = vpack.c.b16 %v3222, %v3221
        %v4036 = vpack.c.b16 %v3224, %v3223
        %v4037 = vpack.c.b16 %v3226, %v3225
        %v4038 = vpack.c.b16 %v3228, %v3227
        %v4039 = vpack.c.b16 %v3230, %v3229
        %v4040 = vpack.c.b16 %v3232, %v3231
        %v4041 = vpack.c.b16 %v3234, %v3233
        %v4042 = vpack.c.b16 %v3236, %v3235
        %v4043 = vpack.c.b16 %v3238, %v3237
        %v4044 = vpack.c.b16 %v3240, %v3239
        %v4045 = vpack.c.b16 %v3242, %v3241
        %v4046 = vpack.c.b16 %v3244, %v3243
        %v4047 = vpack.c.b16 %v3246, %v3245
        %v4048 = vpack.c.b16 %v3248, %v3247
        %v4049 = vpack.c.b16 %v3250, %v3249
        %v4050 = vpack.c.b16 %v3252, %v3251
        %v4051 = vpack.c.b16 %v3254, %v3253
        %v4052 = vpack.c.b16 %v3256, %v3255
        %v4053 = vpack.c.b16 %v3258, %v3257
        %v4054 = vpack.c.b16 %v3260, %v3259
        %v4055 = vpack.c.b16 %v3262, %v3261
        %v4056 = vpack.c.b16 %v3264, %v3263
        %v4057 = vpack.c.b16 %v3266, %v3265
        %v4058 = vpack.c.b16 %v3268, %v3267
        %v4059 = vpack.c.b16 %v3270, %v3269
        %v4060 = vpack.c.b16 %v3272, %v3271
        %v4061 = vpack.c.b16 %v3274, %v3273
        %v4062 = vpack.c.b16 %v3276, %v3275
        %v4063 = vpack.c.b16 %v3278, %v3277
        %v4064 = vpack.c.b16 %v3280, %v3279
        %v4065 = vpack.c.b16 %v3282, %v3281
        %v4066 = vpack.c.b16 %v3284, %v3283
        %v4067 = vpack.c.b16 %v3286, %v3285
        %v4068 = vpack.c.b16 %v3288, %v3287
        %v4069 = vpack.c.b16 %v3290, %v3289
        %v4070 = vpack.c.b16 %v3292, %v3291
        %v4071 = vpack.c.b16 %v3294, %v3293
        %v4072 = vpack.c.b16 %v3296, %v3295
        %v4073 = vpack.c.b16 %v3298, %v3297
        %v4074 = vpack.c.b16 %v3300, %v3299
        %v4075 = vpack.c.b16 %v3302, %v3301
        %v4076 = vpack.c.b16 %v3304, %v3303
        %v4077 = vpack.c.b16 %v3306, %v3305
        %v4078 = vpack.c.b16 %v3308, %v3307
        %v4079 = vpack.c.b16 %v3310, %v3309
        %v4080 = vpack.c.b16 %v3312, %v3311
        %v4081 = vpack.c.b16 %v3314, %v3313
        %v4082 = vpack.c.b16 %v3316, %v3315
        %v4083 = vpack.c.b16 %v3318, %v3317
        %v4084 = vpack.c.b16 %v3320, %v3319
        %v4085 = vpack.c.b16 %v3322, %v3321
        %v4086 = vpack.c.b16 %v3324, %v3323
        %v4087 = vpack.c.b16 %v3326, %v3325
        %v4088 = vpack.c.b16 %v3328, %v3327
        %v4089 = vpack.c.b16 %v3330, %v3329
        %v4090 = vpack.c.b16 %v3332, %v3331
        %v4091 = vpack.c.b16 %v3334, %v3333
        %v4092 = vpack.c.b16 %v3336, %v3335
        %v4093 = vpack.c.b16 %v3338, %v3337
        %v4094 = vpack.c.b16 %v3340, %v3339
        %v4095 = vpack.c.b16 %v3342, %v3341
        %v4096 = vpack.c.b16 %v3344, %v3343
        %v4097 = vpack.c.b16 %v3346, %v3345
        %v4098 = vpack.c.b16 %v3348, %v3347
        %v4099 = vpack.c.b16 %v3350, %v3349
        %v4100 = vpack.c.b16 %v3352, %v3351
        %v4101 = vpack.c.b16 %v3354, %v3353
        %v4102 = vpack.c.b16 %v3356, %v3355
        %v4103 = vpack.c.b16 %v3358, %v3357
        %v4104 = vpack.c.b16 %v3360, %v3359
        %v4105 = vpack.c.b16 %v3362, %v3361
        %v4106 = vpack.c.b16 %v3364, %v3363
        %v4107 = vpack.c.b16 %v3366, %v3365
        %v4108 = vpack.c.b16 %v3368, %v3367
        %v4109 = vpack.c.b16 %v3370, %v3369
        %v4110 = vpack.c.b16 %v3372, %v3371
        %v4111 = vpack.c.b16 %v3374, %v3373
        %v4112 = vpack.c.b16 %v3376, %v3375
        %v4113 = vpack.c.b16 %v3378, %v3377
        %v4114 = vpack.c.b16 %v3380, %v3379
        %v4115 = vpack.c.b16 %v3382, %v3381
        %v4116 = vpack.c.b16 %v3384, %v3383
        %v4117 = vpack.c.b16 %v3386, %v3385
        %v4118 = vpack.c.b16 %v3388, %v3387
        %v4119 = vpack.c.b16 %v3390, %v3389
        %v4120 = vpack.c.b16 %v3392, %v3391
        %v4121 = vpack.c.b16 %v3394, %v3393
        %v4122 = vpack.c.b16 %v3396, %v3395
        %v4123 = vpack.c.b16 %v3398, %v3397
        %v4124 = vpack.c.b16 %v3400, %v3399
        %v4125 = vpack.c.b16 %v3402, %v3401
        %v4126 = vpack.c.b16 %v3404, %v3403
        %v4127 = vpack.c.b16 %v3406, %v3405
        %v4128 = vpack.c.b16 %v3408, %v3407
        %v4129 = vpack.c.b16 %v3410, %v3409
        %v4130 = vpack.c.b16 %v3412, %v3411
        %v4131 = vpack.c.b16 %v3414, %v3413
        %v4132 = vpack.c.b16 %v3416, %v3415
        %v4133 = vpack.c.b16 %v3418, %v3417
        %v4134 = vpack.c.b16 %v3420, %v3419
        %v4135 = vpack.c.b16 %v3422, %v3421
        %v4136 = vpack.c.b16 %v3424, %v3423
        %v4137 = vpack.c.b16 %v3426, %v3425
        %v4138 = vpack.c.b16 %v3428, %v3427
        %v4139 = vpack.c.b16 %v3430, %v3429
        %v4140 = vpack.c.b16 %v3432, %v3431
        %v4141 = vpack.c.b16 %v3434, %v3433
        %v4142 = vpack.c.b16 %v3436, %v3435
        %v4143 = vpack.c.b16 %v3438, %v3437
        %v4144 = vpack.c.b16 %v3440, %v3439
        %v4145 = vpack.c.b16 %v3442, %v3441
        %v4146 = vpack.c.b16 %v3444, %v3443
        %v4147 = vpack.c.b16 %v3446, %v3445
        %v4148 = vpack.c.b16 %v3448, %v3447
        %v4149 = vpack.c.b16 %v3450, %v3449
        %v4150 = vpack.c.b16 %v3452, %v3451
        %v4151 = vpack.c.b16 %v3454, %v3453
        %v4152 = vpack.c.b16 %v3456, %v3455
        %v4153 = vpack.c.b16 %v3458, %v3457
        %v4154 = vpack.c.b16 %v3460, %v3459
        %v4155 = vpack.c.b16 %v3462, %v3461
        %v4156 = vpack.c.b16 %v3464, %v3463
        %v4157 = vpack.c.b16 %v3466, %v3465
        %v4158 = vpack.c.b16 %v3468, %v3467
        %v4159 = vpack.c.b16 %v3470, %v3469
        %v4160 = vpack.c.b16 %v3472, %v3471
        %v4161 = vpack.c.b16 %v3474, %v3473
        %v4162 = vpack.c.b16 %v3476, %v3475
        %v4163 = vpack.c.b16 %v3478, %v3477
        %v4164 = vpack.c.b16 %v3480, %v3479
        %v4165 = vpack.c.b16 %v3482, %v3481
        %v4166 = vpack.c.b16 %v3484, %v3483
        %v4167 = vpack.c.b16 %v3486, %v3485
        %v4168 = vpack.c.b16 %v3488, %v3487
        %v4169 = vpack.c.b16 %v3490, %v3489
        %v4170 = vpack.c.b16 %v3492, %v3491
        %v4171 = vpack.c.b16 %v3494, %v3493
        %v4172 = vpack.c.b16 %v3496, %v3495
        %v4173 = vpack.c.b16 %v3498, %v3497
        %v4174 = vpack.c.b16 %v3500, %v3499
        %v4175 = vpack.c.b16 %v3502, %v3501
        %v4176 = vpack.c.b16 %v3504, %v3503
        %v4177 = vpack.c.b16 %v3506, %v3505
        %v4178 = vpack.c.b16 %v3508, %v3507
        %v4179 = vpack.c.b16 %v3510, %v3509
        %v4180 = vpack.c.b16 %v3512, %v3511
        %v4181 = vpack.c.b16 %v3514, %v3513
        %v4182 = vpack.c.b16 %v3516, %v3515
        %v4183 = vpack.c.b16 %v3518, %v3517
        %v4184 = vpack.c.b16 %v3520, %v3519
        %v4185 = vpack.c.b16 %v3522, %v3521
        %v4186 = vpack.c.b16 %v3524, %v3523
        %v4187 = vpack.c.b16 %v3526, %v3525
        %v4188 = vpack.c.b16 %v3528, %v3527
        %v4189 = vpack.c.b16 %v3530, %v3529
        %v4190 = vpack.c.b16 %v3532, %v3531
        %v4191 = vpack.c.b16 %v3534, %v3533
        %v4192 = vpack.c.b16 %v3536, %v3535
        %v4193 = vpack.c.b16 %v3538, %v3537
        %v4194 = vpack.c.b16 %v3540, %v3539
        %v4195 = vpack.c.b16 %v3542, %v3541
        %v4196 = vpack.c.b16 %v3544, %v3543
        %v4197 = vpack.c.b16 %v3546, %v3545
        %v4198 = vpack.c.b16 %v3548, %v3547
        %v4199 = vpack.c.b16 %v3550, %v3549
        %v4200 = vpack.c.b16 %v3552, %v3551
        %v4201 = vpack.c.b16 %v3554, %v3553
        %v4202 = vpack.c.b16 %v3556, %v3555
        %v4203 = vpack.c.b16 %v3558, %v3557
        %v4204 = vpack.c.b16 %v3560, %v3559
        %v4205 = vpack.c.b16 %v3562, %v3561
        %v4206 = vpack.c.b16 %v3564, %v3563
        %v4207 = vpack.c.b16 %v3566, %v3565
        %v4208 = vpack.c.b16 %v3568, %v3567
        %v4209 = vpack.c.b16 %v3570, %v3569
        %v4210 = vpack.c.b16 %v3572, %v3571
        %v4211 = vpack.c.b16 %v3574, %v3573
        %v4212 = vpack.c.b16 %v3576, %v3575
        %v4213 = vpack.c.b16 %v3578, %v3577
        %v4214 = vpack.c.b16 %v3580, %v3579
        %v4215 = vpack.c.b16 %v3582, %v3581
        %v4216 = vpack.c.b16 %v3584, %v3583
        %v4217 = vpack.c.b16 %v3586, %v3585
        %v4218 = vpack.c.b16 %v3588, %v3587
        %v4219 = vpack.c.b16 %v3590, %v3589
        %v4220 = vpack.c.b16 %v3592, %v3591
        %v4221 = vpack.c.b16 %v3594, %v3593
        %v4222 = vpack.c.b16 %v3596, %v3595
        %v4223 = vpack.c.b16 %v3598, %v3597
        %v4224 = vpack.c.b16 %v3600, %v3599
        %v4225 = vpack.c.b16 %v3602, %v3601
        %v4226 = vpack.c.b16 %v3604, %v3603
        %v4227 = vpack.c.b16 %v3606, %v3605
        %v4228 = vpack.c.b16 %v3608, %v3607
        %v4229 = vpack.c.b16 %v3610, %v3609
        %v4230 = vpack.c.b16 %v3612, %v3611
        %v4231 = vpack.c.b16 %v3614, %v3613
        %v4232 = vpack.c.b16 %v3616, %v3615
        %v4233 = vpack.c.b16 %v3618, %v3617
        %v4234 = vpack.c.b16 %v3620, %v3619
        %v4235 = vpack.c.b16 %v3622, %v3621
        %v4236 = vpack.c.b16 %v3624, %v3623
        %v4237 = vpack.c.b16 %v3626, %v3625
        %v4238 = vpack.c.b16 %v3628, %v3627
        %v4239 = vpack.c.b16 %v3630, %v3629
        %v4240 = vpack.c.b16 %v3632, %v3631
        %v4241 = vpack.c.b16 %v3634, %v3633
        %v4242 = vpack.c.b16 %v3636, %v3635
        %v4243 = vpack.c.b16 %v3638, %v3637
        %v4244 = vpack.c.b16 %v3640, %v3639
        %v4245 = vpack.c.b16 %v3642, %v3641
        %v4246 = vpack.c.b16 %v3644, %v3643
        %v4247 = vpack.c.b16 %v3646, %v3645
        %v4248 = vpack.c.b16 %v3648, %v3647
        %v4249 = vpack.c.b16 %v3650, %v3649
        %v4250 = vpack.c.b16 %v3652, %v3651
        %v4251 = vpack.c.b16 %v3654, %v3653
        %v4252 = vpack.c.b16 %v3656, %v3655
        %v4253 = vpack.c.b16 %v3658, %v3657
        %v4254 = vpack.c.b16 %v3660, %v3659
        %v4255 = vpack.c.b16 %v3662, %v3661
        %v4256 = vpack.c.b16 %v3664, %v3663
        %v4257 = vpack.c.b16 %v3666, %v3665
        %v4258 = vpack.c.b16 %v3668, %v3667
        %v4259 = vpack.c.b16 %v3670, %v3669
        %v4260 = vpack.c.b16 %v3672, %v3671
        %v4261 = vpack.c.b16 %v3674, %v3673
        %v4262 = vpack.c.b16 %v3676, %v3675
        %v4263 = vpack.c.b16 %v3678, %v3677
        %v4264 = vpack.c.b16 %v3680, %v3679
        %v4265 = vpack.c.b16 %v3682, %v3681
        %v4266 = vpack.c.b16 %v3684, %v3683
        %v4267 = vpack.c.b16 %v3686, %v3685
        %v4268 = vpack.c.b16 %v3688, %v3687
        %v4269 = vpack.c.b16 %v3690, %v3689
        %v4270 = vpack.c.b16 %v3692, %v3691
        %v4271 = vpack.c.b16 %v3694, %v3693
        %v4272 = vpack.c.b16 %v3696, %v3695
        %v4273 = vpack.c.b16 %v3698, %v3697
        %v4274 = vpack.c.b16 %v3700, %v3699
        %v4275 = vpack.c.b16 %v3702, %v3701
        %v4276 = vpack.c.b16 %v3704, %v3703
        %v4277 = vpack.c.b16 %v3706, %v3705
        %v4278 = vpack.c.b16 %v3708, %v3707
        %v4279 = vpack.c.b16 %v3710, %v3709
        %v4280 = vpack.c.b16 %v3712, %v3711
        %v4281 = vpack.c.b16 %v3714, %v3713
        %v4282 = vpack.c.b16 %v3716, %v3715
        %v4283 = vpack.c.b16 %v3718, %v3717
        %v4284 = vpack.c.b16 %v3720, %v3719
        %v4285 = vpack.c.b16 %v3722, %v3721
        %v4286 = vpack.c.b16 %v3724, %v3723
        %v4287 = vpack.c.b16 %v3726, %v3725
        %v4288 = vpack.c.b16 %v3728, %v3727
        %v4289 = vpack.c.b16 %v3730, %v3729
        %v4290 = vpack.c.b16 %v3732, %v3731
        %v4291 = vpack.c.b16 %v3734, %v3733
        %v4292 = vpack.c.b16 %v3736, %v3735
        %v4293 = vpack.c.b16 %v3738, %v3737
        %v4294 = vpack.c.b16 %v3740, %v3739
        %v4295 = vpack.c.b16 %v3742, %v3741
        %v4296 = vpack.c.b16 %v3744, %v3743
        %v4297 = vpack.c.b16 %v3746, %v3745
        %v4298 = vpack.c.b16 %v3748, %v3747
        %v4299 = vpack.c.b16 %v3750, %v3749
        %v4300 = vpack.c.b16 %v3752, %v3751
        %v4301 = vpack.c.b16 %v3754, %v3753
        %v4302 = vpack.c.b16 %v3756, %v3755
        %v4303 = vpack.c.b16 %v3758, %v3757
        %v4304 = vpack.c.b16 %v3760, %v3759
        %v4305 = vpack.c.b16 %v3762, %v3761
        %v4306 = vpack.c.b16 %v3764, %v3763
        %v4307 = vpack.c.b16 %v3766, %v3765
        %v4308 = vpack.c.b16 %v3768, %v3767
        %v4309 = vpack.c.b16 %v3770, %v3769
        %v4310 = vpack.c.b16 %v3772, %v3771
        %v4311 = vpack.c.b16 %v3774, %v3773
        %v4312 = vpack.c.b16 %v3776, %v3775
        %v4313 = vpack.c.b16 %v3778, %v3777
        %v4314 = vpack.c.b16 %v3780, %v3779
        %v4315 = vpack.c.b16 %v3782, %v3781
        %v4316 = vpack.c.b16 %v3784, %v3783
        %v4317 = vpack.c.b16 %v3786, %v3785
        %v4318 = vpack.c.b16 %v3788, %v3787
        %v4319 = vpack.c.b16 %v3790, %v3789
        %v4320 = vpack.c.b16 %v3792, %v3791
        %v4321 = vpack.c.b16 %v3794, %v3793
        %v4322 = vpack.c.b16 %v3796, %v3795
        %v4323 = vpack.c.b16 %v3798, %v3797
        %v4324 = vpack.c.b16 %v3800, %v3799
        %v4325 = vpack.c.b16 %v3802, %v3801
        %v4326 = vpack.c.b16 %v3804, %v3803
        %v4327 = vpack.c.b16 %v3806, %v3805
        %v4328 = vpack.c.b16 %v3808, %v3807
        %v4329 = vpack.c.b16 %v3810, %v3809
        %v4330 = vpack.c.b16 %v3812, %v3811
        %v4331 = vpack.c.b16 %v3814, %v3813
        %v4332 = vpack.c.b16 %v3816, %v3815
        %v4333 = vpack.c.b16 %v3818, %v3817
        %v4334 = vpack.c.b16 %v3820, %v3819
        %v4335 = vpack.c.b16 %v3822, %v3821
        %v4336 = vpack.c.b16 %v3824, %v3823
        %4849 = vmatprep.subr.bf16.mxu0 0
        %4850 = vmatpush1.bf16.msra.mxu0 %v3825
        %4851 = vmatprep.subr.bf16.mxu0 0
        %4852 = vmatpush1.bf16.msra.mxu0 %v3826
        %4853 = vmatprep.subr.bf16.mxu0 0
        %4854 = vmatpush1.bf16.msra.mxu0 %v3827
        %4855 = vmatprep.subr.bf16.mxu0 0
        %4856 = vmatpush1.bf16.msra.mxu0 %v3828
        %4857 = vmatprep.subr.bf16.mxu0 0
        %4858 = vmatpush1.bf16.msra.mxu0 %v3829
        %4859 = vmatprep.subr.bf16.mxu0 0
        %4860 = vmatpush1.bf16.msra.mxu0 %v3830
        %4861 = vmatprep.subr.bf16.mxu0 0
        %4862 = vmatpush1.bf16.msra.mxu0 %v3831
        %4863 = vmatprep.subr.bf16.mxu0 0
        %4864 = vmatpush1.bf16.msra.mxu0 %v3832
        %4865 = vmatprep.subr.bf16.mxu0 0
        %4866 = vmatpush1.bf16.msra.mxu0 %v3833
        %4867 = vmatprep.subr.bf16.mxu0 0
        %4868 = vmatpush1.bf16.msra.mxu0 %v3834
        %4869 = vmatprep.subr.bf16.mxu0 0
        %4870 = vmatpush1.bf16.msra.mxu0 %v3835
        %4871 = vmatprep.subr.bf16.mxu0 0
        %4872 = vmatpush1.bf16.msra.mxu0 %v3836
        %4873 = vmatprep.subr.bf16.mxu0 0
        %4874 = vmatpush1.bf16.msra.mxu0 %v3837
        %4875 = vmatprep.subr.bf16.mxu0 0
        %4876 = vmatpush1.bf16.msra.mxu0 %v3838
        %4877 = vmatprep.subr.bf16.mxu0 0
        %4878 = vmatpush1.bf16.msra.mxu0 %v3839
        %4879 = vmatprep.subr.bf16.mxu0 0
        %4880 = vmatpush1.bf16.msra.mxu0 %v3840
        %4881 = vmatprep.mubr.bf16.mxu0 %v1650
        %4882 = vmatmul.mubr.bf16.gmra.mrb[0].mxu0 %v1649
        %v4883 = vpop.f32.mrb[0].mxu0
        %v4884 = vadd.f32 0.0, %v4883
        %v4885 = vpop.f32.mrb[0].mxu0
        %v4886 = vpop.f32.mrb[0].mxu0
        %v4887 = vadd.f32 0.0, %v4886
        %v4888 = vpop.f32.mrb[0].mxu0
        %4889 = vdwg.mxu0
        %4890 = vmatprep.subr.bf16.mxu0 0
        %4891 = vmatpush1.bf16.msra.mxu0 %v3841
        %4892 = vmatprep.subr.bf16.mxu0 0
        %4893 = vmatpush1.bf16.msra.mxu0 %v3842
        %4894 = vmatprep.subr.bf16.mxu0 0
        %4895 = vmatpush1.bf16.msra.mxu0 %v3843
        %4896 = vmatprep.subr.bf16.mxu0 0
        %4897 = vmatpush1.bf16.msra.mxu0 %v3844
        %4898 = vmatprep.subr.bf16.mxu0 0
        %4899 = vmatpush1.bf16.msra.mxu0 %v3845
        %4900 = vmatprep.subr.bf16.mxu0 0
        %4901 = vmatpush1.bf16.msra.mxu0 %v3846
        %4902 = vmatprep.subr.bf16.mxu0 0
        %4903 = vmatpush1.bf16.msra.mxu0 %v3847
        %4904 = vmatprep.subr.bf16.mxu0 0
        %4905 = vmatpush1.bf16.msra.mxu0 %v3848
        %4906 = vmatprep.subr.bf16.mxu0 0
        %4907 = vmatpush1.bf16.msra.mxu0 %v3849
        %4908 = vmatprep.subr.bf16.mxu0 0
        %4909 = vmatpush1.bf16.msra.mxu0 %v3850
        %4910 = vmatprep.subr.bf16.mxu0 0
        %4911 = vmatpush1.bf16.msra.mxu0 %v3851
        %4912 = vmatprep.subr.bf16.mxu0 0
        %4913 = vmatpush1.bf16.msra.mxu0 %v3852
        %4914 = vmatprep.subr.bf16.mxu0 0
        %4915 = vmatpush1.bf16.msra.mxu0 %v3853
        %4916 = vmatprep.subr.bf16.mxu0 0
        %4917 = vmatpush1.bf16.msra.mxu0 %v3854
        %4918 = vmatprep.subr.bf16.mxu0 0
        %4919 = vmatpush1.bf16.msra.mxu0 %v3855
        %4920 = vmatprep.subr.bf16.mxu0 0
        %4921 = vmatpush1.bf16.msra.mxu0 %v3856
        %4922 = vmatprep.mubr.bf16.mxu0 %v1652
        %4923 = vmatmul.mubr.bf16.gmra.mrb[0].mxu0 %v1651
        %v4924 = vpop.f32.mrb[0].mxu0
        %v4925 = vadd.f32 %v4884, %v4924
        %v4926 = vpop.f32.mrb[0].mxu0
        %v4927 = vpop.f32.mrb[0].mxu0
        %v4928 = vadd.f32 %v4887, %v4927
        %v4929 = vpop.f32.mrb[0].mxu0
        %4930 = vdwg.mxu0
        %4931 = vmatprep.subr.bf16.mxu0 0
        %4932 = vmatpush1.bf16.msra.mxu0 %v3857
        %4933 = vmatprep.subr.bf16.mxu0 0
        %4934 = vmatpush1.bf16.msra.mxu0 %v3858
        %4935 = vmatprep.subr.bf16.mxu0 0
        %4936 = vmatpush1.bf16.msra.mxu0 %v3859
        %4937 = vmatprep.subr.bf16.mxu0 0
        %4938 = vmatpush1.bf16.msra.mxu0 %v3860
        %4939 = vmatprep.subr.bf16.mxu0 0
        %4940 = vmatpush1.bf16.msra.mxu0 %v3861
        %4941 = vmatprep.subr.bf16.mxu0 0
        %4942 = vmatpush1.bf16.msra.mxu0 %v3862
        %4943 = vmatprep.subr.bf16.mxu0 0
        %4944 = vmatpush1.bf16.msra.mxu0 %v3863
        %4945 = vmatprep.subr.bf16.mxu0 0
        %4946 = vmatpush1.bf16.msra.mxu0 %v3864
        %4947 = vmatprep.subr.bf16.mxu0 0
        %4948 = vmatpush1.bf16.msra.mxu0 %v3865
        %4949 = vmatprep.subr.bf16.mxu0 0
        %4950 = vmatpush1.bf16.msra.mxu0 %v3866
        %4951 = vmatprep.subr.bf16.mxu0 0
        %4952 = vmatpush1.bf16.msra.mxu0 %v3867
        %4953 = vmatprep.subr.bf16.mxu0 0
        %4954 = vmatpush1.bf16.msra.mxu0 %v3868
        %4955 = vmatprep.subr.bf16.mxu0 0
        %4956 = vmatpush1.bf16.msra.mxu0 %v3869
        %4957 = vmatprep.subr.bf16.mxu0 0
        %4958 = vmatpush1.bf16.msra.mxu0 %v3870
        %4959 = vmatprep.subr.bf16.mxu0 0
        %4960 = vmatpush1.bf16.msra.mxu0 %v3871
        %4961 = vmatprep.subr.bf16.mxu0 0
        %4962 = vmatpush1.bf16.msra.mxu0 %v3872
        %4963 = vmatprep.mubr.bf16.mxu0 %v1654
        %4964 = vmatmul.mubr.bf16.gmra.mrb[0].mxu0 %v1653
        %v4965 = vpop.f32.mrb[0].mxu0
        %v4966 = vadd.f32 %v4925, %v4965
        %v4967 = vpop.f32.mrb[0].mxu0
        %v4968 = vpop.f32.mrb[0].mxu0
        %v4969 = vadd.f32 %v4928, %v4968
        %v4970 = vpop.f32.mrb[0].mxu0
        %4971 = vdwg.mxu0
        %4972 = vmatprep.subr.bf16.mxu0 0
        %4973 = vmatpush1.bf16.msra.mxu0 %v3873
        %4974 = vmatprep.subr.bf16.mxu0 0
        %4975 = vmatpush1.bf16.msra.mxu0 %v3874
        %4976 = vmatprep.subr.bf16.mxu0 0
        %4977 = vmatpush1.bf16.msra.mxu0 %v3875
        %4978 = vmatprep.subr.bf16.mxu0 0
        %4979 = vmatpush1.bf16.msra.mxu0 %v3876
        %4980 = vmatprep.subr.bf16.mxu0 0
        %4981 = vmatpush1.bf16.msra.mxu0 %v3877
        %4982 = vmatprep.subr.bf16.mxu0 0
        %4983 = vmatpush1.bf16.msra.mxu0 %v3878
        %4984 = vmatprep.subr.bf16.mxu0 0
        %4985 = vmatpush1.bf16.msra.mxu0 %v3879
        %4986 = vmatprep.subr.bf16.mxu0 0
        %4987 = vmatpush1.bf16.msra.mxu0 %v3880
        %4988 = vmatprep.subr.bf16.mxu0 0
        %4989 = vmatpush1.bf16.msra.mxu0 %v3881
        %4990 = vmatprep.subr.bf16.mxu0 0
        %4991 = vmatpush1.bf16.msra.mxu0 %v3882
        %4992 = vmatprep.subr.bf16.mxu0 0
        %4993 = vmatpush1.bf16.msra.mxu0 %v3883
        %4994 = vmatprep.subr.bf16.mxu0 0
        %4995 = vmatpush1.bf16.msra.mxu0 %v3884
        %4996 = vmatprep.subr.bf16.mxu0 0
        %4997 = vmatpush1.bf16.msra.mxu0 %v3885
        %4998 = vmatprep.subr.bf16.mxu0 0
        %4999 = vmatpush1.bf16.msra.mxu0 %v3886
        %5000 = vmatprep.subr.bf16.mxu0 0
        %5001 = vmatpush1.bf16.msra.mxu0 %v3887
        %5002 = vmatprep.subr.bf16.mxu0 0
        %5003 = vmatpush1.bf16.msra.mxu0 %v3888
        %5004 = vmatprep.mubr.bf16.mxu0 %v1656
        %5005 = vmatmul.mubr.bf16.gmra.mrb[0].mxu0 %v1655
        %v5006 = vpop.f32.mrb[0].mxu0
        %v5007 = vadd.f32 %v4966, %v5006
        %v5008 = vpop.f32.mrb[0].mxu0
        %v5009 = vpop.f32.mrb[0].mxu0
        %v5010 = vadd.f32 %v4969, %v5009
        %v5011 = vpop.f32.mrb[0].mxu0
        %5012 = vdwg.mxu0
        %5013 = vmatprep.subr.bf16.mxu0 0
        %5014 = vmatpush1.bf16.msra.mxu0 %v3889
        %5015 = vmatprep.subr.bf16.mxu0 0
        %5016 = vmatpush1.bf16.msra.mxu0 %v3890
        %5017 = vmatprep.subr.bf16.mxu0 0
        %5018 = vmatpush1.bf16.msra.mxu0 %v3891
        %5019 = vmatprep.subr.bf16.mxu0 0
        %5020 = vmatpush1.bf16.msra.mxu0 %v3892
        %5021 = vmatprep.subr.bf16.mxu0 0
        %5022 = vmatpush1.bf16.msra.mxu0 %v3893
        %5023 = vmatprep.subr.bf16.mxu0 0
        %5024 = vmatpush1.bf16.msra.mxu0 %v3894
        %5025 = vmatprep.subr.bf16.mxu0 0
        %5026 = vmatpush1.bf16.msra.mxu0 %v3895
        %5027 = vmatprep.subr.bf16.mxu0 0
        %5028 = vmatpush1.bf16.msra.mxu0 %v3896
        %5029 = vmatprep.subr.bf16.mxu0 0
        %5030 = vmatpush1.bf16.msra.mxu0 %v3897
        %5031 = vmatprep.subr.bf16.mxu0 0
        %5032 = vmatpush1.bf16.msra.mxu0 %v3898
        %5033 = vmatprep.subr.bf16.mxu0 0
        %5034 = vmatpush1.bf16.msra.mxu0 %v3899
        %5035 = vmatprep.subr.bf16.mxu0 0
        %5036 = vmatpush1.bf16.msra.mxu0 %v3900
        %5037 = vmatprep.subr.bf16.mxu0 0
        %5038 = vmatpush1.bf16.msra.mxu0 %v3901
        %5039 = vmatprep.subr.bf16.mxu0 0
        %5040 = vmatpush1.bf16.msra.mxu0 %v3902
        %5041 = vmatprep.subr.bf16.mxu0 0
        %5042 = vmatpush1.bf16.msra.mxu0 %v3903
        %5043 = vmatprep.subr.bf16.mxu0 0
        %5044 = vmatpush1.bf16.msra.mxu0 %v3904
        %5045 = vmatprep.mubr.bf16.mxu0 %v1658
        %5046 = vmatmul.mubr.bf16.gmra.mrb[0].mxu0 %v1657
        %v5047 = vpop.f32.mrb[0].mxu0
        %v5048 = vadd.f32 %v5007, %v5047
        %v5049 = vpop.f32.mrb[0].mxu0
        %v5050 = vpop.f32.mrb[0].mxu0
        %v5051 = vadd.f32 %v5010, %v5050
        %v5052 = vpop.f32.mrb[0].mxu0
        %5053 = vdwg.mxu0
        %5054 = vmatprep.subr.bf16.mxu0 0
        %5055 = vmatpush1.bf16.msra.mxu0 %v3905
        %5056 = vmatprep.subr.bf16.mxu0 0
        %5057 = vmatpush1.bf16.msra.mxu0 %v3906
        %5058 = vmatprep.subr.bf16.mxu0 0
        %5059 = vmatpush1.bf16.msra.mxu0 %v3907
        %5060 = vmatprep.subr.bf16.mxu0 0
        %5061 = vmatpush1.bf16.msra.mxu0 %v3908
        %5062 = vmatprep.subr.bf16.mxu0 0
        %5063 = vmatpush1.bf16.msra.mxu0 %v3909
        %5064 = vmatprep.subr.bf16.mxu0 0
        %5065 = vmatpush1.bf16.msra.mxu0 %v3910
        %5066 = vmatprep.subr.bf16.mxu0 0
        %5067 = vmatpush1.bf16.msra.mxu0 %v3911
        %5068 = vmatprep.subr.bf16.mxu0 0
        %5069 = vmatpush1.bf16.msra.mxu0 %v3912
        %5070 = vmatprep.subr.bf16.mxu0 0
        %5071 = vmatpush1.bf16.msra.mxu0 %v3913
        %5072 = vmatprep.subr.bf16.mxu0 0
        %5073 = vmatpush1.bf16.msra.mxu0 %v3914
        %5074 = vmatprep.subr.bf16.mxu0 0
        %5075 = vmatpush1.bf16.msra.mxu0 %v3915
        %5076 = vmatprep.subr.bf16.mxu0 0
        %5077 = vmatpush1.bf16.msra.mxu0 %v3916
        %5078 = vmatprep.subr.bf16.mxu0 0
        %5079 = vmatpush1.bf16.msra.mxu0 %v3917
        %5080 = vmatprep.subr.bf16.mxu0 0
        %5081 = vmatpush1.bf16.msra.mxu0 %v3918
        %5082 = vmatprep.subr.bf16.mxu0 0
        %5083 = vmatpush1.bf16.msra.mxu0 %v3919
        %5084 = vmatprep.subr.bf16.mxu0 0
        %5085 = vmatpush1.bf16.msra.mxu0 %v3920
        %5086 = vmatprep.mubr.bf16.mxu0 %v1660
        %5087 = vmatmul.mubr.bf16.gmra.mrb[0].mxu0 %v1659
        %v5088 = vpop.f32.mrb[0].mxu0
        %v5089 = vadd.f32 %v5048, %v5088
        %v5090 = vpop.f32.mrb[0].mxu0
        %v5091 = vpop.f32.mrb[0].mxu0
        %v5092 = vadd.f32 %v5051, %v5091
        %v5093 = vpop.f32.mrb[0].mxu0
        %5094 = vdwg.mxu0
        %5095 = vmatprep.subr.bf16.mxu0 0
        %5096 = vmatpush1.bf16.msra.mxu0 %v3921
        %5097 = vmatprep.subr.bf16.mxu0 0
        %5098 = vmatpush1.bf16.msra.mxu0 %v3922
        %5099 = vmatprep.subr.bf16.mxu0 0
        %5100 = vmatpush1.bf16.msra.mxu0 %v3923
        %5101 = vmatprep.subr.bf16.mxu0 0
        %5102 = vmatpush1.bf16.msra.mxu0 %v3924
        %5103 = vmatprep.subr.bf16.mxu0 0
        %5104 = vmatpush1.bf16.msra.mxu0 %v3925
        %5105 = vmatprep.subr.bf16.mxu0 0
        %5106 = vmatpush1.bf16.msra.mxu0 %v3926
        %5107 = vmatprep.subr.bf16.mxu0 0
        %5108 = vmatpush1.bf16.msra.mxu0 %v3927
        %5109 = vmatprep.subr.bf16.mxu0 0
        %5110 = vmatpush1.bf16.msra.mxu0 %v3928
        %5111 = vmatprep.subr.bf16.mxu0 0
        %5112 = vmatpush1.bf16.msra.mxu0 %v3929
        %5113 = vmatprep.subr.bf16.mxu0 0
        %5114 = vmatpush1.bf16.msra.mxu0 %v3930
        %5115 = vmatprep.subr.bf16.mxu0 0
        %5116 = vmatpush1.bf16.msra.mxu0 %v3931
        %5117 = vmatprep.subr.bf16.mxu0 0
        %5118 = vmatpush1.bf16.msra.mxu0 %v3932
        %5119 = vmatprep.subr.bf16.mxu0 0
        %5120 = vmatpush1.bf16.msra.mxu0 %v3933
        %5121 = vmatprep.subr.bf16.mxu0 0
        %5122 = vmatpush1.bf16.msra.mxu0 %v3934
        %5123 = vmatprep.subr.bf16.mxu0 0
        %5124 = vmatpush1.bf16.msra.mxu0 %v3935
        %5125 = vmatprep.subr.bf16.mxu0 0
        %5126 = vmatpush1.bf16.msra.mxu0 %v3936
        %5127 = vmatprep.mubr.bf16.mxu0 %v1662
        %5128 = vmatmul.mubr.bf16.gmra.mrb[0].mxu0 %v1661
        %v5129 = vpop.f32.mrb[0].mxu0
        %v5130 = vadd.f32 %v5089, %v5129
        %v5131 = vpop.f32.mrb[0].mxu0
        %v5132 = vpop.f32.mrb[0].mxu0
        %v5133 = vadd.f32 %v5092, %v5132
        %v5134 = vpop.f32.mrb[0].mxu0
        %5135 = vdwg.mxu0
        %5136 = vmatprep.subr.bf16.mxu0 0
        %5137 = vmatpush1.bf16.msra.mxu0 %v3937
        %5138 = vmatprep.subr.bf16.mxu0 0
        %5139 = vmatpush1.bf16.msra.mxu0 %v3938
        %5140 = vmatprep.subr.bf16.mxu0 0
        %5141 = vmatpush1.bf16.msra.mxu0 %v3939
        %5142 = vmatprep.subr.bf16.mxu0 0
        %5143 = vmatpush1.bf16.msra.mxu0 %v3940
        %5144 = vmatprep.subr.bf16.mxu0 0
        %5145 = vmatpush1.bf16.msra.mxu0 %v3941
        %5146 = vmatprep.subr.bf16.mxu0 0
        %5147 = vmatpush1.bf16.msra.mxu0 %v3942
        %5148 = vmatprep.subr.bf16.mxu0 0
        %5149 = vmatpush1.bf16.msra.mxu0 %v3943
        %5150 = vmatprep.subr.bf16.mxu0 0
        %5151 = vmatpush1.bf16.msra.mxu0 %v3944
        %5152 = vmatprep.subr.bf16.mxu0 0
        %5153 = vmatpush1.bf16.msra.mxu0 %v3945
        %5154 = vmatprep.subr.bf16.mxu0 0
        %5155 = vmatpush1.bf16.msra.mxu0 %v3946
        %5156 = vmatprep.subr.bf16.mxu0 0
        %5157 = vmatpush1.bf16.msra.mxu0 %v3947
        %5158 = vmatprep.subr.bf16.mxu0 0
        %5159 = vmatpush1.bf16.msra.mxu0 %v3948
        %5160 = vmatprep.subr.bf16.mxu0 0
        %5161 = vmatpush1.bf16.msra.mxu0 %v3949
        %5162 = vmatprep.subr.bf16.mxu0 0
        %5163 = vmatpush1.bf16.msra.mxu0 %v3950
        %5164 = vmatprep.subr.bf16.mxu0 0
        %5165 = vmatpush1.bf16.msra.mxu0 %v3951
        %5166 = vmatprep.subr.bf16.mxu0 0
        %5167 = vmatpush1.bf16.msra.mxu0 %v3952
        %5168 = vmatprep.mubr.bf16.mxu0 %v1664
        %5169 = vmatmul.mubr.bf16.gmra.mrb[0].mxu0 %v1663
        %v5170 = vpop.f32.mrb[0].mxu0
        %v5171 = vadd.f32 %v5130, %v5170
        %v5172 = vpop.f32.mrb[0].mxu0
        %v5173 = vpop.f32.mrb[0].mxu0
        %v5174 = vadd.f32 %v5133, %v5173
        %v5175 = vpop.f32.mrb[0].mxu0
        %5176 = vdwg.mxu0
        %5177 = vmatprep.subr.bf16.mxu0 0
        %5178 = vmatpush1.bf16.msra.mxu0 %v3953
        %5179 = vmatprep.subr.bf16.mxu0 0
        %5180 = vmatpush1.bf16.msra.mxu0 %v3954
        %5181 = vmatprep.subr.bf16.mxu0 0
        %5182 = vmatpush1.bf16.msra.mxu0 %v3955
        %5183 = vmatprep.subr.bf16.mxu0 0
        %5184 = vmatpush1.bf16.msra.mxu0 %v3956
        %5185 = vmatprep.subr.bf16.mxu0 0
        %5186 = vmatpush1.bf16.msra.mxu0 %v3957
        %5187 = vmatprep.subr.bf16.mxu0 0
        %5188 = vmatpush1.bf16.msra.mxu0 %v3958
        %5189 = vmatprep.subr.bf16.mxu0 0
        %5190 = vmatpush1.bf16.msra.mxu0 %v3959
        %5191 = vmatprep.subr.bf16.mxu0 0
        %5192 = vmatpush1.bf16.msra.mxu0 %v3960
        %5193 = vmatprep.subr.bf16.mxu0 0
        %5194 = vmatpush1.bf16.msra.mxu0 %v3961
        %5195 = vmatprep.subr.bf16.mxu0 0
        %5196 = vmatpush1.bf16.msra.mxu0 %v3962
        %5197 = vmatprep.subr.bf16.mxu0 0
        %5198 = vmatpush1.bf16.msra.mxu0 %v3963
        %5199 = vmatprep.subr.bf16.mxu0 0
        %5200 = vmatpush1.bf16.msra.mxu0 %v3964
        %5201 = vmatprep.subr.bf16.mxu0 0
        %5202 = vmatpush1.bf16.msra.mxu0 %v3965
        %5203 = vmatprep.subr.bf16.mxu0 0
        %5204 = vmatpush1.bf16.msra.mxu0 %v3966
        %5205 = vmatprep.subr.bf16.mxu0 0
        %5206 = vmatpush1.bf16.msra.mxu0 %v3967
        %5207 = vmatprep.subr.bf16.mxu0 0
        %5208 = vmatpush1.bf16.msra.mxu0 %v3968
        %5209 = vmatprep.mubr.bf16.mxu0 %v1666
        %5210 = vmatmul.mubr.bf16.gmra.mrb[0].mxu0 %v1665
        %v5211 = vpop.f32.mrb[0].mxu0
        %v5212 = vadd.f32 %v5171, %v5211
        %v5213 = vpop.f32.mrb[0].mxu0
        %v5214 = vpop.f32.mrb[0].mxu0
        %v5215 = vadd.f32 %v5174, %v5214
        %v5216 = vpop.f32.mrb[0].mxu0
        %5217 = vdwg.mxu0
        %5218 = vmatprep.subr.bf16.mxu0 0
        %5219 = vmatpush1.bf16.msra.mxu0 %v3969
        %5220 = vmatprep.subr.bf16.mxu0 0
        %5221 = vmatpush1.bf16.msra.mxu0 %v3970
        %5222 = vmatprep.subr.bf16.mxu0 0
        %5223 = vmatpush1.bf16.msra.mxu0 %v3971
        %5224 = vmatprep.subr.bf16.mxu0 0
        %5225 = vmatpush1.bf16.msra.mxu0 %v3972
        %5226 = vmatprep.subr.bf16.mxu0 0
        %5227 = vmatpush1.bf16.msra.mxu0 %v3973
        %5228 = vmatprep.subr.bf16.mxu0 0
        %5229 = vmatpush1.bf16.msra.mxu0 %v3974
        %5230 = vmatprep.subr.bf16.mxu0 0
        %5231 = vmatpush1.bf16.msra.mxu0 %v3975
        %5232 = vmatprep.subr.bf16.mxu0 0
        %5233 = vmatpush1.bf16.msra.mxu0 %v3976
        %5234 = vmatprep.subr.bf16.mxu0 0
        %5235 = vmatpush1.bf16.msra.mxu0 %v3977
        %5236 = vmatprep.subr.bf16.mxu0 0
        %5237 = vmatpush1.bf16.msra.mxu0 %v3978
        %5238 = vmatprep.subr.bf16.mxu0 0
        %5239 = vmatpush1.bf16.msra.mxu0 %v3979
        %5240 = vmatprep.subr.bf16.mxu0 0
        %5241 = vmatpush1.bf16.msra.mxu0 %v3980
        %5242 = vmatprep.subr.bf16.mxu0 0
        %5243 = vmatpush1.bf16.msra.mxu0 %v3981
        %5244 = vmatprep.subr.bf16.mxu0 0
        %5245 = vmatpush1.bf16.msra.mxu0 %v3982
        %5246 = vmatprep.subr.bf16.mxu0 0
        %5247 = vmatpush1.bf16.msra.mxu0 %v3983
        %5248 = vmatprep.subr.bf16.mxu0 0
        %5249 = vmatpush1.bf16.msra.mxu0 %v3984
        %5250 = vmatprep.mubr.bf16.mxu0 %v1668
        %5251 = vmatmul.mubr.bf16.gmra.mrb[0].mxu0 %v1667
        %v5252 = vpop.f32.mrb[0].mxu0
        %v5253 = vadd.f32 %v5212, %v5252
        %v5254 = vpop.f32.mrb[0].mxu0
        %v5255 = vpop.f32.mrb[0].mxu0
        %v5256 = vadd.f32 %v5215, %v5255
        %v5257 = vpop.f32.mrb[0].mxu0
        %5258 = vdwg.mxu0
        %5259 = vmatprep.subr.bf16.mxu0 0
        %5260 = vmatpush1.bf16.msra.mxu0 %v3985
        %5261 = vmatprep.subr.bf16.mxu0 0
        %5262 = vmatpush1.bf16.msra.mxu0 %v3986
        %5263 = vmatprep.subr.bf16.mxu0 0
        %5264 = vmatpush1.bf16.msra.mxu0 %v3987
        %5265 = vmatprep.subr.bf16.mxu0 0
        %5266 = vmatpush1.bf16.msra.mxu0 %v3988
        %5267 = vmatprep.subr.bf16.mxu0 0
        %5268 = vmatpush1.bf16.msra.mxu0 %v3989
        %5269 = vmatprep.subr.bf16.mxu0 0
        %5270 = vmatpush1.bf16.msra.mxu0 %v3990
        %5271 = vmatprep.subr.bf16.mxu0 0
        %5272 = vmatpush1.bf16.msra.mxu0 %v3991
        %5273 = vmatprep.subr.bf16.mxu0 0
        %5274 = vmatpush1.bf16.msra.mxu0 %v3992
        %5275 = vmatprep.subr.bf16.mxu0 0
        %5276 = vmatpush1.bf16.msra.mxu0 %v3993
        %5277 = vmatprep.subr.bf16.mxu0 0
        %5278 = vmatpush1.bf16.msra.mxu0 %v3994
        %5279 = vmatprep.subr.bf16.mxu0 0
        %5280 = vmatpush1.bf16.msra.mxu0 %v3995
        %5281 = vmatprep.subr.bf16.mxu0 0
        %5282 = vmatpush1.bf16.msra.mxu0 %v3996
        %5283 = vmatprep.subr.bf16.mxu0 0
        %5284 = vmatpush1.bf16.msra.mxu0 %v3997
        %5285 = vmatprep.subr.bf16.mxu0 0
        %5286 = vmatpush1.bf16.msra.mxu0 %v3998
        %5287 = vmatprep.subr.bf16.mxu0 0
        %5288 = vmatpush1.bf16.msra.mxu0 %v3999
        %5289 = vmatprep.subr.bf16.mxu0 0
        %5290 = vmatpush1.bf16.msra.mxu0 %v4000
        %5291 = vmatprep.mubr.bf16.mxu0 %v1670
        %5292 = vmatmul.mubr.bf16.gmra.mrb[0].mxu0 %v1669
        %v5293 = vpop.f32.mrb[0].mxu0
        %v5294 = vadd.f32 %v5253, %v5293
        %v5295 = vpop.f32.mrb[0].mxu0
        %v5296 = vpop.f32.mrb[0].mxu0
        %v5297 = vadd.f32 %v5256, %v5296
        %v5298 = vpop.f32.mrb[0].mxu0
        %5299 = vdwg.mxu0
        %5300 = vmatprep.subr.bf16.mxu0 0
        %5301 = vmatpush1.bf16.msra.mxu0 %v4001
        %5302 = vmatprep.subr.bf16.mxu0 0
        %5303 = vmatpush1.bf16.msra.mxu0 %v4002
        %5304 = vmatprep.subr.bf16.mxu0 0
        %5305 = vmatpush1.bf16.msra.mxu0 %v4003
        %5306 = vmatprep.subr.bf16.mxu0 0
        %5307 = vmatpush1.bf16.msra.mxu0 %v4004
        %5308 = vmatprep.subr.bf16.mxu0 0
        %5309 = vmatpush1.bf16.msra.mxu0 %v4005
        %5310 = vmatprep.subr.bf16.mxu0 0
        %5311 = vmatpush1.bf16.msra.mxu0 %v4006
        %5312 = vmatprep.subr.bf16.mxu0 0
        %5313 = vmatpush1.bf16.msra.mxu0 %v4007
        %5314 = vmatprep.subr.bf16.mxu0 0
        %5315 = vmatpush1.bf16.msra.mxu0 %v4008
        %5316 = vmatprep.subr.bf16.mxu0 0
        %5317 = vmatpush1.bf16.msra.mxu0 %v4009
        %5318 = vmatprep.subr.bf16.mxu0 0
        %5319 = vmatpush1.bf16.msra.mxu0 %v4010
        %5320 = vmatprep.subr.bf16.mxu0 0
        %5321 = vmatpush1.bf16.msra.mxu0 %v4011
        %5322 = vmatprep.subr.bf16.mxu0 0
        %5323 = vmatpush1.bf16.msra.mxu0 %v4012
        %5324 = vmatprep.subr.bf16.mxu0 0
        %5325 = vmatpush1.bf16.msra.mxu0 %v4013
        %5326 = vmatprep.subr.bf16.mxu0 0
        %5327 = vmatpush1.bf16.msra.mxu0 %v4014
        %5328 = vmatprep.subr.bf16.mxu0 0
        %5329 = vmatpush1.bf16.msra.mxu0 %v4015
        %5330 = vmatprep.subr.bf16.mxu0 0
        %5331 = vmatpush1.bf16.msra.mxu0 %v4016
        %5332 = vmatprep.mubr.bf16.mxu0 %v1672
        %5333 = vmatmul.mubr.bf16.gmra.mrb[0].mxu0 %v1671
        %v5334 = vpop.f32.mrb[0].mxu0
        %v5335 = vadd.f32 %v5294, %v5334
        %v5336 = vpop.f32.mrb[0].mxu0
        %v5337 = vpop.f32.mrb[0].mxu0
        %v5338 = vadd.f32 %v5297, %v5337
        %v5339 = vpop.f32.mrb[0].mxu0
        %5340 = vdwg.mxu0
        %5341 = vmatprep.subr.bf16.mxu0 0
        %5342 = vmatpush1.bf16.msra.mxu0 %v4017
        %5343 = vmatprep.subr.bf16.mxu0 0
        %5344 = vmatpush1.bf16.msra.mxu0 %v4018
        %5345 = vmatprep.subr.bf16.mxu0 0
        %5346 = vmatpush1.bf16.msra.mxu0 %v4019
        %5347 = vmatprep.subr.bf16.mxu0 0
        %5348 = vmatpush1.bf16.msra.mxu0 %v4020
        %5349 = vmatprep.subr.bf16.mxu0 0
        %5350 = vmatpush1.bf16.msra.mxu0 %v4021
        %5351 = vmatprep.subr.bf16.mxu0 0
        %5352 = vmatpush1.bf16.msra.mxu0 %v4022
        %5353 = vmatprep.subr.bf16.mxu0 0
        %5354 = vmatpush1.bf16.msra.mxu0 %v4023
        %5355 = vmatprep.subr.bf16.mxu0 0
        %5356 = vmatpush1.bf16.msra.mxu0 %v4024
        %5357 = vmatprep.subr.bf16.mxu0 0
        %5358 = vmatpush1.bf16.msra.mxu0 %v4025
        %5359 = vmatprep.subr.bf16.mxu0 0
        %5360 = vmatpush1.bf16.msra.mxu0 %v4026
        %5361 = vmatprep.subr.bf16.mxu0 0
        %5362 = vmatpush1.bf16.msra.mxu0 %v4027
        %5363 = vmatprep.subr.bf16.mxu0 0
        %5364 = vmatpush1.bf16.msra.mxu0 %v4028
        %5365 = vmatprep.subr.bf16.mxu0 0
        %5366 = vmatpush1.bf16.msra.mxu0 %v4029
        %5367 = vmatprep.subr.bf16.mxu0 0
        %5368 = vmatpush1.bf16.msra.mxu0 %v4030
        %5369 = vmatprep.subr.bf16.mxu0 0
        %5370 = vmatpush1.bf16.msra.mxu0 %v4031
        %5371 = vmatprep.subr.bf16.mxu0 0
        %5372 = vmatpush1.bf16.msra.mxu0 %v4032
        %5373 = vmatprep.mubr.bf16.mxu0 %v1674
        %5374 = vmatmul.mubr.bf16.gmra.mrb[0].mxu0 %v1673
        %v5375 = vpop.f32.mrb[0].mxu0
        %v5376 = vadd.f32 %v5335, %v5375
        %v5377 = vpop.f32.mrb[0].mxu0
        %v5378 = vpop.f32.mrb[0].mxu0
        %v5379 = vadd.f32 %v5338, %v5378
        %v5380 = vpop.f32.mrb[0].mxu0
        %5381 = vdwg.mxu0
        %5382 = vmatprep.subr.bf16.mxu0 0
        %5383 = vmatpush1.bf16.msra.mxu0 %v4033
        %5384 = vmatprep.subr.bf16.mxu0 0
        %5385 = vmatpush1.bf16.msra.mxu0 %v4034
        %5386 = vmatprep.subr.bf16.mxu0 0
        %5387 = vmatpush1.bf16.msra.mxu0 %v4035
        %5388 = vmatprep.subr.bf16.mxu0 0
        %5389 = vmatpush1.bf16.msra.mxu0 %v4036
        %5390 = vmatprep.subr.bf16.mxu0 0
        %5391 = vmatpush1.bf16.msra.mxu0 %v4037
        %5392 = vmatprep.subr.bf16.mxu0 0
        %5393 = vmatpush1.bf16.msra.mxu0 %v4038
        %5394 = vmatprep.subr.bf16.mxu0 0
        %5395 = vmatpush1.bf16.msra.mxu0 %v4039
        %5396 = vmatprep.subr.bf16.mxu0 0
        %5397 = vmatpush1.bf16.msra.mxu0 %v4040
        %5398 = vmatprep.subr.bf16.mxu0 0
        %5399 = vmatpush1.bf16.msra.mxu0 %v4041
        %5400 = vmatprep.subr.bf16.mxu0 0
        %5401 = vmatpush1.bf16.msra.mxu0 %v4042
        %5402 = vmatprep.subr.bf16.mxu0 0
        %5403 = vmatpush1.bf16.msra.mxu0 %v4043
        %5404 = vmatprep.subr.bf16.mxu0 0
        %5405 = vmatpush1.bf16.msra.mxu0 %v4044
        %5406 = vmatprep.subr.bf16.mxu0 0
        %5407 = vmatpush1.bf16.msra.mxu0 %v4045
        %5408 = vmatprep.subr.bf16.mxu0 0
        %5409 = vmatpush1.bf16.msra.mxu0 %v4046
        %5410 = vmatprep.subr.bf16.mxu0 0
        %5411 = vmatpush1.bf16.msra.mxu0 %v4047
        %5412 = vmatprep.subr.bf16.mxu0 0
        %5413 = vmatpush1.bf16.msra.mxu0 %v4048
        %5414 = vmatprep.mubr.bf16.mxu0 %v1676
        %5415 = vmatmul.mubr.bf16.gmra.mrb[0].mxu0 %v1675
        %v5416 = vpop.f32.mrb[0].mxu0
        %v5417 = vadd.f32 %v5376, %v5416
        %v5418 = vpop.f32.mrb[0].mxu0
        %v5419 = vpop.f32.mrb[0].mxu0
        %v5420 = vadd.f32 %v5379, %v5419
        %v5421 = vpop.f32.mrb[0].mxu0
        %5422 = vdwg.mxu0
        %5423 = vmatprep.subr.bf16.mxu0 0
        %5424 = vmatpush1.bf16.msra.mxu0 %v4049
        %5425 = vmatprep.subr.bf16.mxu0 0
        %5426 = vmatpush1.bf16.msra.mxu0 %v4050
        %5427 = vmatprep.subr.bf16.mxu0 0
        %5428 = vmatpush1.bf16.msra.mxu0 %v4051
        %5429 = vmatprep.subr.bf16.mxu0 0
        %5430 = vmatpush1.bf16.msra.mxu0 %v4052
        %5431 = vmatprep.subr.bf16.mxu0 0
        %5432 = vmatpush1.bf16.msra.mxu0 %v4053
        %5433 = vmatprep.subr.bf16.mxu0 0
        %5434 = vmatpush1.bf16.msra.mxu0 %v4054
        %5435 = vmatprep.subr.bf16.mxu0 0
        %5436 = vmatpush1.bf16.msra.mxu0 %v4055
        %5437 = vmatprep.subr.bf16.mxu0 0
        %5438 = vmatpush1.bf16.msra.mxu0 %v4056
        %5439 = vmatprep.subr.bf16.mxu0 0
        %5440 = vmatpush1.bf16.msra.mxu0 %v4057
        %5441 = vmatprep.subr.bf16.mxu0 0
        %5442 = vmatpush1.bf16.msra.mxu0 %v4058
        %5443 = vmatprep.subr.bf16.mxu0 0
        %5444 = vmatpush1.bf16.msra.mxu0 %v4059
        %5445 = vmatprep.subr.bf16.mxu0 0
        %5446 = vmatpush1.bf16.msra.mxu0 %v4060
        %5447 = vmatprep.subr.bf16.mxu0 0
        %5448 = vmatpush1.bf16.msra.mxu0 %v4061
        %5449 = vmatprep.subr.bf16.mxu0 0
        %5450 = vmatpush1.bf16.msra.mxu0 %v4062
        %5451 = vmatprep.subr.bf16.mxu0 0
        %5452 = vmatpush1.bf16.msra.mxu0 %v4063
        %5453 = vmatprep.subr.bf16.mxu0 0
        %5454 = vmatpush1.bf16.msra.mxu0 %v4064
        %5455 = vmatprep.mubr.bf16.mxu0 %v1678
        %5456 = vmatmul.mubr.bf16.gmra.mrb[0].mxu0 %v1677
        %v5457 = vpop.f32.mrb[0].mxu0
        %v5458 = vadd.f32 %v5417, %v5457
        %v5459 = vpop.f32.mrb[0].mxu0
        %v5460 = vpop.f32.mrb[0].mxu0
        %v5461 = vadd.f32 %v5420, %v5460
        %v5462 = vpop.f32.mrb[0].mxu0
        %5463 = vdwg.mxu0
        %5464 = vmatprep.subr.bf16.mxu0 0
        %5465 = vmatpush1.bf16.msra.mxu0 %v4065
        %5466 = vmatprep.subr.bf16.mxu0 0
        %5467 = vmatpush1.bf16.msra.mxu0 %v4066
        %5468 = vmatprep.subr.bf16.mxu0 0
        %5469 = vmatpush1.bf16.msra.mxu0 %v4067
        %5470 = vmatprep.subr.bf16.mxu0 0
        %5471 = vmatpush1.bf16.msra.mxu0 %v4068
        %5472 = vmatprep.subr.bf16.mxu0 0
        %5473 = vmatpush1.bf16.msra.mxu0 %v4069
        %5474 = vmatprep.subr.bf16.mxu0 0
        %5475 = vmatpush1.bf16.msra.mxu0 %v4070
        %5476 = vmatprep.subr.bf16.mxu0 0
        %5477 = vmatpush1.bf16.msra.mxu0 %v4071
        %5478 = vmatprep.subr.bf16.mxu0 0
        %5479 = vmatpush1.bf16.msra.mxu0 %v4072
        %5480 = vmatprep.subr.bf16.mxu0 0
        %5481 = vmatpush1.bf16.msra.mxu0 %v4073
        %5482 = vmatprep.subr.bf16.mxu0 0
        %5483 = vmatpush1.bf16.msra.mxu0 %v4074
        %5484 = vmatprep.subr.bf16.mxu0 0
        %5485 = vmatpush1.bf16.msra.mxu0 %v4075
        %5486 = vmatprep.subr.bf16.mxu0 0
        %5487 = vmatpush1.bf16.msra.mxu0 %v4076
        %5488 = vmatprep.subr.bf16.mxu0 0
        %5489 = vmatpush1.bf16.msra.mxu0 %v4077
        %5490 = vmatprep.subr.bf16.mxu0 0
        %5491 = vmatpush1.bf16.msra.mxu0 %v4078
        %5492 = vmatprep.subr.bf16.mxu0 0
        %5493 = vmatpush1.bf16.msra.mxu0 %v4079
        %5494 = vmatprep.subr.bf16.mxu0 0
        %5495 = vmatpush1.bf16.msra.mxu0 %v4080
        %5496 = vmatprep.mubr.bf16.mxu0 %v1680
        %5497 = vmatmul.mubr.bf16.gmra.mrb[0].mxu0 %v1679
        %v5498 = vpop.f32.mrb[0].mxu0
        %v5499 = vadd.f32 %v5458, %v5498
        %v5500 = vpop.f32.mrb[0].mxu0
        %v5501 = vpop.f32.mrb[0].mxu0
        %v5502 = vadd.f32 %v5461, %v5501
        %v5503 = vpop.f32.mrb[0].mxu0
        %5504 = vdwg.mxu0
        %5505 = vmatprep.subr.bf16.mxu0 0
        %5506 = vmatpush1.bf16.msra.mxu0 %v4081
        %5507 = vmatprep.subr.bf16.mxu0 0
        %5508 = vmatpush1.bf16.msra.mxu0 %v4082
        %5509 = vmatprep.subr.bf16.mxu0 0
        %5510 = vmatpush1.bf16.msra.mxu0 %v4083
        %5511 = vmatprep.subr.bf16.mxu0 0
        %5512 = vmatpush1.bf16.msra.mxu0 %v4084
        %5513 = vmatprep.subr.bf16.mxu0 0
        %5514 = vmatpush1.bf16.msra.mxu0 %v4085
        %5515 = vmatprep.subr.bf16.mxu0 0
        %5516 = vmatpush1.bf16.msra.mxu0 %v4086
        %5517 = vmatprep.subr.bf16.mxu0 0
        %5518 = vmatpush1.bf16.msra.mxu0 %v4087
        %5519 = vmatprep.subr.bf16.mxu0 0
        %5520 = vmatpush1.bf16.msra.mxu0 %v4088
        %5521 = vmatprep.subr.bf16.mxu0 0
        %5522 = vmatpush1.bf16.msra.mxu0 %v4089
        %5523 = vmatprep.subr.bf16.mxu0 0
        %5524 = vmatpush1.bf16.msra.mxu0 %v4090
        %5525 = vmatprep.subr.bf16.mxu0 0
        %5526 = vmatpush1.bf16.msra.mxu0 %v4091
        %5527 = vmatprep.subr.bf16.mxu0 0
        %5528 = vmatpush1.bf16.msra.mxu0 %v4092
        %5529 = vmatprep.subr.bf16.mxu0 0
        %5530 = vmatpush1.bf16.msra.mxu0 %v4093
        %5531 = vmatprep.subr.bf16.mxu0 0
        %5532 = vmatpush1.bf16.msra.mxu0 %v4094
        %5533 = vmatprep.subr.bf16.mxu0 0
        %5534 = vmatpush1.bf16.msra.mxu0 %v4095
        %5535 = vmatprep.subr.bf16.mxu0 0
        %5536 = vmatpush1.bf16.msra.mxu0 %v4096
        %5537 = vmatprep.mubr.bf16.mxu0 %v1682
        %5538 = vmatmul.mubr.bf16.gmra.mrb[0].mxu0 %v1681
        %v5539 = vpop.f32.mrb[0].mxu0
        %v5540 = vadd.f32 %v5499, %v5539
        %v5541 = vpop.f32.mrb[0].mxu0
        %v5542 = vpop.f32.mrb[0].mxu0
        %v5543 = vadd.f32 %v5502, %v5542
        %v5544 = vpop.f32.mrb[0].mxu0
        %5545 = vdwg.mxu0
        %5546 = vmatprep.subr.bf16.mxu0 0
        %5547 = vmatpush1.bf16.msra.mxu0 %v4097
        %5548 = vmatprep.subr.bf16.mxu0 0
        %5549 = vmatpush1.bf16.msra.mxu0 %v4098
        %5550 = vmatprep.subr.bf16.mxu0 0
        %5551 = vmatpush1.bf16.msra.mxu0 %v4099
        %5552 = vmatprep.subr.bf16.mxu0 0
        %5553 = vmatpush1.bf16.msra.mxu0 %v4100
        %5554 = vmatprep.subr.bf16.mxu0 0
        %5555 = vmatpush1.bf16.msra.mxu0 %v4101
        %5556 = vmatprep.subr.bf16.mxu0 0
        %5557 = vmatpush1.bf16.msra.mxu0 %v4102
        %5558 = vmatprep.subr.bf16.mxu0 0
        %5559 = vmatpush1.bf16.msra.mxu0 %v4103
        %5560 = vmatprep.subr.bf16.mxu0 0
        %5561 = vmatpush1.bf16.msra.mxu0 %v4104
        %5562 = vmatprep.subr.bf16.mxu0 0
        %5563 = vmatpush1.bf16.msra.mxu0 %v4105
        %5564 = vmatprep.subr.bf16.mxu0 0
        %5565 = vmatpush1.bf16.msra.mxu0 %v4106
        %5566 = vmatprep.subr.bf16.mxu0 0
        %5567 = vmatpush1.bf16.msra.mxu0 %v4107
        %5568 = vmatprep.subr.bf16.mxu0 0
        %5569 = vmatpush1.bf16.msra.mxu0 %v4108
        %5570 = vmatprep.subr.bf16.mxu0 0
        %5571 = vmatpush1.bf16.msra.mxu0 %v4109
        %5572 = vmatprep.subr.bf16.mxu0 0
        %5573 = vmatpush1.bf16.msra.mxu0 %v4110
        %5574 = vmatprep.subr.bf16.mxu0 0
        %5575 = vmatpush1.bf16.msra.mxu0 %v4111
        %5576 = vmatprep.subr.bf16.mxu0 0
        %5577 = vmatpush1.bf16.msra.mxu0 %v4112
        %5578 = vmatprep.mubr.bf16.mxu0 %v1684
        %5579 = vmatmul.mubr.bf16.gmra.mrb[0].mxu0 %v1683
        %v5580 = vpop.f32.mrb[0].mxu0
        %v5581 = vadd.f32 %v5540, %v5580
        %v5582 = vpop.f32.mrb[0].mxu0
        %v5583 = vpop.f32.mrb[0].mxu0
        %v5584 = vadd.f32 %v5543, %v5583
        %v5585 = vpop.f32.mrb[0].mxu0
        %5586 = vdwg.mxu0
        %5587 = vmatprep.subr.bf16.mxu0 0
        %5588 = vmatpush1.bf16.msra.mxu0 %v4113
        %5589 = vmatprep.subr.bf16.mxu0 0
        %5590 = vmatpush1.bf16.msra.mxu0 %v4114
        %5591 = vmatprep.subr.bf16.mxu0 0
        %5592 = vmatpush1.bf16.msra.mxu0 %v4115
        %5593 = vmatprep.subr.bf16.mxu0 0
        %5594 = vmatpush1.bf16.msra.mxu0 %v4116
        %5595 = vmatprep.subr.bf16.mxu0 0
        %5596 = vmatpush1.bf16.msra.mxu0 %v4117
        %5597 = vmatprep.subr.bf16.mxu0 0
        %5598 = vmatpush1.bf16.msra.mxu0 %v4118
        %5599 = vmatprep.subr.bf16.mxu0 0
        %5600 = vmatpush1.bf16.msra.mxu0 %v4119
        %5601 = vmatprep.subr.bf16.mxu0 0
        %5602 = vmatpush1.bf16.msra.mxu0 %v4120
        %5603 = vmatprep.subr.bf16.mxu0 0
        %5604 = vmatpush1.bf16.msra.mxu0 %v4121
        %5605 = vmatprep.subr.bf16.mxu0 0
        %5606 = vmatpush1.bf16.msra.mxu0 %v4122
        %5607 = vmatprep.subr.bf16.mxu0 0
        %5608 = vmatpush1.bf16.msra.mxu0 %v4123
        %5609 = vmatprep.subr.bf16.mxu0 0
        %5610 = vmatpush1.bf16.msra.mxu0 %v4124
        %5611 = vmatprep.subr.bf16.mxu0 0
        %5612 = vmatpush1.bf16.msra.mxu0 %v4125
        %5613 = vmatprep.subr.bf16.mxu0 0
        %5614 = vmatpush1.bf16.msra.mxu0 %v4126
        %5615 = vmatprep.subr.bf16.mxu0 0
        %5616 = vmatpush1.bf16.msra.mxu0 %v4127
        %5617 = vmatprep.subr.bf16.mxu0 0
        %5618 = vmatpush1.bf16.msra.mxu0 %v4128
        %5619 = vmatprep.mubr.bf16.mxu0 %v1686
        %5620 = vmatmul.mubr.bf16.gmra.mrb[0].mxu0 %v1685
        %v5621 = vpop.f32.mrb[0].mxu0
        %v5622 = vadd.f32 %v5581, %v5621
        %v5623 = vpop.f32.mrb[0].mxu0
        %v5624 = vpop.f32.mrb[0].mxu0
        %v5625 = vadd.f32 %v5584, %v5624
        %v5626 = vpop.f32.mrb[0].mxu0
        %5627 = vdwg.mxu0
        %5628 = vmatprep.subr.bf16.mxu0 0
        %5629 = vmatpush1.bf16.msra.mxu0 %v4129
        %5630 = vmatprep.subr.bf16.mxu0 0
        %5631 = vmatpush1.bf16.msra.mxu0 %v4130
        %5632 = vmatprep.subr.bf16.mxu0 0
        %5633 = vmatpush1.bf16.msra.mxu0 %v4131
        %5634 = vmatprep.subr.bf16.mxu0 0
        %5635 = vmatpush1.bf16.msra.mxu0 %v4132
        %5636 = vmatprep.subr.bf16.mxu0 0
        %5637 = vmatpush1.bf16.msra.mxu0 %v4133
        %5638 = vmatprep.subr.bf16.mxu0 0
        %5639 = vmatpush1.bf16.msra.mxu0 %v4134
        %5640 = vmatprep.subr.bf16.mxu0 0
        %5641 = vmatpush1.bf16.msra.mxu0 %v4135
        %5642 = vmatprep.subr.bf16.mxu0 0
        %5643 = vmatpush1.bf16.msra.mxu0 %v4136
        %5644 = vmatprep.subr.bf16.mxu0 0
        %5645 = vmatpush1.bf16.msra.mxu0 %v4137
        %5646 = vmatprep.subr.bf16.mxu0 0
        %5647 = vmatpush1.bf16.msra.mxu0 %v4138
        %5648 = vmatprep.subr.bf16.mxu0 0
        %5649 = vmatpush1.bf16.msra.mxu0 %v4139
        %5650 = vmatprep.subr.bf16.mxu0 0
        %5651 = vmatpush1.bf16.msra.mxu0 %v4140
        %5652 = vmatprep.subr.bf16.mxu0 0
        %5653 = vmatpush1.bf16.msra.mxu0 %v4141
        %5654 = vmatprep.subr.bf16.mxu0 0
        %5655 = vmatpush1.bf16.msra.mxu0 %v4142
        %5656 = vmatprep.subr.bf16.mxu0 0
        %5657 = vmatpush1.bf16.msra.mxu0 %v4143
        %5658 = vmatprep.subr.bf16.mxu0 0
        %5659 = vmatpush1.bf16.msra.mxu0 %v4144
        %5660 = vmatprep.mubr.bf16.mxu0 %v1688
        %5661 = vmatmul.mubr.bf16.gmra.mrb[0].mxu0 %v1687
        %v5662 = vpop.f32.mrb[0].mxu0
        %v5663 = vadd.f32 %v5622, %v5662
        %v5664 = vpop.f32.mrb[0].mxu0
        %v5665 = vpop.f32.mrb[0].mxu0
        %v5666 = vadd.f32 %v5625, %v5665
        %v5667 = vpop.f32.mrb[0].mxu0
        %5668 = vdwg.mxu0
        %5669 = vmatprep.subr.bf16.mxu0 0
        %5670 = vmatpush1.bf16.msra.mxu0 %v4145
        %5671 = vmatprep.subr.bf16.mxu0 0
        %5672 = vmatpush1.bf16.msra.mxu0 %v4146
        %5673 = vmatprep.subr.bf16.mxu0 0
        %5674 = vmatpush1.bf16.msra.mxu0 %v4147
        %5675 = vmatprep.subr.bf16.mxu0 0
        %5676 = vmatpush1.bf16.msra.mxu0 %v4148
        %5677 = vmatprep.subr.bf16.mxu0 0
        %5678 = vmatpush1.bf16.msra.mxu0 %v4149
        %5679 = vmatprep.subr.bf16.mxu0 0
        %5680 = vmatpush1.bf16.msra.mxu0 %v4150
        %5681 = vmatprep.subr.bf16.mxu0 0
        %5682 = vmatpush1.bf16.msra.mxu0 %v4151
        %5683 = vmatprep.subr.bf16.mxu0 0
        %5684 = vmatpush1.bf16.msra.mxu0 %v4152
        %5685 = vmatprep.subr.bf16.mxu0 0
        %5686 = vmatpush1.bf16.msra.mxu0 %v4153
        %5687 = vmatprep.subr.bf16.mxu0 0
        %5688 = vmatpush1.bf16.msra.mxu0 %v4154
        %5689 = vmatprep.subr.bf16.mxu0 0
        %5690 = vmatpush1.bf16.msra.mxu0 %v4155
        %5691 = vmatprep.subr.bf16.mxu0 0
        %5692 = vmatpush1.bf16.msra.mxu0 %v4156
        %5693 = vmatprep.subr.bf16.mxu0 0
        %5694 = vmatpush1.bf16.msra.mxu0 %v4157
        %5695 = vmatprep.subr.bf16.mxu0 0
        %5696 = vmatpush1.bf16.msra.mxu0 %v4158
        %5697 = vmatprep.subr.bf16.mxu0 0
        %5698 = vmatpush1.bf16.msra.mxu0 %v4159
        %5699 = vmatprep.subr.bf16.mxu0 0
        %5700 = vmatpush1.bf16.msra.mxu0 %v4160
        %5701 = vmatprep.mubr.bf16.mxu0 %v1690
        %5702 = vmatmul.mubr.bf16.gmra.mrb[0].mxu0 %v1689
        %v5703 = vpop.f32.mrb[0].mxu0
        %v5704 = vadd.f32 %v5663, %v5703
        %v5705 = vpop.f32.mrb[0].mxu0
        %v5706 = vpop.f32.mrb[0].mxu0
        %v5707 = vadd.f32 %v5666, %v5706
        %v5708 = vpop.f32.mrb[0].mxu0
        %5709 = vdwg.mxu0
        %5710 = vmatprep.subr.bf16.mxu0 0
        %5711 = vmatpush1.bf16.msra.mxu0 %v4161
        %5712 = vmatprep.subr.bf16.mxu0 0
        %5713 = vmatpush1.bf16.msra.mxu0 %v4162
        %5714 = vmatprep.subr.bf16.mxu0 0
        %5715 = vmatpush1.bf16.msra.mxu0 %v4163
        %5716 = vmatprep.subr.bf16.mxu0 0
        %5717 = vmatpush1.bf16.msra.mxu0 %v4164
        %5718 = vmatprep.subr.bf16.mxu0 0
        %5719 = vmatpush1.bf16.msra.mxu0 %v4165
        %5720 = vmatprep.subr.bf16.mxu0 0
        %5721 = vmatpush1.bf16.msra.mxu0 %v4166
        %5722 = vmatprep.subr.bf16.mxu0 0
        %5723 = vmatpush1.bf16.msra.mxu0 %v4167
        %5724 = vmatprep.subr.bf16.mxu0 0
        %5725 = vmatpush1.bf16.msra.mxu0 %v4168
        %5726 = vmatprep.subr.bf16.mxu0 0
        %5727 = vmatpush1.bf16.msra.mxu0 %v4169
        %5728 = vmatprep.subr.bf16.mxu0 0
        %5729 = vmatpush1.bf16.msra.mxu0 %v4170
        %5730 = vmatprep.subr.bf16.mxu0 0
        %5731 = vmatpush1.bf16.msra.mxu0 %v4171
        %5732 = vmatprep.subr.bf16.mxu0 0
        %5733 = vmatpush1.bf16.msra.mxu0 %v4172
        %5734 = vmatprep.subr.bf16.mxu0 0
        %5735 = vmatpush1.bf16.msra.mxu0 %v4173
        %5736 = vmatprep.subr.bf16.mxu0 0
        %5737 = vmatpush1.bf16.msra.mxu0 %v4174
        %5738 = vmatprep.subr.bf16.mxu0 0
        %5739 = vmatpush1.bf16.msra.mxu0 %v4175
        %5740 = vmatprep.subr.bf16.mxu0 0
        %5741 = vmatpush1.bf16.msra.mxu0 %v4176
        %5742 = vmatprep.mubr.bf16.mxu0 %v1692
        %5743 = vmatmul.mubr.bf16.gmra.mrb[0].mxu0 %v1691
        %v5744 = vpop.f32.mrb[0].mxu0
        %v5745 = vadd.f32 %v5704, %v5744
        %v5746 = vpop.f32.mrb[0].mxu0
        %v5747 = vpop.f32.mrb[0].mxu0
        %v5748 = vadd.f32 %v5707, %v5747
        %v5749 = vpop.f32.mrb[0].mxu0
        %5750 = vdwg.mxu0
        %5751 = vmatprep.subr.bf16.mxu0 0
        %5752 = vmatpush1.bf16.msra.mxu0 %v4177
        %5753 = vmatprep.subr.bf16.mxu0 0
        %5754 = vmatpush1.bf16.msra.mxu0 %v4178
        %5755 = vmatprep.subr.bf16.mxu0 0
        %5756 = vmatpush1.bf16.msra.mxu0 %v4179
        %5757 = vmatprep.subr.bf16.mxu0 0
        %5758 = vmatpush1.bf16.msra.mxu0 %v4180
        %5759 = vmatprep.subr.bf16.mxu0 0
        %5760 = vmatpush1.bf16.msra.mxu0 %v4181
        %5761 = vmatprep.subr.bf16.mxu0 0
        %5762 = vmatpush1.bf16.msra.mxu0 %v4182
        %5763 = vmatprep.subr.bf16.mxu0 0
        %5764 = vmatpush1.bf16.msra.mxu0 %v4183
        %5765 = vmatprep.subr.bf16.mxu0 0
        %5766 = vmatpush1.bf16.msra.mxu0 %v4184
        %5767 = vmatprep.subr.bf16.mxu0 0
        %5768 = vmatpush1.bf16.msra.mxu0 %v4185
        %5769 = vmatprep.subr.bf16.mxu0 0
        %5770 = vmatpush1.bf16.msra.mxu0 %v4186
        %5771 = vmatprep.subr.bf16.mxu0 0
        %5772 = vmatpush1.bf16.msra.mxu0 %v4187
        %5773 = vmatprep.subr.bf16.mxu0 0
        %5774 = vmatpush1.bf16.msra.mxu0 %v4188
        %5775 = vmatprep.subr.bf16.mxu0 0
        %5776 = vmatpush1.bf16.msra.mxu0 %v4189
        %5777 = vmatprep.subr.bf16.mxu0 0
        %5778 = vmatpush1.bf16.msra.mxu0 %v4190
        %5779 = vmatprep.subr.bf16.mxu0 0
        %5780 = vmatpush1.bf16.msra.mxu0 %v4191
        %5781 = vmatprep.subr.bf16.mxu0 0
        %5782 = vmatpush1.bf16.msra.mxu0 %v4192
        %5783 = vmatprep.mubr.bf16.mxu0 %v1694
        %5784 = vmatmul.mubr.bf16.gmra.mrb[0].mxu0 %v1693
        %v5785 = vpop.f32.mrb[0].mxu0
        %v5786 = vadd.f32 %v5745, %v5785
        %v5787 = vpop.f32.mrb[0].mxu0
        %v5788 = vpop.f32.mrb[0].mxu0
        %v5789 = vadd.f32 %v5748, %v5788
        %v5790 = vpop.f32.mrb[0].mxu0
        %5791 = vdwg.mxu0
        %5792 = vmatprep.subr.bf16.mxu0 0
        %5793 = vmatpush1.bf16.msra.mxu0 %v4193
        %5794 = vmatprep.subr.bf16.mxu0 0
        %5795 = vmatpush1.bf16.msra.mxu0 %v4194
        %5796 = vmatprep.subr.bf16.mxu0 0
        %5797 = vmatpush1.bf16.msra.mxu0 %v4195
        %5798 = vmatprep.subr.bf16.mxu0 0
        %5799 = vmatpush1.bf16.msra.mxu0 %v4196
        %5800 = vmatprep.subr.bf16.mxu0 0
        %5801 = vmatpush1.bf16.msra.mxu0 %v4197
        %5802 = vmatprep.subr.bf16.mxu0 0
        %5803 = vmatpush1.bf16.msra.mxu0 %v4198
        %5804 = vmatprep.subr.bf16.mxu0 0
        %5805 = vmatpush1.bf16.msra.mxu0 %v4199
        %5806 = vmatprep.subr.bf16.mxu0 0
        %5807 = vmatpush1.bf16.msra.mxu0 %v4200
        %5808 = vmatprep.subr.bf16.mxu0 0
        %5809 = vmatpush1.bf16.msra.mxu0 %v4201
        %5810 = vmatprep.subr.bf16.mxu0 0
        %5811 = vmatpush1.bf16.msra.mxu0 %v4202
        %5812 = vmatprep.subr.bf16.mxu0 0
        %5813 = vmatpush1.bf16.msra.mxu0 %v4203
        %5814 = vmatprep.subr.bf16.mxu0 0
        %5815 = vmatpush1.bf16.msra.mxu0 %v4204
        %5816 = vmatprep.subr.bf16.mxu0 0
        %5817 = vmatpush1.bf16.msra.mxu0 %v4205
        %5818 = vmatprep.subr.bf16.mxu0 0
        %5819 = vmatpush1.bf16.msra.mxu0 %v4206
        %5820 = vmatprep.subr.bf16.mxu0 0
        %5821 = vmatpush1.bf16.msra.mxu0 %v4207
        %5822 = vmatprep.subr.bf16.mxu0 0
        %5823 = vmatpush1.bf16.msra.mxu0 %v4208
        %5824 = vmatprep.mubr.bf16.mxu0 %v1696
        %5825 = vmatmul.mubr.bf16.gmra.mrb[0].mxu0 %v1695
        %v5826 = vpop.f32.mrb[0].mxu0
        %v5827 = vadd.f32 %v5786, %v5826
        %v5828 = vpop.f32.mrb[0].mxu0
        %v5829 = vpop.f32.mrb[0].mxu0
        %v5830 = vadd.f32 %v5789, %v5829
        %v5831 = vpop.f32.mrb[0].mxu0
        %5832 = vdwg.mxu0
        %5833 = vmatprep.subr.bf16.mxu0 0
        %5834 = vmatpush1.bf16.msra.mxu0 %v4209
        %5835 = vmatprep.subr.bf16.mxu0 0
        %5836 = vmatpush1.bf16.msra.mxu0 %v4210
        %5837 = vmatprep.subr.bf16.mxu0 0
        %5838 = vmatpush1.bf16.msra.mxu0 %v4211
        %5839 = vmatprep.subr.bf16.mxu0 0
        %5840 = vmatpush1.bf16.msra.mxu0 %v4212
        %5841 = vmatprep.subr.bf16.mxu0 0
        %5842 = vmatpush1.bf16.msra.mxu0 %v4213
        %5843 = vmatprep.subr.bf16.mxu0 0
        %5844 = vmatpush1.bf16.msra.mxu0 %v4214
        %5845 = vmatprep.subr.bf16.mxu0 0
        %5846 = vmatpush1.bf16.msra.mxu0 %v4215
        %5847 = vmatprep.subr.bf16.mxu0 0
        %5848 = vmatpush1.bf16.msra.mxu0 %v4216
        %5849 = vmatprep.subr.bf16.mxu0 0
        %5850 = vmatpush1.bf16.msra.mxu0 %v4217
        %5851 = vmatprep.subr.bf16.mxu0 0
        %5852 = vmatpush1.bf16.msra.mxu0 %v4218
        %5853 = vmatprep.subr.bf16.mxu0 0
        %5854 = vmatpush1.bf16.msra.mxu0 %v4219
        %5855 = vmatprep.subr.bf16.mxu0 0
        %5856 = vmatpush1.bf16.msra.mxu0 %v4220
        %5857 = vmatprep.subr.bf16.mxu0 0
        %5858 = vmatpush1.bf16.msra.mxu0 %v4221
        %5859 = vmatprep.subr.bf16.mxu0 0
        %5860 = vmatpush1.bf16.msra.mxu0 %v4222
        %5861 = vmatprep.subr.bf16.mxu0 0
        %5862 = vmatpush1.bf16.msra.mxu0 %v4223
        %5863 = vmatprep.subr.bf16.mxu0 0
        %5864 = vmatpush1.bf16.msra.mxu0 %v4224
        %5865 = vmatprep.mubr.bf16.mxu0 %v1698
        %5866 = vmatmul.mubr.bf16.gmra.mrb[0].mxu0 %v1697
        %v5867 = vpop.f32.mrb[0].mxu0
        %v5868 = vadd.f32 %v5827, %v5867
        %v5869 = vpop.f32.mrb[0].mxu0
        %v5870 = vpop.f32.mrb[0].mxu0
        %v5871 = vadd.f32 %v5830, %v5870
        %v5872 = vpop.f32.mrb[0].mxu0
        %5873 = vdwg.mxu0
        %5874 = vmatprep.subr.bf16.mxu0 0
        %5875 = vmatpush1.bf16.msra.mxu0 %v4225
        %5876 = vmatprep.subr.bf16.mxu0 0
        %5877 = vmatpush1.bf16.msra.mxu0 %v4226
        %5878 = vmatprep.subr.bf16.mxu0 0
        %5879 = vmatpush1.bf16.msra.mxu0 %v4227
        %5880 = vmatprep.subr.bf16.mxu0 0
        %5881 = vmatpush1.bf16.msra.mxu0 %v4228
        %5882 = vmatprep.subr.bf16.mxu0 0
        %5883 = vmatpush1.bf16.msra.mxu0 %v4229
        %5884 = vmatprep.subr.bf16.mxu0 0
        %5885 = vmatpush1.bf16.msra.mxu0 %v4230
        %5886 = vmatprep.subr.bf16.mxu0 0
        %5887 = vmatpush1.bf16.msra.mxu0 %v4231
        %5888 = vmatprep.subr.bf16.mxu0 0
        %5889 = vmatpush1.bf16.msra.mxu0 %v4232
        %5890 = vmatprep.subr.bf16.mxu0 0
        %5891 = vmatpush1.bf16.msra.mxu0 %v4233
        %5892 = vmatprep.subr.bf16.mxu0 0
        %5893 = vmatpush1.bf16.msra.mxu0 %v4234
        %5894 = vmatprep.subr.bf16.mxu0 0
        %5895 = vmatpush1.bf16.msra.mxu0 %v4235
        %5896 = vmatprep.subr.bf16.mxu0 0
        %5897 = vmatpush1.bf16.msra.mxu0 %v4236
        %5898 = vmatprep.subr.bf16.mxu0 0
        %5899 = vmatpush1.bf16.msra.mxu0 %v4237
        %5900 = vmatprep.subr.bf16.mxu0 0
        %5901 = vmatpush1.bf16.msra.mxu0 %v4238
        %5902 = vmatprep.subr.bf16.mxu0 0
        %5903 = vmatpush1.bf16.msra.mxu0 %v4239
        %5904 = vmatprep.subr.bf16.mxu0 0
        %5905 = vmatpush1.bf16.msra.mxu0 %v4240
        %5906 = vmatprep.mubr.bf16.mxu0 %v1700
        %5907 = vmatmul.mubr.bf16.gmra.mrb[0].mxu0 %v1699
        %v5908 = vpop.f32.mrb[0].mxu0
        %v5909 = vadd.f32 %v5868, %v5908
        %v5910 = vpop.f32.mrb[0].mxu0
        %v5911 = vpop.f32.mrb[0].mxu0
        %v5912 = vadd.f32 %v5871, %v5911
        %v5913 = vpop.f32.mrb[0].mxu0
        %5914 = vdwg.mxu0
        %5915 = vmatprep.subr.bf16.mxu0 0
        %5916 = vmatpush1.bf16.msra.mxu0 %v4241
        %5917 = vmatprep.subr.bf16.mxu0 0
        %5918 = vmatpush1.bf16.msra.mxu0 %v4242
        %5919 = vmatprep.subr.bf16.mxu0 0
        %5920 = vmatpush1.bf16.msra.mxu0 %v4243
        %5921 = vmatprep.subr.bf16.mxu0 0
        %5922 = vmatpush1.bf16.msra.mxu0 %v4244
        %5923 = vmatprep.subr.bf16.mxu0 0
        %5924 = vmatpush1.bf16.msra.mxu0 %v4245
        %5925 = vmatprep.subr.bf16.mxu0 0
        %5926 = vmatpush1.bf16.msra.mxu0 %v4246
        %5927 = vmatprep.subr.bf16.mxu0 0
        %5928 = vmatpush1.bf16.msra.mxu0 %v4247
        %5929 = vmatprep.subr.bf16.mxu0 0
        %5930 = vmatpush1.bf16.msra.mxu0 %v4248
        %5931 = vmatprep.subr.bf16.mxu0 0
        %5932 = vmatpush1.bf16.msra.mxu0 %v4249
        %5933 = vmatprep.subr.bf16.mxu0 0
        %5934 = vmatpush1.bf16.msra.mxu0 %v4250
        %5935 = vmatprep.subr.bf16.mxu0 0
        %5936 = vmatpush1.bf16.msra.mxu0 %v4251
        %5937 = vmatprep.subr.bf16.mxu0 0
        %5938 = vmatpush1.bf16.msra.mxu0 %v4252
        %5939 = vmatprep.subr.bf16.mxu0 0
        %5940 = vmatpush1.bf16.msra.mxu0 %v4253
        %5941 = vmatprep.subr.bf16.mxu0 0
        %5942 = vmatpush1.bf16.msra.mxu0 %v4254
        %5943 = vmatprep.subr.bf16.mxu0 0
        %5944 = vmatpush1.bf16.msra.mxu0 %v4255
        %5945 = vmatprep.subr.bf16.mxu0 0
        %5946 = vmatpush1.bf16.msra.mxu0 %v4256
        %5947 = vmatprep.mubr.bf16.mxu0 %v1702
        %5948 = vmatmul.mubr.bf16.gmra.mrb[0].mxu0 %v1701
        %v5949 = vpop.f32.mrb[0].mxu0
        %v5950 = vadd.f32 %v5909, %v5949
        %v5951 = vpop.f32.mrb[0].mxu0
        %v5952 = vpop.f32.mrb[0].mxu0
        %v5953 = vadd.f32 %v5912, %v5952
        %v5954 = vpop.f32.mrb[0].mxu0
        %5955 = vdwg.mxu0
        %5956 = vmatprep.subr.bf16.mxu0 0
        %5957 = vmatpush1.bf16.msra.mxu0 %v4257
        %5958 = vmatprep.subr.bf16.mxu0 0
        %5959 = vmatpush1.bf16.msra.mxu0 %v4258
        %5960 = vmatprep.subr.bf16.mxu0 0
        %5961 = vmatpush1.bf16.msra.mxu0 %v4259
        %5962 = vmatprep.subr.bf16.mxu0 0
        %5963 = vmatpush1.bf16.msra.mxu0 %v4260
        %5964 = vmatprep.subr.bf16.mxu0 0
        %5965 = vmatpush1.bf16.msra.mxu0 %v4261
        %5966 = vmatprep.subr.bf16.mxu0 0
        %5967 = vmatpush1.bf16.msra.mxu0 %v4262
        %5968 = vmatprep.subr.bf16.mxu0 0
        %5969 = vmatpush1.bf16.msra.mxu0 %v4263
        %5970 = vmatprep.subr.bf16.mxu0 0
        %5971 = vmatpush1.bf16.msra.mxu0 %v4264
        %5972 = vmatprep.subr.bf16.mxu0 0
        %5973 = vmatpush1.bf16.msra.mxu0 %v4265
        %5974 = vmatprep.subr.bf16.mxu0 0
        %5975 = vmatpush1.bf16.msra.mxu0 %v4266
        %5976 = vmatprep.subr.bf16.mxu0 0
        %5977 = vmatpush1.bf16.msra.mxu0 %v4267
        %5978 = vmatprep.subr.bf16.mxu0 0
        %5979 = vmatpush1.bf16.msra.mxu0 %v4268
        %5980 = vmatprep.subr.bf16.mxu0 0
        %5981 = vmatpush1.bf16.msra.mxu0 %v4269
        %5982 = vmatprep.subr.bf16.mxu0 0
        %5983 = vmatpush1.bf16.msra.mxu0 %v4270
        %5984 = vmatprep.subr.bf16.mxu0 0
        %5985 = vmatpush1.bf16.msra.mxu0 %v4271
        %5986 = vmatprep.subr.bf16.mxu0 0
        %5987 = vmatpush1.bf16.msra.mxu0 %v4272
        %5988 = vmatprep.mubr.bf16.mxu0 %v1704
        %5989 = vmatmul.mubr.bf16.gmra.mrb[0].mxu0 %v1703
        %v5990 = vpop.f32.mrb[0].mxu0
        %v5991 = vadd.f32 %v5950, %v5990
        %v5992 = vpop.f32.mrb[0].mxu0
        %v5993 = vpop.f32.mrb[0].mxu0
        %v5994 = vadd.f32 %v5953, %v5993
        %v5995 = vpop.f32.mrb[0].mxu0
        %5996 = vdwg.mxu0
        %5997 = vmatprep.subr.bf16.mxu0 0
        %5998 = vmatpush1.bf16.msra.mxu0 %v4273
        %5999 = vmatprep.subr.bf16.mxu0 0
        %6000 = vmatpush1.bf16.msra.mxu0 %v4274
        %6001 = vmatprep.subr.bf16.mxu0 0
        %6002 = vmatpush1.bf16.msra.mxu0 %v4275
        %6003 = vmatprep.subr.bf16.mxu0 0
        %6004 = vmatpush1.bf16.msra.mxu0 %v4276
        %6005 = vmatprep.subr.bf16.mxu0 0
        %6006 = vmatpush1.bf16.msra.mxu0 %v4277
        %6007 = vmatprep.subr.bf16.mxu0 0
        %6008 = vmatpush1.bf16.msra.mxu0 %v4278
        %6009 = vmatprep.subr.bf16.mxu0 0
        %6010 = vmatpush1.bf16.msra.mxu0 %v4279
        %6011 = vmatprep.subr.bf16.mxu0 0
        %6012 = vmatpush1.bf16.msra.mxu0 %v4280
        %6013 = vmatprep.subr.bf16.mxu0 0
        %6014 = vmatpush1.bf16.msra.mxu0 %v4281
        %6015 = vmatprep.subr.bf16.mxu0 0
        %6016 = vmatpush1.bf16.msra.mxu0 %v4282
        %6017 = vmatprep.subr.bf16.mxu0 0
        %6018 = vmatpush1.bf16.msra.mxu0 %v4283
        %6019 = vmatprep.subr.bf16.mxu0 0
        %6020 = vmatpush1.bf16.msra.mxu0 %v4284
        %6021 = vmatprep.subr.bf16.mxu0 0
        %6022 = vmatpush1.bf16.msra.mxu0 %v4285
        %6023 = vmatprep.subr.bf16.mxu0 0
        %6024 = vmatpush1.bf16.msra.mxu0 %v4286
        %6025 = vmatprep.subr.bf16.mxu0 0
        %6026 = vmatpush1.bf16.msra.mxu0 %v4287
        %6027 = vmatprep.subr.bf16.mxu0 0
        %6028 = vmatpush1.bf16.msra.mxu0 %v4288
        %6029 = vmatprep.mubr.bf16.mxu0 %v1706
        %6030 = vmatmul.mubr.bf16.gmra.mrb[0].mxu0 %v1705
        %v6031 = vpop.f32.mrb[0].mxu0
        %v6032 = vadd.f32 %v5991, %v6031
        %v6033 = vpop.f32.mrb[0].mxu0
        %v6034 = vpop.f32.mrb[0].mxu0
        %v6035 = vadd.f32 %v5994, %v6034
        %v6036 = vpop.f32.mrb[0].mxu0
        %6037 = vdwg.mxu0
        %6038 = vmatprep.subr.bf16.mxu0 0
        %6039 = vmatpush1.bf16.msra.mxu0 %v4289
        %6040 = vmatprep.subr.bf16.mxu0 0
        %6041 = vmatpush1.bf16.msra.mxu0 %v4290
        %6042 = vmatprep.subr.bf16.mxu0 0
        %6043 = vmatpush1.bf16.msra.mxu0 %v4291
        %6044 = vmatprep.subr.bf16.mxu0 0
        %6045 = vmatpush1.bf16.msra.mxu0 %v4292
        %6046 = vmatprep.subr.bf16.mxu0 0
        %6047 = vmatpush1.bf16.msra.mxu0 %v4293
        %6048 = vmatprep.subr.bf16.mxu0 0
        %6049 = vmatpush1.bf16.msra.mxu0 %v4294
        %6050 = vmatprep.subr.bf16.mxu0 0
        %6051 = vmatpush1.bf16.msra.mxu0 %v4295
        %6052 = vmatprep.subr.bf16.mxu0 0
        %6053 = vmatpush1.bf16.msra.mxu0 %v4296
        %6054 = vmatprep.subr.bf16.mxu0 0
        %6055 = vmatpush1.bf16.msra.mxu0 %v4297
        %6056 = vmatprep.subr.bf16.mxu0 0
        %6057 = vmatpush1.bf16.msra.mxu0 %v4298
        %6058 = vmatprep.subr.bf16.mxu0 0
        %6059 = vmatpush1.bf16.msra.mxu0 %v4299
        %6060 = vmatprep.subr.bf16.mxu0 0
        %6061 = vmatpush1.bf16.msra.mxu0 %v4300
        %6062 = vmatprep.subr.bf16.mxu0 0
        %6063 = vmatpush1.bf16.msra.mxu0 %v4301
        %6064 = vmatprep.subr.bf16.mxu0 0
        %6065 = vmatpush1.bf16.msra.mxu0 %v4302
        %6066 = vmatprep.subr.bf16.mxu0 0
        %6067 = vmatpush1.bf16.msra.mxu0 %v4303
        %6068 = vmatprep.subr.bf16.mxu0 0
        %6069 = vmatpush1.bf16.msra.mxu0 %v4304
        %6070 = vmatprep.mubr.bf16.mxu0 %v1708
        %6071 = vmatmul.mubr.bf16.gmra.mrb[0].mxu0 %v1707
        %v6072 = vpop.f32.mrb[0].mxu0
        %v6073 = vadd.f32 %v6032, %v6072
        %v6074 = vpop.f32.mrb[0].mxu0
        %v6075 = vpop.f32.mrb[0].mxu0
        %v6076 = vadd.f32 %v6035, %v6075
        %v6077 = vpop.f32.mrb[0].mxu0
        %6078 = vdwg.mxu0
        %6079 = vmatprep.subr.bf16.mxu0 0
        %6080 = vmatpush1.bf16.msra.mxu0 %v4305
        %6081 = vmatprep.subr.bf16.mxu0 0
        %6082 = vmatpush1.bf16.msra.mxu0 %v4306
        %6083 = vmatprep.subr.bf16.mxu0 0
        %6084 = vmatpush1.bf16.msra.mxu0 %v4307
        %6085 = vmatprep.subr.bf16.mxu0 0
        %6086 = vmatpush1.bf16.msra.mxu0 %v4308
        %6087 = vmatprep.subr.bf16.mxu0 0
        %6088 = vmatpush1.bf16.msra.mxu0 %v4309
        %6089 = vmatprep.subr.bf16.mxu0 0
        %6090 = vmatpush1.bf16.msra.mxu0 %v4310
        %6091 = vmatprep.subr.bf16.mxu0 0
        %6092 = vmatpush1.bf16.msra.mxu0 %v4311
        %6093 = vmatprep.subr.bf16.mxu0 0
        %6094 = vmatpush1.bf16.msra.mxu0 %v4312
        %6095 = vmatprep.subr.bf16.mxu0 0
        %6096 = vmatpush1.bf16.msra.mxu0 %v4313
        %6097 = vmatprep.subr.bf16.mxu0 0
        %6098 = vmatpush1.bf16.msra.mxu0 %v4314
        %6099 = vmatprep.subr.bf16.mxu0 0
        %6100 = vmatpush1.bf16.msra.mxu0 %v4315
        %6101 = vmatprep.subr.bf16.mxu0 0
        %6102 = vmatpush1.bf16.msra.mxu0 %v4316
        %6103 = vmatprep.subr.bf16.mxu0 0
        %6104 = vmatpush1.bf16.msra.mxu0 %v4317
        %6105 = vmatprep.subr.bf16.mxu0 0
        %6106 = vmatpush1.bf16.msra.mxu0 %v4318
        %6107 = vmatprep.subr.bf16.mxu0 0
        %6108 = vmatpush1.bf16.msra.mxu0 %v4319
        %6109 = vmatprep.subr.bf16.mxu0 0
        %6110 = vmatpush1.bf16.msra.mxu0 %v4320
        %6111 = vmatprep.mubr.bf16.mxu0 %v1710
        %6112 = vmatmul.mubr.bf16.gmra.mrb[0].mxu0 %v1709
        %v6113 = vpop.f32.mrb[0].mxu0
        %v6114 = vadd.f32 %v6073, %v6113
        %v6115 = vpop.f32.mrb[0].mxu0
        %v6116 = vpop.f32.mrb[0].mxu0
        %v6117 = vadd.f32 %v6076, %v6116
        %v6118 = vpop.f32.mrb[0].mxu0
        %6119 = vdwg.mxu0
        %6120 = vmatprep.subr.bf16.mxu0 0
        %6121 = vmatpush1.bf16.msra.mxu0 %v4321
        %6122 = vmatprep.subr.bf16.mxu0 0
        %6123 = vmatpush1.bf16.msra.mxu0 %v4322
        %6124 = vmatprep.subr.bf16.mxu0 0
        %6125 = vmatpush1.bf16.msra.mxu0 %v4323
        %6126 = vmatprep.subr.bf16.mxu0 0
        %6127 = vmatpush1.bf16.msra.mxu0 %v4324
        %6128 = vmatprep.subr.bf16.mxu0 0
        %6129 = vmatpush1.bf16.msra.mxu0 %v4325
        %6130 = vmatprep.subr.bf16.mxu0 0
        %6131 = vmatpush1.bf16.msra.mxu0 %v4326
        %6132 = vmatprep.subr.bf16.mxu0 0
        %6133 = vmatpush1.bf16.msra.mxu0 %v4327
        %6134 = vmatprep.subr.bf16.mxu0 0
        %6135 = vmatpush1.bf16.msra.mxu0 %v4328
        %6136 = vmatprep.subr.bf16.mxu0 0
        %6137 = vmatpush1.bf16.msra.mxu0 %v4329
        %6138 = vmatprep.subr.bf16.mxu0 0
        %6139 = vmatpush1.bf16.msra.mxu0 %v4330
        %6140 = vmatprep.subr.bf16.mxu0 0
        %6141 = vmatpush1.bf16.msra.mxu0 %v4331
        %6142 = vmatprep.subr.bf16.mxu0 0
        %6143 = vmatpush1.bf16.msra.mxu0 %v4332
        %6144 = vmatprep.subr.bf16.mxu0 0
        %6145 = vmatpush1.bf16.msra.mxu0 %v4333
        %6146 = vmatprep.subr.bf16.mxu0 0
        %6147 = vmatpush1.bf16.msra.mxu0 %v4334
        %6148 = vmatprep.subr.bf16.mxu0 0
        %6149 = vmatpush1.bf16.msra.mxu0 %v4335
        %6150 = vmatprep.subr.bf16.mxu0 0
        %6151 = vmatpush1.bf16.msra.mxu0 %v4336
        %6152 = vmatprep.mubr.bf16.mxu0 %v1712
        %6153 = vmatmul.mubr.bf16.gmra.mrb[0].mxu0 %v1711
        %v6154 = vpop.f32.mrb[0].mxu0
        %v6155 = vadd.f32 %v6114, %v6154
        %v6156 = vpop.f32.mrb[0].mxu0
        %v6157 = vpop.f32.mrb[0].mxu0
        %v6158 = vadd.f32 %v6117, %v6157
        %v6159 = vpop.f32.mrb[0].mxu0
        %6160 = vdwg.mxu0
        %v6161 = vadd.f32 %v367, %v6155
        %v6162 = vadd.f32 %v368, %v6158
        %vm6163 = vcmask 523264
        %6164 = vst.msk [vmem:[#allocation2] sm:$0xff] %vm6163, %v6161
        %6165 = vst.msk [vmem:[#allocation2 + $0x8] sm:$0xff] %vm6163, %v6162
        %p6166 = scmp.eq.s32.totalorder %s19, 1
        // Predicated region
        $region60: #{lidar_cnn_forward.3} parent=50 // pred_check
          %p6167 = pneg %p6166
        $region61: #{lidar_cnn_forward.3} parent=50 // pred_check_branch
          %6169 = sbr.rel (%p6167) target = $region63
        $region62: #{lidar_cnn_forward.3} parent=50 // pred_region
          %v6170 = vld [vmem:[#allocation2] sm:$0xff]
          %v6171 = vld [vmem:[#allocation2 + $0x8] sm:$0xff]
          %v6172 = vld [vmem:[%s2] sm:$0x1]
          %v6174 = vlaneseq
          %v6175 = vshrl.u32 %v6174, 7
          %v6176 = vsub.s32 0, %v6175
          %v6177 = vrot.slane %v6172, %v6176
          %v6179 = vadd.f32 %v6170, %v6177
          %v6180 = vadd.f32 %v6171, %v6177
          %v6181 = vmax.f32 %v6179, 0.0
          %v6182 = vmax.f32 %v6180, 0.0
          %6183 = vst.msk [vmem:[%s357] sm:$0xff] %vm6163, %v6181
          %6184 = vst.msk [vmem:[%s357 + $0x8] sm:$0xff] %vm6163, %v6182
        $region63: #{lidar_cnn_forward.3} parent=50 // pred_fallthru
          _
        %s6185 = smul.u32 2, %s18
        %p6186 = scmp.lt.s32.totalorder %s6185, 1
        %s6187 = scalar_select %p6186, %s6185, 1
        %s6188 = smul.addr %s6187, 8
        %s6189 = scalar_lea.vmem %s3, %s6188
        // Predicated region
        $region64: #{lidar_cnn_forward.3} parent=50 // pred_check
          %p6190 = pneg %p119
        $region65: #{lidar_cnn_forward.3} parent=50 // pred_check_branch
          %6192 = sbr.rel (%p6190) target = $region67
        $region66: #{lidar_cnn_forward.3} parent=50 // pred_region
          %s6193 = smul.u32 2, %s18
        $region67: #{lidar_cnn_forward.3} parent=50 // pred_fallthru
          _
        // Predicated region
        $region68: #{lidar_cnn_forward.3} parent=50 // pred_check
          %p6194 = pneg %p119
        $region69: #{lidar_cnn_forward.3} parent=50 // pred_check_branch
          %6196 = sbr.rel (%p6194) target = $region71
        $region70: #{lidar_cnn_forward.3} parent=50 // pred_region
          %s6197 = smul.u32 2, %s18
          %p6198 = scmp.lt.s32.totalorder %s6197, 1
          %s6199 = scalar_select %p6198, %s6197, 1
          %s6200 = smul.addr %s6199, 8
          %s6201 = scalar_lea.vmem %s3, %s6200
        $region71: #{lidar_cnn_forward.3} parent=50 // pred_fallthru
          _
      $region51: #{lidar_cnn_forward.3} parent=5 // pred_fallthru
        _
      %p6202 = scmp.le.s32.totalorder 2, %s9
      // Predicated region
      $region72: #{lidar_cnn_forward.3} parent=5 // pred_check
        %p6203 = pneg %p6202
      $region73: #{lidar_cnn_forward.3} parent=5 // pred_check_branch
        %6205 = sbr.rel (%p6203) target = $region75
      $region74: #{lidar_cnn_forward.3} parent=5 // pred_region
        %s6206 = ssub.s32 %s9, 2
      $region75: #{lidar_cnn_forward.3} parent=5 // pred_fallthru
        _
    $region6: #{lidar_cnn_forward.3} parent=1 // loop_footer
      %s13 = sadd.s32 1, %s9
    $region7: #{lidar_cnn_forward.3} parent=1 // loop_footer_branch
      %8 = sbr.rel target = $region3
    $region8: #{lidar_cnn_forward.3} parent=1 // loop_exit
      _

</llo_original>
